<compile_context>
chip_gen: v7x
topology: tpu7x:2x2x1
jax: 0.10.0
libtpu: 0.0.40
codegen_flags: <defaults>
</compile_context>

<pallas_src>
import numpy as np

import jax
import jax.numpy as jnp
from jax.experimental import pallas as pl
from jax.experimental.pallas import tpu as pltpu


# Flattened-spatial widths used by the conv-tower kernel.
_XP1_W = 930      # padded conv1 input: (31 x 30) grid flattened (zero pad row at end)
_CONV1_W = 840    # conv1 output columns r = y*30 + x (x < 28 valid)
_POOL1_W = 807    # columns needed by pool1 (max r = 60*13 + 2*13 = 806)
_XP2_W = 256      # padded conv2 input: (16 x 16) grid flattened
_CONV2_W = 222    # conv2 output columns r = y*16 + x (x < 14 valid)
_POOL2_W = 205    # columns needed by pool2 (max r = 32*6 + 2*6 = 204)


# ---------------------------------------------------------------------------
# Pooling selection matrices (exact 0/1 constants, built once on the host).
# ---------------------------------------------------------------------------
def _pool1_scatter_matrix():
    """(807, 256): picks pooled conv1 pixels and scatters them (with zero
    border) into the flattened, padded 16x16 conv2 input grid."""
    s = np.zeros((_POOL1_W, _XP2_W), np.float32)
    for yy in range(14):
        for xx in range(14):
            s[60 * yy + 2 * xx, 16 * (yy + 1) + (xx + 1)] = 1.0
    return s


def _pool2_select_matrix():
    """(205, 49): picks pooled conv2 pixels into dense (7y'+x') order."""
    s = np.zeros((_POOL2_W, 49), np.float32)
    for yy in range(7):
        for xx in range(7):
            s[32 * yy + 2 * xx, 7 * yy + xx] = 1.0
    return s


# ---------------------------------------------------------------------------
# Pallas kernels
# ---------------------------------------------------------------------------
def _conv_tower_kernel(x_ref, w1_ref, b1_ref, w2_ref, b2_ref, s1_ref, s2_ref,
                       o_ref, z1_ref, z2_ref):
    """conv1+ReLU+pool1+conv2+ReLU+pool2 for one image, fully in VMEM."""
    xp1 = x_ref[0]                                        # (1, 930) flat padded image

    # conv1 (1->32, 3x3, pad 1) on the VPU: 9 shifted broadcast multiply-adds.
    acc1 = None
    for k in range(9):
        dy, dx = divmod(k, 3)
        shift = dy * 30 + dx
        term = w1_ref[:, k:k + 1] * xp1[:, shift:shift + _CONV1_W]   # (32,1)*(1,840)
        acc1 = term if acc1 is None else acc1 + term
    z1_ref[...] = jnp.maximum(acc1 + b1_ref[...], 0.0)    # (32, 840) bias + ReLU

    # pool1 (2x2/2): shifted maxes over the flat grid, then one selection matmul
    # that compacts + zero-pads into the flattened 16x16 conv2 input.
    my1 = jnp.maximum(
        jnp.maximum(z1_ref[:, 0:_POOL1_W], z1_ref[:, 1:1 + _POOL1_W]),
        jnp.maximum(z1_ref[:, 30:30 + _POOL1_W], z1_ref[:, 31:31 + _POOL1_W]))
    xp2 = jnp.dot(my1, s1_ref[...], preferred_element_type=jnp.float32)  # (32, 256)

    # conv2 (32->64, 3x3, pad 1): 9 MXU matmuls on shifted slices.
    acc2 = None
    for k in range(9):
        dy, dx = divmod(k, 3)
        shift = dy * 16 + dx
        term = jnp.dot(w2_ref[k], xp2[:, shift:shift + _CONV2_W],
                       preferred_element_type=jnp.float32)           # (64, 222)
        acc2 = term if acc2 is None else acc2 + term
    z2_ref[...] = jnp.maximum(acc2 + b2_ref[...], 0.0)    # (64, 222) bias + ReLU

    # pool2 (2x2/2) + compaction into torch NCHW-flatten order (c, y', x').
    my2 = jnp.maximum(
        jnp.maximum(z2_ref[:, 0:_POOL2_W], z2_ref[:, 1:1 + _POOL2_W]),
        jnp.maximum(z2_ref[:, 16:16 + _POOL2_W], z2_ref[:, 17:17 + _POOL2_W]))
    o_ref[0] = jnp.dot(my2, s2_ref[...], preferred_element_type=jnp.float32)  # (64, 49)


def _mlp_kernel(x_ref, w1_ref, b1_ref, w2_ref, b2_ref, o_ref):
    """Fused fc1 + ReLU + fc2 (fc2 zero-padded to 128 lanes)."""
    h = jnp.dot(x_ref[...], w1_ref[...], preferred_element_type=jnp.float32)
    h = jnp.maximum(h + b1_ref[...], 0.0)
    out = jnp.dot(h, w2_ref[...], preferred_element_type=jnp.float32) + b2_ref[...]
    o_ref[...] = out.astype(o_ref.dtype)


# ---------------------------------------------------------------------------
# Pallas wrappers
# ---------------------------------------------------------------------------
def conv_tower(xpf, kp):
    """xpf: (B, 1, 930) flattened padded images -> (B, 64, 49) pooled features."""
    B = xpf.shape[0]
    return pl.pallas_call(
        _conv_tower_kernel,
        out_shape=jax.ShapeDtypeStruct((B, 64, 49), jnp.float32),
        grid=(B,),
        in_specs=[
            pl.BlockSpec((1, 1, _XP1_W), lambda b: (b, 0, 0)),
            pl.BlockSpec((32, 9), lambda b: (0, 0)),          # conv1 weights (resident)
            pl.BlockSpec((32, 1), lambda b: (0, 0)),          # conv1 bias
            pl.BlockSpec((9, 64, 32), lambda b: (0, 0, 0)),   # conv2 weights (resident)
            pl.BlockSpec((64, 1), lambda b: (0, 0)),          # conv2 bias
            pl.BlockSpec((_POOL1_W, _XP2_W), lambda b: (0, 0)),   # pool1 scatter matrix
            pl.BlockSpec((_POOL2_W, 49), lambda b: (0, 0)),       # pool2 select matrix
        ],
        out_specs=pl.BlockSpec((1, 64, 49), lambda b: (b, 0, 0)),
        scratch_shapes=[
            pltpu.VMEM((32, _CONV1_W), jnp.float32),
            pltpu.VMEM((64, _CONV2_W), jnp.float32),
        ],
        compiler_params=pltpu.CompilerParams(
            dimension_semantics=("parallel",)),
    )(xpf, kp["w1m"], kp["b1m"], kp["w2t"], kp["b2m"], kp["s1p"], kp["s2p"])


def mlp_head(flat, kp):
    """flat: (B, 3136) -> (B, 128) fused fc1+ReLU+fc2 (padded output lanes)."""
    B = flat.shape[0]
    return pl.pallas_call(
        _mlp_kernel,
        out_shape=jax.ShapeDtypeStruct((B, 128), jnp.float32),
        grid=(1,),
        in_specs=[
            pl.BlockSpec((B, 3136), lambda i: (0, 0)),
            pl.BlockSpec((3136, 128), lambda i: (0, 0)),
            pl.BlockSpec((1, 128), lambda i: (0, 0)),
            pl.BlockSpec((128, 128), lambda i: (0, 0)),
            pl.BlockSpec((1, 128), lambda i: (0, 0)),
        ],
        out_specs=pl.BlockSpec((B, 128), lambda i: (0, 0)),
        compiler_params=pltpu.CompilerParams(
            dimension_semantics=("arbitrary",)),
    )(flat, kp["wfc1"], kp["bfc1"], kp["wfc2p"], kp["bfc2p"])


# ---------------------------------------------------------------------------
# Model params (torch-equivalent layouts) + one-time kernel-layout preparation
# ---------------------------------------------------------------------------
def init_params(key):
    ks = jax.random.split(key, 8)
    s = 0.05
    return dict(
        w1=jax.random.normal(ks[0], (3, 3, 1, 32), jnp.float32) * s,    # HWIO
        b1=jax.random.normal(ks[1], (32,), jnp.float32) * s,
        w2=jax.random.normal(ks[2], (3, 3, 32, 64), jnp.float32) * s,   # HWIO
        b2=jax.random.normal(ks[3], (64,), jnp.float32) * s,
        wfc1=jax.random.normal(ks[4], (64 * 7 * 7, 128), jnp.float32) * s,
        bfc1=jax.random.normal(ks[5], (128,), jnp.float32) * s,
        wfc2=jax.random.normal(ks[6], (128, 47), jnp.float32) * s,
        bfc2=jax.random.normal(ks[7], (47,), jnp.float32) * s,
    )


def prepare_params(p):
    """One-time re-layout of the torch-style weights for the kernels (exact)."""
    w1m = p["w1"].reshape(9, 32).T                                  # (32, 9)  [co, dy*3+dx]
    w2t = jnp.transpose(p["w2"].reshape(9, 32, 64), (0, 2, 1))      # (9, 64, 32) [k, co, ci]
    wfc2p = jnp.zeros((128, 128), jnp.float32).at[:, :47].set(p["wfc2"])
    bfc2p = jnp.zeros((1, 128), jnp.float32).at[:, :47].set(p["bfc2"])
    return dict(
        w1m=w1m,
        b1m=p["b1"].reshape(32, 1),
        w2t=w2t,
        b2m=p["b2"].reshape(64, 1),
        wfc1=p["wfc1"],                       # torch flatten order == kernel order
        bfc1=p["bfc1"].reshape(1, 128),
        wfc2p=wfc2p,
        bfc2p=bfc2p,
        s1p=jnp.asarray(_pool1_scatter_matrix()),
        s2p=jnp.asarray(_pool2_select_matrix()),
    )


def cnn_forward(x_nchw, kp):
    # TODO(synk): the module's print() shape logging has no kernel equivalent; omitted.
    B = x_nchw.shape[0]
    x2 = x_nchw.reshape(B, 28, 28)
    # Zero-pad to a 31x30 grid and flatten spatially -> (B, 1, 930).
    xpf = jnp.pad(x2, ((0, 0), (1, 2), (1, 1))).reshape(B, 1, _XP1_W)

    feat = conv_tower(xpf, kp)                # (B, 64, 49): conv/pool tower in VMEM
    flat = feat.reshape(B, 64 * 7 * 7)        # free HBM reshape, torch NCHW order
    out = mlp_head(flat, kp)                  # (B, 128), lane-dense
    return out[:, :47]


def cnn_reference(x_nchw, p):
    """Pure-JAX reference of the same forward pass (for a sanity check)."""
    x = jnp.transpose(x_nchw, (0, 2, 3, 1))
    dn1 = jax.lax.conv_dimension_numbers(x.shape, p["w1"].shape,
                                         ("NHWC", "HWIO", "NHWC"))
    y = jax.lax.conv_general_dilated(x, p["w1"], (1, 1), "SAME",
                                     dimension_numbers=dn1)
    y = jnp.maximum(y + p["b1"], 0.0)
    y = jax.lax.reduce_window(y, -jnp.inf, jax.lax.max,
                              (1, 2, 2, 1), (1, 2, 2, 1), "VALID")
    dn2 = jax.lax.conv_dimension_numbers(y.shape, p["w2"].shape,
                                         ("NHWC", "HWIO", "NHWC"))
    y = jax.lax.conv_general_dilated(y, p["w2"], (1, 1), "SAME",
                                     dimension_numbers=dn2)
    y = jnp.maximum(y + p["b2"], 0.0)
    y = jax.lax.reduce_window(y, -jnp.inf, jax.lax.max,
                              (1, 2, 2, 1), (1, 2, 2, 1), "VALID")
    flat = jnp.transpose(y, (0, 3, 1, 2)).reshape(x.shape[0], -1)
    h = jnp.maximum(flat @ p["wfc1"] + p["bfc1"], 0.0)
    return h @ p["wfc2"] + p["bfc2"]


if __name__ == "__main__":
    key = jax.random.PRNGKey(0)
    kx, kpar = jax.random.split(key)
    # Spatial/channel dims are fixed by fc1 (64*7*7): input must be (B, 1, 28, 28).
    x = jax.random.normal(kx, (8, 1, 28, 28), jnp.float32)
    params = init_params(kpar)
    kparams = prepare_params(params)

    out = jax.jit(cnn_forward)(x, kparams)
    out = jax.block_until_ready(out)
    assert out.shape == (8, 47), out.shape

    ref = cnn_reference(x, params)
    max_err = float(jnp.max(jnp.abs(out - ref)))
    if max_err > 1e-2:
        raise AssertionError(f"mismatch vs reference: max abs err = {max_err}")

    print("KERNEL_OK")
</pallas_src>

<mosaic_0001>
module attributes {stable_mosaic.version = 11 : i64} {
  func.func @_conv_tower_kernel(%arg0: i32, %arg1: memref<1x1x930xf32, #tpu.memory_space<vmem>>, %arg2: memref<32x9xf32, #tpu.memory_space<vmem>>, %arg3: memref<32x1xf32, #tpu.memory_space<vmem>>, %arg4: memref<9x64x32xf32, #tpu.memory_space<vmem>>, %arg5: memref<64x1xf32, #tpu.memory_space<vmem>>, %arg6: memref<807x256xf32, #tpu.memory_space<vmem>>, %arg7: memref<205x49xf32, #tpu.memory_space<vmem>>, %arg8: memref<1x64x49xf32, #tpu.memory_space<vmem>>, %arg9: memref<32x840xf32, #tpu.memory_space<vmem>>, %arg10: memref<64x222xf32, #tpu.memory_space<vmem>>) attributes {dimension_semantics = [#tpu.dimension_semantics<parallel>], iteration_bounds = array<i64: 8>, scalar_prefetch = 0 : i64, scratch_operands = 2 : i64, tpu.core_type = #tpu.core_type<tc>, window_params = [{transform_indices = @transform_0, window_bounds = array<i64: 1, 1, 930>}, {pipeline_mode = #tpu.pipeline_mode<synchronous>, transform_indices = @transform_1, window_bounds = array<i64: 32, 9>}, {pipeline_mode = #tpu.pipeline_mode<synchronous>, transform_indices = @transform_2, window_bounds = array<i64: 32, 1>}, {pipeline_mode = #tpu.pipeline_mode<synchronous>, transform_indices = @transform_3, window_bounds = array<i64: 9, 64, 32>}, {pipeline_mode = #tpu.pipeline_mode<synchronous>, transform_indices = @transform_4, window_bounds = array<i64: 64, 1>}, {pipeline_mode = #tpu.pipeline_mode<synchronous>, transform_indices = @transform_5, window_bounds = array<i64: 807, 256>}, {pipeline_mode = #tpu.pipeline_mode<synchronous>, transform_indices = @transform_6, window_bounds = array<i64: 205, 49>}, {transform_indices = @transform_7, window_bounds = array<i64: 1, 64, 49>}]} {
    %c0 = arith.constant 0 : index
    %c0_0 = arith.constant 0 : index
    %c0_1 = arith.constant 0 : index
    %0 = vector.load %arg1[%c0, %c0_0, %c0_1] : memref<1x1x930xf32, #tpu.memory_space<vmem>>, vector<1x1x930xf32>
    %1 = vector.shape_cast %0 : vector<1x1x930xf32> to vector<1x930xf32>
    %c0_2 = arith.constant 0 : index
    %c0_3 = arith.constant 0 : index
    %2 = vector.load %arg2[%c0_2, %c0_3] : memref<32x9xf32, #tpu.memory_space<vmem>>, vector<32x1xf32>
    %3 = vector.extract_strided_slice %1 {offsets = [0, 0], sizes = [1, 840], strides = [1, 1]} : vector<1x930xf32> to vector<1x840xf32>
    %4 = vector.broadcast %2 : vector<32x1xf32> to vector<32x840xf32>
    %5 = vector.broadcast %3 : vector<1x840xf32> to vector<32x840xf32>
    %6 = arith.mulf %4, %5 : vector<32x840xf32>
    %c0_4 = arith.constant 0 : index
    %c1 = arith.constant 1 : index
    %7 = vector.load %arg2[%c0_4, %c1] : memref<32x9xf32, #tpu.memory_space<vmem>>, vector<32x1xf32>
    %8 = vector.extract_strided_slice %1 {offsets = [0, 1], sizes = [1, 840], strides = [1, 1]} : vector<1x930xf32> to vector<1x840xf32>
    %9 = vector.broadcast %7 : vector<32x1xf32> to vector<32x840xf32>
    %10 = vector.broadcast %8 : vector<1x840xf32> to vector<32x840xf32>
    %11 = arith.mulf %9, %10 : vector<32x840xf32>
    %12 = arith.addf %6, %11 : vector<32x840xf32>
    %c0_5 = arith.constant 0 : index
    %c2 = arith.constant 2 : index
    %13 = vector.load %arg2[%c0_5, %c2] : memref<32x9xf32, #tpu.memory_space<vmem>>, vector<32x1xf32>
    %14 = vector.extract_strided_slice %1 {offsets = [0, 2], sizes = [1, 840], strides = [1, 1]} : vector<1x930xf32> to vector<1x840xf32>
    %15 = vector.broadcast %13 : vector<32x1xf32> to vector<32x840xf32>
    %16 = vector.broadcast %14 : vector<1x840xf32> to vector<32x840xf32>
    %17 = arith.mulf %15, %16 : vector<32x840xf32>
    %18 = arith.addf %12, %17 : vector<32x840xf32>
    %c0_6 = arith.constant 0 : index
    %c3 = arith.constant 3 : index
    %19 = vector.load %arg2[%c0_6, %c3] : memref<32x9xf32, #tpu.memory_space<vmem>>, vector<32x1xf32>
    %20 = vector.extract_strided_slice %1 {offsets = [0, 30], sizes = [1, 840], strides = [1, 1]} : vector<1x930xf32> to vector<1x840xf32>
    %21 = vector.broadcast %19 : vector<32x1xf32> to vector<32x840xf32>
    %22 = vector.broadcast %20 : vector<1x840xf32> to vector<32x840xf32>
    %23 = arith.mulf %21, %22 : vector<32x840xf32>
    %24 = arith.addf %18, %23 : vector<32x840xf32>
    %c0_7 = arith.constant 0 : index
    %c4 = arith.constant 4 : index
    %25 = vector.load %arg2[%c0_7, %c4] : memref<32x9xf32, #tpu.memory_space<vmem>>, vector<32x1xf32>
    %26 = vector.extract_strided_slice %1 {offsets = [0, 31], sizes = [1, 840], strides = [1, 1]} : vector<1x930xf32> to vector<1x840xf32>
    %27 = vector.broadcast %25 : vector<32x1xf32> to vector<32x840xf32>
    %28 = vector.broadcast %26 : vector<1x840xf32> to vector<32x840xf32>
    %29 = arith.mulf %27, %28 : vector<32x840xf32>
    %30 = arith.addf %24, %29 : vector<32x840xf32>
    %c0_8 = arith.constant 0 : index
    %c5 = arith.constant 5 : index
    %31 = vector.load %arg2[%c0_8, %c5] : memref<32x9xf32, #tpu.memory_space<vmem>>, vector<32x1xf32>
    %32 = vector.extract_strided_slice %1 {offsets = [0, 32], sizes = [1, 840], strides = [1, 1]} : vector<1x930xf32> to vector<1x840xf32>
    %33 = vector.broadcast %31 : vector<32x1xf32> to vector<32x840xf32>
    %34 = vector.broadcast %32 : vector<1x840xf32> to vector<32x840xf32>
    %35 = arith.mulf %33, %34 : vector<32x840xf32>
    %36 = arith.addf %30, %35 : vector<32x840xf32>
    %c0_9 = arith.constant 0 : index
    %c6 = arith.constant 6 : index
    %37 = vector.load %arg2[%c0_9, %c6] : memref<32x9xf32, #tpu.memory_space<vmem>>, vector<32x1xf32>
    %38 = vector.extract_strided_slice %1 {offsets = [0, 60], sizes = [1, 840], strides = [1, 1]} : vector<1x930xf32> to vector<1x840xf32>
    %39 = vector.broadcast %37 : vector<32x1xf32> to vector<32x840xf32>
    %40 = vector.broadcast %38 : vector<1x840xf32> to vector<32x840xf32>
    %41 = arith.mulf %39, %40 : vector<32x840xf32>
    %42 = arith.addf %36, %41 : vector<32x840xf32>
    %c0_10 = arith.constant 0 : index
    %c7 = arith.constant 7 : index
    %43 = vector.load %arg2[%c0_10, %c7] : memref<32x9xf32, #tpu.memory_space<vmem>>, vector<32x1xf32>
    %44 = vector.extract_strided_slice %1 {offsets = [0, 61], sizes = [1, 840], strides = [1, 1]} : vector<1x930xf32> to vector<1x840xf32>
    %45 = vector.broadcast %43 : vector<32x1xf32> to vector<32x840xf32>
    %46 = vector.broadcast %44 : vector<1x840xf32> to vector<32x840xf32>
    %47 = arith.mulf %45, %46 : vector<32x840xf32>
    %48 = arith.addf %42, %47 : vector<32x840xf32>
    %c0_11 = arith.constant 0 : index
    %c8 = arith.constant 8 : index
    %49 = vector.load %arg2[%c0_11, %c8] : memref<32x9xf32, #tpu.memory_space<vmem>>, vector<32x1xf32>
    %50 = vector.extract_strided_slice %1 {offsets = [0, 62], sizes = [1, 840], strides = [1, 1]} : vector<1x930xf32> to vector<1x840xf32>
    %51 = vector.broadcast %49 : vector<32x1xf32> to vector<32x840xf32>
    %52 = vector.broadcast %50 : vector<1x840xf32> to vector<32x840xf32>
    %53 = arith.mulf %51, %52 : vector<32x840xf32>
    %54 = arith.addf %48, %53 : vector<32x840xf32>
    %c0_12 = arith.constant 0 : index
    %c0_13 = arith.constant 0 : index
    %55 = vector.load %arg3[%c0_12, %c0_13] : memref<32x1xf32, #tpu.memory_space<vmem>>, vector<32x1xf32>
    %56 = vector.broadcast %55 : vector<32x1xf32> to vector<32x840xf32>
    %57 = arith.addf %54, %56 : vector<32x840xf32>
    %cst = arith.constant 0.000000e+00 : f32
    %58 = vector.broadcast %cst : f32 to vector<32x840xf32>
    %59 = arith.maximumf %57, %58 : vector<32x840xf32>
    %c0_14 = arith.constant 0 : index
    %c0_15 = arith.constant 0 : index
    %60 = vector.load %arg9[%c0_14, %c0_15] : memref<32x840xf32, #tpu.memory_space<vmem>>, vector<32x840xf32>
    tpu.vector_store %arg9[%c0_14, %c0_15], %59 {strides = array<i32>} : memref<32x840xf32, #tpu.memory_space<vmem>>, vector<32x840xf32>,
    %c0_16 = arith.constant 0 : index
    %c0_17 = arith.constant 0 : index
    %61 = vector.load %arg9[%c0_16, %c0_17] : memref<32x840xf32, #tpu.memory_space<vmem>>, vector<32x807xf32>
    %c0_18 = arith.constant 0 : index
    %c1_19 = arith.constant 1 : index
    %62 = vector.load %arg9[%c0_18, %c1_19] : memref<32x840xf32, #tpu.memory_space<vmem>>, vector<32x807xf32>
    %63 = arith.maximumf %61, %62 : vector<32x807xf32>
    %c0_20 = arith.constant 0 : index
    %c30 = arith.constant 30 : index
    %64 = vector.load %arg9[%c0_20, %c30] : memref<32x840xf32, #tpu.memory_space<vmem>>, vector<32x807xf32>
    %c0_21 = arith.constant 0 : index
    %c31 = arith.constant 31 : index
    %65 = vector.load %arg9[%c0_21, %c31] : memref<32x840xf32, #tpu.memory_space<vmem>>, vector<32x807xf32>
    %66 = arith.maximumf %64, %65 : vector<32x807xf32>
    %67 = arith.maximumf %63, %66 : vector<32x807xf32>
    %c0_22 = arith.constant 0 : index
    %c0_23 = arith.constant 0 : index
    %68 = vector.load %arg6[%c0_22, %c0_23] : memref<807x256xf32, #tpu.memory_space<vmem>>, vector<807x256xf32>
    %cst_24 = arith.constant dense<0.000000e+00> : vector<32x256xf32>
    %69 = tpu.matmul %67, %68, %cst_24 {dimension_numbers = #tpu.dot_dimension_numbers<[1], [0], [0], [1], [0, 0, 1, 1], [], []>} : vector<32x807xf32>, vector<807x256xf32>, vector<32x256xf32> -> vector<32x256xf32>
    %c0_25 = arith.constant 0 : index
    %c0_26 = arith.constant 0 : index
    %c0_27 = arith.constant 0 : index
    %70 = vector.load %arg4[%c0_25, %c0_26, %c0_27] : memref<9x64x32xf32, #tpu.memory_space<vmem>>, vector<1x64x32xf32>
    %71 = vector.shape_cast %70 : vector<1x64x32xf32> to vector<64x32xf32>
    %72 = vector.extract_strided_slice %69 {offsets = [0, 0], sizes = [32, 222], strides = [1, 1]} : vector<32x256xf32> to vector<32x222xf32>
    %cst_28 = arith.constant dense<0.000000e+00> : vector<64x222xf32>
    %73 = tpu.matmul %71, %72, %cst_28 {dimension_numbers = #tpu.dot_dimension_numbers<[1], [0], [0], [1], [0, 0, 1, 1], [], []>} : vector<64x32xf32>, vector<32x222xf32>, vector<64x222xf32> -> vector<64x222xf32>
    %c1_29 = arith.constant 1 : index
    %c0_30 = arith.constant 0 : index
    %c0_31 = arith.constant 0 : index
    %74 = vector.load %arg4[%c1_29, %c0_30, %c0_31] : memref<9x64x32xf32, #tpu.memory_space<vmem>>, vector<1x64x32xf32>
    %75 = vector.shape_cast %74 : vector<1x64x32xf32> to vector<64x32xf32>
    %76 = vector.extract_strided_slice %69 {offsets = [0, 1], sizes = [32, 222], strides = [1, 1]} : vector<32x256xf32> to vector<32x222xf32>
    %cst_32 = arith.constant dense<0.000000e+00> : vector<64x222xf32>
    %77 = tpu.matmul %75, %76, %cst_32 {dimension_numbers = #tpu.dot_dimension_numbers<[1], [0], [0], [1], [0, 0, 1, 1], [], []>} : vector<64x32xf32>, vector<32x222xf32>, vector<64x222xf32> -> vector<64x222xf32>
    %78 = arith.addf %73, %77 : vector<64x222xf32>
    %c2_33 = arith.constant 2 : index
    %c0_34 = arith.constant 0 : index
    %c0_35 = arith.constant 0 : index
    %79 = vector.load %arg4[%c2_33, %c0_34, %c0_35] : memref<9x64x32xf32, #tpu.memory_space<vmem>>, vector<1x64x32xf32>
    %80 = vector.shape_cast %79 : vector<1x64x32xf32> to vector<64x32xf32>
    %81 = vector.extract_strided_slice %69 {offsets = [0, 2], sizes = [32, 222], strides = [1, 1]} : vector<32x256xf32> to vector<32x222xf32>
    %cst_36 = arith.constant dense<0.000000e+00> : vector<64x222xf32>
    %82 = tpu.matmul %80, %81, %cst_36 {dimension_numbers = #tpu.dot_dimension_numbers<[1], [0], [0], [1], [0, 0, 1, 1], [], []>} : vector<64x32xf32>, vector<32x222xf32>, vector<64x222xf32> -> vector<64x222xf32>
    %83 = arith.addf %78, %82 : vector<64x222xf32>
    %c3_37 = arith.constant 3 : index
    %c0_38 = arith.constant 0 : index
    %c0_39 = arith.constant 0 : index
    %84 = vector.load %arg4[%c3_37, %c0_38, %c0_39] : memref<9x64x32xf32, #tpu.memory_space<vmem>>, vector<1x64x32xf32>
    %85 = vector.shape_cast %84 : vector<1x64x32xf32> to vector<64x32xf32>
    %86 = vector.extract_strided_slice %69 {offsets = [0, 16], sizes = [32, 222], strides = [1, 1]} : vector<32x256xf32> to vector<32x222xf32>
    %cst_40 = arith.constant dense<0.000000e+00> : vector<64x222xf32>
    %87 = tpu.matmul %85, %86, %cst_40 {dimension_numbers = #tpu.dot_dimension_numbers<[1], [0], [0], [1], [0, 0, 1, 1], [], []>} : vector<64x32xf32>, vector<32x222xf32>, vector<64x222xf32> -> vector<64x222xf32>
    %88 = arith.addf %83, %87 : vector<64x222xf32>
    %c4_41 = arith.constant 4 : index
    %c0_42 = arith.constant 0 : index
    %c0_43 = arith.constant 0 : index
    %89 = vector.load %arg4[%c4_41, %c0_42, %c0_43] : memref<9x64x32xf32, #tpu.memory_space<vmem>>, vector<1x64x32xf32>
    %90 = vector.shape_cast %89 : vector<1x64x32xf32> to vector<64x32xf32>
    %91 = vector.extract_strided_slice %69 {offsets = [0, 17], sizes = [32, 222], strides = [1, 1]} : vector<32x256xf32> to vector<32x222xf32>
    %cst_44 = arith.constant dense<0.000000e+00> : vector<64x222xf32>
    %92 = tpu.matmul %90, %91, %cst_44 {dimension_numbers = #tpu.dot_dimension_numbers<[1], [0], [0], [1], [0, 0, 1, 1], [], []>} : vector<64x32xf32>, vector<32x222xf32>, vector<64x222xf32> -> vector<64x222xf32>
    %93 = arith.addf %88, %92 : vector<64x222xf32>
    %c5_45 = arith.constant 5 : index
    %c0_46 = arith.constant 0 : index
    %c0_47 = arith.constant 0 : index
    %94 = vector.load %arg4[%c5_45, %c0_46, %c0_47] : memref<9x64x32xf32, #tpu.memory_space<vmem>>, vector<1x64x32xf32>
    %95 = vector.shape_cast %94 : vector<1x64x32xf32> to vector<64x32xf32>
    %96 = vector.extract_strided_slice %69 {offsets = [0, 18], sizes = [32, 222], strides = [1, 1]} : vector<32x256xf32> to vector<32x222xf32>
    %cst_48 = arith.constant dense<0.000000e+00> : vector<64x222xf32>
    %97 = tpu.matmul %95, %96, %cst_48 {dimension_numbers = #tpu.dot_dimension_numbers<[1], [0], [0], [1], [0, 0, 1, 1], [], []>} : vector<64x32xf32>, vector<32x222xf32>, vector<64x222xf32> -> vector<64x222xf32>
    %98 = arith.addf %93, %97 : vector<64x222xf32>
    %c6_49 = arith.constant 6 : index
    %c0_50 = arith.constant 0 : index
    %c0_51 = arith.constant 0 : index
    %99 = vector.load %arg4[%c6_49, %c0_50, %c0_51] : memref<9x64x32xf32, #tpu.memory_space<vmem>>, vector<1x64x32xf32>
    %100 = vector.shape_cast %99 : vector<1x64x32xf32> to vector<64x32xf32>
    %101 = vector.extract_strided_slice %69 {offsets = [0, 32], sizes = [32, 222], strides = [1, 1]} : vector<32x256xf32> to vector<32x222xf32>
    %cst_52 = arith.constant dense<0.000000e+00> : vector<64x222xf32>
    %102 = tpu.matmul %100, %101, %cst_52 {dimension_numbers = #tpu.dot_dimension_numbers<[1], [0], [0], [1], [0, 0, 1, 1], [], []>} : vector<64x32xf32>, vector<32x222xf32>, vector<64x222xf32> -> vector<64x222xf32>
    %103 = arith.addf %98, %102 : vector<64x222xf32>
    %c7_53 = arith.constant 7 : index
    %c0_54 = arith.constant 0 : index
    %c0_55 = arith.constant 0 : index
    %104 = vector.load %arg4[%c7_53, %c0_54, %c0_55] : memref<9x64x32xf32, #tpu.memory_space<vmem>>, vector<1x64x32xf32>
    %105 = vector.shape_cast %104 : vector<1x64x32xf32> to vector<64x32xf32>
    %106 = vector.extract_strided_slice %69 {offsets = [0, 33], sizes = [32, 222], strides = [1, 1]} : vector<32x256xf32> to vector<32x222xf32>
    %cst_56 = arith.constant dense<0.000000e+00> : vector<64x222xf32>
    %107 = tpu.matmul %105, %106, %cst_56 {dimension_numbers = #tpu.dot_dimension_numbers<[1], [0], [0], [1], [0, 0, 1, 1], [], []>} : vector<64x32xf32>, vector<32x222xf32>, vector<64x222xf32> -> vector<64x222xf32>
    %108 = arith.addf %103, %107 : vector<64x222xf32>
    %c8_57 = arith.constant 8 : index
    %c0_58 = arith.constant 0 : index
    %c0_59 = arith.constant 0 : index
    %109 = vector.load %arg4[%c8_57, %c0_58, %c0_59] : memref<9x64x32xf32, #tpu.memory_space<vmem>>, vector<1x64x32xf32>
    %110 = vector.shape_cast %109 : vector<1x64x32xf32> to vector<64x32xf32>
    %111 = vector.extract_strided_slice %69 {offsets = [0, 34], sizes = [32, 222], strides = [1, 1]} : vector<32x256xf32> to vector<32x222xf32>
    %cst_60 = arith.constant dense<0.000000e+00> : vector<64x222xf32>
    %112 = tpu.matmul %110, %111, %cst_60 {dimension_numbers = #tpu.dot_dimension_numbers<[1], [0], [0], [1], [0, 0, 1, 1], [], []>} : vector<64x32xf32>, vector<32x222xf32>, vector<64x222xf32> -> vector<64x222xf32>
    %113 = arith.addf %108, %112 : vector<64x222xf32>
    %c0_61 = arith.constant 0 : index
    %c0_62 = arith.constant 0 : index
    %114 = vector.load %arg5[%c0_61, %c0_62] : memref<64x1xf32, #tpu.memory_space<vmem>>, vector<64x1xf32>
    %115 = vector.broadcast %114 : vector<64x1xf32> to vector<64x222xf32>
    %116 = arith.addf %113, %115 : vector<64x222xf32>
    %cst_63 = arith.constant 0.000000e+00 : f32
    %117 = vector.broadcast %cst_63 : f32 to vector<64x222xf32>
    %118 = arith.maximumf %116, %117 : vector<64x222xf32>
    %c0_64 = arith.constant 0 : index
    %c0_65 = arith.constant 0 : index
    %119 = vector.load %arg10[%c0_64, %c0_65] : memref<64x222xf32, #tpu.memory_space<vmem>>, vector<64x222xf32>
    tpu.vector_store %arg10[%c0_64, %c0_65], %118 {strides = array<i32>} : memref<64x222xf32, #tpu.memory_space<vmem>>, vector<64x222xf32>,
    %c0_66 = arith.constant 0 : index
    %c0_67 = arith.constant 0 : index
    %120 = vector.load %arg10[%c0_66, %c0_67] : memref<64x222xf32, #tpu.memory_space<vmem>>, vector<64x205xf32>
    %c0_68 = arith.constant 0 : index
    %c1_69 = arith.constant 1 : index
    %121 = vector.load %arg10[%c0_68, %c1_69] : memref<64x222xf32, #tpu.memory_space<vmem>>, vector<64x205xf32>
    %122 = arith.maximumf %120, %121 : vector<64x205xf32>
    %c0_70 = arith.constant 0 : index
    %c16 = arith.constant 16 : index
    %123 = vector.load %arg10[%c0_70, %c16] : memref<64x222xf32, #tpu.memory_space<vmem>>, vector<64x205xf32>
    %c0_71 = arith.constant 0 : index
    %c17 = arith.constant 17 : index
    %124 = vector.load %arg10[%c0_71, %c17] : memref<64x222xf32, #tpu.memory_space<vmem>>, vector<64x205xf32>
    %125 = arith.maximumf %123, %124 : vector<64x205xf32>
    %126 = arith.maximumf %122, %125 : vector<64x205xf32>
    %c0_72 = arith.constant 0 : index
    %c0_73 = arith.constant 0 : index
    %127 = vector.load %arg7[%c0_72, %c0_73] : memref<205x49xf32, #tpu.memory_space<vmem>>, vector<205x49xf32>
    %cst_74 = arith.constant dense<0.000000e+00> : vector<64x49xf32>
    %128 = tpu.matmul %126, %127, %cst_74 {dimension_numbers = #tpu.dot_dimension_numbers<[1], [0], [0], [1], [0, 0, 1, 1], [], []>} : vector<64x205xf32>, vector<205x49xf32>, vector<64x49xf32> -> vector<64x49xf32>
    %c0_75 = arith.constant 0 : index
    %c0_76 = arith.constant 0 : index
    %c0_77 = arith.constant 0 : index
    %129 = vector.load %arg8[%c0_75, %c0_76, %c0_77] : memref<1x64x49xf32, #tpu.memory_space<vmem>>, vector<1x64x49xf32>
    %130 = vector.shape_cast %129 : vector<1x64x49xf32> to vector<64x49xf32>
    %131 = vector.shape_cast %128 : vector<64x49xf32> to vector<1x64x49xf32>
    tpu.vector_store %arg8[%c0_75, %c0_76, %c0_77], %131 {strides = array<i32>} : memref<1x64x49xf32, #tpu.memory_space<vmem>>, vector<1x64x49xf32>,
    return
  }
  func.func @transform_0(%arg0: i32) -> (i32, i32, i32) {
    %c0_i32 = arith.constant 0 : i32
    %c0_i32_0 = arith.constant 0 : i32
    %c0_i32_1 = arith.constant 0 : i32
    return %arg0, %c0_i32, %c0_i32_0 : i32, i32, i32
  }
  func.func @transform_1(%arg0: i32) -> (i32, i32) {
    %c0_i32 = arith.constant 0 : i32
    %c0_i32_0 = arith.constant 0 : i32
    %c0_i32_1 = arith.constant 0 : i32
    return %c0_i32, %c0_i32_0 : i32, i32
  }
  func.func @transform_2(%arg0: i32) -> (i32, i32) {
    %c0_i32 = arith.constant 0 : i32
    %c0_i32_0 = arith.constant 0 : i32
    %c0_i32_1 = arith.constant 0 : i32
    return %c0_i32, %c0_i32_0 : i32, i32
  }
  func.func @transform_3(%arg0: i32) -> (i32, i32, i32) {
    %c0_i32 = arith.constant 0 : i32
    %c0_i32_0 = arith.constant 0 : i32
    %c0_i32_1 = arith.constant 0 : i32
    %c0_i32_2 = arith.constant 0 : i32
    return %c0_i32, %c0_i32_0, %c0_i32_1 : i32, i32, i32
  }
  func.func @transform_4(%arg0: i32) -> (i32, i32) {
    %c0_i32 = arith.constant 0 : i32
    %c0_i32_0 = arith.constant 0 : i32
    %c0_i32_1 = arith.constant 0 : i32
    return %c0_i32, %c0_i32_0 : i32, i32
  }
  func.func @transform_5(%arg0: i32) -> (i32, i32) {
    %c0_i32 = arith.constant 0 : i32
    %c0_i32_0 = arith.constant 0 : i32
    %c0_i32_1 = arith.constant 0 : i32
    return %c0_i32, %c0_i32_0 : i32, i32
  }
  func.func @transform_6(%arg0: i32) -> (i32, i32) {
    %c0_i32 = arith.constant 0 : i32
    %c0_i32_0 = arith.constant 0 : i32
    %c0_i32_1 = arith.constant 0 : i32
    return %c0_i32, %c0_i32_0 : i32, i32
  }
  func.func @transform_7(%arg0: i32) -> (i32, i32, i32) {
    %c0_i32 = arith.constant 0 : i32
    %c0_i32_0 = arith.constant 0 : i32
    %c0_i32_1 = arith.constant 0 : i32
    return %arg0, %c0_i32, %c0_i32_0 : i32, i32, i32
  }
}

module attributes {stable_mosaic.version = 11 : i64} {
  func.func @_mlp_kernel(%arg0: i32, %arg1: memref<8x3136xf32, #tpu.memory_space<vmem>>, %arg2: memref<3136x128xf32, #tpu.memory_space<vmem>>, %arg3: memref<1x128xf32, #tpu.memory_space<vmem>>, %arg4: memref<128x128xf32, #tpu.memory_space<vmem>>, %arg5: memref<1x128xf32, #tpu.memory_space<vmem>>, %arg6: memref<8x128xf32, #tpu.memory_space<vmem>>) attributes {dimension_semantics = [#tpu.dimension_semantics<arbitrary>], iteration_bounds = array<i64: 1>, scalar_prefetch = 0 : i64, scratch_operands = 0 : i64, tpu.core_type = #tpu.core_type<tc>, window_params = [{pipeline_mode = #tpu.pipeline_mode<synchronous>, transform_indices = @transform_0, window_bounds = array<i64: 8, 3136>}, {pipeline_mode = #tpu.pipeline_mode<synchronous>, transform_indices = @transform_1, window_bounds = array<i64: 3136, 128>}, {pipeline_mode = #tpu.pipeline_mode<synchronous>, transform_indices = @transform_2, window_bounds = array<i64: 1, 128>}, {pipeline_mode = #tpu.pipeline_mode<synchronous>, transform_indices = @transform_3, window_bounds = array<i64: 128, 128>}, {pipeline_mode = #tpu.pipeline_mode<synchronous>, transform_indices = @transform_4, window_bounds = array<i64: 1, 128>}, {pipeline_mode = #tpu.pipeline_mode<synchronous>, transform_indices = @transform_5, window_bounds = array<i64: 8, 128>}]} {
    %c0 = arith.constant 0 : index
    %c0_0 = arith.constant 0 : index
    %0 = vector.load %arg1[%c0, %c0_0] : memref<8x3136xf32, #tpu.memory_space<vmem>>, vector<8x3136xf32>
    %c0_1 = arith.constant 0 : index
    %c0_2 = arith.constant 0 : index
    %1 = vector.load %arg2[%c0_1, %c0_2] : memref<3136x128xf32, #tpu.memory_space<vmem>>, vector<3136x128xf32>
    %cst = arith.constant dense<0.000000e+00> : vector<8x128xf32>
    %2 = tpu.matmul %0, %1, %cst {dimension_numbers = #tpu.dot_dimension_numbers<[1], [0], [0], [1], [0, 0, 1, 1], [], []>} : vector<8x3136xf32>, vector<3136x128xf32>, vector<8x128xf32> -> vector<8x128xf32>
    %c0_3 = arith.constant 0 : index
    %c0_4 = arith.constant 0 : index
    %3 = vector.load %arg3[%c0_3, %c0_4] : memref<1x128xf32, #tpu.memory_space<vmem>>, vector<1x128xf32>
    %4 = vector.broadcast %3 : vector<1x128xf32> to vector<8x128xf32>
    %5 = arith.addf %2, %4 : vector<8x128xf32>
    %cst_5 = arith.constant 0.000000e+00 : f32
    %6 = vector.broadcast %cst_5 : f32 to vector<8x128xf32>
    %7 = arith.maximumf %5, %6 : vector<8x128xf32>
    %c0_6 = arith.constant 0 : index
    %c0_7 = arith.constant 0 : index
    %8 = vector.load %arg4[%c0_6, %c0_7] : memref<128x128xf32, #tpu.memory_space<vmem>>, vector<128x128xf32>
    %cst_8 = arith.constant dense<0.000000e+00> : vector<8x128xf32>
    %9 = tpu.matmul %7, %8, %cst_8 {dimension_numbers = #tpu.dot_dimension_numbers<[1], [0], [0], [1], [0, 0, 1, 1], [], []>} : vector<8x128xf32>, vector<128x128xf32>, vector<8x128xf32> -> vector<8x128xf32>
    %c0_9 = arith.constant 0 : index
    %c0_10 = arith.constant 0 : index
    %10 = vector.load %arg5[%c0_9, %c0_10] : memref<1x128xf32, #tpu.memory_space<vmem>>, vector<1x128xf32>
    %11 = vector.broadcast %10 : vector<1x128xf32> to vector<8x128xf32>
    %12 = arith.addf %9, %11 : vector<8x128xf32>
    %c0_11 = arith.constant 0 : index
    %c0_12 = arith.constant 0 : index
    %13 = vector.load %arg6[%c0_11, %c0_12] : memref<8x128xf32, #tpu.memory_space<vmem>>, vector<8x128xf32>
    tpu.vector_store %arg6[%c0_11, %c0_12], %12 {strides = array<i32>} : memref<8x128xf32, #tpu.memory_space<vmem>>, vector<8x128xf32>,
    return
  }
  func.func @transform_0(%arg0: i32) -> (i32, i32) {
    %c0_i32 = arith.constant 0 : i32
    %c0_i32_0 = arith.constant 0 : i32
    %c0_i32_1 = arith.constant 0 : i32
    return %c0_i32, %c0_i32_0 : i32, i32
  }
  func.func @transform_1(%arg0: i32) -> (i32, i32) {
    %c0_i32 = arith.constant 0 : i32
    %c0_i32_0 = arith.constant 0 : i32
    %c0_i32_1 = arith.constant 0 : i32
    return %c0_i32, %c0_i32_0 : i32, i32
  }
  func.func @transform_2(%arg0: i32) -> (i32, i32) {
    %c0_i32 = arith.constant 0 : i32
    %c0_i32_0 = arith.constant 0 : i32
    %c0_i32_1 = arith.constant 0 : i32
    return %c0_i32, %c0_i32_0 : i32, i32
  }
  func.func @transform_3(%arg0: i32) -> (i32, i32) {
    %c0_i32 = arith.constant 0 : i32
    %c0_i32_0 = arith.constant 0 : i32
    %c0_i32_1 = arith.constant 0 : i32
    return %c0_i32, %c0_i32_0 : i32, i32
  }
  func.func @transform_4(%arg0: i32) -> (i32, i32) {
    %c0_i32 = arith.constant 0 : i32
    %c0_i32_0 = arith.constant 0 : i32
    %c0_i32_1 = arith.constant 0 : i32
    return %c0_i32, %c0_i32_0 : i32, i32
  }
  func.func @transform_5(%arg0: i32) -> (i32, i32) {
    %c0_i32 = arith.constant 0 : i32
    %c0_i32_0 = arith.constant 0 : i32
    %c0_i32_1 = arith.constant 0 : i32
    return %c0_i32, %c0_i32_0 : i32, i32
  }
}

</mosaic_0001>

<llo_original>
// kernel: cnn_forward.3
$region0: #{cnn_forward.3}
  #allocation0 [shape = 'u32[]', space=smem, size = 0x4, offset = 0x4, fixed_abs, tag = 'smem constant byte address 0x4 - core index']
  #allocation1 [shape = 'u32[144,128]{1,0:T(1,128)}', space=vmem, size = 0x12000, scoped, tag = 'internal scratch']
  %s0 = inlined_call_operand.vmem [shape: f32[8,3136], index: 0, kind: input, shape index: {}]
  %s1 = inlined_call_operand.vmem [shape: f32[3136,128], index: 1, kind: input, shape index: {}]
  %s2 = inlined_call_operand.vmem [shape: f32[1,128], index: 2, kind: input, shape index: {}]
  %s3 = inlined_call_operand.vmem [shape: f32[128,128], index: 3, kind: input, shape index: {}]
  %s4 = inlined_call_operand.vmem [shape: f32[1,128], index: 4, kind: input, shape index: {}]
  %s5 = inlined_call_operand.hbm [shape: f32[8,128], index: 5, kind: output, shape index: {}]
  %s6 = sld [smem:[#allocation0]]
  $region30: #{cnn_forward.3} parent=0
    _
  %s8 = ssub.s32 1, %s6
  %s9 = scalar_select 0, %s8, %s6
  $region1: #{cnn_forward.3} parent=0
    #allocation2 [shape = 'u8[4096]{0}', space=vmem, size = 0x1000, scoped, tag = 'output window, operand 0, single buffered']
    #allocation3 [shape = 's32[1]{0}', space=sflag, size = 0x4, scoped, tag = 'scoped memory for cnn_forward.3']
    %10 = vsyncpa [#allocation3], 0
    // Predicated region
    $region2: #{cnn_forward.3} parent=1 // pred_check
      _
    $region3: #{cnn_forward.3} parent=1 // pred_check_branch
      %12 = sbr.rel (0) target = $region5
    $region4: #{cnn_forward.3} parent=1 // pred_region
      _
    $region5: #{cnn_forward.3} parent=1 // pred_fallthru
      _
    // Predicated region
    $region6: #{cnn_forward.3} parent=1 // pred_check
      _
    $region7: #{cnn_forward.3} parent=1 // pred_check_branch
      %14 = sbr.rel (0) target = $region9
    $region8: #{cnn_forward.3} parent=1 // pred_region
      _
    $region9: #{cnn_forward.3} parent=1 // pred_fallthru
      _
    // Predicated region
    $region10: #{cnn_forward.3} parent=1 // pred_check
      _
    $region11: #{cnn_forward.3} parent=1 // pred_check_branch
      %16 = sbr.rel (0) target = $region13
    $region12: #{cnn_forward.3} parent=1 // pred_region
      _
    $region13: #{cnn_forward.3} parent=1 // pred_fallthru
      _
    // Predicated region
    $region14: #{cnn_forward.3} parent=1 // pred_check
      _
    $region15: #{cnn_forward.3} parent=1 // pred_check_branch
      %18 = sbr.rel (0) target = $region17
    $region16: #{cnn_forward.3} parent=1 // pred_region
      _
    $region17: #{cnn_forward.3} parent=1 // pred_fallthru
      _
    // Predicated region
    $region18: #{cnn_forward.3} parent=1 // pred_check
      _
    $region19: #{cnn_forward.3} parent=1 // pred_check_branch
      %20 = sbr.rel (0) target = $region21
    $region20: #{cnn_forward.3} parent=1 // pred_region
      _
    $region21: #{cnn_forward.3} parent=1 // pred_fallthru
      _
    %v21 = vld [vmem:[%s0] sm:$0xff]
    %v22 = vld [vmem:[%s0 + $0x8] sm:$0xff]
    %v23 = vld [vmem:[%s0 + $0x10] sm:$0xff]
    %v24 = vld [vmem:[%s0 + $0x18] sm:$0xff]
    %v25 = vld [vmem:[%s0 + $0x20] sm:$0xff]
    %v26 = vld [vmem:[%s0 + $0x28] sm:$0xff]
    %v27 = vld [vmem:[%s0 + $0x30] sm:$0xff]
    %v28 = vld [vmem:[%s0 + $0x38] sm:$0xff]
    %v29 = vld [vmem:[%s0 + $0x40] sm:$0xff]
    %v30 = vld [vmem:[%s0 + $0x48] sm:$0xff]
    %v31 = vld [vmem:[%s0 + $0x50] sm:$0xff]
    %v32 = vld [vmem:[%s0 + $0x58] sm:$0xff]
    %v33 = vld [vmem:[%s0 + $0x60] sm:$0xff]
    %v34 = vld [vmem:[%s0 + $0x68] sm:$0xff]
    %v35 = vld [vmem:[%s0 + $0x70] sm:$0xff]
    %v36 = vld [vmem:[%s0 + $0x78] sm:$0xff]
    %v37 = vld [vmem:[%s0 + $0x80] sm:$0xff]
    %v38 = vld [vmem:[%s0 + $0x88] sm:$0xff]
    %v39 = vld [vmem:[%s0 + $0x90] sm:$0xff]
    %v40 = vld [vmem:[%s0 + $0x98] sm:$0xff]
    %v41 = vld [vmem:[%s0 + $0xa0] sm:$0xff]
    %v42 = vld [vmem:[%s0 + $0xa8] sm:$0xff]
    %v43 = vld [vmem:[%s0 + $0xb0] sm:$0xff]
    %v44 = vld [vmem:[%s0 + $0xb8] sm:$0xff]
    %v45 = vld [vmem:[%s0 + $0xc0] sm:$0xff]
    %v46 = vld [vmem:[%s1] sm:$0xff]
    %v47 = vld [vmem:[%s1 + $0x8] sm:$0xff]
    %v48 = vld [vmem:[%s1 + $0x10] sm:$0xff]
    %v49 = vld [vmem:[%s1 + $0x18] sm:$0xff]
    %v50 = vld [vmem:[%s1 + $0x20] sm:$0xff]
    %v51 = vld [vmem:[%s1 + $0x28] sm:$0xff]
    %v52 = vld [vmem:[%s1 + $0x30] sm:$0xff]
    %v53 = vld [vmem:[%s1 + $0x38] sm:$0xff]
    %v54 = vld [vmem:[%s1 + $0x40] sm:$0xff]
    %v55 = vld [vmem:[%s1 + $0x48] sm:$0xff]
    %v56 = vld [vmem:[%s1 + $0x50] sm:$0xff]
    %v57 = vld [vmem:[%s1 + $0x58] sm:$0xff]
    %v58 = vld [vmem:[%s1 + $0x60] sm:$0xff]
    %v59 = vld [vmem:[%s1 + $0x68] sm:$0xff]
    %v60 = vld [vmem:[%s1 + $0x70] sm:$0xff]
    %v61 = vld [vmem:[%s1 + $0x78] sm:$0xff]
    %v62 = vld [vmem:[%s1 + $0x80] sm:$0xff]
    %v63 = vld [vmem:[%s1 + $0x88] sm:$0xff]
    %v64 = vld [vmem:[%s1 + $0x90] sm:$0xff]
    %v65 = vld [vmem:[%s1 + $0x98] sm:$0xff]
    %v66 = vld [vmem:[%s1 + $0xa0] sm:$0xff]
    %v67 = vld [vmem:[%s1 + $0xa8] sm:$0xff]
    %v68 = vld [vmem:[%s1 + $0xb0] sm:$0xff]
    %v69 = vld [vmem:[%s1 + $0xb8] sm:$0xff]
    %v70 = vld [vmem:[%s1 + $0xc0] sm:$0xff]
    %v71 = vld [vmem:[%s1 + $0xc8] sm:$0xff]
    %v72 = vld [vmem:[%s1 + $0xd0] sm:$0xff]
    %v73 = vld [vmem:[%s1 + $0xd8] sm:$0xff]
    %v74 = vld [vmem:[%s1 + $0xe0] sm:$0xff]
    %v75 = vld [vmem:[%s1 + $0xe8] sm:$0xff]
    %v76 = vld [vmem:[%s1 + $0xf0] sm:$0xff]
    %v77 = vld [vmem:[%s1 + $0xf8] sm:$0xff]
    %v78 = vld [vmem:[%s1 + $0x100] sm:$0xff]
    %v79 = vld [vmem:[%s1 + $0x108] sm:$0xff]
    %v80 = vld [vmem:[%s1 + $0x110] sm:$0xff]
    %v81 = vld [vmem:[%s1 + $0x118] sm:$0xff]
    %v82 = vld [vmem:[%s1 + $0x120] sm:$0xff]
    %v83 = vld [vmem:[%s1 + $0x128] sm:$0xff]
    %v84 = vld [vmem:[%s1 + $0x130] sm:$0xff]
    %v85 = vld [vmem:[%s1 + $0x138] sm:$0xff]
    %v86 = vld [vmem:[%s1 + $0x140] sm:$0xff]
    %v87 = vld [vmem:[%s1 + $0x148] sm:$0xff]
    %v88 = vld [vmem:[%s1 + $0x150] sm:$0xff]
    %v89 = vld [vmem:[%s1 + $0x158] sm:$0xff]
    %v90 = vld [vmem:[%s1 + $0x160] sm:$0xff]
    %v91 = vld [vmem:[%s1 + $0x168] sm:$0xff]
    %v92 = vld [vmem:[%s1 + $0x170] sm:$0xff]
    %v93 = vld [vmem:[%s1 + $0x178] sm:$0xff]
    %v94 = vld [vmem:[%s1 + $0x180] sm:$0xff]
    %v95 = vld [vmem:[%s1 + $0x188] sm:$0xff]
    %v96 = vld [vmem:[%s1 + $0x190] sm:$0xff]
    %v97 = vld [vmem:[%s1 + $0x198] sm:$0xff]
    %v98 = vld [vmem:[%s1 + $0x1a0] sm:$0xff]
    %v99 = vld [vmem:[%s1 + $0x1a8] sm:$0xff]
    %v100 = vld [vmem:[%s1 + $0x1b0] sm:$0xff]
    %v101 = vld [vmem:[%s1 + $0x1b8] sm:$0xff]
    %v102 = vld [vmem:[%s1 + $0x1c0] sm:$0xff]
    %v103 = vld [vmem:[%s1 + $0x1c8] sm:$0xff]
    %v104 = vld [vmem:[%s1 + $0x1d0] sm:$0xff]
    %v105 = vld [vmem:[%s1 + $0x1d8] sm:$0xff]
    %v106 = vld [vmem:[%s1 + $0x1e0] sm:$0xff]
    %v107 = vld [vmem:[%s1 + $0x1e8] sm:$0xff]
    %v108 = vld [vmem:[%s1 + $0x1f0] sm:$0xff]
    %v109 = vld [vmem:[%s1 + $0x1f8] sm:$0xff]
    %v110 = vld [vmem:[%s1 + $0x200] sm:$0xff]
    %v111 = vld [vmem:[%s1 + $0x208] sm:$0xff]
    %v112 = vld [vmem:[%s1 + $0x210] sm:$0xff]
    %v113 = vld [vmem:[%s1 + $0x218] sm:$0xff]
    %v114 = vld [vmem:[%s1 + $0x220] sm:$0xff]
    %v115 = vld [vmem:[%s1 + $0x228] sm:$0xff]
    %v116 = vld [vmem:[%s1 + $0x230] sm:$0xff]
    %v117 = vld [vmem:[%s1 + $0x238] sm:$0xff]
    %v118 = vld [vmem:[%s1 + $0x240] sm:$0xff]
    %v119 = vld [vmem:[%s1 + $0x248] sm:$0xff]
    %v120 = vld [vmem:[%s1 + $0x250] sm:$0xff]
    %v121 = vld [vmem:[%s1 + $0x258] sm:$0xff]
    %v122 = vld [vmem:[%s1 + $0x260] sm:$0xff]
    %v123 = vld [vmem:[%s1 + $0x268] sm:$0xff]
    %v124 = vld [vmem:[%s1 + $0x270] sm:$0xff]
    %v125 = vld [vmem:[%s1 + $0x278] sm:$0xff]
    %v126 = vld [vmem:[%s1 + $0x280] sm:$0xff]
    %v127 = vld [vmem:[%s1 + $0x288] sm:$0xff]
    %v128 = vld [vmem:[%s1 + $0x290] sm:$0xff]
    %v129 = vld [vmem:[%s1 + $0x298] sm:$0xff]
    %v130 = vld [vmem:[%s1 + $0x2a0] sm:$0xff]
    %v131 = vld [vmem:[%s1 + $0x2a8] sm:$0xff]
    %v132 = vld [vmem:[%s1 + $0x2b0] sm:$0xff]
    %v133 = vld [vmem:[%s1 + $0x2b8] sm:$0xff]
    %v134 = vld [vmem:[%s1 + $0x2c0] sm:$0xff]
    %v135 = vld [vmem:[%s1 + $0x2c8] sm:$0xff]
    %v136 = vld [vmem:[%s1 + $0x2d0] sm:$0xff]
    %v137 = vld [vmem:[%s1 + $0x2d8] sm:$0xff]
    %v138 = vld [vmem:[%s1 + $0x2e0] sm:$0xff]
    %v139 = vld [vmem:[%s1 + $0x2e8] sm:$0xff]
    %v140 = vld [vmem:[%s1 + $0x2f0] sm:$0xff]
    %v141 = vld [vmem:[%s1 + $0x2f8] sm:$0xff]
    %v142 = vld [vmem:[%s1 + $0x300] sm:$0xff]
    %v143 = vld [vmem:[%s1 + $0x308] sm:$0xff]
    %v144 = vld [vmem:[%s1 + $0x310] sm:$0xff]
    %v145 = vld [vmem:[%s1 + $0x318] sm:$0xff]
    %v146 = vld [vmem:[%s1 + $0x320] sm:$0xff]
    %v147 = vld [vmem:[%s1 + $0x328] sm:$0xff]
    %v148 = vld [vmem:[%s1 + $0x330] sm:$0xff]
    %v149 = vld [vmem:[%s1 + $0x338] sm:$0xff]
    %v150 = vld [vmem:[%s1 + $0x340] sm:$0xff]
    %v151 = vld [vmem:[%s1 + $0x348] sm:$0xff]
    %v152 = vld [vmem:[%s1 + $0x350] sm:$0xff]
    %v153 = vld [vmem:[%s1 + $0x358] sm:$0xff]
    %v154 = vld [vmem:[%s1 + $0x360] sm:$0xff]
    %v155 = vld [vmem:[%s1 + $0x368] sm:$0xff]
    %v156 = vld [vmem:[%s1 + $0x370] sm:$0xff]
    %v157 = vld [vmem:[%s1 + $0x378] sm:$0xff]
    %v158 = vld [vmem:[%s1 + $0x380] sm:$0xff]
    %v159 = vld [vmem:[%s1 + $0x388] sm:$0xff]
    %v160 = vld [vmem:[%s1 + $0x390] sm:$0xff]
    %v161 = vld [vmem:[%s1 + $0x398] sm:$0xff]
    %v162 = vld [vmem:[%s1 + $0x3a0] sm:$0xff]
    %v163 = vld [vmem:[%s1 + $0x3a8] sm:$0xff]
    %v164 = vld [vmem:[%s1 + $0x3b0] sm:$0xff]
    %v165 = vld [vmem:[%s1 + $0x3b8] sm:$0xff]
    %v166 = vld [vmem:[%s1 + $0x3c0] sm:$0xff]
    %v167 = vld [vmem:[%s1 + $0x3c8] sm:$0xff]
    %v168 = vld [vmem:[%s1 + $0x3d0] sm:$0xff]
    %v169 = vld [vmem:[%s1 + $0x3d8] sm:$0xff]
    %v170 = vld [vmem:[%s1 + $0x3e0] sm:$0xff]
    %v171 = vld [vmem:[%s1 + $0x3e8] sm:$0xff]
    %v172 = vld [vmem:[%s1 + $0x3f0] sm:$0xff]
    %v173 = vld [vmem:[%s1 + $0x3f8] sm:$0xff]
    %v174 = vld [vmem:[%s1 + $0x400] sm:$0xff]
    %v175 = vld [vmem:[%s1 + $0x408] sm:$0xff]
    %v176 = vld [vmem:[%s1 + $0x410] sm:$0xff]
    %v177 = vld [vmem:[%s1 + $0x418] sm:$0xff]
    %v178 = vld [vmem:[%s1 + $0x420] sm:$0xff]
    %v179 = vld [vmem:[%s1 + $0x428] sm:$0xff]
    %v180 = vld [vmem:[%s1 + $0x430] sm:$0xff]
    %v181 = vld [vmem:[%s1 + $0x438] sm:$0xff]
    %v182 = vld [vmem:[%s1 + $0x440] sm:$0xff]
    %v183 = vld [vmem:[%s1 + $0x448] sm:$0xff]
    %v184 = vld [vmem:[%s1 + $0x450] sm:$0xff]
    %v185 = vld [vmem:[%s1 + $0x458] sm:$0xff]
    %v186 = vld [vmem:[%s1 + $0x460] sm:$0xff]
    %v187 = vld [vmem:[%s1 + $0x468] sm:$0xff]
    %v188 = vld [vmem:[%s1 + $0x470] sm:$0xff]
    %v189 = vld [vmem:[%s1 + $0x478] sm:$0xff]
    %v190 = vld [vmem:[%s1 + $0x480] sm:$0xff]
    %v191 = vld [vmem:[%s1 + $0x488] sm:$0xff]
    %v192 = vld [vmem:[%s1 + $0x490] sm:$0xff]
    %v193 = vld [vmem:[%s1 + $0x498] sm:$0xff]
    %v194 = vld [vmem:[%s1 + $0x4a0] sm:$0xff]
    %v195 = vld [vmem:[%s1 + $0x4a8] sm:$0xff]
    %v196 = vld [vmem:[%s1 + $0x4b0] sm:$0xff]
    %v197 = vld [vmem:[%s1 + $0x4b8] sm:$0xff]
    %v198 = vld [vmem:[%s1 + $0x4c0] sm:$0xff]
    %v199 = vld [vmem:[%s1 + $0x4c8] sm:$0xff]
    %v200 = vld [vmem:[%s1 + $0x4d0] sm:$0xff]
    %v201 = vld [vmem:[%s1 + $0x4d8] sm:$0xff]
    %v202 = vld [vmem:[%s1 + $0x4e0] sm:$0xff]
    %v203 = vld [vmem:[%s1 + $0x4e8] sm:$0xff]
    %v204 = vld [vmem:[%s1 + $0x4f0] sm:$0xff]
    %v205 = vld [vmem:[%s1 + $0x4f8] sm:$0xff]
    %v206 = vld [vmem:[%s1 + $0x500] sm:$0xff]
    %v207 = vld [vmem:[%s1 + $0x508] sm:$0xff]
    %v208 = vld [vmem:[%s1 + $0x510] sm:$0xff]
    %v209 = vld [vmem:[%s1 + $0x518] sm:$0xff]
    %v210 = vld [vmem:[%s1 + $0x520] sm:$0xff]
    %v211 = vld [vmem:[%s1 + $0x528] sm:$0xff]
    %v212 = vld [vmem:[%s1 + $0x530] sm:$0xff]
    %v213 = vld [vmem:[%s1 + $0x538] sm:$0xff]
    %v214 = vld [vmem:[%s1 + $0x540] sm:$0xff]
    %v215 = vld [vmem:[%s1 + $0x548] sm:$0xff]
    %v216 = vld [vmem:[%s1 + $0x550] sm:$0xff]
    %v217 = vld [vmem:[%s1 + $0x558] sm:$0xff]
    %v218 = vld [vmem:[%s1 + $0x560] sm:$0xff]
    %v219 = vld [vmem:[%s1 + $0x568] sm:$0xff]
    %v220 = vld [vmem:[%s1 + $0x570] sm:$0xff]
    %v221 = vld [vmem:[%s1 + $0x578] sm:$0xff]
    %v222 = vld [vmem:[%s1 + $0x580] sm:$0xff]
    %v223 = vld [vmem:[%s1 + $0x588] sm:$0xff]
    %v224 = vld [vmem:[%s1 + $0x590] sm:$0xff]
    %v225 = vld [vmem:[%s1 + $0x598] sm:$0xff]
    %v226 = vld [vmem:[%s1 + $0x5a0] sm:$0xff]
    %v227 = vld [vmem:[%s1 + $0x5a8] sm:$0xff]
    %v228 = vld [vmem:[%s1 + $0x5b0] sm:$0xff]
    %v229 = vld [vmem:[%s1 + $0x5b8] sm:$0xff]
    %v230 = vld [vmem:[%s1 + $0x5c0] sm:$0xff]
    %v231 = vld [vmem:[%s1 + $0x5c8] sm:$0xff]
    %v232 = vld [vmem:[%s1 + $0x5d0] sm:$0xff]
    %v233 = vld [vmem:[%s1 + $0x5d8] sm:$0xff]
    %v234 = vld [vmem:[%s1 + $0x5e0] sm:$0xff]
    %v235 = vld [vmem:[%s1 + $0x5e8] sm:$0xff]
    %v236 = vld [vmem:[%s1 + $0x5f0] sm:$0xff]
    %v237 = vld [vmem:[%s1 + $0x5f8] sm:$0xff]
    %v238 = vld [vmem:[%s1 + $0x600] sm:$0xff]
    %v239 = vld [vmem:[%s1 + $0x608] sm:$0xff]
    %v240 = vld [vmem:[%s1 + $0x610] sm:$0xff]
    %v241 = vld [vmem:[%s1 + $0x618] sm:$0xff]
    %v242 = vld [vmem:[%s1 + $0x620] sm:$0xff]
    %v243 = vld [vmem:[%s1 + $0x628] sm:$0xff]
    %v244 = vld [vmem:[%s1 + $0x630] sm:$0xff]
    %v245 = vld [vmem:[%s1 + $0x638] sm:$0xff]
    %v246 = vld [vmem:[%s1 + $0x640] sm:$0xff]
    %v247 = vld [vmem:[%s1 + $0x648] sm:$0xff]
    %v248 = vld [vmem:[%s1 + $0x650] sm:$0xff]
    %v249 = vld [vmem:[%s1 + $0x658] sm:$0xff]
    %v250 = vld [vmem:[%s1 + $0x660] sm:$0xff]
    %v251 = vld [vmem:[%s1 + $0x668] sm:$0xff]
    %v252 = vld [vmem:[%s1 + $0x670] sm:$0xff]
    %v253 = vld [vmem:[%s1 + $0x678] sm:$0xff]
    %v254 = vld [vmem:[%s1 + $0x680] sm:$0xff]
    %v255 = vld [vmem:[%s1 + $0x688] sm:$0xff]
    %v256 = vld [vmem:[%s1 + $0x690] sm:$0xff]
    %v257 = vld [vmem:[%s1 + $0x698] sm:$0xff]
    %v258 = vld [vmem:[%s1 + $0x6a0] sm:$0xff]
    %v259 = vld [vmem:[%s1 + $0x6a8] sm:$0xff]
    %v260 = vld [vmem:[%s1 + $0x6b0] sm:$0xff]
    %v261 = vld [vmem:[%s1 + $0x6b8] sm:$0xff]
    %v262 = vld [vmem:[%s1 + $0x6c0] sm:$0xff]
    %v263 = vld [vmem:[%s1 + $0x6c8] sm:$0xff]
    %v264 = vld [vmem:[%s1 + $0x6d0] sm:$0xff]
    %v265 = vld [vmem:[%s1 + $0x6d8] sm:$0xff]
    %v266 = vld [vmem:[%s1 + $0x6e0] sm:$0xff]
    %v267 = vld [vmem:[%s1 + $0x6e8] sm:$0xff]
    %v268 = vld [vmem:[%s1 + $0x6f0] sm:$0xff]
    %v269 = vld [vmem:[%s1 + $0x6f8] sm:$0xff]
    %v270 = vld [vmem:[%s1 + $0x700] sm:$0xff]
    %v271 = vld [vmem:[%s1 + $0x708] sm:$0xff]
    %v272 = vld [vmem:[%s1 + $0x710] sm:$0xff]
    %v273 = vld [vmem:[%s1 + $0x718] sm:$0xff]
    %v274 = vld [vmem:[%s1 + $0x720] sm:$0xff]
    %v275 = vld [vmem:[%s1 + $0x728] sm:$0xff]
    %v276 = vld [vmem:[%s1 + $0x730] sm:$0xff]
    %v277 = vld [vmem:[%s1 + $0x738] sm:$0xff]
    %v278 = vld [vmem:[%s1 + $0x740] sm:$0xff]
    %v279 = vld [vmem:[%s1 + $0x748] sm:$0xff]
    %v280 = vld [vmem:[%s1 + $0x750] sm:$0xff]
    %v281 = vld [vmem:[%s1 + $0x758] sm:$0xff]
    %v282 = vld [vmem:[%s1 + $0x760] sm:$0xff]
    %v283 = vld [vmem:[%s1 + $0x768] sm:$0xff]
    %v284 = vld [vmem:[%s1 + $0x770] sm:$0xff]
    %v285 = vld [vmem:[%s1 + $0x778] sm:$0xff]
    %v286 = vld [vmem:[%s1 + $0x780] sm:$0xff]
    %v287 = vld [vmem:[%s1 + $0x788] sm:$0xff]
    %v288 = vld [vmem:[%s1 + $0x790] sm:$0xff]
    %v289 = vld [vmem:[%s1 + $0x798] sm:$0xff]
    %v290 = vld [vmem:[%s1 + $0x7a0] sm:$0xff]
    %v291 = vld [vmem:[%s1 + $0x7a8] sm:$0xff]
    %v292 = vld [vmem:[%s1 + $0x7b0] sm:$0xff]
    %v293 = vld [vmem:[%s1 + $0x7b8] sm:$0xff]
    %v294 = vld [vmem:[%s1 + $0x7c0] sm:$0xff]
    %v295 = vld [vmem:[%s1 + $0x7c8] sm:$0xff]
    %v296 = vld [vmem:[%s1 + $0x7d0] sm:$0xff]
    %v297 = vld [vmem:[%s1 + $0x7d8] sm:$0xff]
    %v298 = vld [vmem:[%s1 + $0x7e0] sm:$0xff]
    %v299 = vld [vmem:[%s1 + $0x7e8] sm:$0xff]
    %v300 = vld [vmem:[%s1 + $0x7f0] sm:$0xff]
    %v301 = vld [vmem:[%s1 + $0x7f8] sm:$0xff]
    %v302 = vld [vmem:[%s1 + $0x800] sm:$0xff]
    %v303 = vld [vmem:[%s1 + $0x808] sm:$0xff]
    %v304 = vld [vmem:[%s1 + $0x810] sm:$0xff]
    %v305 = vld [vmem:[%s1 + $0x818] sm:$0xff]
    %v306 = vld [vmem:[%s1 + $0x820] sm:$0xff]
    %v307 = vld [vmem:[%s1 + $0x828] sm:$0xff]
    %v308 = vld [vmem:[%s1 + $0x830] sm:$0xff]
    %v309 = vld [vmem:[%s1 + $0x838] sm:$0xff]
    %v310 = vld [vmem:[%s1 + $0x840] sm:$0xff]
    %v311 = vld [vmem:[%s1 + $0x848] sm:$0xff]
    %v312 = vld [vmem:[%s1 + $0x850] sm:$0xff]
    %v313 = vld [vmem:[%s1 + $0x858] sm:$0xff]
    %v314 = vld [vmem:[%s1 + $0x860] sm:$0xff]
    %v315 = vld [vmem:[%s1 + $0x868] sm:$0xff]
    %v316 = vld [vmem:[%s1 + $0x870] sm:$0xff]
    %v317 = vld [vmem:[%s1 + $0x878] sm:$0xff]
    %v318 = vld [vmem:[%s1 + $0x880] sm:$0xff]
    %v319 = vld [vmem:[%s1 + $0x888] sm:$0xff]
    %v320 = vld [vmem:[%s1 + $0x890] sm:$0xff]
    %v321 = vld [vmem:[%s1 + $0x898] sm:$0xff]
    %v322 = vld [vmem:[%s1 + $0x8a0] sm:$0xff]
    %v323 = vld [vmem:[%s1 + $0x8a8] sm:$0xff]
    %v324 = vld [vmem:[%s1 + $0x8b0] sm:$0xff]
    %v325 = vld [vmem:[%s1 + $0x8b8] sm:$0xff]
    %v326 = vld [vmem:[%s1 + $0x8c0] sm:$0xff]
    %v327 = vld [vmem:[%s1 + $0x8c8] sm:$0xff]
    %v328 = vld [vmem:[%s1 + $0x8d0] sm:$0xff]
    %v329 = vld [vmem:[%s1 + $0x8d8] sm:$0xff]
    %v330 = vld [vmem:[%s1 + $0x8e0] sm:$0xff]
    %v331 = vld [vmem:[%s1 + $0x8e8] sm:$0xff]
    %v332 = vld [vmem:[%s1 + $0x8f0] sm:$0xff]
    %v333 = vld [vmem:[%s1 + $0x8f8] sm:$0xff]
    %v334 = vld [vmem:[%s1 + $0x900] sm:$0xff]
    %v335 = vld [vmem:[%s1 + $0x908] sm:$0xff]
    %v336 = vld [vmem:[%s1 + $0x910] sm:$0xff]
    %v337 = vld [vmem:[%s1 + $0x918] sm:$0xff]
    %v338 = vld [vmem:[%s1 + $0x920] sm:$0xff]
    %v339 = vld [vmem:[%s1 + $0x928] sm:$0xff]
    %v340 = vld [vmem:[%s1 + $0x930] sm:$0xff]
    %v341 = vld [vmem:[%s1 + $0x938] sm:$0xff]
    %v342 = vld [vmem:[%s1 + $0x940] sm:$0xff]
    %v343 = vld [vmem:[%s1 + $0x948] sm:$0xff]
    %v344 = vld [vmem:[%s1 + $0x950] sm:$0xff]
    %v345 = vld [vmem:[%s1 + $0x958] sm:$0xff]
    %v346 = vld [vmem:[%s1 + $0x960] sm:$0xff]
    %v347 = vld [vmem:[%s1 + $0x968] sm:$0xff]
    %v348 = vld [vmem:[%s1 + $0x970] sm:$0xff]
    %v349 = vld [vmem:[%s1 + $0x978] sm:$0xff]
    %v350 = vld [vmem:[%s1 + $0x980] sm:$0xff]
    %v351 = vld [vmem:[%s1 + $0x988] sm:$0xff]
    %v352 = vld [vmem:[%s1 + $0x990] sm:$0xff]
    %v353 = vld [vmem:[%s1 + $0x998] sm:$0xff]
    %v354 = vld [vmem:[%s1 + $0x9a0] sm:$0xff]
    %v355 = vld [vmem:[%s1 + $0x9a8] sm:$0xff]
    %v356 = vld [vmem:[%s1 + $0x9b0] sm:$0xff]
    %v357 = vld [vmem:[%s1 + $0x9b8] sm:$0xff]
    %v358 = vld [vmem:[%s1 + $0x9c0] sm:$0xff]
    %v359 = vld [vmem:[%s1 + $0x9c8] sm:$0xff]
    %v360 = vld [vmem:[%s1 + $0x9d0] sm:$0xff]
    %v361 = vld [vmem:[%s1 + $0x9d8] sm:$0xff]
    %v362 = vld [vmem:[%s1 + $0x9e0] sm:$0xff]
    %v363 = vld [vmem:[%s1 + $0x9e8] sm:$0xff]
    %v364 = vld [vmem:[%s1 + $0x9f0] sm:$0xff]
    %v365 = vld [vmem:[%s1 + $0x9f8] sm:$0xff]
    %v366 = vld [vmem:[%s1 + $0xa00] sm:$0xff]
    %v367 = vld [vmem:[%s1 + $0xa08] sm:$0xff]
    %v368 = vld [vmem:[%s1 + $0xa10] sm:$0xff]
    %v369 = vld [vmem:[%s1 + $0xa18] sm:$0xff]
    %v370 = vld [vmem:[%s1 + $0xa20] sm:$0xff]
    %v371 = vld [vmem:[%s1 + $0xa28] sm:$0xff]
    %v372 = vld [vmem:[%s1 + $0xa30] sm:$0xff]
    %v373 = vld [vmem:[%s1 + $0xa38] sm:$0xff]
    %v374 = vld [vmem:[%s1 + $0xa40] sm:$0xff]
    %v375 = vld [vmem:[%s1 + $0xa48] sm:$0xff]
    %v376 = vld [vmem:[%s1 + $0xa50] sm:$0xff]
    %v377 = vld [vmem:[%s1 + $0xa58] sm:$0xff]
    %v378 = vld [vmem:[%s1 + $0xa60] sm:$0xff]
    %v379 = vld [vmem:[%s1 + $0xa68] sm:$0xff]
    %v380 = vld [vmem:[%s1 + $0xa70] sm:$0xff]
    %v381 = vld [vmem:[%s1 + $0xa78] sm:$0xff]
    %v382 = vld [vmem:[%s1 + $0xa80] sm:$0xff]
    %v383 = vld [vmem:[%s1 + $0xa88] sm:$0xff]
    %v384 = vld [vmem:[%s1 + $0xa90] sm:$0xff]
    %v385 = vld [vmem:[%s1 + $0xa98] sm:$0xff]
    %v386 = vld [vmem:[%s1 + $0xaa0] sm:$0xff]
    %v387 = vld [vmem:[%s1 + $0xaa8] sm:$0xff]
    %v388 = vld [vmem:[%s1 + $0xab0] sm:$0xff]
    %v389 = vld [vmem:[%s1 + $0xab8] sm:$0xff]
    %v390 = vld [vmem:[%s1 + $0xac0] sm:$0xff]
    %v391 = vld [vmem:[%s1 + $0xac8] sm:$0xff]
    %v392 = vld [vmem:[%s1 + $0xad0] sm:$0xff]
    %v393 = vld [vmem:[%s1 + $0xad8] sm:$0xff]
    %v394 = vld [vmem:[%s1 + $0xae0] sm:$0xff]
    %v395 = vld [vmem:[%s1 + $0xae8] sm:$0xff]
    %v396 = vld [vmem:[%s1 + $0xaf0] sm:$0xff]
    %v397 = vld [vmem:[%s1 + $0xaf8] sm:$0xff]
    %v398 = vld [vmem:[%s1 + $0xb00] sm:$0xff]
    %v399 = vld [vmem:[%s1 + $0xb08] sm:$0xff]
    %v400 = vld [vmem:[%s1 + $0xb10] sm:$0xff]
    %v401 = vld [vmem:[%s1 + $0xb18] sm:$0xff]
    %v402 = vld [vmem:[%s1 + $0xb20] sm:$0xff]
    %v403 = vld [vmem:[%s1 + $0xb28] sm:$0xff]
    %v404 = vld [vmem:[%s1 + $0xb30] sm:$0xff]
    %v405 = vld [vmem:[%s1 + $0xb38] sm:$0xff]
    %v406 = vld [vmem:[%s1 + $0xb40] sm:$0xff]
    %v407 = vld [vmem:[%s1 + $0xb48] sm:$0xff]
    %v408 = vld [vmem:[%s1 + $0xb50] sm:$0xff]
    %v409 = vld [vmem:[%s1 + $0xb58] sm:$0xff]
    %v410 = vld [vmem:[%s1 + $0xb60] sm:$0xff]
    %v411 = vld [vmem:[%s1 + $0xb68] sm:$0xff]
    %v412 = vld [vmem:[%s1 + $0xb70] sm:$0xff]
    %v413 = vld [vmem:[%s1 + $0xb78] sm:$0xff]
    %v414 = vld [vmem:[%s1 + $0xb80] sm:$0xff]
    %v415 = vld [vmem:[%s1 + $0xb88] sm:$0xff]
    %v416 = vld [vmem:[%s1 + $0xb90] sm:$0xff]
    %v417 = vld [vmem:[%s1 + $0xb98] sm:$0xff]
    %v418 = vld [vmem:[%s1 + $0xba0] sm:$0xff]
    %v419 = vld [vmem:[%s1 + $0xba8] sm:$0xff]
    %v420 = vld [vmem:[%s1 + $0xbb0] sm:$0xff]
    %v421 = vld [vmem:[%s1 + $0xbb8] sm:$0xff]
    %v422 = vld [vmem:[%s1 + $0xbc0] sm:$0xff]
    %v423 = vld [vmem:[%s1 + $0xbc8] sm:$0xff]
    %v424 = vld [vmem:[%s1 + $0xbd0] sm:$0xff]
    %v425 = vld [vmem:[%s1 + $0xbd8] sm:$0xff]
    %v426 = vld [vmem:[%s1 + $0xbe0] sm:$0xff]
    %v427 = vld [vmem:[%s1 + $0xbe8] sm:$0xff]
    %v428 = vld [vmem:[%s1 + $0xbf0] sm:$0xff]
    %v429 = vld [vmem:[%s1 + $0xbf8] sm:$0xff]
    %v430 = vld [vmem:[%s1 + $0xc00] sm:$0xff]
    %v431 = vld [vmem:[%s1 + $0xc08] sm:$0xff]
    %v432 = vld [vmem:[%s1 + $0xc10] sm:$0xff]
    %v433 = vld [vmem:[%s1 + $0xc18] sm:$0xff]
    %v434 = vld [vmem:[%s1 + $0xc20] sm:$0xff]
    %v435 = vld [vmem:[%s1 + $0xc28] sm:$0xff]
    %v436 = vld [vmem:[%s1 + $0xc30] sm:$0xff]
    %v437 = vld [vmem:[%s1 + $0xc38] sm:$0xff]
    %v438 = vld [vmem:[%s2] sm:$0x1]
    %v440 = vlaneseq
    %v441 = vshrl.u32 %v440, 7
    %v442 = vsub.s32 0, %v441
    %v443 = vrot.slane %v438, %v442
    %vm445 = vcmask 523264
    %v447 = vsel %vm445, %v45, 0
    %449 = vmatprep.subr.mxu0 0.0
    %450 = vmatpush1.msra.mxu0 %v46
    %451 = vmatprep.subr.mxu0 0.0
    %452 = vmatpush1.msra.mxu0 %v47
    %453 = vmatprep.subr.mxu0 0.0
    %454 = vmatpush1.msra.mxu0 %v48
    %455 = vmatprep.subr.mxu0 0.0
    %456 = vmatpush1.msra.mxu0 %v49
    %457 = vmatprep.subr.mxu0 0.0
    %458 = vmatpush1.msra.mxu0 %v50
    %459 = vmatprep.subr.mxu0 0.0
    %460 = vmatpush1.msra.mxu0 %v51
    %461 = vmatprep.subr.mxu0 0.0
    %462 = vmatpush1.msra.mxu0 %v52
    %463 = vmatprep.subr.mxu0 0.0
    %464 = vmatpush1.msra.mxu0 %v53
    %465 = vmatprep.subr.mxu0 0.0
    %466 = vmatpush1.msra.mxu0 %v54
    %467 = vmatprep.subr.mxu0 0.0
    %468 = vmatpush1.msra.mxu0 %v55
    %469 = vmatprep.subr.mxu0 0.0
    %470 = vmatpush1.msra.mxu0 %v56
    %471 = vmatprep.subr.mxu0 0.0
    %472 = vmatpush1.msra.mxu0 %v57
    %473 = vmatprep.subr.mxu0 0.0
    %474 = vmatpush1.msra.mxu0 %v58
    %475 = vmatprep.subr.mxu0 0.0
    %476 = vmatpush1.msra.mxu0 %v59
    %477 = vmatprep.subr.mxu0 0.0
    %478 = vmatpush1.msra.mxu0 %v60
    %479 = vmatprep.subr.mxu0 0.0
    %480 = vmatpush1.msra.mxu0 %v61
    %481 = vmatprep.subr.mxu0 0.0
    %482 = vmatpush1.msra.mxu0 %v62
    %483 = vmatprep.subr.mxu0 0.0
    %484 = vmatpush1.msra.mxu0 %v63
    %485 = vmatprep.subr.mxu0 0.0
    %486 = vmatpush1.msra.mxu0 %v64
    %487 = vmatprep.subr.mxu0 0.0
    %488 = vmatpush1.msra.mxu0 %v65
    %489 = vmatprep.subr.mxu0 0.0
    %490 = vmatpush1.msra.mxu0 %v66
    %491 = vmatprep.subr.mxu0 0.0
    %492 = vmatpush1.msra.mxu0 %v67
    %493 = vmatprep.subr.mxu0 0.0
    %494 = vmatpush1.msra.mxu0 %v68
    %495 = vmatprep.subr.mxu0 0.0
    %496 = vmatpush1.msra.mxu0 %v69
    %497 = vmatprep.subr.mxu0 0.0
    %498 = vmatpush1.msra.mxu0 %v70
    %499 = vmatprep.subr.mxu0 0.0
    %500 = vmatpush1.msra.mxu0 %v71
    %501 = vmatprep.subr.mxu0 0.0
    %502 = vmatpush1.msra.mxu0 %v72
    %503 = vmatprep.subr.mxu0 0.0
    %504 = vmatpush1.msra.mxu0 %v73
    %505 = vmatprep.subr.mxu0 0.0
    %506 = vmatpush1.msra.mxu0 %v74
    %507 = vmatprep.subr.mxu0 0.0
    %508 = vmatpush1.msra.mxu0 %v75
    %509 = vmatprep.subr.mxu0 0.0
    %510 = vmatpush1.msra.mxu0 %v76
    %511 = vmatprep.subr.mxu0 0.0
    %512 = vmatpush1.msra.mxu0 %v77
    %513 = vmatprep.mubr.f32.mxu0 %v22
    %514 = vmatmul.mubr.f32.gmra.mrb[0].mxu0 %v21
    %v515 = vpop.f32.mrb[0].mxu0
    %v516 = vadd.f32 %v443, %v515
    %v517 = vpop.f32.mrb[0].mxu0
    %518 = vdwg.mxu0
    %519 = vmatprep.subr.mxu0 0.0
    %520 = vmatpush1.msra.mxu0 %v78
    %521 = vmatprep.subr.mxu0 0.0
    %522 = vmatpush1.msra.mxu0 %v79
    %523 = vmatprep.subr.mxu0 0.0
    %524 = vmatpush1.msra.mxu0 %v80
    %525 = vmatprep.subr.mxu0 0.0
    %526 = vmatpush1.msra.mxu0 %v81
    %527 = vmatprep.subr.mxu0 0.0
    %528 = vmatpush1.msra.mxu0 %v82
    %529 = vmatprep.subr.mxu0 0.0
    %530 = vmatpush1.msra.mxu0 %v83
    %531 = vmatprep.subr.mxu0 0.0
    %532 = vmatpush1.msra.mxu0 %v84
    %533 = vmatprep.subr.mxu0 0.0
    %534 = vmatpush1.msra.mxu0 %v85
    %535 = vmatprep.subr.mxu0 0.0
    %536 = vmatpush1.msra.mxu0 %v86
    %537 = vmatprep.subr.mxu0 0.0
    %538 = vmatpush1.msra.mxu0 %v87
    %539 = vmatprep.subr.mxu0 0.0
    %540 = vmatpush1.msra.mxu0 %v88
    %541 = vmatprep.subr.mxu0 0.0
    %542 = vmatpush1.msra.mxu0 %v89
    %543 = vmatprep.subr.mxu0 0.0
    %544 = vmatpush1.msra.mxu0 %v90
    %545 = vmatprep.subr.mxu0 0.0
    %546 = vmatpush1.msra.mxu0 %v91
    %547 = vmatprep.subr.mxu0 0.0
    %548 = vmatpush1.msra.mxu0 %v92
    %549 = vmatprep.subr.mxu0 0.0
    %550 = vmatpush1.msra.mxu0 %v93
    %551 = vmatprep.subr.mxu0 0.0
    %552 = vmatpush1.msra.mxu0 %v94
    %553 = vmatprep.subr.mxu0 0.0
    %554 = vmatpush1.msra.mxu0 %v95
    %555 = vmatprep.subr.mxu0 0.0
    %556 = vmatpush1.msra.mxu0 %v96
    %557 = vmatprep.subr.mxu0 0.0
    %558 = vmatpush1.msra.mxu0 %v97
    %559 = vmatprep.subr.mxu0 0.0
    %560 = vmatpush1.msra.mxu0 %v98
    %561 = vmatprep.subr.mxu0 0.0
    %562 = vmatpush1.msra.mxu0 %v99
    %563 = vmatprep.subr.mxu0 0.0
    %564 = vmatpush1.msra.mxu0 %v100
    %565 = vmatprep.subr.mxu0 0.0
    %566 = vmatpush1.msra.mxu0 %v101
    %567 = vmatprep.subr.mxu0 0.0
    %568 = vmatpush1.msra.mxu0 %v102
    %569 = vmatprep.subr.mxu0 0.0
    %570 = vmatpush1.msra.mxu0 %v103
    %571 = vmatprep.subr.mxu0 0.0
    %572 = vmatpush1.msra.mxu0 %v104
    %573 = vmatprep.subr.mxu0 0.0
    %574 = vmatpush1.msra.mxu0 %v105
    %575 = vmatprep.subr.mxu0 0.0
    %576 = vmatpush1.msra.mxu0 %v106
    %577 = vmatprep.subr.mxu0 0.0
    %578 = vmatpush1.msra.mxu0 %v107
    %579 = vmatprep.subr.mxu0 0.0
    %580 = vmatpush1.msra.mxu0 %v108
    %581 = vmatprep.subr.mxu0 0.0
    %582 = vmatpush1.msra.mxu0 %v109
    %583 = vmatprep.mubr.f32.mxu0 %v24
    %584 = vmatmul.mubr.f32.gmra.mrb[0].mxu0 %v23
    %v585 = vpop.f32.mrb[0].mxu0
    %v586 = vadd.f32 %v516, %v585
    %v587 = vpop.f32.mrb[0].mxu0
    %588 = vdwg.mxu0
    %589 = vmatprep.subr.mxu0 0.0
    %590 = vmatpush1.msra.mxu0 %v110
    %591 = vmatprep.subr.mxu0 0.0
    %592 = vmatpush1.msra.mxu0 %v111
    %593 = vmatprep.subr.mxu0 0.0
    %594 = vmatpush1.msra.mxu0 %v112
    %595 = vmatprep.subr.mxu0 0.0
    %596 = vmatpush1.msra.mxu0 %v113
    %597 = vmatprep.subr.mxu0 0.0
    %598 = vmatpush1.msra.mxu0 %v114
    %599 = vmatprep.subr.mxu0 0.0
    %600 = vmatpush1.msra.mxu0 %v115
    %601 = vmatprep.subr.mxu0 0.0
    %602 = vmatpush1.msra.mxu0 %v116
    %603 = vmatprep.subr.mxu0 0.0
    %604 = vmatpush1.msra.mxu0 %v117
    %605 = vmatprep.subr.mxu0 0.0
    %606 = vmatpush1.msra.mxu0 %v118
    %607 = vmatprep.subr.mxu0 0.0
    %608 = vmatpush1.msra.mxu0 %v119
    %609 = vmatprep.subr.mxu0 0.0
    %610 = vmatpush1.msra.mxu0 %v120
    %611 = vmatprep.subr.mxu0 0.0
    %612 = vmatpush1.msra.mxu0 %v121
    %613 = vmatprep.subr.mxu0 0.0
    %614 = vmatpush1.msra.mxu0 %v122
    %615 = vmatprep.subr.mxu0 0.0
    %616 = vmatpush1.msra.mxu0 %v123
    %617 = vmatprep.subr.mxu0 0.0
    %618 = vmatpush1.msra.mxu0 %v124
    %619 = vmatprep.subr.mxu0 0.0
    %620 = vmatpush1.msra.mxu0 %v125
    %621 = vmatprep.subr.mxu0 0.0
    %622 = vmatpush1.msra.mxu0 %v126
    %623 = vmatprep.subr.mxu0 0.0
    %624 = vmatpush1.msra.mxu0 %v127
    %625 = vmatprep.subr.mxu0 0.0
    %626 = vmatpush1.msra.mxu0 %v128
    %627 = vmatprep.subr.mxu0 0.0
    %628 = vmatpush1.msra.mxu0 %v129
    %629 = vmatprep.subr.mxu0 0.0
    %630 = vmatpush1.msra.mxu0 %v130
    %631 = vmatprep.subr.mxu0 0.0
    %632 = vmatpush1.msra.mxu0 %v131
    %633 = vmatprep.subr.mxu0 0.0
    %634 = vmatpush1.msra.mxu0 %v132
    %635 = vmatprep.subr.mxu0 0.0
    %636 = vmatpush1.msra.mxu0 %v133
    %637 = vmatprep.subr.mxu0 0.0
    %638 = vmatpush1.msra.mxu0 %v134
    %639 = vmatprep.subr.mxu0 0.0
    %640 = vmatpush1.msra.mxu0 %v135
    %641 = vmatprep.subr.mxu0 0.0
    %642 = vmatpush1.msra.mxu0 %v136
    %643 = vmatprep.subr.mxu0 0.0
    %644 = vmatpush1.msra.mxu0 %v137
    %645 = vmatprep.subr.mxu0 0.0
    %646 = vmatpush1.msra.mxu0 %v138
    %647 = vmatprep.subr.mxu0 0.0
    %648 = vmatpush1.msra.mxu0 %v139
    %649 = vmatprep.subr.mxu0 0.0
    %650 = vmatpush1.msra.mxu0 %v140
    %651 = vmatprep.subr.mxu0 0.0
    %652 = vmatpush1.msra.mxu0 %v141
    %653 = vmatprep.mubr.f32.mxu0 %v26
    %654 = vmatmul.mubr.f32.gmra.mrb[0].mxu0 %v25
    %v655 = vpop.f32.mrb[0].mxu0
    %v656 = vadd.f32 %v586, %v655
    %v657 = vpop.f32.mrb[0].mxu0
    %658 = vdwg.mxu0
    %659 = vmatprep.subr.mxu0 0.0
    %660 = vmatpush1.msra.mxu0 %v142
    %661 = vmatprep.subr.mxu0 0.0
    %662 = vmatpush1.msra.mxu0 %v143
    %663 = vmatprep.subr.mxu0 0.0
    %664 = vmatpush1.msra.mxu0 %v144
    %665 = vmatprep.subr.mxu0 0.0
    %666 = vmatpush1.msra.mxu0 %v145
    %667 = vmatprep.subr.mxu0 0.0
    %668 = vmatpush1.msra.mxu0 %v146
    %669 = vmatprep.subr.mxu0 0.0
    %670 = vmatpush1.msra.mxu0 %v147
    %671 = vmatprep.subr.mxu0 0.0
    %672 = vmatpush1.msra.mxu0 %v148
    %673 = vmatprep.subr.mxu0 0.0
    %674 = vmatpush1.msra.mxu0 %v149
    %675 = vmatprep.subr.mxu0 0.0
    %676 = vmatpush1.msra.mxu0 %v150
    %677 = vmatprep.subr.mxu0 0.0
    %678 = vmatpush1.msra.mxu0 %v151
    %679 = vmatprep.subr.mxu0 0.0
    %680 = vmatpush1.msra.mxu0 %v152
    %681 = vmatprep.subr.mxu0 0.0
    %682 = vmatpush1.msra.mxu0 %v153
    %683 = vmatprep.subr.mxu0 0.0
    %684 = vmatpush1.msra.mxu0 %v154
    %685 = vmatprep.subr.mxu0 0.0
    %686 = vmatpush1.msra.mxu0 %v155
    %687 = vmatprep.subr.mxu0 0.0
    %688 = vmatpush1.msra.mxu0 %v156
    %689 = vmatprep.subr.mxu0 0.0
    %690 = vmatpush1.msra.mxu0 %v157
    %691 = vmatprep.subr.mxu0 0.0
    %692 = vmatpush1.msra.mxu0 %v158
    %693 = vmatprep.subr.mxu0 0.0
    %694 = vmatpush1.msra.mxu0 %v159
    %695 = vmatprep.subr.mxu0 0.0
    %696 = vmatpush1.msra.mxu0 %v160
    %697 = vmatprep.subr.mxu0 0.0
    %698 = vmatpush1.msra.mxu0 %v161
    %699 = vmatprep.subr.mxu0 0.0
    %700 = vmatpush1.msra.mxu0 %v162
    %701 = vmatprep.subr.mxu0 0.0
    %702 = vmatpush1.msra.mxu0 %v163
    %703 = vmatprep.subr.mxu0 0.0
    %704 = vmatpush1.msra.mxu0 %v164
    %705 = vmatprep.subr.mxu0 0.0
    %706 = vmatpush1.msra.mxu0 %v165
    %707 = vmatprep.subr.mxu0 0.0
    %708 = vmatpush1.msra.mxu0 %v166
    %709 = vmatprep.subr.mxu0 0.0
    %710 = vmatpush1.msra.mxu0 %v167
    %711 = vmatprep.subr.mxu0 0.0
    %712 = vmatpush1.msra.mxu0 %v168
    %713 = vmatprep.subr.mxu0 0.0
    %714 = vmatpush1.msra.mxu0 %v169
    %715 = vmatprep.subr.mxu0 0.0
    %716 = vmatpush1.msra.mxu0 %v170
    %717 = vmatprep.subr.mxu0 0.0
    %718 = vmatpush1.msra.mxu0 %v171
    %719 = vmatprep.subr.mxu0 0.0
    %720 = vmatpush1.msra.mxu0 %v172
    %721 = vmatprep.subr.mxu0 0.0
    %722 = vmatpush1.msra.mxu0 %v173
    %723 = vmatprep.mubr.f32.mxu0 %v28
    %724 = vmatmul.mubr.f32.gmra.mrb[0].mxu0 %v27
    %v725 = vpop.f32.mrb[0].mxu0
    %v726 = vadd.f32 %v656, %v725
    %v727 = vpop.f32.mrb[0].mxu0
    %728 = vdwg.mxu0
    %729 = vmatprep.subr.mxu0 0.0
    %730 = vmatpush1.msra.mxu0 %v174
    %731 = vmatprep.subr.mxu0 0.0
    %732 = vmatpush1.msra.mxu0 %v175
    %733 = vmatprep.subr.mxu0 0.0
    %734 = vmatpush1.msra.mxu0 %v176
    %735 = vmatprep.subr.mxu0 0.0
    %736 = vmatpush1.msra.mxu0 %v177
    %737 = vmatprep.subr.mxu0 0.0
    %738 = vmatpush1.msra.mxu0 %v178
    %739 = vmatprep.subr.mxu0 0.0
    %740 = vmatpush1.msra.mxu0 %v179
    %741 = vmatprep.subr.mxu0 0.0
    %742 = vmatpush1.msra.mxu0 %v180
    %743 = vmatprep.subr.mxu0 0.0
    %744 = vmatpush1.msra.mxu0 %v181
    %745 = vmatprep.subr.mxu0 0.0
    %746 = vmatpush1.msra.mxu0 %v182
    %747 = vmatprep.subr.mxu0 0.0
    %748 = vmatpush1.msra.mxu0 %v183
    %749 = vmatprep.subr.mxu0 0.0
    %750 = vmatpush1.msra.mxu0 %v184
    %751 = vmatprep.subr.mxu0 0.0
    %752 = vmatpush1.msra.mxu0 %v185
    %753 = vmatprep.subr.mxu0 0.0
    %754 = vmatpush1.msra.mxu0 %v186
    %755 = vmatprep.subr.mxu0 0.0
    %756 = vmatpush1.msra.mxu0 %v187
    %757 = vmatprep.subr.mxu0 0.0
    %758 = vmatpush1.msra.mxu0 %v188
    %759 = vmatprep.subr.mxu0 0.0
    %760 = vmatpush1.msra.mxu0 %v189
    %761 = vmatprep.subr.mxu0 0.0
    %762 = vmatpush1.msra.mxu0 %v190
    %763 = vmatprep.subr.mxu0 0.0
    %764 = vmatpush1.msra.mxu0 %v191
    %765 = vmatprep.subr.mxu0 0.0
    %766 = vmatpush1.msra.mxu0 %v192
    %767 = vmatprep.subr.mxu0 0.0
    %768 = vmatpush1.msra.mxu0 %v193
    %769 = vmatprep.subr.mxu0 0.0
    %770 = vmatpush1.msra.mxu0 %v194
    %771 = vmatprep.subr.mxu0 0.0
    %772 = vmatpush1.msra.mxu0 %v195
    %773 = vmatprep.subr.mxu0 0.0
    %774 = vmatpush1.msra.mxu0 %v196
    %775 = vmatprep.subr.mxu0 0.0
    %776 = vmatpush1.msra.mxu0 %v197
    %777 = vmatprep.subr.mxu0 0.0
    %778 = vmatpush1.msra.mxu0 %v198
    %779 = vmatprep.subr.mxu0 0.0
    %780 = vmatpush1.msra.mxu0 %v199
    %781 = vmatprep.subr.mxu0 0.0
    %782 = vmatpush1.msra.mxu0 %v200
    %783 = vmatprep.subr.mxu0 0.0
    %784 = vmatpush1.msra.mxu0 %v201
    %785 = vmatprep.subr.mxu0 0.0
    %786 = vmatpush1.msra.mxu0 %v202
    %787 = vmatprep.subr.mxu0 0.0
    %788 = vmatpush1.msra.mxu0 %v203
    %789 = vmatprep.subr.mxu0 0.0
    %790 = vmatpush1.msra.mxu0 %v204
    %791 = vmatprep.subr.mxu0 0.0
    %792 = vmatpush1.msra.mxu0 %v205
    %793 = vmatprep.mubr.f32.mxu0 %v30
    %794 = vmatmul.mubr.f32.gmra.mrb[0].mxu0 %v29
    %v795 = vpop.f32.mrb[0].mxu0
    %v796 = vadd.f32 %v726, %v795
    %v797 = vpop.f32.mrb[0].mxu0
    %798 = vdwg.mxu0
    %799 = vmatprep.subr.mxu0 0.0
    %800 = vmatpush1.msra.mxu0 %v206
    %801 = vmatprep.subr.mxu0 0.0
    %802 = vmatpush1.msra.mxu0 %v207
    %803 = vmatprep.subr.mxu0 0.0
    %804 = vmatpush1.msra.mxu0 %v208
    %805 = vmatprep.subr.mxu0 0.0
    %806 = vmatpush1.msra.mxu0 %v209
    %807 = vmatprep.subr.mxu0 0.0
    %808 = vmatpush1.msra.mxu0 %v210
    %809 = vmatprep.subr.mxu0 0.0
    %810 = vmatpush1.msra.mxu0 %v211
    %811 = vmatprep.subr.mxu0 0.0
    %812 = vmatpush1.msra.mxu0 %v212
    %813 = vmatprep.subr.mxu0 0.0
    %814 = vmatpush1.msra.mxu0 %v213
    %815 = vmatprep.subr.mxu0 0.0
    %816 = vmatpush1.msra.mxu0 %v214
    %817 = vmatprep.subr.mxu0 0.0
    %818 = vmatpush1.msra.mxu0 %v215
    %819 = vmatprep.subr.mxu0 0.0
    %820 = vmatpush1.msra.mxu0 %v216
    %821 = vmatprep.subr.mxu0 0.0
    %822 = vmatpush1.msra.mxu0 %v217
    %823 = vmatprep.subr.mxu0 0.0
    %824 = vmatpush1.msra.mxu0 %v218
    %825 = vmatprep.subr.mxu0 0.0
    %826 = vmatpush1.msra.mxu0 %v219
    %827 = vmatprep.subr.mxu0 0.0
    %828 = vmatpush1.msra.mxu0 %v220
    %829 = vmatprep.subr.mxu0 0.0
    %830 = vmatpush1.msra.mxu0 %v221
    %831 = vmatprep.subr.mxu0 0.0
    %832 = vmatpush1.msra.mxu0 %v222
    %833 = vmatprep.subr.mxu0 0.0
    %834 = vmatpush1.msra.mxu0 %v223
    %835 = vmatprep.subr.mxu0 0.0
    %836 = vmatpush1.msra.mxu0 %v224
    %837 = vmatprep.subr.mxu0 0.0
    %838 = vmatpush1.msra.mxu0 %v225
    %839 = vmatprep.subr.mxu0 0.0
    %840 = vmatpush1.msra.mxu0 %v226
    %841 = vmatprep.subr.mxu0 0.0
    %842 = vmatpush1.msra.mxu0 %v227
    %843 = vmatprep.subr.mxu0 0.0
    %844 = vmatpush1.msra.mxu0 %v228
    %845 = vmatprep.subr.mxu0 0.0
    %846 = vmatpush1.msra.mxu0 %v229
    %847 = vmatprep.subr.mxu0 0.0
    %848 = vmatpush1.msra.mxu0 %v230
    %849 = vmatprep.subr.mxu0 0.0
    %850 = vmatpush1.msra.mxu0 %v231
    %851 = vmatprep.subr.mxu0 0.0
    %852 = vmatpush1.msra.mxu0 %v232
    %853 = vmatprep.subr.mxu0 0.0
    %854 = vmatpush1.msra.mxu0 %v233
    %855 = vmatprep.subr.mxu0 0.0
    %856 = vmatpush1.msra.mxu0 %v234
    %857 = vmatprep.subr.mxu0 0.0
    %858 = vmatpush1.msra.mxu0 %v235
    %859 = vmatprep.subr.mxu0 0.0
    %860 = vmatpush1.msra.mxu0 %v236
    %861 = vmatprep.subr.mxu0 0.0
    %862 = vmatpush1.msra.mxu0 %v237
    %863 = vmatprep.mubr.f32.mxu0 %v32
    %864 = vmatmul.mubr.f32.gmra.mrb[0].mxu0 %v31
    %v865 = vpop.f32.mrb[0].mxu0
    %v866 = vadd.f32 %v796, %v865
    %v867 = vpop.f32.mrb[0].mxu0
    %868 = vdwg.mxu0
    %869 = vmatprep.subr.mxu0 0.0
    %870 = vmatpush1.msra.mxu0 %v238
    %871 = vmatprep.subr.mxu0 0.0
    %872 = vmatpush1.msra.mxu0 %v239
    %873 = vmatprep.subr.mxu0 0.0
    %874 = vmatpush1.msra.mxu0 %v240
    %875 = vmatprep.subr.mxu0 0.0
    %876 = vmatpush1.msra.mxu0 %v241
    %877 = vmatprep.subr.mxu0 0.0
    %878 = vmatpush1.msra.mxu0 %v242
    %879 = vmatprep.subr.mxu0 0.0
    %880 = vmatpush1.msra.mxu0 %v243
    %881 = vmatprep.subr.mxu0 0.0
    %882 = vmatpush1.msra.mxu0 %v244
    %883 = vmatprep.subr.mxu0 0.0
    %884 = vmatpush1.msra.mxu0 %v245
    %885 = vmatprep.subr.mxu0 0.0
    %886 = vmatpush1.msra.mxu0 %v246
    %887 = vmatprep.subr.mxu0 0.0
    %888 = vmatpush1.msra.mxu0 %v247
    %889 = vmatprep.subr.mxu0 0.0
    %890 = vmatpush1.msra.mxu0 %v248
    %891 = vmatprep.subr.mxu0 0.0
    %892 = vmatpush1.msra.mxu0 %v249
    %893 = vmatprep.subr.mxu0 0.0
    %894 = vmatpush1.msra.mxu0 %v250
    %895 = vmatprep.subr.mxu0 0.0
    %896 = vmatpush1.msra.mxu0 %v251
    %897 = vmatprep.subr.mxu0 0.0
    %898 = vmatpush1.msra.mxu0 %v252
    %899 = vmatprep.subr.mxu0 0.0
    %900 = vmatpush1.msra.mxu0 %v253
    %901 = vmatprep.subr.mxu0 0.0
    %902 = vmatpush1.msra.mxu0 %v254
    %903 = vmatprep.subr.mxu0 0.0
    %904 = vmatpush1.msra.mxu0 %v255
    %905 = vmatprep.subr.mxu0 0.0
    %906 = vmatpush1.msra.mxu0 %v256
    %907 = vmatprep.subr.mxu0 0.0
    %908 = vmatpush1.msra.mxu0 %v257
    %909 = vmatprep.subr.mxu0 0.0
    %910 = vmatpush1.msra.mxu0 %v258
    %911 = vmatprep.subr.mxu0 0.0
    %912 = vmatpush1.msra.mxu0 %v259
    %913 = vmatprep.subr.mxu0 0.0
    %914 = vmatpush1.msra.mxu0 %v260
    %915 = vmatprep.subr.mxu0 0.0
    %916 = vmatpush1.msra.mxu0 %v261
    %917 = vmatprep.subr.mxu0 0.0
    %918 = vmatpush1.msra.mxu0 %v262
    %919 = vmatprep.subr.mxu0 0.0
    %920 = vmatpush1.msra.mxu0 %v263
    %921 = vmatprep.subr.mxu0 0.0
    %922 = vmatpush1.msra.mxu0 %v264
    %923 = vmatprep.subr.mxu0 0.0
    %924 = vmatpush1.msra.mxu0 %v265
    %925 = vmatprep.subr.mxu0 0.0
    %926 = vmatpush1.msra.mxu0 %v266
    %927 = vmatprep.subr.mxu0 0.0
    %928 = vmatpush1.msra.mxu0 %v267
    %929 = vmatprep.subr.mxu0 0.0
    %930 = vmatpush1.msra.mxu0 %v268
    %931 = vmatprep.subr.mxu0 0.0
    %932 = vmatpush1.msra.mxu0 %v269
    %933 = vmatprep.mubr.f32.mxu0 %v34
    %934 = vmatmul.mubr.f32.gmra.mrb[0].mxu0 %v33
    %v935 = vpop.f32.mrb[0].mxu0
    %v936 = vadd.f32 %v866, %v935
    %v937 = vpop.f32.mrb[0].mxu0
    %938 = vdwg.mxu0
    %939 = vmatprep.subr.mxu0 0.0
    %940 = vmatpush1.msra.mxu0 %v270
    %941 = vmatprep.subr.mxu0 0.0
    %942 = vmatpush1.msra.mxu0 %v271
    %943 = vmatprep.subr.mxu0 0.0
    %944 = vmatpush1.msra.mxu0 %v272
    %945 = vmatprep.subr.mxu0 0.0
    %946 = vmatpush1.msra.mxu0 %v273
    %947 = vmatprep.subr.mxu0 0.0
    %948 = vmatpush1.msra.mxu0 %v274
    %949 = vmatprep.subr.mxu0 0.0
    %950 = vmatpush1.msra.mxu0 %v275
    %951 = vmatprep.subr.mxu0 0.0
    %952 = vmatpush1.msra.mxu0 %v276
    %953 = vmatprep.subr.mxu0 0.0
    %954 = vmatpush1.msra.mxu0 %v277
    %955 = vmatprep.subr.mxu0 0.0
    %956 = vmatpush1.msra.mxu0 %v278
    %957 = vmatprep.subr.mxu0 0.0
    %958 = vmatpush1.msra.mxu0 %v279
    %959 = vmatprep.subr.mxu0 0.0
    %960 = vmatpush1.msra.mxu0 %v280
    %961 = vmatprep.subr.mxu0 0.0
    %962 = vmatpush1.msra.mxu0 %v281
    %963 = vmatprep.subr.mxu0 0.0
    %964 = vmatpush1.msra.mxu0 %v282
    %965 = vmatprep.subr.mxu0 0.0
    %966 = vmatpush1.msra.mxu0 %v283
    %967 = vmatprep.subr.mxu0 0.0
    %968 = vmatpush1.msra.mxu0 %v284
    %969 = vmatprep.subr.mxu0 0.0
    %970 = vmatpush1.msra.mxu0 %v285
    %971 = vmatprep.subr.mxu0 0.0
    %972 = vmatpush1.msra.mxu0 %v286
    %973 = vmatprep.subr.mxu0 0.0
    %974 = vmatpush1.msra.mxu0 %v287
    %975 = vmatprep.subr.mxu0 0.0
    %976 = vmatpush1.msra.mxu0 %v288
    %977 = vmatprep.subr.mxu0 0.0
    %978 = vmatpush1.msra.mxu0 %v289
    %979 = vmatprep.subr.mxu0 0.0
    %980 = vmatpush1.msra.mxu0 %v290
    %981 = vmatprep.subr.mxu0 0.0
    %982 = vmatpush1.msra.mxu0 %v291
    %983 = vmatprep.subr.mxu0 0.0
    %984 = vmatpush1.msra.mxu0 %v292
    %985 = vmatprep.subr.mxu0 0.0
    %986 = vmatpush1.msra.mxu0 %v293
    %987 = vmatprep.subr.mxu0 0.0
    %988 = vmatpush1.msra.mxu0 %v294
    %989 = vmatprep.subr.mxu0 0.0
    %990 = vmatpush1.msra.mxu0 %v295
    %991 = vmatprep.subr.mxu0 0.0
    %992 = vmatpush1.msra.mxu0 %v296
    %993 = vmatprep.subr.mxu0 0.0
    %994 = vmatpush1.msra.mxu0 %v297
    %995 = vmatprep.subr.mxu0 0.0
    %996 = vmatpush1.msra.mxu0 %v298
    %997 = vmatprep.subr.mxu0 0.0
    %998 = vmatpush1.msra.mxu0 %v299
    %999 = vmatprep.subr.mxu0 0.0
    %1000 = vmatpush1.msra.mxu0 %v300
    %1001 = vmatprep.subr.mxu0 0.0
    %1002 = vmatpush1.msra.mxu0 %v301
    %1003 = vmatprep.mubr.f32.mxu0 %v36
    %1004 = vmatmul.mubr.f32.gmra.mrb[0].mxu0 %v35
    %v1005 = vpop.f32.mrb[0].mxu0
    %v1006 = vadd.f32 %v936, %v1005
    %v1007 = vpop.f32.mrb[0].mxu0
    %1008 = vdwg.mxu0
    %1009 = vmatprep.subr.mxu0 0.0
    %1010 = vmatpush1.msra.mxu0 %v302
    %1011 = vmatprep.subr.mxu0 0.0
    %1012 = vmatpush1.msra.mxu0 %v303
    %1013 = vmatprep.subr.mxu0 0.0
    %1014 = vmatpush1.msra.mxu0 %v304
    %1015 = vmatprep.subr.mxu0 0.0
    %1016 = vmatpush1.msra.mxu0 %v305
    %1017 = vmatprep.subr.mxu0 0.0
    %1018 = vmatpush1.msra.mxu0 %v306
    %1019 = vmatprep.subr.mxu0 0.0
    %1020 = vmatpush1.msra.mxu0 %v307
    %1021 = vmatprep.subr.mxu0 0.0
    %1022 = vmatpush1.msra.mxu0 %v308
    %1023 = vmatprep.subr.mxu0 0.0
    %1024 = vmatpush1.msra.mxu0 %v309
    %1025 = vmatprep.subr.mxu0 0.0
    %1026 = vmatpush1.msra.mxu0 %v310
    %1027 = vmatprep.subr.mxu0 0.0
    %1028 = vmatpush1.msra.mxu0 %v311
    %1029 = vmatprep.subr.mxu0 0.0
    %1030 = vmatpush1.msra.mxu0 %v312
    %1031 = vmatprep.subr.mxu0 0.0
    %1032 = vmatpush1.msra.mxu0 %v313
    %1033 = vmatprep.subr.mxu0 0.0
    %1034 = vmatpush1.msra.mxu0 %v314
    %1035 = vmatprep.subr.mxu0 0.0
    %1036 = vmatpush1.msra.mxu0 %v315
    %1037 = vmatprep.subr.mxu0 0.0
    %1038 = vmatpush1.msra.mxu0 %v316
    %1039 = vmatprep.subr.mxu0 0.0
    %1040 = vmatpush1.msra.mxu0 %v317
    %1041 = vmatprep.subr.mxu0 0.0
    %1042 = vmatpush1.msra.mxu0 %v318
    %1043 = vmatprep.subr.mxu0 0.0
    %1044 = vmatpush1.msra.mxu0 %v319
    %1045 = vmatprep.subr.mxu0 0.0
    %1046 = vmatpush1.msra.mxu0 %v320
    %1047 = vmatprep.subr.mxu0 0.0
    %1048 = vmatpush1.msra.mxu0 %v321
    %1049 = vmatprep.subr.mxu0 0.0
    %1050 = vmatpush1.msra.mxu0 %v322
    %1051 = vmatprep.subr.mxu0 0.0
    %1052 = vmatpush1.msra.mxu0 %v323
    %1053 = vmatprep.subr.mxu0 0.0
    %1054 = vmatpush1.msra.mxu0 %v324
    %1055 = vmatprep.subr.mxu0 0.0
    %1056 = vmatpush1.msra.mxu0 %v325
    %1057 = vmatprep.subr.mxu0 0.0
    %1058 = vmatpush1.msra.mxu0 %v326
    %1059 = vmatprep.subr.mxu0 0.0
    %1060 = vmatpush1.msra.mxu0 %v327
    %1061 = vmatprep.subr.mxu0 0.0
    %1062 = vmatpush1.msra.mxu0 %v328
    %1063 = vmatprep.subr.mxu0 0.0
    %1064 = vmatpush1.msra.mxu0 %v329
    %1065 = vmatprep.subr.mxu0 0.0
    %1066 = vmatpush1.msra.mxu0 %v330
    %1067 = vmatprep.subr.mxu0 0.0
    %1068 = vmatpush1.msra.mxu0 %v331
    %1069 = vmatprep.subr.mxu0 0.0
    %1070 = vmatpush1.msra.mxu0 %v332
    %1071 = vmatprep.subr.mxu0 0.0
    %1072 = vmatpush1.msra.mxu0 %v333
    %1073 = vmatprep.mubr.f32.mxu0 %v38
    %1074 = vmatmul.mubr.f32.gmra.mrb[0].mxu0 %v37
    %v1075 = vpop.f32.mrb[0].mxu0
    %v1076 = vadd.f32 %v1006, %v1075
    %v1077 = vpop.f32.mrb[0].mxu0
    %1078 = vdwg.mxu0
    %1079 = vmatprep.subr.mxu0 0.0
    %1080 = vmatpush1.msra.mxu0 %v334
    %1081 = vmatprep.subr.mxu0 0.0
    %1082 = vmatpush1.msra.mxu0 %v335
    %1083 = vmatprep.subr.mxu0 0.0
    %1084 = vmatpush1.msra.mxu0 %v336
    %1085 = vmatprep.subr.mxu0 0.0
    %1086 = vmatpush1.msra.mxu0 %v337
    %1087 = vmatprep.subr.mxu0 0.0
    %1088 = vmatpush1.msra.mxu0 %v338
    %1089 = vmatprep.subr.mxu0 0.0
    %1090 = vmatpush1.msra.mxu0 %v339
    %1091 = vmatprep.subr.mxu0 0.0
    %1092 = vmatpush1.msra.mxu0 %v340
    %1093 = vmatprep.subr.mxu0 0.0
    %1094 = vmatpush1.msra.mxu0 %v341
    %1095 = vmatprep.subr.mxu0 0.0
    %1096 = vmatpush1.msra.mxu0 %v342
    %1097 = vmatprep.subr.mxu0 0.0
    %1098 = vmatpush1.msra.mxu0 %v343
    %1099 = vmatprep.subr.mxu0 0.0
    %1100 = vmatpush1.msra.mxu0 %v344
    %1101 = vmatprep.subr.mxu0 0.0
    %1102 = vmatpush1.msra.mxu0 %v345
    %1103 = vmatprep.subr.mxu0 0.0
    %1104 = vmatpush1.msra.mxu0 %v346
    %1105 = vmatprep.subr.mxu0 0.0
    %1106 = vmatpush1.msra.mxu0 %v347
    %1107 = vmatprep.subr.mxu0 0.0
    %1108 = vmatpush1.msra.mxu0 %v348
    %1109 = vmatprep.subr.mxu0 0.0
    %1110 = vmatpush1.msra.mxu0 %v349
    %1111 = vmatprep.subr.mxu0 0.0
    %1112 = vmatpush1.msra.mxu0 %v350
    %1113 = vmatprep.subr.mxu0 0.0
    %1114 = vmatpush1.msra.mxu0 %v351
    %1115 = vmatprep.subr.mxu0 0.0
    %1116 = vmatpush1.msra.mxu0 %v352
    %1117 = vmatprep.subr.mxu0 0.0
    %1118 = vmatpush1.msra.mxu0 %v353
    %1119 = vmatprep.subr.mxu0 0.0
    %1120 = vmatpush1.msra.mxu0 %v354
    %1121 = vmatprep.subr.mxu0 0.0
    %1122 = vmatpush1.msra.mxu0 %v355
    %1123 = vmatprep.subr.mxu0 0.0
    %1124 = vmatpush1.msra.mxu0 %v356
    %1125 = vmatprep.subr.mxu0 0.0
    %1126 = vmatpush1.msra.mxu0 %v357
    %1127 = vmatprep.subr.mxu0 0.0
    %1128 = vmatpush1.msra.mxu0 %v358
    %1129 = vmatprep.subr.mxu0 0.0
    %1130 = vmatpush1.msra.mxu0 %v359
    %1131 = vmatprep.subr.mxu0 0.0
    %1132 = vmatpush1.msra.mxu0 %v360
    %1133 = vmatprep.subr.mxu0 0.0
    %1134 = vmatpush1.msra.mxu0 %v361
    %1135 = vmatprep.subr.mxu0 0.0
    %1136 = vmatpush1.msra.mxu0 %v362
    %1137 = vmatprep.subr.mxu0 0.0
    %1138 = vmatpush1.msra.mxu0 %v363
    %1139 = vmatprep.subr.mxu0 0.0
    %1140 = vmatpush1.msra.mxu0 %v364
    %1141 = vmatprep.subr.mxu0 0.0
    %1142 = vmatpush1.msra.mxu0 %v365
    %1143 = vmatprep.mubr.f32.mxu0 %v40
    %1144 = vmatmul.mubr.f32.gmra.mrb[0].mxu0 %v39
    %v1145 = vpop.f32.mrb[0].mxu0
    %v1146 = vadd.f32 %v1076, %v1145
    %v1147 = vpop.f32.mrb[0].mxu0
    %1148 = vdwg.mxu0
    %1149 = vmatprep.subr.mxu0 0.0
    %1150 = vmatpush1.msra.mxu0 %v366
    %1151 = vmatprep.subr.mxu0 0.0
    %1152 = vmatpush1.msra.mxu0 %v367
    %1153 = vmatprep.subr.mxu0 0.0
    %1154 = vmatpush1.msra.mxu0 %v368
    %1155 = vmatprep.subr.mxu0 0.0
    %1156 = vmatpush1.msra.mxu0 %v369
    %1157 = vmatprep.subr.mxu0 0.0
    %1158 = vmatpush1.msra.mxu0 %v370
    %1159 = vmatprep.subr.mxu0 0.0
    %1160 = vmatpush1.msra.mxu0 %v371
    %1161 = vmatprep.subr.mxu0 0.0
    %1162 = vmatpush1.msra.mxu0 %v372
    %1163 = vmatprep.subr.mxu0 0.0
    %1164 = vmatpush1.msra.mxu0 %v373
    %1165 = vmatprep.subr.mxu0 0.0
    %1166 = vmatpush1.msra.mxu0 %v374
    %1167 = vmatprep.subr.mxu0 0.0
    %1168 = vmatpush1.msra.mxu0 %v375
    %1169 = vmatprep.subr.mxu0 0.0
    %1170 = vmatpush1.msra.mxu0 %v376
    %1171 = vmatprep.subr.mxu0 0.0
    %1172 = vmatpush1.msra.mxu0 %v377
    %1173 = vmatprep.subr.mxu0 0.0
    %1174 = vmatpush1.msra.mxu0 %v378
    %1175 = vmatprep.subr.mxu0 0.0
    %1176 = vmatpush1.msra.mxu0 %v379
    %1177 = vmatprep.subr.mxu0 0.0
    %1178 = vmatpush1.msra.mxu0 %v380
    %1179 = vmatprep.subr.mxu0 0.0
    %1180 = vmatpush1.msra.mxu0 %v381
    %1181 = vmatprep.subr.mxu0 0.0
    %1182 = vmatpush1.msra.mxu0 %v382
    %1183 = vmatprep.subr.mxu0 0.0
    %1184 = vmatpush1.msra.mxu0 %v383
    %1185 = vmatprep.subr.mxu0 0.0
    %1186 = vmatpush1.msra.mxu0 %v384
    %1187 = vmatprep.subr.mxu0 0.0
    %1188 = vmatpush1.msra.mxu0 %v385
    %1189 = vmatprep.subr.mxu0 0.0
    %1190 = vmatpush1.msra.mxu0 %v386
    %1191 = vmatprep.subr.mxu0 0.0
    %1192 = vmatpush1.msra.mxu0 %v387
    %1193 = vmatprep.subr.mxu0 0.0
    %1194 = vmatpush1.msra.mxu0 %v388
    %1195 = vmatprep.subr.mxu0 0.0
    %1196 = vmatpush1.msra.mxu0 %v389
    %1197 = vmatprep.subr.mxu0 0.0
    %1198 = vmatpush1.msra.mxu0 %v390
    %1199 = vmatprep.subr.mxu0 0.0
    %1200 = vmatpush1.msra.mxu0 %v391
    %1201 = vmatprep.subr.mxu0 0.0
    %1202 = vmatpush1.msra.mxu0 %v392
    %1203 = vmatprep.subr.mxu0 0.0
    %1204 = vmatpush1.msra.mxu0 %v393
    %1205 = vmatprep.subr.mxu0 0.0
    %1206 = vmatpush1.msra.mxu0 %v394
    %1207 = vmatprep.subr.mxu0 0.0
    %1208 = vmatpush1.msra.mxu0 %v395
    %1209 = vmatprep.subr.mxu0 0.0
    %1210 = vmatpush1.msra.mxu0 %v396
    %1211 = vmatprep.subr.mxu0 0.0
    %1212 = vmatpush1.msra.mxu0 %v397
    %1213 = vmatprep.mubr.f32.mxu0 %v42
    %1214 = vmatmul.mubr.f32.gmra.mrb[0].mxu0 %v41
    %v1215 = vpop.f32.mrb[0].mxu0
    %v1216 = vadd.f32 %v1146, %v1215
    %v1217 = vpop.f32.mrb[0].mxu0
    %1218 = vdwg.mxu0
    %1219 = vmatprep.subr.mxu0 0.0
    %1220 = vmatpush1.msra.mxu0 %v398
    %1221 = vmatprep.subr.mxu0 0.0
    %1222 = vmatpush1.msra.mxu0 %v399
    %1223 = vmatprep.subr.mxu0 0.0
    %1224 = vmatpush1.msra.mxu0 %v400
    %1225 = vmatprep.subr.mxu0 0.0
    %1226 = vmatpush1.msra.mxu0 %v401
    %1227 = vmatprep.subr.mxu0 0.0
    %1228 = vmatpush1.msra.mxu0 %v402
    %1229 = vmatprep.subr.mxu0 0.0
    %1230 = vmatpush1.msra.mxu0 %v403
    %1231 = vmatprep.subr.mxu0 0.0
    %1232 = vmatpush1.msra.mxu0 %v404
    %1233 = vmatprep.subr.mxu0 0.0
    %1234 = vmatpush1.msra.mxu0 %v405
    %1235 = vmatprep.subr.mxu0 0.0
    %1236 = vmatpush1.msra.mxu0 %v406
    %1237 = vmatprep.subr.mxu0 0.0
    %1238 = vmatpush1.msra.mxu0 %v407
    %1239 = vmatprep.subr.mxu0 0.0
    %1240 = vmatpush1.msra.mxu0 %v408
    %1241 = vmatprep.subr.mxu0 0.0
    %1242 = vmatpush1.msra.mxu0 %v409
    %1243 = vmatprep.subr.mxu0 0.0
    %1244 = vmatpush1.msra.mxu0 %v410
    %1245 = vmatprep.subr.mxu0 0.0
    %1246 = vmatpush1.msra.mxu0 %v411
    %1247 = vmatprep.subr.mxu0 0.0
    %1248 = vmatpush1.msra.mxu0 %v412
    %1249 = vmatprep.subr.mxu0 0.0
    %1250 = vmatpush1.msra.mxu0 %v413
    %1251 = vmatprep.subr.mxu0 0.0
    %1252 = vmatpush1.msra.mxu0 %v414
    %1253 = vmatprep.subr.mxu0 0.0
    %1254 = vmatpush1.msra.mxu0 %v415
    %1255 = vmatprep.subr.mxu0 0.0
    %1256 = vmatpush1.msra.mxu0 %v416
    %1257 = vmatprep.subr.mxu0 0.0
    %1258 = vmatpush1.msra.mxu0 %v417
    %1259 = vmatprep.subr.mxu0 0.0
    %1260 = vmatpush1.msra.mxu0 %v418
    %1261 = vmatprep.subr.mxu0 0.0
    %1262 = vmatpush1.msra.mxu0 %v419
    %1263 = vmatprep.subr.mxu0 0.0
    %1264 = vmatpush1.msra.mxu0 %v420
    %1265 = vmatprep.subr.mxu0 0.0
    %1266 = vmatpush1.msra.mxu0 %v421
    %1267 = vmatprep.subr.mxu0 0.0
    %1268 = vmatpush1.msra.mxu0 %v422
    %1269 = vmatprep.subr.mxu0 0.0
    %1270 = vmatpush1.msra.mxu0 %v423
    %1271 = vmatprep.subr.mxu0 0.0
    %1272 = vmatpush1.msra.mxu0 %v424
    %1273 = vmatprep.subr.mxu0 0.0
    %1274 = vmatpush1.msra.mxu0 %v425
    %1275 = vmatprep.subr.mxu0 0.0
    %1276 = vmatpush1.msra.mxu0 %v426
    %1277 = vmatprep.subr.mxu0 0.0
    %1278 = vmatpush1.msra.mxu0 %v427
    %1279 = vmatprep.subr.mxu0 0.0
    %1280 = vmatpush1.msra.mxu0 %v428
    %1281 = vmatprep.subr.mxu0 0.0
    %1282 = vmatpush1.msra.mxu0 %v429
    %1283 = vmatprep.mubr.f32.mxu0 %v44
    %1284 = vmatmul.mubr.f32.gmra.mrb[0].mxu0 %v43
    %v1285 = vpop.f32.mrb[0].mxu0
    %v1286 = vadd.f32 %v1216, %v1285
    %v1287 = vpop.f32.mrb[0].mxu0
    %1288 = vdwg.mxu0
    %1289 = vmatprep.subr.mxu0 0.0
    %1290 = vmatpush1.msra.mxu0 %v430
    %1291 = vmatprep.subr.mxu0 0.0
    %1292 = vmatpush1.msra.mxu0 %v431
    %1293 = vmatprep.subr.mxu0 0.0
    %1294 = vmatpush1.msra.mxu0 %v432
    %1295 = vmatprep.subr.mxu0 0.0
    %1296 = vmatpush1.msra.mxu0 %v433
    %1297 = vmatprep.subr.mxu0 0.0
    %1298 = vmatpush1.msra.mxu0 %v434
    %1299 = vmatprep.subr.mxu0 0.0
    %1300 = vmatpush1.msra.mxu0 %v435
    %1301 = vmatprep.subr.mxu0 0.0
    %1302 = vmatpush1.msra.mxu0 %v436
    %1303 = vmatprep.subr.mxu0 0.0
    %1304 = vmatpush1.msra.mxu0 %v437
    %1305 = vmatprep.subr.mxu0 0.0
    %1306 = vmatpush1.msra.mxu0 0.0
    %1307 = vmatprep.subr.mxu0 0.0
    %1308 = vmatpush1.msra.mxu0 0.0
    %1309 = vmatprep.subr.mxu0 0.0
    %1310 = vmatpush1.msra.mxu0 0.0
    %1311 = vmatprep.subr.mxu0 0.0
    %1312 = vmatpush1.msra.mxu0 0.0
    %1313 = vmatprep.subr.mxu0 0.0
    %1314 = vmatpush1.msra.mxu0 0.0
    %1315 = vmatprep.subr.mxu0 0.0
    %1316 = vmatpush1.msra.mxu0 0.0
    %1317 = vmatprep.subr.mxu0 0.0
    %1318 = vmatpush1.msra.mxu0 0.0
    %1319 = vmatprep.subr.mxu0 0.0
    %1320 = vmatpush1.msra.mxu0 0.0
    %1321 = vmatprep.subr.mxu0 0.0
    %1322 = vmatpush1.msra.mxu0 0.0
    %1323 = vmatprep.subr.mxu0 0.0
    %1324 = vmatpush1.msra.mxu0 0.0
    %1325 = vmatprep.subr.mxu0 0.0
    %1326 = vmatpush1.msra.mxu0 0.0
    %1327 = vmatprep.subr.mxu0 0.0
    %1328 = vmatpush1.msra.mxu0 0.0
    %1329 = vmatprep.subr.mxu0 0.0
    %1330 = vmatpush1.msra.mxu0 0.0
    %1331 = vmatprep.subr.mxu0 0.0
    %1332 = vmatpush1.msra.mxu0 0.0
    %1333 = vmatprep.subr.mxu0 0.0
    %1334 = vmatpush1.msra.mxu0 0.0
    %1335 = vmatprep.subr.mxu0 0.0
    %1336 = vmatpush1.msra.mxu0 0.0
    %1337 = vmatprep.subr.mxu0 0.0
    %1338 = vmatpush1.msra.mxu0 0.0
    %1339 = vmatprep.subr.mxu0 0.0
    %1340 = vmatpush1.msra.mxu0 0.0
    %1341 = vmatprep.subr.mxu0 0.0
    %1342 = vmatpush1.msra.mxu0 0.0
    %1343 = vmatprep.subr.mxu0 0.0
    %1344 = vmatpush1.msra.mxu0 0.0
    %1345 = vmatprep.subr.mxu0 0.0
    %1346 = vmatpush1.msra.mxu0 0.0
    %1347 = vmatprep.subr.mxu0 0.0
    %1348 = vmatpush1.msra.mxu0 0.0
    %1349 = vmatprep.subr.mxu0 0.0
    %1350 = vmatpush1.msra.mxu0 0.0
    %1351 = vmatprep.subr.mxu0 0.0
    %1352 = vmatpush1.msra.mxu0 0.0
    %1353 = vmatprep.mubr.f32.mxu0 0.0
    %1354 = vmatmul.mubr.f32.gmra.mrb[0].mxu0 %v447
    %v1355 = vpop.f32.mrb[0].mxu0
    %v1356 = vadd.f32 %v1286, %v1355
    %v1357 = vpop.f32.mrb[0].mxu0
    %1358 = vdwg.mxu0
    %v1359 = vmax.f32 %v1356, 0.0
    %v1360 = vld [vmem:[%s3] sm:$0xff]
    %v1361 = vld [vmem:[%s3 + $0x8] sm:$0xff]
    %v1362 = vld [vmem:[%s3 + $0x10] sm:$0xff]
    %v1363 = vld [vmem:[%s3 + $0x18] sm:$0xff]
    %v1364 = vld [vmem:[%s3 + $0x20] sm:$0xff]
    %v1365 = vld [vmem:[%s3 + $0x28] sm:$0xff]
    %v1366 = vld [vmem:[%s3 + $0x30] sm:$0xff]
    %v1367 = vld [vmem:[%s3 + $0x38] sm:$0xff]
    %v1368 = vld [vmem:[%s3 + $0x40] sm:$0xff]
    %v1369 = vld [vmem:[%s3 + $0x48] sm:$0xff]
    %v1370 = vld [vmem:[%s3 + $0x50] sm:$0xff]
    %v1371 = vld [vmem:[%s3 + $0x58] sm:$0xff]
    %v1372 = vld [vmem:[%s3 + $0x60] sm:$0xff]
    %v1373 = vld [vmem:[%s3 + $0x68] sm:$0xff]
    %v1374 = vld [vmem:[%s3 + $0x70] sm:$0xff]
    %v1375 = vld [vmem:[%s3 + $0x78] sm:$0xff]
    %v1376 = vld [vmem:[%s4] sm:$0x1]
    %v1378 = vlaneseq
    %v1379 = vshrl.u32 %v1378, 7
    %v1380 = vsub.s32 0, %v1379
    %v1381 = vrot.slane %v1376, %v1380
    %1383 = vmatprep.subr.mxu0 0.0
    %1384 = vmatpush1.msra.mxu0 %v1360
    %1385 = vmatprep.subr.mxu0 0.0
    %1386 = vmatpush1.msra.mxu0 %v1361
    %1387 = vmatprep.subr.mxu0 0.0
    %1388 = vmatpush1.msra.mxu0 %v1362
    %1389 = vmatprep.subr.mxu0 0.0
    %1390 = vmatpush1.msra.mxu0 %v1363
    %1391 = vmatprep.subr.mxu0 0.0
    %1392 = vmatpush1.msra.mxu0 %v1364
    %1393 = vmatprep.subr.mxu0 0.0
    %1394 = vmatpush1.msra.mxu0 %v1365
    %1395 = vmatprep.subr.mxu0 0.0
    %1396 = vmatpush1.msra.mxu0 %v1366
    %1397 = vmatprep.subr.mxu0 0.0
    %1398 = vmatpush1.msra.mxu0 %v1367
    %1399 = vmatprep.subr.mxu0 0.0
    %1400 = vmatpush1.msra.mxu0 %v1368
    %1401 = vmatprep.subr.mxu0 0.0
    %1402 = vmatpush1.msra.mxu0 %v1369
    %1403 = vmatprep.subr.mxu0 0.0
    %1404 = vmatpush1.msra.mxu0 %v1370
    %1405 = vmatprep.subr.mxu0 0.0
    %1406 = vmatpush1.msra.mxu0 %v1371
    %1407 = vmatprep.subr.mxu0 0.0
    %1408 = vmatpush1.msra.mxu0 %v1372
    %1409 = vmatprep.subr.mxu0 0.0
    %1410 = vmatpush1.msra.mxu0 %v1373
    %1411 = vmatprep.subr.mxu0 0.0
    %1412 = vmatpush1.msra.mxu0 %v1374
    %1413 = vmatprep.subr.mxu0 0.0
    %1414 = vmatpush1.msra.mxu0 %v1375
    %1415 = vmatprep.subr.mxu0 0.0
    %1416 = vmatpush1.msra.mxu0 0.0
    %1417 = vmatprep.subr.mxu0 0.0
    %1418 = vmatpush1.msra.mxu0 0.0
    %1419 = vmatprep.subr.mxu0 0.0
    %1420 = vmatpush1.msra.mxu0 0.0
    %1421 = vmatprep.subr.mxu0 0.0
    %1422 = vmatpush1.msra.mxu0 0.0
    %1423 = vmatprep.subr.mxu0 0.0
    %1424 = vmatpush1.msra.mxu0 0.0
    %1425 = vmatprep.subr.mxu0 0.0
    %1426 = vmatpush1.msra.mxu0 0.0
    %1427 = vmatprep.subr.mxu0 0.0
    %1428 = vmatpush1.msra.mxu0 0.0
    %1429 = vmatprep.subr.mxu0 0.0
    %1430 = vmatpush1.msra.mxu0 0.0
    %1431 = vmatprep.subr.mxu0 0.0
    %1432 = vmatpush1.msra.mxu0 0.0
    %1433 = vmatprep.subr.mxu0 0.0
    %1434 = vmatpush1.msra.mxu0 0.0
    %1435 = vmatprep.subr.mxu0 0.0
    %1436 = vmatpush1.msra.mxu0 0.0
    %1437 = vmatprep.subr.mxu0 0.0
    %1438 = vmatpush1.msra.mxu0 0.0
    %1439 = vmatprep.subr.mxu0 0.0
    %1440 = vmatpush1.msra.mxu0 0.0
    %1441 = vmatprep.subr.mxu0 0.0
    %1442 = vmatpush1.msra.mxu0 0.0
    %1443 = vmatprep.subr.mxu0 0.0
    %1444 = vmatpush1.msra.mxu0 0.0
    %1445 = vmatprep.subr.mxu0 0.0
    %1446 = vmatpush1.msra.mxu0 0.0
    %1447 = vmatprep.mubr.f32.mxu0 0.0
    %1448 = vmatmul.mubr.f32.gmra.mrb[0].mxu0 %v1359
    %v1449 = vpop.f32.mrb[0].mxu0
    %v1450 = vadd.f32 %v1381, %v1449
    %v1451 = vpop.f32.mrb[0].mxu0
    %1452 = vdwg.mxu0
    %1453 = vst [vmem:[#allocation2] sm:$0xff] %v1450
    // Predicated region
    $region22: #{cnn_forward.3} parent=1 // pred_check
      _
    $region23: #{cnn_forward.3} parent=1 // pred_check_branch
      %1455 = sbr.rel (0) target = $region25
    $region24: #{cnn_forward.3} parent=1 // pred_region
      %s1457 = ssub.s32 128, 128
      %1458 = vsyncadd [#allocation3], %s1457
      %s1460 = sshll.u32 [#allocation2], 4
      %s1461 = int_to_ptr.vmem [resolvable:$true] %s1460
      %1463 = dma.vmem_to_hbm [thread:$0]  %s1461, 128, %s5, [#allocation3]
    $region25: #{cnn_forward.3} parent=1 // pred_fallthru
      _
    // Predicated region
    $region26: #{cnn_forward.3} parent=1 // pred_check
      _
    $region27: #{cnn_forward.3} parent=1 // pred_check_branch
      %1465 = sbr.rel (0) target = $region29
    $region28: #{cnn_forward.3} parent=1 // pred_region
      %1466 = dma.done [#allocation3], 128
    $region29: #{cnn_forward.3} parent=1 // pred_fallthru
      _
    %1467 = vsyncpa [#allocation3], 1

// kernel: cnn_forward.2
$region0: #{cnn_forward.2}
  #allocation0 [shape = 'u32[]', space=smem, size = 0x4, offset = 0x4, fixed_abs, tag = 'smem constant byte address 0x4 - core index']
  #allocation1 [shape = 'u32[144,128]{1,0:T(1,128)}', space=vmem, size = 0x12000, scoped, tag = 'internal scratch']
  #allocation2 [shape = 'f32[32,840]{1,0:T(8,128)}', space=vmem, size = 0x1c000, scoped, tag = 'scratch operand']
  #allocation3 [shape = 'f32[64,222]{1,0:T(8,128)}', space=vmem, size = 0x10000, scoped, tag = 'scratch operand']
  %s0 = inlined_call_operand.vmem [shape: f32[8,1,930], index: 0, kind: input, shape index: {}]
  %s1 = inlined_call_operand.vmem [shape: f32[32,9], index: 1, kind: input, shape index: {}]
  %s2 = inlined_call_operand.vmem [shape: f32[32,1], index: 2, kind: input, shape index: {}]
  %s3 = inlined_call_operand.vmem [shape: f32[9,64,32], index: 3, kind: input, shape index: {}]
  %s4 = inlined_call_operand.vmem [shape: f32[64,1], index: 4, kind: input, shape index: {}]
  %s5 = inlined_call_operand.vmem [shape: f32[807,256], index: 5, kind: input, shape index: {}]
  %s6 = inlined_call_operand.vmem [shape: f32[205,49], index: 6, kind: input, shape index: {}]
  %s7 = inlined_call_operand.vmem [shape: f32[8,64,49], index: 7, kind: output, shape index: {}]
  %s8 = sld [smem:[#allocation0]]
  $region61: #{cnn_forward.2} parent=0
    _
  %s10 = ssub.s32 1, %s8
  %s11 = scalar_select 0, %s10, %s8
  loop: start=0, step=1, limit=10
  $region2: #{cnn_forward.2} parent=0 // loop_pre_header
    _
  $region3: #{cnn_forward.2} parent=0 // loop_header
    %s13 = sphi 0, %s17
    %p14 = scmp.ge.s32.totalorder %s13, 10
    %s23 = sphi 0, %s25
    %s26 = sphi 0, %s23
    %s27 = sphi 0, %s26
    %s43 = sphi 0, %s27
    %s47 = sphi 0, %s47
    %s49 = sphi 0, %s47
    %s50 = sphi 0, %s49
    %s64 = sphi 0, %s50
    %s68 = sphi 0, %s68
    %s70 = sphi 0, %s68
    %s71 = sphi 0, %s70
    %s85 = sphi 0, %s71
    %s89 = sphi 0, %s89
    %s91 = sphi 0, %s89
    %s92 = sphi 0, %s91
    %s106 = sphi 0, %s92
    %s110 = sphi 0, %s110
    %s112 = sphi 0, %s110
    %s113 = sphi 0, %s112
    %s127 = sphi 0, %s113
    %s131 = sphi 0, %s131
    %s133 = sphi 0, %s131
    %s134 = sphi 0, %s133
    %s148 = sphi 0, %s134
    %s152 = sphi 0, %s152
    %s154 = sphi 0, %s152
    %s155 = sphi 0, %s154
    %s169 = sphi 0, %s155
    %s175 = sphi 0, %s177
    %s178 = sphi 0, %s175
    %s179 = sphi 0, %s178
    %s195 = sphi 0, %s179
  $region4: #{cnn_forward.2} parent=0 // loop_header_branch
    %16 = sbr.rel (%p14) target = $region8
  $region5: #{cnn_forward.2} parent=0 // loop_body
    %s18 = ssub.s32 %s13, 1
    %s19 = ssub.s32 %s13, 2
    %s20 = sadd.s32 %s13, 1
    %s21 = ssub.s32 %s13, %s20
    %p22 = scmp.eq.s32.totalorder %s21, 0
    %s24 = sadd.s32 %s23, 1
    %s25 = scalar_select %p22, %s23, %s24
    %p28 = pneg %p22
    %p29 = scmp.eq.s32.totalorder %s13, 7
    %p30 = por %p28, %p29
    %p31 = scmp.ne.s32.totalorder %s23, %s26
    %p32 = scmp.eq.s32.totalorder %s13, 0
    %p33 = por %p31, %p32
    %p34 = scmp.ne.s32.totalorder %s23, %s26
    %p35 = scmp.eq.s32.totalorder %s18, 7
    %p36 = por %p34, %p35
    %p37 = scmp.ne.s32.totalorder %s26, %s27
    %p38 = scmp.eq.s32.totalorder %s18, 0
    %p39 = por %p37, %p38
    %p40 = scmp.ne.s32.totalorder %s26, %s27
    %p41 = scmp.eq.s32.totalorder %s19, 7
    %p42 = por %p40, %p41
    %p44 = scmp.ne.s32.totalorder %s27, %s43
    %p45 = scmp.eq.s32.totalorder %s19, 0
    %p46 = por %p44, %p45
    %s48 = sadd.s32 %s47, 1
    %p51 = scmp.eq.s32.totalorder %s13, 7
    %p52 = scmp.ne.s32.totalorder %s47, %s49
    %p53 = scmp.eq.s32.totalorder %s13, 0
    %p54 = por %p52, %p53
    %p55 = scmp.ne.s32.totalorder %s47, %s49
    %p56 = scmp.eq.s32.totalorder %s18, 7
    %p57 = por %p55, %p56
    %p58 = scmp.ne.s32.totalorder %s49, %s50
    %p59 = scmp.eq.s32.totalorder %s18, 0
    %p60 = por %p58, %p59
    %p61 = scmp.ne.s32.totalorder %s49, %s50
    %p62 = scmp.eq.s32.totalorder %s19, 7
    %p63 = por %p61, %p62
    %p65 = scmp.ne.s32.totalorder %s50, %s64
    %p66 = scmp.eq.s32.totalorder %s19, 0
    %p67 = por %p65, %p66
    %s69 = sadd.s32 %s68, 1
    %p72 = scmp.eq.s32.totalorder %s13, 7
    %p73 = scmp.ne.s32.totalorder %s68, %s70
    %p74 = scmp.eq.s32.totalorder %s13, 0
    %p75 = por %p73, %p74
    %p76 = scmp.ne.s32.totalorder %s68, %s70
    %p77 = scmp.eq.s32.totalorder %s18, 7
    %p78 = por %p76, %p77
    %p79 = scmp.ne.s32.totalorder %s70, %s71
    %p80 = scmp.eq.s32.totalorder %s18, 0
    %p81 = por %p79, %p80
    %p82 = scmp.ne.s32.totalorder %s70, %s71
    %p83 = scmp.eq.s32.totalorder %s19, 7
    %p84 = por %p82, %p83
    %p86 = scmp.ne.s32.totalorder %s71, %s85
    %p87 = scmp.eq.s32.totalorder %s19, 0
    %p88 = por %p86, %p87
    %s90 = sadd.s32 %s89, 1
    %p93 = scmp.eq.s32.totalorder %s13, 7
    %p94 = scmp.ne.s32.totalorder %s89, %s91
    %p95 = scmp.eq.s32.totalorder %s13, 0
    %p96 = por %p94, %p95
    %p97 = scmp.ne.s32.totalorder %s89, %s91
    %p98 = scmp.eq.s32.totalorder %s18, 7
    %p99 = por %p97, %p98
    %p100 = scmp.ne.s32.totalorder %s91, %s92
    %p101 = scmp.eq.s32.totalorder %s18, 0
    %p102 = por %p100, %p101
    %p103 = scmp.ne.s32.totalorder %s91, %s92
    %p104 = scmp.eq.s32.totalorder %s19, 7
    %p105 = por %p103, %p104
    %p107 = scmp.ne.s32.totalorder %s92, %s106
    %p108 = scmp.eq.s32.totalorder %s19, 0
    %p109 = por %p107, %p108
    %s111 = sadd.s32 %s110, 1
    %p114 = scmp.eq.s32.totalorder %s13, 7
    %p115 = scmp.ne.s32.totalorder %s110, %s112
    %p116 = scmp.eq.s32.totalorder %s13, 0
    %p117 = por %p115, %p116
    %p118 = scmp.ne.s32.totalorder %s110, %s112
    %p119 = scmp.eq.s32.totalorder %s18, 7
    %p120 = por %p118, %p119
    %p121 = scmp.ne.s32.totalorder %s112, %s113
    %p122 = scmp.eq.s32.totalorder %s18, 0
    %p123 = por %p121, %p122
    %p124 = scmp.ne.s32.totalorder %s112, %s113
    %p125 = scmp.eq.s32.totalorder %s19, 7
    %p126 = por %p124, %p125
    %p128 = scmp.ne.s32.totalorder %s113, %s127
    %p129 = scmp.eq.s32.totalorder %s19, 0
    %p130 = por %p128, %p129
    %s132 = sadd.s32 %s131, 1
    %p135 = scmp.eq.s32.totalorder %s13, 7
    %p136 = scmp.ne.s32.totalorder %s131, %s133
    %p137 = scmp.eq.s32.totalorder %s13, 0
    %p138 = por %p136, %p137
    %p139 = scmp.ne.s32.totalorder %s131, %s133
    %p140 = scmp.eq.s32.totalorder %s18, 7
    %p141 = por %p139, %p140
    %p142 = scmp.ne.s32.totalorder %s133, %s134
    %p143 = scmp.eq.s32.totalorder %s18, 0
    %p144 = por %p142, %p143
    %p145 = scmp.ne.s32.totalorder %s133, %s134
    %p146 = scmp.eq.s32.totalorder %s19, 7
    %p147 = por %p145, %p146
    %p149 = scmp.ne.s32.totalorder %s134, %s148
    %p150 = scmp.eq.s32.totalorder %s19, 0
    %p151 = por %p149, %p150
    %s153 = sadd.s32 %s152, 1
    %p156 = scmp.eq.s32.totalorder %s13, 7
    %p157 = scmp.ne.s32.totalorder %s152, %s154
    %p158 = scmp.eq.s32.totalorder %s13, 0
    %p159 = por %p157, %p158
    %p160 = scmp.ne.s32.totalorder %s152, %s154
    %p161 = scmp.eq.s32.totalorder %s18, 7
    %p162 = por %p160, %p161
    %p163 = scmp.ne.s32.totalorder %s154, %s155
    %p164 = scmp.eq.s32.totalorder %s18, 0
    %p165 = por %p163, %p164
    %p166 = scmp.ne.s32.totalorder %s154, %s155
    %p167 = scmp.eq.s32.totalorder %s19, 7
    %p168 = por %p166, %p167
    %p170 = scmp.ne.s32.totalorder %s155, %s169
    %p171 = scmp.eq.s32.totalorder %s19, 0
    %p172 = por %p170, %p171
    %s173 = ssub.s32 %s13, %s20
    %p174 = scmp.eq.s32.totalorder %s173, 0
    %s176 = sadd.s32 %s175, 1
    %s177 = scalar_select %p174, %s175, %s176
    %p180 = pneg %p174
    %p181 = scmp.eq.s32.totalorder %s13, 7
    %p182 = por %p180, %p181
    %p183 = scmp.ne.s32.totalorder %s175, %s178
    %p184 = scmp.eq.s32.totalorder %s13, 0
    %p185 = por %p183, %p184
    %p186 = scmp.ne.s32.totalorder %s175, %s178
    %p187 = scmp.eq.s32.totalorder %s18, 7
    %p188 = por %p186, %p187
    %p189 = scmp.ne.s32.totalorder %s178, %s179
    %p190 = scmp.eq.s32.totalorder %s18, 0
    %p191 = por %p189, %p190
    %p192 = scmp.ne.s32.totalorder %s178, %s179
    %p193 = scmp.eq.s32.totalorder %s19, 7
    %p194 = por %p192, %p193
    %p196 = scmp.ne.s32.totalorder %s179, %s195
    %p197 = scmp.eq.s32.totalorder %s19, 0
    %p198 = por %p196, %p197
    %p199 = scmp.le.s32.totalorder 1, %s13
    %p200 = scmp.lt.s32.totalorder %s13, 9
    %p201 = pnand %p199, %p200
    %p202 = pneg %p201
    // Predicated region
    $region9: #{cnn_forward.2} parent=5 // pred_check
      _
    $region10: #{cnn_forward.2} parent=5 // pred_check_branch
      %204 = sbr.rel (%p201) target = $region12
    $region11: #{cnn_forward.2} parent=5 // pred_region
      %s205 = ssub.s32 %s13, 1
      // Predicated region
      $region13: #{cnn_forward.2} parent=11 // pred_check
        %p206 = pneg %p60
      $region14: #{cnn_forward.2} parent=11 // pred_check_branch
        %208 = sbr.rel (%p206) target = $region16
      $region15: #{cnn_forward.2} parent=11 // pred_region
        _
      $region16: #{cnn_forward.2} parent=11 // pred_fallthru
        _
      // Predicated region
      $region17: #{cnn_forward.2} parent=11 // pred_check
        %p209 = pneg %p81
      $region18: #{cnn_forward.2} parent=11 // pred_check_branch
        %211 = sbr.rel (%p209) target = $region20
      $region19: #{cnn_forward.2} parent=11 // pred_region
        _
      $region20: #{cnn_forward.2} parent=11 // pred_fallthru
        _
      // Predicated region
      $region21: #{cnn_forward.2} parent=11 // pred_check
        %p212 = pneg %p102
      $region22: #{cnn_forward.2} parent=11 // pred_check_branch
        %214 = sbr.rel (%p212) target = $region24
      $region23: #{cnn_forward.2} parent=11 // pred_region
        _
      $region24: #{cnn_forward.2} parent=11 // pred_fallthru
        _
      // Predicated region
      $region25: #{cnn_forward.2} parent=11 // pred_check
        %p215 = pneg %p123
      $region26: #{cnn_forward.2} parent=11 // pred_check_branch
        %217 = sbr.rel (%p215) target = $region28
      $region27: #{cnn_forward.2} parent=11 // pred_region
        _
      $region28: #{cnn_forward.2} parent=11 // pred_fallthru
        _
      // Predicated region
      $region29: #{cnn_forward.2} parent=11 // pred_check
        %p218 = pneg %p144
      $region30: #{cnn_forward.2} parent=11 // pred_check_branch
        %220 = sbr.rel (%p218) target = $region32
      $region31: #{cnn_forward.2} parent=11 // pred_region
        _
      $region32: #{cnn_forward.2} parent=11 // pred_fallthru
        _
      // Predicated region
      $region33: #{cnn_forward.2} parent=11 // pred_check
        %p221 = pneg %p165
      $region34: #{cnn_forward.2} parent=11 // pred_check_branch
        %223 = sbr.rel (%p221) target = $region36
      $region35: #{cnn_forward.2} parent=11 // pred_region
        _
      $region36: #{cnn_forward.2} parent=11 // pred_fallthru
        _
    $region12: #{cnn_forward.2} parent=5 // pred_fallthru
      _
    %p224 = scmp.lt.s32.totalorder %s13, 8
    // Predicated region
    $region37: #{cnn_forward.2} parent=5 // pred_check
      %p225 = pneg %p224
    $region38: #{cnn_forward.2} parent=5 // pred_check_branch
      %227 = sbr.rel (%p225) target = $region40
    $region39: #{cnn_forward.2} parent=5 // pred_region
      // Predicated region
      $region41: #{cnn_forward.2} parent=39 // pred_check
        %p228 = pneg %p33
      $region42: #{cnn_forward.2} parent=39 // pred_check_branch
        %230 = sbr.rel (%p228) target = $region44
      $region43: #{cnn_forward.2} parent=39 // pred_region
        %p231 = scmp.lt.s32.totalorder %s13, 7
        %s232 = scalar_select %p231, %s13, 7
        %s233 = smul.addr %s232, 8
        %s234 = scalar_lea.vmem %s0, %s233
      $region44: #{cnn_forward.2} parent=39 // pred_fallthru
        _
    $region40: #{cnn_forward.2} parent=5 // pred_fallthru
      _
    %p235 = scmp.le.s32.totalorder 1, %s13
    %p236 = scmp.lt.s32.totalorder %s13, 9
    %p237 = pnand %p235, %p236
    %p238 = pneg %p237
    // Predicated region
    $region45: #{cnn_forward.2} parent=5 // pred_check
      _
    $region46: #{cnn_forward.2} parent=5 // pred_check_branch
      %240 = sbr.rel (%p237) target = $region48
    $region47: #{cnn_forward.2} parent=5 // pred_region
      %s241 = ssub.s32 %s13, 1
      %p242 = scmp.lt.s32.totalorder %s18, 7
      %s243 = scalar_select %p242, %s18, 7
      %s244 = smul.addr %s243, 8
      %s245 = scalar_lea.vmem %s0, %s244
      %p246 = pneg %p39
      %p247 = pneg %p36
      %p248 = pneg %p60
      %p249 = pneg %p57
      %p250 = pneg %p81
      %p251 = pneg %p78
      %p252 = pneg %p102
      %p253 = pneg %p99
      %p254 = pneg %p123
      %p255 = pneg %p120
      %p256 = pneg %p144
      %p257 = pneg %p141
      %p258 = pneg %p165
      %p259 = pneg %p162
      %p260 = pneg %p191
      %p261 = pneg %p188
      %p262 = scmp.lt.s32.totalorder %s18, 7
      %s263 = scalar_select %p262, %s18, 7
      %s264 = smul.addr %s263, 8
      %s265 = smul.addr %s264, 8
      %s266 = scalar_lea.vmem %s7, %s265
      %p267 = scmp.lt.s32.totalorder %s18, 7
      %s268 = scalar_select %p267, %s18, 7
      %s269 = smul.addr %s268, 8
      %s270 = scalar_lea.vmem %s0, %s269
      %p271 = scmp.lt.s32.totalorder %s18, 7
      %s272 = scalar_select %p271, %s18, 7
      %s273 = smul.addr %s272, 8
      %s274 = smul.addr %s273, 8
      %s275 = scalar_lea.vmem %s7, %s274
      %v276 = vld [vmem:[%s270] sm:$0xff]
      %v277 = vld [vmem:[%s1] sm:$0xff]
      %v278 = vld [vmem:[%s1 + $0x8] sm:$0xff]
      %v279 = vld [vmem:[%s1 + $0x10] sm:$0xff]
      %v280 = vld [vmem:[%s1 + $0x18] sm:$0xff]
      %282 = vset.pattern.permute.xlu0 0
      %283 = vperm.xlu0 %282, %v277
      %v284 = vpop.permute.xlu0 %283
      %287 = vset.pattern.permute.xlu0 0
      %288 = vperm.xlu0 %287, %v278
      %v289 = vpop.permute.xlu0 %288
      %292 = vset.pattern.permute.xlu0 0
      %293 = vperm.xlu0 %292, %v279
      %v294 = vpop.permute.xlu0 %293
      %297 = vset.pattern.permute.xlu0 0
      %298 = vperm.xlu0 %297, %v280
      %v299 = vpop.permute.xlu0 %298
      %v302 = vlaneseq
      %v303 = vshrl.u32 %v302, 7
      %v304 = vsub.s32 0, %v303
      %v305 = vrot.slane %v276, %v304
      %v306 = vlaneseq
      %v307 = vshrl.u32 %v306, 7
      %v308 = vsub.s32 1, %v307
      %v309 = vrot.slane %v276, %v308
      %v310 = vlaneseq
      %v311 = vshrl.u32 %v310, 7
      %v312 = vsub.s32 2, %v311
      %v313 = vrot.slane %v276, %v312
      %v314 = vlaneseq
      %v315 = vshrl.u32 %v314, 7
      %v316 = vsub.s32 3, %v315
      %v317 = vrot.slane %v276, %v316
      %v318 = vlaneseq
      %v319 = vshrl.u32 %v318, 7
      %v320 = vsub.s32 4, %v319
      %v321 = vrot.slane %v276, %v320
      %v322 = vlaneseq
      %v323 = vshrl.u32 %v322, 7
      %v324 = vsub.s32 5, %v323
      %v325 = vrot.slane %v276, %v324
      %v326 = vlaneseq
      %v327 = vshrl.u32 %v326, 7
      %v328 = vsub.s32 6, %v327
      %v329 = vrot.slane %v276, %v328
      %v337 = vmul.f32 %v284, %v305
      %v338 = vmul.f32 %v284, %v309
      %v339 = vmul.f32 %v284, %v313
      %v340 = vmul.f32 %v284, %v317
      %v341 = vmul.f32 %v284, %v321
      %v342 = vmul.f32 %v284, %v325
      %v343 = vmul.f32 %v284, %v329
      %v344 = vmul.f32 %v289, %v305
      %v345 = vmul.f32 %v289, %v309
      %v346 = vmul.f32 %v289, %v313
      %v347 = vmul.f32 %v289, %v317
      %v348 = vmul.f32 %v289, %v321
      %v349 = vmul.f32 %v289, %v325
      %v350 = vmul.f32 %v289, %v329
      %v351 = vmul.f32 %v294, %v305
      %v352 = vmul.f32 %v294, %v309
      %v353 = vmul.f32 %v294, %v313
      %v354 = vmul.f32 %v294, %v317
      %v355 = vmul.f32 %v294, %v321
      %v356 = vmul.f32 %v294, %v325
      %v357 = vmul.f32 %v294, %v329
      %v358 = vmul.f32 %v299, %v305
      %v359 = vmul.f32 %v299, %v309
      %v360 = vmul.f32 %v299, %v313
      %v361 = vmul.f32 %v299, %v317
      %v362 = vmul.f32 %v299, %v321
      %v363 = vmul.f32 %v299, %v325
      %v364 = vmul.f32 %v299, %v329
      %365 = vset.pattern.permute.xlu0 1
      %366 = vperm.xlu0 %365, %v277
      %v367 = vpop.permute.xlu0 %366
      %369 = vset.pattern.permute.xlu0 1
      %370 = vperm.xlu0 %369, %v278
      %v371 = vpop.permute.xlu0 %370
      %373 = vset.pattern.permute.xlu0 1
      %374 = vperm.xlu0 %373, %v279
      %v375 = vpop.permute.xlu0 %374
      %377 = vset.pattern.permute.xlu0 1
      %378 = vperm.xlu0 %377, %v280
      %v379 = vpop.permute.xlu0 %378
      %v381 = vmul.f32 %v367, %v305
      %v382 = vmul.f32 %v367, %v309
      %v383 = vmul.f32 %v367, %v313
      %v384 = vmul.f32 %v367, %v317
      %v385 = vmul.f32 %v367, %v321
      %v386 = vmul.f32 %v367, %v325
      %v387 = vmul.f32 %v367, %v329
      %v388 = vmul.f32 %v371, %v305
      %v389 = vmul.f32 %v371, %v309
      %v390 = vmul.f32 %v371, %v313
      %v391 = vmul.f32 %v371, %v317
      %v392 = vmul.f32 %v371, %v321
      %v393 = vmul.f32 %v371, %v325
      %v394 = vmul.f32 %v371, %v329
      %v395 = vmul.f32 %v375, %v305
      %v396 = vmul.f32 %v375, %v309
      %v397 = vmul.f32 %v375, %v313
      %v398 = vmul.f32 %v375, %v317
      %v399 = vmul.f32 %v375, %v321
      %v400 = vmul.f32 %v375, %v325
      %v401 = vmul.f32 %v375, %v329
      %v402 = vmul.f32 %v379, %v305
      %v403 = vmul.f32 %v379, %v309
      %v404 = vmul.f32 %v379, %v313
      %v405 = vmul.f32 %v379, %v317
      %v406 = vmul.f32 %v379, %v321
      %v407 = vmul.f32 %v379, %v325
      %v408 = vmul.f32 %v379, %v329
      %437 = vrot.lane.b32.xlu0 %v381, 127
      %v438 = vpop.permute.xlu0 %437
      %439 = vrot.lane.b32.xlu0 %v382, 127
      %v440 = vpop.permute.xlu0 %439
      %441 = vrot.lane.b32.xlu0 %v383, 127
      %v442 = vpop.permute.xlu0 %441
      %443 = vrot.lane.b32.xlu0 %v384, 127
      %v444 = vpop.permute.xlu0 %443
      %445 = vrot.lane.b32.xlu0 %v385, 127
      %v446 = vpop.permute.xlu0 %445
      %447 = vrot.lane.b32.xlu0 %v386, 127
      %v448 = vpop.permute.xlu0 %447
      %449 = vrot.lane.b32.xlu0 %v387, 127
      %v450 = vpop.permute.xlu0 %449
      %451 = vrot.lane.b32.xlu0 %v388, 127
      %v452 = vpop.permute.xlu0 %451
      %453 = vrot.lane.b32.xlu0 %v389, 127
      %v454 = vpop.permute.xlu0 %453
      %455 = vrot.lane.b32.xlu0 %v390, 127
      %v456 = vpop.permute.xlu0 %455
      %457 = vrot.lane.b32.xlu0 %v391, 127
      %v458 = vpop.permute.xlu0 %457
      %459 = vrot.lane.b32.xlu0 %v392, 127
      %v460 = vpop.permute.xlu0 %459
      %461 = vrot.lane.b32.xlu0 %v393, 127
      %v462 = vpop.permute.xlu0 %461
      %463 = vrot.lane.b32.xlu0 %v394, 127
      %v464 = vpop.permute.xlu0 %463
      %465 = vrot.lane.b32.xlu0 %v395, 127
      %v466 = vpop.permute.xlu0 %465
      %467 = vrot.lane.b32.xlu0 %v396, 127
      %v468 = vpop.permute.xlu0 %467
      %469 = vrot.lane.b32.xlu0 %v397, 127
      %v470 = vpop.permute.xlu0 %469
      %471 = vrot.lane.b32.xlu0 %v398, 127
      %v472 = vpop.permute.xlu0 %471
      %473 = vrot.lane.b32.xlu0 %v399, 127
      %v474 = vpop.permute.xlu0 %473
      %475 = vrot.lane.b32.xlu0 %v400, 127
      %v476 = vpop.permute.xlu0 %475
      %477 = vrot.lane.b32.xlu0 %v401, 127
      %v478 = vpop.permute.xlu0 %477
      %479 = vrot.lane.b32.xlu0 %v402, 127
      %v480 = vpop.permute.xlu0 %479
      %481 = vrot.lane.b32.xlu0 %v403, 127
      %v482 = vpop.permute.xlu0 %481
      %483 = vrot.lane.b32.xlu0 %v404, 127
      %v484 = vpop.permute.xlu0 %483
      %485 = vrot.lane.b32.xlu0 %v405, 127
      %v486 = vpop.permute.xlu0 %485
      %487 = vrot.lane.b32.xlu0 %v406, 127
      %v488 = vpop.permute.xlu0 %487
      %489 = vrot.lane.b32.xlu0 %v407, 127
      %v490 = vpop.permute.xlu0 %489
      %491 = vrot.lane.b32.xlu0 %v408, 127
      %v492 = vpop.permute.xlu0 %491
      %vm493 = vcmask 1039360
      %v494 = vsel %vm493, %v438, %v440
      %v495 = vsel %vm493, %v440, %v442
      %v496 = vsel %vm493, %v442, %v444
      %v497 = vsel %vm493, %v444, %v446
      %v498 = vsel %vm493, %v446, %v448
      %v499 = vsel %vm493, %v448, %v450
      %v500 = vsel %vm493, %v452, %v454
      %v501 = vsel %vm493, %v454, %v456
      %v502 = vsel %vm493, %v456, %v458
      %v503 = vsel %vm493, %v458, %v460
      %v504 = vsel %vm493, %v460, %v462
      %v505 = vsel %vm493, %v462, %v464
      %v506 = vsel %vm493, %v466, %v468
      %v507 = vsel %vm493, %v468, %v470
      %v508 = vsel %vm493, %v470, %v472
      %v509 = vsel %vm493, %v472, %v474
      %v510 = vsel %vm493, %v474, %v476
      %v511 = vsel %vm493, %v476, %v478
      %v512 = vsel %vm493, %v480, %v482
      %v513 = vsel %vm493, %v482, %v484
      %v514 = vsel %vm493, %v484, %v486
      %v515 = vsel %vm493, %v486, %v488
      %v516 = vsel %vm493, %v488, %v490
      %v517 = vsel %vm493, %v490, %v492
      %v546 = vadd.f32 %v337, %v494
      %v547 = vadd.f32 %v338, %v495
      %v548 = vadd.f32 %v339, %v496
      %v549 = vadd.f32 %v340, %v497
      %v550 = vadd.f32 %v341, %v498
      %v551 = vadd.f32 %v342, %v499
      %v552 = vadd.f32 %v343, %v450
      %v553 = vadd.f32 %v344, %v500
      %v554 = vadd.f32 %v345, %v501
      %v555 = vadd.f32 %v346, %v502
      %v556 = vadd.f32 %v347, %v503
      %v557 = vadd.f32 %v348, %v504
      %v558 = vadd.f32 %v349, %v505
      %v559 = vadd.f32 %v350, %v464
      %v560 = vadd.f32 %v351, %v506
      %v561 = vadd.f32 %v352, %v507
      %v562 = vadd.f32 %v353, %v508
      %v563 = vadd.f32 %v354, %v509
      %v564 = vadd.f32 %v355, %v510
      %v565 = vadd.f32 %v356, %v511
      %v566 = vadd.f32 %v357, %v478
      %v567 = vadd.f32 %v358, %v512
      %v568 = vadd.f32 %v359, %v513
      %v569 = vadd.f32 %v360, %v514
      %v570 = vadd.f32 %v361, %v515
      %v571 = vadd.f32 %v362, %v516
      %v572 = vadd.f32 %v363, %v517
      %v573 = vadd.f32 %v364, %v492
      %574 = vset.pattern.permute.xlu0 2
      %575 = vperm.xlu0 %574, %v277
      %v576 = vpop.permute.xlu0 %575
      %578 = vset.pattern.permute.xlu0 2
      %579 = vperm.xlu0 %578, %v278
      %v580 = vpop.permute.xlu0 %579
      %582 = vset.pattern.permute.xlu0 2
      %583 = vperm.xlu0 %582, %v279
      %v584 = vpop.permute.xlu0 %583
      %586 = vset.pattern.permute.xlu0 2
      %587 = vperm.xlu0 %586, %v280
      %v588 = vpop.permute.xlu0 %587
      %v590 = vmul.f32 %v576, %v305
      %v591 = vmul.f32 %v576, %v309
      %v592 = vmul.f32 %v576, %v313
      %v593 = vmul.f32 %v576, %v317
      %v594 = vmul.f32 %v576, %v321
      %v595 = vmul.f32 %v576, %v325
      %v596 = vmul.f32 %v576, %v329
      %v597 = vmul.f32 %v580, %v305
      %v598 = vmul.f32 %v580, %v309
      %v599 = vmul.f32 %v580, %v313
      %v600 = vmul.f32 %v580, %v317
      %v601 = vmul.f32 %v580, %v321
      %v602 = vmul.f32 %v580, %v325
      %v603 = vmul.f32 %v580, %v329
      %v604 = vmul.f32 %v584, %v305
      %v605 = vmul.f32 %v584, %v309
      %v606 = vmul.f32 %v584, %v313
      %v607 = vmul.f32 %v584, %v317
      %v608 = vmul.f32 %v584, %v321
      %v609 = vmul.f32 %v584, %v325
      %v610 = vmul.f32 %v584, %v329
      %v611 = vmul.f32 %v588, %v305
      %v612 = vmul.f32 %v588, %v309
      %v613 = vmul.f32 %v588, %v313
      %v614 = vmul.f32 %v588, %v317
      %v615 = vmul.f32 %v588, %v321
      %v616 = vmul.f32 %v588, %v325
      %v617 = vmul.f32 %v588, %v329
      %646 = vrot.lane.b32.xlu0 %v590, 126
      %v647 = vpop.permute.xlu0 %646
      %648 = vrot.lane.b32.xlu0 %v591, 126
      %v649 = vpop.permute.xlu0 %648
      %650 = vrot.lane.b32.xlu0 %v592, 126
      %v651 = vpop.permute.xlu0 %650
      %652 = vrot.lane.b32.xlu0 %v593, 126
      %v653 = vpop.permute.xlu0 %652
      %654 = vrot.lane.b32.xlu0 %v594, 126
      %v655 = vpop.permute.xlu0 %654
      %656 = vrot.lane.b32.xlu0 %v595, 126
      %v657 = vpop.permute.xlu0 %656
      %658 = vrot.lane.b32.xlu0 %v596, 126
      %v659 = vpop.permute.xlu0 %658
      %660 = vrot.lane.b32.xlu0 %v597, 126
      %v661 = vpop.permute.xlu0 %660
      %662 = vrot.lane.b32.xlu0 %v598, 126
      %v663 = vpop.permute.xlu0 %662
      %664 = vrot.lane.b32.xlu0 %v599, 126
      %v665 = vpop.permute.xlu0 %664
      %666 = vrot.lane.b32.xlu0 %v600, 126
      %v667 = vpop.permute.xlu0 %666
      %668 = vrot.lane.b32.xlu0 %v601, 126
      %v669 = vpop.permute.xlu0 %668
      %670 = vrot.lane.b32.xlu0 %v602, 126
      %v671 = vpop.permute.xlu0 %670
      %672 = vrot.lane.b32.xlu0 %v603, 126
      %v673 = vpop.permute.xlu0 %672
      %674 = vrot.lane.b32.xlu0 %v604, 126
      %v675 = vpop.permute.xlu0 %674
      %676 = vrot.lane.b32.xlu0 %v605, 126
      %v677 = vpop.permute.xlu0 %676
      %678 = vrot.lane.b32.xlu0 %v606, 126
      %v679 = vpop.permute.xlu0 %678
      %680 = vrot.lane.b32.xlu0 %v607, 126
      %v681 = vpop.permute.xlu0 %680
      %682 = vrot.lane.b32.xlu0 %v608, 126
      %v683 = vpop.permute.xlu0 %682
      %684 = vrot.lane.b32.xlu0 %v609, 126
      %v685 = vpop.permute.xlu0 %684
      %686 = vrot.lane.b32.xlu0 %v610, 126
      %v687 = vpop.permute.xlu0 %686
      %688 = vrot.lane.b32.xlu0 %v611, 126
      %v689 = vpop.permute.xlu0 %688
      %690 = vrot.lane.b32.xlu0 %v612, 126
      %v691 = vpop.permute.xlu0 %690
      %692 = vrot.lane.b32.xlu0 %v613, 126
      %v693 = vpop.permute.xlu0 %692
      %694 = vrot.lane.b32.xlu0 %v614, 126
      %v695 = vpop.permute.xlu0 %694
      %696 = vrot.lane.b32.xlu0 %v615, 126
      %v697 = vpop.permute.xlu0 %696
      %698 = vrot.lane.b32.xlu0 %v616, 126
      %v699 = vpop.permute.xlu0 %698
      %700 = vrot.lane.b32.xlu0 %v617, 126
      %v701 = vpop.permute.xlu0 %700
      %vm702 = vcmask 1031168
      %v703 = vsel %vm702, %v647, %v649
      %v704 = vsel %vm702, %v649, %v651
      %v705 = vsel %vm702, %v651, %v653
      %v706 = vsel %vm702, %v653, %v655
      %v707 = vsel %vm702, %v655, %v657
      %v708 = vsel %vm702, %v657, %v659
      %v709 = vsel %vm702, %v661, %v663
      %v710 = vsel %vm702, %v663, %v665
      %v711 = vsel %vm702, %v665, %v667
      %v712 = vsel %vm702, %v667, %v669
      %v713 = vsel %vm702, %v669, %v671
      %v714 = vsel %vm702, %v671, %v673
      %v715 = vsel %vm702, %v675, %v677
      %v716 = vsel %vm702, %v677, %v679
      %v717 = vsel %vm702, %v679, %v681
      %v718 = vsel %vm702, %v681, %v683
      %v719 = vsel %vm702, %v683, %v685
      %v720 = vsel %vm702, %v685, %v687
      %v721 = vsel %vm702, %v689, %v691
      %v722 = vsel %vm702, %v691, %v693
      %v723 = vsel %vm702, %v693, %v695
      %v724 = vsel %vm702, %v695, %v697
      %v725 = vsel %vm702, %v697, %v699
      %v726 = vsel %vm702, %v699, %v701
      %v755 = vadd.f32 %v546, %v703
      %v756 = vadd.f32 %v547, %v704
      %v757 = vadd.f32 %v548, %v705
      %v758 = vadd.f32 %v549, %v706
      %v759 = vadd.f32 %v550, %v707
      %v760 = vadd.f32 %v551, %v708
      %v761 = vadd.f32 %v552, %v659
      %v762 = vadd.f32 %v553, %v709
      %v763 = vadd.f32 %v554, %v710
      %v764 = vadd.f32 %v555, %v711
      %v765 = vadd.f32 %v556, %v712
      %v766 = vadd.f32 %v557, %v713
      %v767 = vadd.f32 %v558, %v714
      %v768 = vadd.f32 %v559, %v673
      %v769 = vadd.f32 %v560, %v715
      %v770 = vadd.f32 %v561, %v716
      %v771 = vadd.f32 %v562, %v717
      %v772 = vadd.f32 %v563, %v718
      %v773 = vadd.f32 %v564, %v719
      %v774 = vadd.f32 %v565, %v720
      %v775 = vadd.f32 %v566, %v687
      %v776 = vadd.f32 %v567, %v721
      %v777 = vadd.f32 %v568, %v722
      %v778 = vadd.f32 %v569, %v723
      %v779 = vadd.f32 %v570, %v724
      %v780 = vadd.f32 %v571, %v725
      %v781 = vadd.f32 %v572, %v726
      %v782 = vadd.f32 %v573, %v701
      %783 = vset.pattern.permute.xlu0 3
      %784 = vperm.xlu0 %783, %v277
      %v785 = vpop.permute.xlu0 %784
      %787 = vset.pattern.permute.xlu0 3
      %788 = vperm.xlu0 %787, %v278
      %v789 = vpop.permute.xlu0 %788
      %791 = vset.pattern.permute.xlu0 3
      %792 = vperm.xlu0 %791, %v279
      %v793 = vpop.permute.xlu0 %792
      %795 = vset.pattern.permute.xlu0 3
      %796 = vperm.xlu0 %795, %v280
      %v797 = vpop.permute.xlu0 %796
      %v799 = vmul.f32 %v785, %v305
      %v800 = vmul.f32 %v785, %v309
      %v801 = vmul.f32 %v785, %v313
      %v802 = vmul.f32 %v785, %v317
      %v803 = vmul.f32 %v785, %v321
      %v804 = vmul.f32 %v785, %v325
      %v805 = vmul.f32 %v785, %v329
      %v806 = vmul.f32 %v789, %v305
      %v807 = vmul.f32 %v789, %v309
      %v808 = vmul.f32 %v789, %v313
      %v809 = vmul.f32 %v789, %v317
      %v810 = vmul.f32 %v789, %v321
      %v811 = vmul.f32 %v789, %v325
      %v812 = vmul.f32 %v789, %v329
      %v813 = vmul.f32 %v793, %v305
      %v814 = vmul.f32 %v793, %v309
      %v815 = vmul.f32 %v793, %v313
      %v816 = vmul.f32 %v793, %v317
      %v817 = vmul.f32 %v793, %v321
      %v818 = vmul.f32 %v793, %v325
      %v819 = vmul.f32 %v793, %v329
      %v820 = vmul.f32 %v797, %v305
      %v821 = vmul.f32 %v797, %v309
      %v822 = vmul.f32 %v797, %v313
      %v823 = vmul.f32 %v797, %v317
      %v824 = vmul.f32 %v797, %v321
      %v825 = vmul.f32 %v797, %v325
      %v826 = vmul.f32 %v797, %v329
      %855 = vrot.lane.b32.xlu0 %v799, 98
      %v856 = vpop.permute.xlu0 %855
      %857 = vrot.lane.b32.xlu0 %v800, 98
      %v858 = vpop.permute.xlu0 %857
      %859 = vrot.lane.b32.xlu0 %v801, 98
      %v860 = vpop.permute.xlu0 %859
      %861 = vrot.lane.b32.xlu0 %v802, 98
      %v862 = vpop.permute.xlu0 %861
      %863 = vrot.lane.b32.xlu0 %v803, 98
      %v864 = vpop.permute.xlu0 %863
      %865 = vrot.lane.b32.xlu0 %v804, 98
      %v866 = vpop.permute.xlu0 %865
      %867 = vrot.lane.b32.xlu0 %v805, 98
      %v868 = vpop.permute.xlu0 %867
      %869 = vrot.lane.b32.xlu0 %v806, 98
      %v870 = vpop.permute.xlu0 %869
      %871 = vrot.lane.b32.xlu0 %v807, 98
      %v872 = vpop.permute.xlu0 %871
      %873 = vrot.lane.b32.xlu0 %v808, 98
      %v874 = vpop.permute.xlu0 %873
      %875 = vrot.lane.b32.xlu0 %v809, 98
      %v876 = vpop.permute.xlu0 %875
      %877 = vrot.lane.b32.xlu0 %v810, 98
      %v878 = vpop.permute.xlu0 %877
      %879 = vrot.lane.b32.xlu0 %v811, 98
      %v880 = vpop.permute.xlu0 %879
      %881 = vrot.lane.b32.xlu0 %v812, 98
      %v882 = vpop.permute.xlu0 %881
      %883 = vrot.lane.b32.xlu0 %v813, 98
      %v884 = vpop.permute.xlu0 %883
      %885 = vrot.lane.b32.xlu0 %v814, 98
      %v886 = vpop.permute.xlu0 %885
      %887 = vrot.lane.b32.xlu0 %v815, 98
      %v888 = vpop.permute.xlu0 %887
      %889 = vrot.lane.b32.xlu0 %v816, 98
      %v890 = vpop.permute.xlu0 %889
      %891 = vrot.lane.b32.xlu0 %v817, 98
      %v892 = vpop.permute.xlu0 %891
      %893 = vrot.lane.b32.xlu0 %v818, 98
      %v894 = vpop.permute.xlu0 %893
      %895 = vrot.lane.b32.xlu0 %v819, 98
      %v896 = vpop.permute.xlu0 %895
      %897 = vrot.lane.b32.xlu0 %v820, 98
      %v898 = vpop.permute.xlu0 %897
      %899 = vrot.lane.b32.xlu0 %v821, 98
      %v900 = vpop.permute.xlu0 %899
      %901 = vrot.lane.b32.xlu0 %v822, 98
      %v902 = vpop.permute.xlu0 %901
      %903 = vrot.lane.b32.xlu0 %v823, 98
      %v904 = vpop.permute.xlu0 %903
      %905 = vrot.lane.b32.xlu0 %v824, 98
      %v906 = vpop.permute.xlu0 %905
      %907 = vrot.lane.b32.xlu0 %v825, 98
      %v908 = vpop.permute.xlu0 %907
      %909 = vrot.lane.b32.xlu0 %v826, 98
      %v910 = vpop.permute.xlu0 %909
      %vm911 = vcmask 801792
      %v912 = vsel %vm911, %v856, %v858
      %v913 = vsel %vm911, %v858, %v860
      %v914 = vsel %vm911, %v860, %v862
      %v915 = vsel %vm911, %v862, %v864
      %v916 = vsel %vm911, %v864, %v866
      %v917 = vsel %vm911, %v866, %v868
      %v918 = vsel %vm911, %v870, %v872
      %v919 = vsel %vm911, %v872, %v874
      %v920 = vsel %vm911, %v874, %v876
      %v921 = vsel %vm911, %v876, %v878
      %v922 = vsel %vm911, %v878, %v880
      %v923 = vsel %vm911, %v880, %v882
      %v924 = vsel %vm911, %v884, %v886
      %v925 = vsel %vm911, %v886, %v888
      %v926 = vsel %vm911, %v888, %v890
      %v927 = vsel %vm911, %v890, %v892
      %v928 = vsel %vm911, %v892, %v894
      %v929 = vsel %vm911, %v894, %v896
      %v930 = vsel %vm911, %v898, %v900
      %v931 = vsel %vm911, %v900, %v902
      %v932 = vsel %vm911, %v902, %v904
      %v933 = vsel %vm911, %v904, %v906
      %v934 = vsel %vm911, %v906, %v908
      %v935 = vsel %vm911, %v908, %v910
      %v964 = vadd.f32 %v755, %v912
      %v965 = vadd.f32 %v756, %v913
      %v966 = vadd.f32 %v757, %v914
      %v967 = vadd.f32 %v758, %v915
      %v968 = vadd.f32 %v759, %v916
      %v969 = vadd.f32 %v760, %v917
      %v970 = vadd.f32 %v761, %v868
      %v971 = vadd.f32 %v762, %v918
      %v972 = vadd.f32 %v763, %v919
      %v973 = vadd.f32 %v764, %v920
      %v974 = vadd.f32 %v765, %v921
      %v975 = vadd.f32 %v766, %v922
      %v976 = vadd.f32 %v767, %v923
      %v977 = vadd.f32 %v768, %v882
      %v978 = vadd.f32 %v769, %v924
      %v979 = vadd.f32 %v770, %v925
      %v980 = vadd.f32 %v771, %v926
      %v981 = vadd.f32 %v772, %v927
      %v982 = vadd.f32 %v773, %v928
      %v983 = vadd.f32 %v774, %v929
      %v984 = vadd.f32 %v775, %v896
      %v985 = vadd.f32 %v776, %v930
      %v986 = vadd.f32 %v777, %v931
      %v987 = vadd.f32 %v778, %v932
      %v988 = vadd.f32 %v779, %v933
      %v989 = vadd.f32 %v780, %v934
      %v990 = vadd.f32 %v781, %v935
      %v991 = vadd.f32 %v782, %v910
      %992 = vset.pattern.permute.xlu0 4
      %993 = vperm.xlu0 %992, %v277
      %v994 = vpop.permute.xlu0 %993
      %996 = vset.pattern.permute.xlu0 4
      %997 = vperm.xlu0 %996, %v278
      %v998 = vpop.permute.xlu0 %997
      %1000 = vset.pattern.permute.xlu0 4
      %1001 = vperm.xlu0 %1000, %v279
      %v1002 = vpop.permute.xlu0 %1001
      %1004 = vset.pattern.permute.xlu0 4
      %1005 = vperm.xlu0 %1004, %v280
      %v1006 = vpop.permute.xlu0 %1005
      %v1008 = vmul.f32 %v994, %v305
      %v1009 = vmul.f32 %v994, %v309
      %v1010 = vmul.f32 %v994, %v313
      %v1011 = vmul.f32 %v994, %v317
      %v1012 = vmul.f32 %v994, %v321
      %v1013 = vmul.f32 %v994, %v325
      %v1014 = vmul.f32 %v994, %v329
      %v1015 = vmul.f32 %v998, %v305
      %v1016 = vmul.f32 %v998, %v309
      %v1017 = vmul.f32 %v998, %v313
      %v1018 = vmul.f32 %v998, %v317
      %v1019 = vmul.f32 %v998, %v321
      %v1020 = vmul.f32 %v998, %v325
      %v1021 = vmul.f32 %v998, %v329
      %v1022 = vmul.f32 %v1002, %v305
      %v1023 = vmul.f32 %v1002, %v309
      %v1024 = vmul.f32 %v1002, %v313
      %v1025 = vmul.f32 %v1002, %v317
      %v1026 = vmul.f32 %v1002, %v321
      %v1027 = vmul.f32 %v1002, %v325
      %v1028 = vmul.f32 %v1002, %v329
      %v1029 = vmul.f32 %v1006, %v305
      %v1030 = vmul.f32 %v1006, %v309
      %v1031 = vmul.f32 %v1006, %v313
      %v1032 = vmul.f32 %v1006, %v317
      %v1033 = vmul.f32 %v1006, %v321
      %v1034 = vmul.f32 %v1006, %v325
      %v1035 = vmul.f32 %v1006, %v329
      %1064 = vrot.lane.b32.xlu0 %v1008, 97
      %v1065 = vpop.permute.xlu0 %1064
      %1066 = vrot.lane.b32.xlu0 %v1009, 97
      %v1067 = vpop.permute.xlu0 %1066
      %1068 = vrot.lane.b32.xlu0 %v1010, 97
      %v1069 = vpop.permute.xlu0 %1068
      %1070 = vrot.lane.b32.xlu0 %v1011, 97
      %v1071 = vpop.permute.xlu0 %1070
      %1072 = vrot.lane.b32.xlu0 %v1012, 97
      %v1073 = vpop.permute.xlu0 %1072
      %1074 = vrot.lane.b32.xlu0 %v1013, 97
      %v1075 = vpop.permute.xlu0 %1074
      %1076 = vrot.lane.b32.xlu0 %v1014, 97
      %v1077 = vpop.permute.xlu0 %1076
      %1078 = vrot.lane.b32.xlu0 %v1015, 97
      %v1079 = vpop.permute.xlu0 %1078
      %1080 = vrot.lane.b32.xlu0 %v1016, 97
      %v1081 = vpop.permute.xlu0 %1080
      %1082 = vrot.lane.b32.xlu0 %v1017, 97
      %v1083 = vpop.permute.xlu0 %1082
      %1084 = vrot.lane.b32.xlu0 %v1018, 97
      %v1085 = vpop.permute.xlu0 %1084
      %1086 = vrot.lane.b32.xlu0 %v1019, 97
      %v1087 = vpop.permute.xlu0 %1086
      %1088 = vrot.lane.b32.xlu0 %v1020, 97
      %v1089 = vpop.permute.xlu0 %1088
      %1090 = vrot.lane.b32.xlu0 %v1021, 97
      %v1091 = vpop.permute.xlu0 %1090
      %1092 = vrot.lane.b32.xlu0 %v1022, 97
      %v1093 = vpop.permute.xlu0 %1092
      %1094 = vrot.lane.b32.xlu0 %v1023, 97
      %v1095 = vpop.permute.xlu0 %1094
      %1096 = vrot.lane.b32.xlu0 %v1024, 97
      %v1097 = vpop.permute.xlu0 %1096
      %1098 = vrot.lane.b32.xlu0 %v1025, 97
      %v1099 = vpop.permute.xlu0 %1098
      %1100 = vrot.lane.b32.xlu0 %v1026, 97
      %v1101 = vpop.permute.xlu0 %1100
      %1102 = vrot.lane.b32.xlu0 %v1027, 97
      %v1103 = vpop.permute.xlu0 %1102
      %1104 = vrot.lane.b32.xlu0 %v1028, 97
      %v1105 = vpop.permute.xlu0 %1104
      %1106 = vrot.lane.b32.xlu0 %v1029, 97
      %v1107 = vpop.permute.xlu0 %1106
      %1108 = vrot.lane.b32.xlu0 %v1030, 97
      %v1109 = vpop.permute.xlu0 %1108
      %1110 = vrot.lane.b32.xlu0 %v1031, 97
      %v1111 = vpop.permute.xlu0 %1110
      %1112 = vrot.lane.b32.xlu0 %v1032, 97
      %v1113 = vpop.permute.xlu0 %1112
      %1114 = vrot.lane.b32.xlu0 %v1033, 97
      %v1115 = vpop.permute.xlu0 %1114
      %1116 = vrot.lane.b32.xlu0 %v1034, 97
      %v1117 = vpop.permute.xlu0 %1116
      %1118 = vrot.lane.b32.xlu0 %v1035, 97
      %v1119 = vpop.permute.xlu0 %1118
      %vm1120 = vcmask 793600
      %v1121 = vsel %vm1120, %v1065, %v1067
      %v1122 = vsel %vm1120, %v1067, %v1069
      %v1123 = vsel %vm1120, %v1069, %v1071
      %v1124 = vsel %vm1120, %v1071, %v1073
      %v1125 = vsel %vm1120, %v1073, %v1075
      %v1126 = vsel %vm1120, %v1075, %v1077
      %v1127 = vsel %vm1120, %v1079, %v1081
      %v1128 = vsel %vm1120, %v1081, %v1083
      %v1129 = vsel %vm1120, %v1083, %v1085
      %v1130 = vsel %vm1120, %v1085, %v1087
      %v1131 = vsel %vm1120, %v1087, %v1089
      %v1132 = vsel %vm1120, %v1089, %v1091
      %v1133 = vsel %vm1120, %v1093, %v1095
      %v1134 = vsel %vm1120, %v1095, %v1097
      %v1135 = vsel %vm1120, %v1097, %v1099
      %v1136 = vsel %vm1120, %v1099, %v1101
      %v1137 = vsel %vm1120, %v1101, %v1103
      %v1138 = vsel %vm1120, %v1103, %v1105
      %v1139 = vsel %vm1120, %v1107, %v1109
      %v1140 = vsel %vm1120, %v1109, %v1111
      %v1141 = vsel %vm1120, %v1111, %v1113
      %v1142 = vsel %vm1120, %v1113, %v1115
      %v1143 = vsel %vm1120, %v1115, %v1117
      %v1144 = vsel %vm1120, %v1117, %v1119
      %v1173 = vadd.f32 %v964, %v1121
      %v1174 = vadd.f32 %v965, %v1122
      %v1175 = vadd.f32 %v966, %v1123
      %v1176 = vadd.f32 %v967, %v1124
      %v1177 = vadd.f32 %v968, %v1125
      %v1178 = vadd.f32 %v969, %v1126
      %v1179 = vadd.f32 %v970, %v1077
      %v1180 = vadd.f32 %v971, %v1127
      %v1181 = vadd.f32 %v972, %v1128
      %v1182 = vadd.f32 %v973, %v1129
      %v1183 = vadd.f32 %v974, %v1130
      %v1184 = vadd.f32 %v975, %v1131
      %v1185 = vadd.f32 %v976, %v1132
      %v1186 = vadd.f32 %v977, %v1091
      %v1187 = vadd.f32 %v978, %v1133
      %v1188 = vadd.f32 %v979, %v1134
      %v1189 = vadd.f32 %v980, %v1135
      %v1190 = vadd.f32 %v981, %v1136
      %v1191 = vadd.f32 %v982, %v1137
      %v1192 = vadd.f32 %v983, %v1138
      %v1193 = vadd.f32 %v984, %v1105
      %v1194 = vadd.f32 %v985, %v1139
      %v1195 = vadd.f32 %v986, %v1140
      %v1196 = vadd.f32 %v987, %v1141
      %v1197 = vadd.f32 %v988, %v1142
      %v1198 = vadd.f32 %v989, %v1143
      %v1199 = vadd.f32 %v990, %v1144
      %v1200 = vadd.f32 %v991, %v1119
      %1201 = vset.pattern.permute.xlu0 5
      %1202 = vperm.xlu0 %1201, %v277
      %v1203 = vpop.permute.xlu0 %1202
      %1205 = vset.pattern.permute.xlu0 5
      %1206 = vperm.xlu0 %1205, %v278
      %v1207 = vpop.permute.xlu0 %1206
      %1209 = vset.pattern.permute.xlu0 5
      %1210 = vperm.xlu0 %1209, %v279
      %v1211 = vpop.permute.xlu0 %1210
      %1213 = vset.pattern.permute.xlu0 5
      %1214 = vperm.xlu0 %1213, %v280
      %v1215 = vpop.permute.xlu0 %1214
      %v1217 = vmul.f32 %v1203, %v305
      %v1218 = vmul.f32 %v1203, %v309
      %v1219 = vmul.f32 %v1203, %v313
      %v1220 = vmul.f32 %v1203, %v317
      %v1221 = vmul.f32 %v1203, %v321
      %v1222 = vmul.f32 %v1203, %v325
      %v1223 = vmul.f32 %v1203, %v329
      %v1224 = vmul.f32 %v1207, %v305
      %v1225 = vmul.f32 %v1207, %v309
      %v1226 = vmul.f32 %v1207, %v313
      %v1227 = vmul.f32 %v1207, %v317
      %v1228 = vmul.f32 %v1207, %v321
      %v1229 = vmul.f32 %v1207, %v325
      %v1230 = vmul.f32 %v1207, %v329
      %v1231 = vmul.f32 %v1211, %v305
      %v1232 = vmul.f32 %v1211, %v309
      %v1233 = vmul.f32 %v1211, %v313
      %v1234 = vmul.f32 %v1211, %v317
      %v1235 = vmul.f32 %v1211, %v321
      %v1236 = vmul.f32 %v1211, %v325
      %v1237 = vmul.f32 %v1211, %v329
      %v1238 = vmul.f32 %v1215, %v305
      %v1239 = vmul.f32 %v1215, %v309
      %v1240 = vmul.f32 %v1215, %v313
      %v1241 = vmul.f32 %v1215, %v317
      %v1242 = vmul.f32 %v1215, %v321
      %v1243 = vmul.f32 %v1215, %v325
      %v1244 = vmul.f32 %v1215, %v329
      %1273 = vrot.lane.b32.xlu0 %v1217, 96
      %v1274 = vpop.permute.xlu0 %1273
      %1275 = vrot.lane.b32.xlu0 %v1218, 96
      %v1276 = vpop.permute.xlu0 %1275
      %1277 = vrot.lane.b32.xlu0 %v1219, 96
      %v1278 = vpop.permute.xlu0 %1277
      %1279 = vrot.lane.b32.xlu0 %v1220, 96
      %v1280 = vpop.permute.xlu0 %1279
      %1281 = vrot.lane.b32.xlu0 %v1221, 96
      %v1282 = vpop.permute.xlu0 %1281
      %1283 = vrot.lane.b32.xlu0 %v1222, 96
      %v1284 = vpop.permute.xlu0 %1283
      %1285 = vrot.lane.b32.xlu0 %v1223, 96
      %v1286 = vpop.permute.xlu0 %1285
      %1287 = vrot.lane.b32.xlu0 %v1224, 96
      %v1288 = vpop.permute.xlu0 %1287
      %1289 = vrot.lane.b32.xlu0 %v1225, 96
      %v1290 = vpop.permute.xlu0 %1289
      %1291 = vrot.lane.b32.xlu0 %v1226, 96
      %v1292 = vpop.permute.xlu0 %1291
      %1293 = vrot.lane.b32.xlu0 %v1227, 96
      %v1294 = vpop.permute.xlu0 %1293
      %1295 = vrot.lane.b32.xlu0 %v1228, 96
      %v1296 = vpop.permute.xlu0 %1295
      %1297 = vrot.lane.b32.xlu0 %v1229, 96
      %v1298 = vpop.permute.xlu0 %1297
      %1299 = vrot.lane.b32.xlu0 %v1230, 96
      %v1300 = vpop.permute.xlu0 %1299
      %1301 = vrot.lane.b32.xlu0 %v1231, 96
      %v1302 = vpop.permute.xlu0 %1301
      %1303 = vrot.lane.b32.xlu0 %v1232, 96
      %v1304 = vpop.permute.xlu0 %1303
      %1305 = vrot.lane.b32.xlu0 %v1233, 96
      %v1306 = vpop.permute.xlu0 %1305
      %1307 = vrot.lane.b32.xlu0 %v1234, 96
      %v1308 = vpop.permute.xlu0 %1307
      %1309 = vrot.lane.b32.xlu0 %v1235, 96
      %v1310 = vpop.permute.xlu0 %1309
      %1311 = vrot.lane.b32.xlu0 %v1236, 96
      %v1312 = vpop.permute.xlu0 %1311
      %1313 = vrot.lane.b32.xlu0 %v1237, 96
      %v1314 = vpop.permute.xlu0 %1313
      %1315 = vrot.lane.b32.xlu0 %v1238, 96
      %v1316 = vpop.permute.xlu0 %1315
      %1317 = vrot.lane.b32.xlu0 %v1239, 96
      %v1318 = vpop.permute.xlu0 %1317
      %1319 = vrot.lane.b32.xlu0 %v1240, 96
      %v1320 = vpop.permute.xlu0 %1319
      %1321 = vrot.lane.b32.xlu0 %v1241, 96
      %v1322 = vpop.permute.xlu0 %1321
      %1323 = vrot.lane.b32.xlu0 %v1242, 96
      %v1324 = vpop.permute.xlu0 %1323
      %1325 = vrot.lane.b32.xlu0 %v1243, 96
      %v1326 = vpop.permute.xlu0 %1325
      %1327 = vrot.lane.b32.xlu0 %v1244, 96
      %v1328 = vpop.permute.xlu0 %1327
      %vm1329 = vcmask 785408
      %v1330 = vsel %vm1329, %v1274, %v1276
      %v1331 = vsel %vm1329, %v1276, %v1278
      %v1332 = vsel %vm1329, %v1278, %v1280
      %v1333 = vsel %vm1329, %v1280, %v1282
      %v1334 = vsel %vm1329, %v1282, %v1284
      %v1335 = vsel %vm1329, %v1284, %v1286
      %v1336 = vsel %vm1329, %v1288, %v1290
      %v1337 = vsel %vm1329, %v1290, %v1292
      %v1338 = vsel %vm1329, %v1292, %v1294
      %v1339 = vsel %vm1329, %v1294, %v1296
      %v1340 = vsel %vm1329, %v1296, %v1298
      %v1341 = vsel %vm1329, %v1298, %v1300
      %v1342 = vsel %vm1329, %v1302, %v1304
      %v1343 = vsel %vm1329, %v1304, %v1306
      %v1344 = vsel %vm1329, %v1306, %v1308
      %v1345 = vsel %vm1329, %v1308, %v1310
      %v1346 = vsel %vm1329, %v1310, %v1312
      %v1347 = vsel %vm1329, %v1312, %v1314
      %v1348 = vsel %vm1329, %v1316, %v1318
      %v1349 = vsel %vm1329, %v1318, %v1320
      %v1350 = vsel %vm1329, %v1320, %v1322
      %v1351 = vsel %vm1329, %v1322, %v1324
      %v1352 = vsel %vm1329, %v1324, %v1326
      %v1353 = vsel %vm1329, %v1326, %v1328
      %v1382 = vadd.f32 %v1173, %v1330
      %v1383 = vadd.f32 %v1174, %v1331
      %v1384 = vadd.f32 %v1175, %v1332
      %v1385 = vadd.f32 %v1176, %v1333
      %v1386 = vadd.f32 %v1177, %v1334
      %v1387 = vadd.f32 %v1178, %v1335
      %v1388 = vadd.f32 %v1179, %v1286
      %v1389 = vadd.f32 %v1180, %v1336
      %v1390 = vadd.f32 %v1181, %v1337
      %v1391 = vadd.f32 %v1182, %v1338
      %v1392 = vadd.f32 %v1183, %v1339
      %v1393 = vadd.f32 %v1184, %v1340
      %v1394 = vadd.f32 %v1185, %v1341
      %v1395 = vadd.f32 %v1186, %v1300
      %v1396 = vadd.f32 %v1187, %v1342
      %v1397 = vadd.f32 %v1188, %v1343
      %v1398 = vadd.f32 %v1189, %v1344
      %v1399 = vadd.f32 %v1190, %v1345
      %v1400 = vadd.f32 %v1191, %v1346
      %v1401 = vadd.f32 %v1192, %v1347
      %v1402 = vadd.f32 %v1193, %v1314
      %v1403 = vadd.f32 %v1194, %v1348
      %v1404 = vadd.f32 %v1195, %v1349
      %v1405 = vadd.f32 %v1196, %v1350
      %v1406 = vadd.f32 %v1197, %v1351
      %v1407 = vadd.f32 %v1198, %v1352
      %v1408 = vadd.f32 %v1199, %v1353
      %v1409 = vadd.f32 %v1200, %v1328
      %1410 = vset.pattern.permute.xlu0 6
      %1411 = vperm.xlu0 %1410, %v277
      %v1412 = vpop.permute.xlu0 %1411
      %1414 = vset.pattern.permute.xlu0 6
      %1415 = vperm.xlu0 %1414, %v278
      %v1416 = vpop.permute.xlu0 %1415
      %1418 = vset.pattern.permute.xlu0 6
      %1419 = vperm.xlu0 %1418, %v279
      %v1420 = vpop.permute.xlu0 %1419
      %1422 = vset.pattern.permute.xlu0 6
      %1423 = vperm.xlu0 %1422, %v280
      %v1424 = vpop.permute.xlu0 %1423
      %v1426 = vlaneseq
      %v1427 = vshrl.u32 %v1426, 7
      %v1428 = vsub.s32 7, %v1427
      %v1429 = vrot.slane %v276, %v1428
      %v1431 = vmul.f32 %v1412, %v305
      %v1432 = vmul.f32 %v1412, %v309
      %v1433 = vmul.f32 %v1412, %v313
      %v1434 = vmul.f32 %v1412, %v317
      %v1435 = vmul.f32 %v1412, %v321
      %v1436 = vmul.f32 %v1412, %v325
      %v1437 = vmul.f32 %v1412, %v329
      %v1438 = vmul.f32 %v1412, %v1429
      %v1439 = vmul.f32 %v1416, %v305
      %v1440 = vmul.f32 %v1416, %v309
      %v1441 = vmul.f32 %v1416, %v313
      %v1442 = vmul.f32 %v1416, %v317
      %v1443 = vmul.f32 %v1416, %v321
      %v1444 = vmul.f32 %v1416, %v325
      %v1445 = vmul.f32 %v1416, %v329
      %v1446 = vmul.f32 %v1416, %v1429
      %v1447 = vmul.f32 %v1420, %v305
      %v1448 = vmul.f32 %v1420, %v309
      %v1449 = vmul.f32 %v1420, %v313
      %v1450 = vmul.f32 %v1420, %v317
      %v1451 = vmul.f32 %v1420, %v321
      %v1452 = vmul.f32 %v1420, %v325
      %v1453 = vmul.f32 %v1420, %v329
      %v1454 = vmul.f32 %v1420, %v1429
      %v1455 = vmul.f32 %v1424, %v305
      %v1456 = vmul.f32 %v1424, %v309
      %v1457 = vmul.f32 %v1424, %v313
      %v1458 = vmul.f32 %v1424, %v317
      %v1459 = vmul.f32 %v1424, %v321
      %v1460 = vmul.f32 %v1424, %v325
      %v1461 = vmul.f32 %v1424, %v329
      %v1462 = vmul.f32 %v1424, %v1429
      %1495 = vrot.lane.b32.xlu0 %v1431, 68
      %v1496 = vpop.permute.xlu0 %1495
      %1497 = vrot.lane.b32.xlu0 %v1432, 68
      %v1498 = vpop.permute.xlu0 %1497
      %1499 = vrot.lane.b32.xlu0 %v1433, 68
      %v1500 = vpop.permute.xlu0 %1499
      %1501 = vrot.lane.b32.xlu0 %v1434, 68
      %v1502 = vpop.permute.xlu0 %1501
      %1503 = vrot.lane.b32.xlu0 %v1435, 68
      %v1504 = vpop.permute.xlu0 %1503
      %1505 = vrot.lane.b32.xlu0 %v1436, 68
      %v1506 = vpop.permute.xlu0 %1505
      %1507 = vrot.lane.b32.xlu0 %v1437, 68
      %v1508 = vpop.permute.xlu0 %1507
      %1509 = vrot.lane.b32.xlu0 %v1438, 68
      %v1510 = vpop.permute.xlu0 %1509
      %1511 = vrot.lane.b32.xlu0 %v1439, 68
      %v1512 = vpop.permute.xlu0 %1511
      %1513 = vrot.lane.b32.xlu0 %v1440, 68
      %v1514 = vpop.permute.xlu0 %1513
      %1515 = vrot.lane.b32.xlu0 %v1441, 68
      %v1516 = vpop.permute.xlu0 %1515
      %1517 = vrot.lane.b32.xlu0 %v1442, 68
      %v1518 = vpop.permute.xlu0 %1517
      %1519 = vrot.lane.b32.xlu0 %v1443, 68
      %v1520 = vpop.permute.xlu0 %1519
      %1521 = vrot.lane.b32.xlu0 %v1444, 68
      %v1522 = vpop.permute.xlu0 %1521
      %1523 = vrot.lane.b32.xlu0 %v1445, 68
      %v1524 = vpop.permute.xlu0 %1523
      %1525 = vrot.lane.b32.xlu0 %v1446, 68
      %v1526 = vpop.permute.xlu0 %1525
      %1527 = vrot.lane.b32.xlu0 %v1447, 68
      %v1528 = vpop.permute.xlu0 %1527
      %1529 = vrot.lane.b32.xlu0 %v1448, 68
      %v1530 = vpop.permute.xlu0 %1529
      %1531 = vrot.lane.b32.xlu0 %v1449, 68
      %v1532 = vpop.permute.xlu0 %1531
      %1533 = vrot.lane.b32.xlu0 %v1450, 68
      %v1534 = vpop.permute.xlu0 %1533
      %1535 = vrot.lane.b32.xlu0 %v1451, 68
      %v1536 = vpop.permute.xlu0 %1535
      %1537 = vrot.lane.b32.xlu0 %v1452, 68
      %v1538 = vpop.permute.xlu0 %1537
      %1539 = vrot.lane.b32.xlu0 %v1453, 68
      %v1540 = vpop.permute.xlu0 %1539
      %1541 = vrot.lane.b32.xlu0 %v1454, 68
      %v1542 = vpop.permute.xlu0 %1541
      %1543 = vrot.lane.b32.xlu0 %v1455, 68
      %v1544 = vpop.permute.xlu0 %1543
      %1545 = vrot.lane.b32.xlu0 %v1456, 68
      %v1546 = vpop.permute.xlu0 %1545
      %1547 = vrot.lane.b32.xlu0 %v1457, 68
      %v1548 = vpop.permute.xlu0 %1547
      %1549 = vrot.lane.b32.xlu0 %v1458, 68
      %v1550 = vpop.permute.xlu0 %1549
      %1551 = vrot.lane.b32.xlu0 %v1459, 68
      %v1552 = vpop.permute.xlu0 %1551
      %1553 = vrot.lane.b32.xlu0 %v1460, 68
      %v1554 = vpop.permute.xlu0 %1553
      %1555 = vrot.lane.b32.xlu0 %v1461, 68
      %v1556 = vpop.permute.xlu0 %1555
      %1557 = vrot.lane.b32.xlu0 %v1462, 68
      %v1558 = vpop.permute.xlu0 %1557
      %vm1559 = vcmask 556032
      %v1560 = vsel %vm1559, %v1496, %v1498
      %v1561 = vsel %vm1559, %v1498, %v1500
      %v1562 = vsel %vm1559, %v1500, %v1502
      %v1563 = vsel %vm1559, %v1502, %v1504
      %v1564 = vsel %vm1559, %v1504, %v1506
      %v1565 = vsel %vm1559, %v1506, %v1508
      %v1566 = vsel %vm1559, %v1508, %v1510
      %v1567 = vsel %vm1559, %v1512, %v1514
      %v1568 = vsel %vm1559, %v1514, %v1516
      %v1569 = vsel %vm1559, %v1516, %v1518
      %v1570 = vsel %vm1559, %v1518, %v1520
      %v1571 = vsel %vm1559, %v1520, %v1522
      %v1572 = vsel %vm1559, %v1522, %v1524
      %v1573 = vsel %vm1559, %v1524, %v1526
      %v1574 = vsel %vm1559, %v1528, %v1530
      %v1575 = vsel %vm1559, %v1530, %v1532
      %v1576 = vsel %vm1559, %v1532, %v1534
      %v1577 = vsel %vm1559, %v1534, %v1536
      %v1578 = vsel %vm1559, %v1536, %v1538
      %v1579 = vsel %vm1559, %v1538, %v1540
      %v1580 = vsel %vm1559, %v1540, %v1542
      %v1581 = vsel %vm1559, %v1544, %v1546
      %v1582 = vsel %vm1559, %v1546, %v1548
      %v1583 = vsel %vm1559, %v1548, %v1550
      %v1584 = vsel %vm1559, %v1550, %v1552
      %v1585 = vsel %vm1559, %v1552, %v1554
      %v1586 = vsel %vm1559, %v1554, %v1556
      %v1587 = vsel %vm1559, %v1556, %v1558
      %v1616 = vadd.f32 %v1382, %v1560
      %v1617 = vadd.f32 %v1383, %v1561
      %v1618 = vadd.f32 %v1384, %v1562
      %v1619 = vadd.f32 %v1385, %v1563
      %v1620 = vadd.f32 %v1386, %v1564
      %v1621 = vadd.f32 %v1387, %v1565
      %v1622 = vadd.f32 %v1388, %v1566
      %v1623 = vadd.f32 %v1389, %v1567
      %v1624 = vadd.f32 %v1390, %v1568
      %v1625 = vadd.f32 %v1391, %v1569
      %v1626 = vadd.f32 %v1392, %v1570
      %v1627 = vadd.f32 %v1393, %v1571
      %v1628 = vadd.f32 %v1394, %v1572
      %v1629 = vadd.f32 %v1395, %v1573
      %v1630 = vadd.f32 %v1396, %v1574
      %v1631 = vadd.f32 %v1397, %v1575
      %v1632 = vadd.f32 %v1398, %v1576
      %v1633 = vadd.f32 %v1399, %v1577
      %v1634 = vadd.f32 %v1400, %v1578
      %v1635 = vadd.f32 %v1401, %v1579
      %v1636 = vadd.f32 %v1402, %v1580
      %v1637 = vadd.f32 %v1403, %v1581
      %v1638 = vadd.f32 %v1404, %v1582
      %v1639 = vadd.f32 %v1405, %v1583
      %v1640 = vadd.f32 %v1406, %v1584
      %v1641 = vadd.f32 %v1407, %v1585
      %v1642 = vadd.f32 %v1408, %v1586
      %v1643 = vadd.f32 %v1409, %v1587
      %1644 = vset.pattern.permute.xlu0 7
      %1645 = vperm.xlu0 %1644, %v277
      %v1646 = vpop.permute.xlu0 %1645
      %1648 = vset.pattern.permute.xlu0 7
      %1649 = vperm.xlu0 %1648, %v278
      %v1650 = vpop.permute.xlu0 %1649
      %1652 = vset.pattern.permute.xlu0 7
      %1653 = vperm.xlu0 %1652, %v279
      %v1654 = vpop.permute.xlu0 %1653
      %1656 = vset.pattern.permute.xlu0 7
      %1657 = vperm.xlu0 %1656, %v280
      %v1658 = vpop.permute.xlu0 %1657
      %v1660 = vmul.f32 %v1646, %v305
      %v1661 = vmul.f32 %v1646, %v309
      %v1662 = vmul.f32 %v1646, %v313
      %v1663 = vmul.f32 %v1646, %v317
      %v1664 = vmul.f32 %v1646, %v321
      %v1665 = vmul.f32 %v1646, %v325
      %v1666 = vmul.f32 %v1646, %v329
      %v1667 = vmul.f32 %v1646, %v1429
      %v1668 = vmul.f32 %v1650, %v305
      %v1669 = vmul.f32 %v1650, %v309
      %v1670 = vmul.f32 %v1650, %v313
      %v1671 = vmul.f32 %v1650, %v317
      %v1672 = vmul.f32 %v1650, %v321
      %v1673 = vmul.f32 %v1650, %v325
      %v1674 = vmul.f32 %v1650, %v329
      %v1675 = vmul.f32 %v1650, %v1429
      %v1676 = vmul.f32 %v1654, %v305
      %v1677 = vmul.f32 %v1654, %v309
      %v1678 = vmul.f32 %v1654, %v313
      %v1679 = vmul.f32 %v1654, %v317
      %v1680 = vmul.f32 %v1654, %v321
      %v1681 = vmul.f32 %v1654, %v325
      %v1682 = vmul.f32 %v1654, %v329
      %v1683 = vmul.f32 %v1654, %v1429
      %v1684 = vmul.f32 %v1658, %v305
      %v1685 = vmul.f32 %v1658, %v309
      %v1686 = vmul.f32 %v1658, %v313
      %v1687 = vmul.f32 %v1658, %v317
      %v1688 = vmul.f32 %v1658, %v321
      %v1689 = vmul.f32 %v1658, %v325
      %v1690 = vmul.f32 %v1658, %v329
      %v1691 = vmul.f32 %v1658, %v1429
      %1724 = vrot.lane.b32.xlu0 %v1660, 67
      %v1725 = vpop.permute.xlu0 %1724
      %1726 = vrot.lane.b32.xlu0 %v1661, 67
      %v1727 = vpop.permute.xlu0 %1726
      %1728 = vrot.lane.b32.xlu0 %v1662, 67
      %v1729 = vpop.permute.xlu0 %1728
      %1730 = vrot.lane.b32.xlu0 %v1663, 67
      %v1731 = vpop.permute.xlu0 %1730
      %1732 = vrot.lane.b32.xlu0 %v1664, 67
      %v1733 = vpop.permute.xlu0 %1732
      %1734 = vrot.lane.b32.xlu0 %v1665, 67
      %v1735 = vpop.permute.xlu0 %1734
      %1736 = vrot.lane.b32.xlu0 %v1666, 67
      %v1737 = vpop.permute.xlu0 %1736
      %1738 = vrot.lane.b32.xlu0 %v1667, 67
      %v1739 = vpop.permute.xlu0 %1738
      %1740 = vrot.lane.b32.xlu0 %v1668, 67
      %v1741 = vpop.permute.xlu0 %1740
      %1742 = vrot.lane.b32.xlu0 %v1669, 67
      %v1743 = vpop.permute.xlu0 %1742
      %1744 = vrot.lane.b32.xlu0 %v1670, 67
      %v1745 = vpop.permute.xlu0 %1744
      %1746 = vrot.lane.b32.xlu0 %v1671, 67
      %v1747 = vpop.permute.xlu0 %1746
      %1748 = vrot.lane.b32.xlu0 %v1672, 67
      %v1749 = vpop.permute.xlu0 %1748
      %1750 = vrot.lane.b32.xlu0 %v1673, 67
      %v1751 = vpop.permute.xlu0 %1750
      %1752 = vrot.lane.b32.xlu0 %v1674, 67
      %v1753 = vpop.permute.xlu0 %1752
      %1754 = vrot.lane.b32.xlu0 %v1675, 67
      %v1755 = vpop.permute.xlu0 %1754
      %1756 = vrot.lane.b32.xlu0 %v1676, 67
      %v1757 = vpop.permute.xlu0 %1756
      %1758 = vrot.lane.b32.xlu0 %v1677, 67
      %v1759 = vpop.permute.xlu0 %1758
      %1760 = vrot.lane.b32.xlu0 %v1678, 67
      %v1761 = vpop.permute.xlu0 %1760
      %1762 = vrot.lane.b32.xlu0 %v1679, 67
      %v1763 = vpop.permute.xlu0 %1762
      %1764 = vrot.lane.b32.xlu0 %v1680, 67
      %v1765 = vpop.permute.xlu0 %1764
      %1766 = vrot.lane.b32.xlu0 %v1681, 67
      %v1767 = vpop.permute.xlu0 %1766
      %1768 = vrot.lane.b32.xlu0 %v1682, 67
      %v1769 = vpop.permute.xlu0 %1768
      %1770 = vrot.lane.b32.xlu0 %v1683, 67
      %v1771 = vpop.permute.xlu0 %1770
      %1772 = vrot.lane.b32.xlu0 %v1684, 67
      %v1773 = vpop.permute.xlu0 %1772
      %1774 = vrot.lane.b32.xlu0 %v1685, 67
      %v1775 = vpop.permute.xlu0 %1774
      %1776 = vrot.lane.b32.xlu0 %v1686, 67
      %v1777 = vpop.permute.xlu0 %1776
      %1778 = vrot.lane.b32.xlu0 %v1687, 67
      %v1779 = vpop.permute.xlu0 %1778
      %1780 = vrot.lane.b32.xlu0 %v1688, 67
      %v1781 = vpop.permute.xlu0 %1780
      %1782 = vrot.lane.b32.xlu0 %v1689, 67
      %v1783 = vpop.permute.xlu0 %1782
      %1784 = vrot.lane.b32.xlu0 %v1690, 67
      %v1785 = vpop.permute.xlu0 %1784
      %1786 = vrot.lane.b32.xlu0 %v1691, 67
      %v1787 = vpop.permute.xlu0 %1786
      %vm1788 = vcmask 547840
      %v1789 = vsel %vm1788, %v1725, %v1727
      %v1790 = vsel %vm1788, %v1727, %v1729
      %v1791 = vsel %vm1788, %v1729, %v1731
      %v1792 = vsel %vm1788, %v1731, %v1733
      %v1793 = vsel %vm1788, %v1733, %v1735
      %v1794 = vsel %vm1788, %v1735, %v1737
      %v1795 = vsel %vm1788, %v1737, %v1739
      %v1796 = vsel %vm1788, %v1741, %v1743
      %v1797 = vsel %vm1788, %v1743, %v1745
      %v1798 = vsel %vm1788, %v1745, %v1747
      %v1799 = vsel %vm1788, %v1747, %v1749
      %v1800 = vsel %vm1788, %v1749, %v1751
      %v1801 = vsel %vm1788, %v1751, %v1753
      %v1802 = vsel %vm1788, %v1753, %v1755
      %v1803 = vsel %vm1788, %v1757, %v1759
      %v1804 = vsel %vm1788, %v1759, %v1761
      %v1805 = vsel %vm1788, %v1761, %v1763
      %v1806 = vsel %vm1788, %v1763, %v1765
      %v1807 = vsel %vm1788, %v1765, %v1767
      %v1808 = vsel %vm1788, %v1767, %v1769
      %v1809 = vsel %vm1788, %v1769, %v1771
      %v1810 = vsel %vm1788, %v1773, %v1775
      %v1811 = vsel %vm1788, %v1775, %v1777
      %v1812 = vsel %vm1788, %v1777, %v1779
      %v1813 = vsel %vm1788, %v1779, %v1781
      %v1814 = vsel %vm1788, %v1781, %v1783
      %v1815 = vsel %vm1788, %v1783, %v1785
      %v1816 = vsel %vm1788, %v1785, %v1787
      %v1845 = vadd.f32 %v1616, %v1789
      %v1846 = vadd.f32 %v1617, %v1790
      %v1847 = vadd.f32 %v1618, %v1791
      %v1848 = vadd.f32 %v1619, %v1792
      %v1849 = vadd.f32 %v1620, %v1793
      %v1850 = vadd.f32 %v1621, %v1794
      %v1851 = vadd.f32 %v1622, %v1795
      %v1852 = vadd.f32 %v1623, %v1796
      %v1853 = vadd.f32 %v1624, %v1797
      %v1854 = vadd.f32 %v1625, %v1798
      %v1855 = vadd.f32 %v1626, %v1799
      %v1856 = vadd.f32 %v1627, %v1800
      %v1857 = vadd.f32 %v1628, %v1801
      %v1858 = vadd.f32 %v1629, %v1802
      %v1859 = vadd.f32 %v1630, %v1803
      %v1860 = vadd.f32 %v1631, %v1804
      %v1861 = vadd.f32 %v1632, %v1805
      %v1862 = vadd.f32 %v1633, %v1806
      %v1863 = vadd.f32 %v1634, %v1807
      %v1864 = vadd.f32 %v1635, %v1808
      %v1865 = vadd.f32 %v1636, %v1809
      %v1866 = vadd.f32 %v1637, %v1810
      %v1867 = vadd.f32 %v1638, %v1811
      %v1868 = vadd.f32 %v1639, %v1812
      %v1869 = vadd.f32 %v1640, %v1813
      %v1870 = vadd.f32 %v1641, %v1814
      %v1871 = vadd.f32 %v1642, %v1815
      %v1872 = vadd.f32 %v1643, %v1816
      %1873 = vset.pattern.permute.xlu0 8
      %1874 = vperm.xlu0 %1873, %v277
      %v1875 = vpop.permute.xlu0 %1874
      %1877 = vset.pattern.permute.xlu0 8
      %1878 = vperm.xlu0 %1877, %v278
      %v1879 = vpop.permute.xlu0 %1878
      %1881 = vset.pattern.permute.xlu0 8
      %1882 = vperm.xlu0 %1881, %v279
      %v1883 = vpop.permute.xlu0 %1882
      %1885 = vset.pattern.permute.xlu0 8
      %1886 = vperm.xlu0 %1885, %v280
      %v1887 = vpop.permute.xlu0 %1886
      %v1889 = vmul.f32 %v1875, %v305
      %v1890 = vmul.f32 %v1875, %v309
      %v1891 = vmul.f32 %v1875, %v313
      %v1892 = vmul.f32 %v1875, %v317
      %v1893 = vmul.f32 %v1875, %v321
      %v1894 = vmul.f32 %v1875, %v325
      %v1895 = vmul.f32 %v1875, %v329
      %v1896 = vmul.f32 %v1875, %v1429
      %v1897 = vmul.f32 %v1879, %v305
      %v1898 = vmul.f32 %v1879, %v309
      %v1899 = vmul.f32 %v1879, %v313
      %v1900 = vmul.f32 %v1879, %v317
      %v1901 = vmul.f32 %v1879, %v321
      %v1902 = vmul.f32 %v1879, %v325
      %v1903 = vmul.f32 %v1879, %v329
      %v1904 = vmul.f32 %v1879, %v1429
      %v1905 = vmul.f32 %v1883, %v305
      %v1906 = vmul.f32 %v1883, %v309
      %v1907 = vmul.f32 %v1883, %v313
      %v1908 = vmul.f32 %v1883, %v317
      %v1909 = vmul.f32 %v1883, %v321
      %v1910 = vmul.f32 %v1883, %v325
      %v1911 = vmul.f32 %v1883, %v329
      %v1912 = vmul.f32 %v1883, %v1429
      %v1913 = vmul.f32 %v1887, %v305
      %v1914 = vmul.f32 %v1887, %v309
      %v1915 = vmul.f32 %v1887, %v313
      %v1916 = vmul.f32 %v1887, %v317
      %v1917 = vmul.f32 %v1887, %v321
      %v1918 = vmul.f32 %v1887, %v325
      %v1919 = vmul.f32 %v1887, %v329
      %v1920 = vmul.f32 %v1887, %v1429
      %1953 = vrot.lane.b32.xlu0 %v1889, 66
      %v1954 = vpop.permute.xlu0 %1953
      %1955 = vrot.lane.b32.xlu0 %v1890, 66
      %v1956 = vpop.permute.xlu0 %1955
      %1957 = vrot.lane.b32.xlu0 %v1891, 66
      %v1958 = vpop.permute.xlu0 %1957
      %1959 = vrot.lane.b32.xlu0 %v1892, 66
      %v1960 = vpop.permute.xlu0 %1959
      %1961 = vrot.lane.b32.xlu0 %v1893, 66
      %v1962 = vpop.permute.xlu0 %1961
      %1963 = vrot.lane.b32.xlu0 %v1894, 66
      %v1964 = vpop.permute.xlu0 %1963
      %1965 = vrot.lane.b32.xlu0 %v1895, 66
      %v1966 = vpop.permute.xlu0 %1965
      %1967 = vrot.lane.b32.xlu0 %v1896, 66
      %v1968 = vpop.permute.xlu0 %1967
      %1969 = vrot.lane.b32.xlu0 %v1897, 66
      %v1970 = vpop.permute.xlu0 %1969
      %1971 = vrot.lane.b32.xlu0 %v1898, 66
      %v1972 = vpop.permute.xlu0 %1971
      %1973 = vrot.lane.b32.xlu0 %v1899, 66
      %v1974 = vpop.permute.xlu0 %1973
      %1975 = vrot.lane.b32.xlu0 %v1900, 66
      %v1976 = vpop.permute.xlu0 %1975
      %1977 = vrot.lane.b32.xlu0 %v1901, 66
      %v1978 = vpop.permute.xlu0 %1977
      %1979 = vrot.lane.b32.xlu0 %v1902, 66
      %v1980 = vpop.permute.xlu0 %1979
      %1981 = vrot.lane.b32.xlu0 %v1903, 66
      %v1982 = vpop.permute.xlu0 %1981
      %1983 = vrot.lane.b32.xlu0 %v1904, 66
      %v1984 = vpop.permute.xlu0 %1983
      %1985 = vrot.lane.b32.xlu0 %v1905, 66
      %v1986 = vpop.permute.xlu0 %1985
      %1987 = vrot.lane.b32.xlu0 %v1906, 66
      %v1988 = vpop.permute.xlu0 %1987
      %1989 = vrot.lane.b32.xlu0 %v1907, 66
      %v1990 = vpop.permute.xlu0 %1989
      %1991 = vrot.lane.b32.xlu0 %v1908, 66
      %v1992 = vpop.permute.xlu0 %1991
      %1993 = vrot.lane.b32.xlu0 %v1909, 66
      %v1994 = vpop.permute.xlu0 %1993
      %1995 = vrot.lane.b32.xlu0 %v1910, 66
      %v1996 = vpop.permute.xlu0 %1995
      %1997 = vrot.lane.b32.xlu0 %v1911, 66
      %v1998 = vpop.permute.xlu0 %1997
      %1999 = vrot.lane.b32.xlu0 %v1912, 66
      %v2000 = vpop.permute.xlu0 %1999
      %2001 = vrot.lane.b32.xlu0 %v1913, 66
      %v2002 = vpop.permute.xlu0 %2001
      %2003 = vrot.lane.b32.xlu0 %v1914, 66
      %v2004 = vpop.permute.xlu0 %2003
      %2005 = vrot.lane.b32.xlu0 %v1915, 66
      %v2006 = vpop.permute.xlu0 %2005
      %2007 = vrot.lane.b32.xlu0 %v1916, 66
      %v2008 = vpop.permute.xlu0 %2007
      %2009 = vrot.lane.b32.xlu0 %v1917, 66
      %v2010 = vpop.permute.xlu0 %2009
      %2011 = vrot.lane.b32.xlu0 %v1918, 66
      %v2012 = vpop.permute.xlu0 %2011
      %2013 = vrot.lane.b32.xlu0 %v1919, 66
      %v2014 = vpop.permute.xlu0 %2013
      %2015 = vrot.lane.b32.xlu0 %v1920, 66
      %v2016 = vpop.permute.xlu0 %2015
      %vm2017 = vcmask 539648
      %v2018 = vsel %vm2017, %v1954, %v1956
      %v2019 = vsel %vm2017, %v1956, %v1958
      %v2020 = vsel %vm2017, %v1958, %v1960
      %v2021 = vsel %vm2017, %v1960, %v1962
      %v2022 = vsel %vm2017, %v1962, %v1964
      %v2023 = vsel %vm2017, %v1964, %v1966
      %v2024 = vsel %vm2017, %v1966, %v1968
      %v2025 = vsel %vm2017, %v1970, %v1972
      %v2026 = vsel %vm2017, %v1972, %v1974
      %v2027 = vsel %vm2017, %v1974, %v1976
      %v2028 = vsel %vm2017, %v1976, %v1978
      %v2029 = vsel %vm2017, %v1978, %v1980
      %v2030 = vsel %vm2017, %v1980, %v1982
      %v2031 = vsel %vm2017, %v1982, %v1984
      %v2032 = vsel %vm2017, %v1986, %v1988
      %v2033 = vsel %vm2017, %v1988, %v1990
      %v2034 = vsel %vm2017, %v1990, %v1992
      %v2035 = vsel %vm2017, %v1992, %v1994
      %v2036 = vsel %vm2017, %v1994, %v1996
      %v2037 = vsel %vm2017, %v1996, %v1998
      %v2038 = vsel %vm2017, %v1998, %v2000
      %v2039 = vsel %vm2017, %v2002, %v2004
      %v2040 = vsel %vm2017, %v2004, %v2006
      %v2041 = vsel %vm2017, %v2006, %v2008
      %v2042 = vsel %vm2017, %v2008, %v2010
      %v2043 = vsel %vm2017, %v2010, %v2012
      %v2044 = vsel %vm2017, %v2012, %v2014
      %v2045 = vsel %vm2017, %v2014, %v2016
      %v2074 = vadd.f32 %v1845, %v2018
      %v2075 = vadd.f32 %v1846, %v2019
      %v2076 = vadd.f32 %v1847, %v2020
      %v2077 = vadd.f32 %v1848, %v2021
      %v2078 = vadd.f32 %v1849, %v2022
      %v2079 = vadd.f32 %v1850, %v2023
      %v2080 = vadd.f32 %v1851, %v2024
      %v2081 = vadd.f32 %v1852, %v2025
      %v2082 = vadd.f32 %v1853, %v2026
      %v2083 = vadd.f32 %v1854, %v2027
      %v2084 = vadd.f32 %v1855, %v2028
      %v2085 = vadd.f32 %v1856, %v2029
      %v2086 = vadd.f32 %v1857, %v2030
      %v2087 = vadd.f32 %v1858, %v2031
      %v2088 = vadd.f32 %v1859, %v2032
      %v2089 = vadd.f32 %v1860, %v2033
      %v2090 = vadd.f32 %v1861, %v2034
      %v2091 = vadd.f32 %v1862, %v2035
      %v2092 = vadd.f32 %v1863, %v2036
      %v2093 = vadd.f32 %v1864, %v2037
      %v2094 = vadd.f32 %v1865, %v2038
      %v2095 = vadd.f32 %v1866, %v2039
      %v2096 = vadd.f32 %v1867, %v2040
      %v2097 = vadd.f32 %v1868, %v2041
      %v2098 = vadd.f32 %v1869, %v2042
      %v2099 = vadd.f32 %v1870, %v2043
      %v2100 = vadd.f32 %v1871, %v2044
      %v2101 = vadd.f32 %v1872, %v2045
      %v2102 = vld [vmem:[%s2] sm:$0xff]
      %v2103 = vld [vmem:[%s2 + $0x8] sm:$0xff]
      %v2104 = vld [vmem:[%s2 + $0x10] sm:$0xff]
      %v2105 = vld [vmem:[%s2 + $0x18] sm:$0xff]
      %2107 = vset.pattern.permute.xlu0 0
      %2108 = vperm.xlu0 %2107, %v2102
      %v2109 = vpop.permute.xlu0 %2108
      %2112 = vset.pattern.permute.xlu0 0
      %2113 = vperm.xlu0 %2112, %v2103
      %v2114 = vpop.permute.xlu0 %2113
      %2117 = vset.pattern.permute.xlu0 0
      %2118 = vperm.xlu0 %2117, %v2104
      %v2119 = vpop.permute.xlu0 %2118
      %2122 = vset.pattern.permute.xlu0 0
      %2123 = vperm.xlu0 %2122, %v2105
      %v2124 = vpop.permute.xlu0 %2123
      %v2126 = vadd.f32 %v2074, %v2109
      %v2127 = vadd.f32 %v2075, %v2109
      %v2128 = vadd.f32 %v2076, %v2109
      %v2129 = vadd.f32 %v2077, %v2109
      %v2130 = vadd.f32 %v2078, %v2109
      %v2131 = vadd.f32 %v2079, %v2109
      %v2132 = vadd.f32 %v2080, %v2109
      %v2133 = vadd.f32 %v2081, %v2114
      %v2134 = vadd.f32 %v2082, %v2114
      %v2135 = vadd.f32 %v2083, %v2114
      %v2136 = vadd.f32 %v2084, %v2114
      %v2137 = vadd.f32 %v2085, %v2114
      %v2138 = vadd.f32 %v2086, %v2114
      %v2139 = vadd.f32 %v2087, %v2114
      %v2140 = vadd.f32 %v2088, %v2119
      %v2141 = vadd.f32 %v2089, %v2119
      %v2142 = vadd.f32 %v2090, %v2119
      %v2143 = vadd.f32 %v2091, %v2119
      %v2144 = vadd.f32 %v2092, %v2119
      %v2145 = vadd.f32 %v2093, %v2119
      %v2146 = vadd.f32 %v2094, %v2119
      %v2147 = vadd.f32 %v2095, %v2124
      %v2148 = vadd.f32 %v2096, %v2124
      %v2149 = vadd.f32 %v2097, %v2124
      %v2150 = vadd.f32 %v2098, %v2124
      %v2151 = vadd.f32 %v2099, %v2124
      %v2152 = vadd.f32 %v2100, %v2124
      %v2153 = vadd.f32 %v2101, %v2124
      %v2154 = vmax.f32 %v2126, 0.0
      %v2155 = vmax.f32 %v2127, 0.0
      %v2156 = vmax.f32 %v2128, 0.0
      %v2157 = vmax.f32 %v2129, 0.0
      %v2158 = vmax.f32 %v2130, 0.0
      %v2159 = vmax.f32 %v2131, 0.0
      %v2160 = vmax.f32 %v2132, 0.0
      %v2161 = vmax.f32 %v2133, 0.0
      %v2162 = vmax.f32 %v2134, 0.0
      %v2163 = vmax.f32 %v2135, 0.0
      %v2164 = vmax.f32 %v2136, 0.0
      %v2165 = vmax.f32 %v2137, 0.0
      %v2166 = vmax.f32 %v2138, 0.0
      %v2167 = vmax.f32 %v2139, 0.0
      %v2168 = vmax.f32 %v2140, 0.0
      %v2169 = vmax.f32 %v2141, 0.0
      %v2170 = vmax.f32 %v2142, 0.0
      %v2171 = vmax.f32 %v2143, 0.0
      %v2172 = vmax.f32 %v2144, 0.0
      %v2173 = vmax.f32 %v2145, 0.0
      %v2174 = vmax.f32 %v2146, 0.0
      %v2175 = vmax.f32 %v2147, 0.0
      %v2176 = vmax.f32 %v2148, 0.0
      %v2177 = vmax.f32 %v2149, 0.0
      %v2178 = vmax.f32 %v2150, 0.0
      %v2179 = vmax.f32 %v2151, 0.0
      %v2180 = vmax.f32 %v2152, 0.0
      %v2181 = vmax.f32 %v2153, 0.0
      %2182 = vst [vmem:[#allocation2] sm:$0xff] %v2154
      %2183 = vst [vmem:[#allocation2 + $0x8] sm:$0xff] %v2155
      %2184 = vst [vmem:[#allocation2 + $0x10] sm:$0xff] %v2156
      %2185 = vst [vmem:[#allocation2 + $0x18] sm:$0xff] %v2157
      %2186 = vst [vmem:[#allocation2 + $0x20] sm:$0xff] %v2158
      %2187 = vst [vmem:[#allocation2 + $0x28] sm:$0xff] %v2159
      %vm2188 = vcmask 588800
      %2189 = vst.msk [vmem:[#allocation2 + $0x30] sm:$0xff] %vm2188, %v2160
      %2190 = vst [vmem:[#allocation2 + $0x38] sm:$0xff] %v2161
      %2191 = vst [vmem:[#allocation2 + $0x40] sm:$0xff] %v2162
      %2192 = vst [vmem:[#allocation2 + $0x48] sm:$0xff] %v2163
      %2193 = vst [vmem:[#allocation2 + $0x50] sm:$0xff] %v2164
      %2194 = vst [vmem:[#allocation2 + $0x58] sm:$0xff] %v2165
      %2195 = vst [vmem:[#allocation2 + $0x60] sm:$0xff] %v2166
      %2196 = vst.msk [vmem:[#allocation2 + $0x68] sm:$0xff] %vm2188, %v2167
      %2197 = vst [vmem:[#allocation2 + $0x70] sm:$0xff] %v2168
      %2198 = vst [vmem:[#allocation2 + $0x78] sm:$0xff] %v2169
      %2199 = vst [vmem:[#allocation2 + $0x80] sm:$0xff] %v2170
      %2200 = vst [vmem:[#allocation2 + $0x88] sm:$0xff] %v2171
      %2201 = vst [vmem:[#allocation2 + $0x90] sm:$0xff] %v2172
      %2202 = vst [vmem:[#allocation2 + $0x98] sm:$0xff] %v2173
      %2203 = vst.msk [vmem:[#allocation2 + $0xa0] sm:$0xff] %vm2188, %v2174
      %2204 = vst [vmem:[#allocation2 + $0xa8] sm:$0xff] %v2175
      %2205 = vst [vmem:[#allocation2 + $0xb0] sm:$0xff] %v2176
      %2206 = vst [vmem:[#allocation2 + $0xb8] sm:$0xff] %v2177
      %2207 = vst [vmem:[#allocation2 + $0xc0] sm:$0xff] %v2178
      %2208 = vst [vmem:[#allocation2 + $0xc8] sm:$0xff] %v2179
      %2209 = vst [vmem:[#allocation2 + $0xd0] sm:$0xff] %v2180
      %2210 = vst.msk [vmem:[#allocation2 + $0xd8] sm:$0xff] %vm2188, %v2181
      %v2211 = vld [vmem:[#allocation2] sm:$0xff]
      %v2212 = vld [vmem:[#allocation2 + $0x8] sm:$0xff]
      %v2213 = vld [vmem:[#allocation2 + $0x10] sm:$0xff]
      %v2214 = vld [vmem:[#allocation2 + $0x18] sm:$0xff]
      %v2215 = vld [vmem:[#allocation2 + $0x20] sm:$0xff]
      %v2216 = vld [vmem:[#allocation2 + $0x28] sm:$0xff]
      %v2217 = vld [vmem:[#allocation2 + $0x30] sm:$0xff]
      %v2218 = vld [vmem:[#allocation2 + $0x38] sm:$0xff]
      %v2219 = vld [vmem:[#allocation2 + $0x40] sm:$0xff]
      %v2220 = vld [vmem:[#allocation2 + $0x48] sm:$0xff]
      %v2221 = vld [vmem:[#allocation2 + $0x50] sm:$0xff]
      %v2222 = vld [vmem:[#allocation2 + $0x58] sm:$0xff]
      %v2223 = vld [vmem:[#allocation2 + $0x60] sm:$0xff]
      %v2224 = vld [vmem:[#allocation2 + $0x68] sm:$0xff]
      %v2225 = vld [vmem:[#allocation2 + $0x70] sm:$0xff]
      %v2226 = vld [vmem:[#allocation2 + $0x78] sm:$0xff]
      %v2227 = vld [vmem:[#allocation2 + $0x80] sm:$0xff]
      %v2228 = vld [vmem:[#allocation2 + $0x88] sm:$0xff]
      %v2229 = vld [vmem:[#allocation2 + $0x90] sm:$0xff]
      %v2230 = vld [vmem:[#allocation2 + $0x98] sm:$0xff]
      %v2231 = vld [vmem:[#allocation2 + $0xa0] sm:$0xff]
      %v2232 = vld [vmem:[#allocation2 + $0xa8] sm:$0xff]
      %v2233 = vld [vmem:[#allocation2 + $0xb0] sm:$0xff]
      %v2234 = vld [vmem:[#allocation2 + $0xb8] sm:$0xff]
      %v2235 = vld [vmem:[#allocation2 + $0xc0] sm:$0xff]
      %v2236 = vld [vmem:[#allocation2 + $0xc8] sm:$0xff]
      %v2237 = vld [vmem:[#allocation2 + $0xd0] sm:$0xff]
      %v2238 = vld [vmem:[#allocation2 + $0xd8] sm:$0xff]
      %2267 = vrot.lane.b32.xlu0 %v2211, 127
      %v2268 = vpop.permute.xlu0 %2267
      %2269 = vrot.lane.b32.xlu0 %v2212, 127
      %v2270 = vpop.permute.xlu0 %2269
      %2271 = vrot.lane.b32.xlu0 %v2213, 127
      %v2272 = vpop.permute.xlu0 %2271
      %2273 = vrot.lane.b32.xlu0 %v2214, 127
      %v2274 = vpop.permute.xlu0 %2273
      %2275 = vrot.lane.b32.xlu0 %v2215, 127
      %v2276 = vpop.permute.xlu0 %2275
      %2277 = vrot.lane.b32.xlu0 %v2216, 127
      %v2278 = vpop.permute.xlu0 %2277
      %2279 = vrot.lane.b32.xlu0 %v2217, 127
      %v2280 = vpop.permute.xlu0 %2279
      %2281 = vrot.lane.b32.xlu0 %v2218, 127
      %v2282 = vpop.permute.xlu0 %2281
      %2283 = vrot.lane.b32.xlu0 %v2219, 127
      %v2284 = vpop.permute.xlu0 %2283
      %2285 = vrot.lane.b32.xlu0 %v2220, 127
      %v2286 = vpop.permute.xlu0 %2285
      %2287 = vrot.lane.b32.xlu0 %v2221, 127
      %v2288 = vpop.permute.xlu0 %2287
      %2289 = vrot.lane.b32.xlu0 %v2222, 127
      %v2290 = vpop.permute.xlu0 %2289
      %2291 = vrot.lane.b32.xlu0 %v2223, 127
      %v2292 = vpop.permute.xlu0 %2291
      %2293 = vrot.lane.b32.xlu0 %v2224, 127
      %v2294 = vpop.permute.xlu0 %2293
      %2295 = vrot.lane.b32.xlu0 %v2225, 127
      %v2296 = vpop.permute.xlu0 %2295
      %2297 = vrot.lane.b32.xlu0 %v2226, 127
      %v2298 = vpop.permute.xlu0 %2297
      %2299 = vrot.lane.b32.xlu0 %v2227, 127
      %v2300 = vpop.permute.xlu0 %2299
      %2301 = vrot.lane.b32.xlu0 %v2228, 127
      %v2302 = vpop.permute.xlu0 %2301
      %2303 = vrot.lane.b32.xlu0 %v2229, 127
      %v2304 = vpop.permute.xlu0 %2303
      %2305 = vrot.lane.b32.xlu0 %v2230, 127
      %v2306 = vpop.permute.xlu0 %2305
      %2307 = vrot.lane.b32.xlu0 %v2231, 127
      %v2308 = vpop.permute.xlu0 %2307
      %2309 = vrot.lane.b32.xlu0 %v2232, 127
      %v2310 = vpop.permute.xlu0 %2309
      %2311 = vrot.lane.b32.xlu0 %v2233, 127
      %v2312 = vpop.permute.xlu0 %2311
      %2313 = vrot.lane.b32.xlu0 %v2234, 127
      %v2314 = vpop.permute.xlu0 %2313
      %2315 = vrot.lane.b32.xlu0 %v2235, 127
      %v2316 = vpop.permute.xlu0 %2315
      %2317 = vrot.lane.b32.xlu0 %v2236, 127
      %v2318 = vpop.permute.xlu0 %2317
      %2319 = vrot.lane.b32.xlu0 %v2237, 127
      %v2320 = vpop.permute.xlu0 %2319
      %2321 = vrot.lane.b32.xlu0 %v2238, 127
      %v2322 = vpop.permute.xlu0 %2321
      %v2323 = vsel %vm493, %v2268, %v2270
      %v2324 = vsel %vm493, %v2270, %v2272
      %v2325 = vsel %vm493, %v2272, %v2274
      %v2326 = vsel %vm493, %v2274, %v2276
      %v2327 = vsel %vm493, %v2276, %v2278
      %v2328 = vsel %vm493, %v2278, %v2280
      %v2329 = vsel %vm493, %v2282, %v2284
      %v2330 = vsel %vm493, %v2284, %v2286
      %v2331 = vsel %vm493, %v2286, %v2288
      %v2332 = vsel %vm493, %v2288, %v2290
      %v2333 = vsel %vm493, %v2290, %v2292
      %v2334 = vsel %vm493, %v2292, %v2294
      %v2335 = vsel %vm493, %v2296, %v2298
      %v2336 = vsel %vm493, %v2298, %v2300
      %v2337 = vsel %vm493, %v2300, %v2302
      %v2338 = vsel %vm493, %v2302, %v2304
      %v2339 = vsel %vm493, %v2304, %v2306
      %v2340 = vsel %vm493, %v2306, %v2308
      %v2341 = vsel %vm493, %v2310, %v2312
      %v2342 = vsel %vm493, %v2312, %v2314
      %v2343 = vsel %vm493, %v2314, %v2316
      %v2344 = vsel %vm493, %v2316, %v2318
      %v2345 = vsel %vm493, %v2318, %v2320
      %v2346 = vsel %vm493, %v2320, %v2322
      %v2375 = vmax.f32 %v2211, %v2323
      %v2376 = vmax.f32 %v2212, %v2324
      %v2377 = vmax.f32 %v2213, %v2325
      %v2378 = vmax.f32 %v2214, %v2326
      %v2379 = vmax.f32 %v2215, %v2327
      %v2380 = vmax.f32 %v2216, %v2328
      %v2381 = vmax.f32 %v2217, %v2280
      %v2382 = vmax.f32 %v2218, %v2329
      %v2383 = vmax.f32 %v2219, %v2330
      %v2384 = vmax.f32 %v2220, %v2331
      %v2385 = vmax.f32 %v2221, %v2332
      %v2386 = vmax.f32 %v2222, %v2333
      %v2387 = vmax.f32 %v2223, %v2334
      %v2388 = vmax.f32 %v2224, %v2294
      %v2389 = vmax.f32 %v2225, %v2335
      %v2390 = vmax.f32 %v2226, %v2336
      %v2391 = vmax.f32 %v2227, %v2337
      %v2392 = vmax.f32 %v2228, %v2338
      %v2393 = vmax.f32 %v2229, %v2339
      %v2394 = vmax.f32 %v2230, %v2340
      %v2395 = vmax.f32 %v2231, %v2308
      %v2396 = vmax.f32 %v2232, %v2341
      %v2397 = vmax.f32 %v2233, %v2342
      %v2398 = vmax.f32 %v2234, %v2343
      %v2399 = vmax.f32 %v2235, %v2344
      %v2400 = vmax.f32 %v2236, %v2345
      %v2401 = vmax.f32 %v2237, %v2346
      %v2402 = vmax.f32 %v2238, %v2322
      %2431 = vrot.lane.b32.xlu0 %v2375, 98
      %v2432 = vpop.permute.xlu0 %2431
      %2433 = vrot.lane.b32.xlu0 %v2376, 98
      %v2434 = vpop.permute.xlu0 %2433
      %2435 = vrot.lane.b32.xlu0 %v2377, 98
      %v2436 = vpop.permute.xlu0 %2435
      %2437 = vrot.lane.b32.xlu0 %v2378, 98
      %v2438 = vpop.permute.xlu0 %2437
      %2439 = vrot.lane.b32.xlu0 %v2379, 98
      %v2440 = vpop.permute.xlu0 %2439
      %2441 = vrot.lane.b32.xlu0 %v2380, 98
      %v2442 = vpop.permute.xlu0 %2441
      %2443 = vrot.lane.b32.xlu0 %v2381, 98
      %v2444 = vpop.permute.xlu0 %2443
      %2445 = vrot.lane.b32.xlu0 %v2382, 98
      %v2446 = vpop.permute.xlu0 %2445
      %2447 = vrot.lane.b32.xlu0 %v2383, 98
      %v2448 = vpop.permute.xlu0 %2447
      %2449 = vrot.lane.b32.xlu0 %v2384, 98
      %v2450 = vpop.permute.xlu0 %2449
      %2451 = vrot.lane.b32.xlu0 %v2385, 98
      %v2452 = vpop.permute.xlu0 %2451
      %2453 = vrot.lane.b32.xlu0 %v2386, 98
      %v2454 = vpop.permute.xlu0 %2453
      %2455 = vrot.lane.b32.xlu0 %v2387, 98
      %v2456 = vpop.permute.xlu0 %2455
      %2457 = vrot.lane.b32.xlu0 %v2388, 98
      %v2458 = vpop.permute.xlu0 %2457
      %2459 = vrot.lane.b32.xlu0 %v2389, 98
      %v2460 = vpop.permute.xlu0 %2459
      %2461 = vrot.lane.b32.xlu0 %v2390, 98
      %v2462 = vpop.permute.xlu0 %2461
      %2463 = vrot.lane.b32.xlu0 %v2391, 98
      %v2464 = vpop.permute.xlu0 %2463
      %2465 = vrot.lane.b32.xlu0 %v2392, 98
      %v2466 = vpop.permute.xlu0 %2465
      %2467 = vrot.lane.b32.xlu0 %v2393, 98
      %v2468 = vpop.permute.xlu0 %2467
      %2469 = vrot.lane.b32.xlu0 %v2394, 98
      %v2470 = vpop.permute.xlu0 %2469
      %2471 = vrot.lane.b32.xlu0 %v2395, 98
      %v2472 = vpop.permute.xlu0 %2471
      %2473 = vrot.lane.b32.xlu0 %v2396, 98
      %v2474 = vpop.permute.xlu0 %2473
      %2475 = vrot.lane.b32.xlu0 %v2397, 98
      %v2476 = vpop.permute.xlu0 %2475
      %2477 = vrot.lane.b32.xlu0 %v2398, 98
      %v2478 = vpop.permute.xlu0 %2477
      %2479 = vrot.lane.b32.xlu0 %v2399, 98
      %v2480 = vpop.permute.xlu0 %2479
      %2481 = vrot.lane.b32.xlu0 %v2400, 98
      %v2482 = vpop.permute.xlu0 %2481
      %2483 = vrot.lane.b32.xlu0 %v2401, 98
      %v2484 = vpop.permute.xlu0 %2483
      %2485 = vrot.lane.b32.xlu0 %v2402, 98
      %v2486 = vpop.permute.xlu0 %2485
      %v2487 = vsel %vm911, %v2432, %v2434
      %v2488 = vsel %vm911, %v2434, %v2436
      %v2489 = vsel %vm911, %v2436, %v2438
      %v2490 = vsel %vm911, %v2438, %v2440
      %v2491 = vsel %vm911, %v2440, %v2442
      %v2492 = vsel %vm911, %v2442, %v2444
      %v2493 = vsel %vm911, %v2446, %v2448
      %v2494 = vsel %vm911, %v2448, %v2450
      %v2495 = vsel %vm911, %v2450, %v2452
      %v2496 = vsel %vm911, %v2452, %v2454
      %v2497 = vsel %vm911, %v2454, %v2456
      %v2498 = vsel %vm911, %v2456, %v2458
      %v2499 = vsel %vm911, %v2460, %v2462
      %v2500 = vsel %vm911, %v2462, %v2464
      %v2501 = vsel %vm911, %v2464, %v2466
      %v2502 = vsel %vm911, %v2466, %v2468
      %v2503 = vsel %vm911, %v2468, %v2470
      %v2504 = vsel %vm911, %v2470, %v2472
      %v2505 = vsel %vm911, %v2474, %v2476
      %v2506 = vsel %vm911, %v2476, %v2478
      %v2507 = vsel %vm911, %v2478, %v2480
      %v2508 = vsel %vm911, %v2480, %v2482
      %v2509 = vsel %vm911, %v2482, %v2484
      %v2510 = vsel %vm911, %v2484, %v2486
      %v2539 = vmax.f32 %v2375, %v2487
      %v2540 = vmax.f32 %v2376, %v2488
      %v2541 = vmax.f32 %v2377, %v2489
      %v2542 = vmax.f32 %v2378, %v2490
      %v2543 = vmax.f32 %v2379, %v2491
      %v2544 = vmax.f32 %v2380, %v2492
      %v2545 = vmax.f32 %v2381, %v2444
      %v2546 = vmax.f32 %v2382, %v2493
      %v2547 = vmax.f32 %v2383, %v2494
      %v2548 = vmax.f32 %v2384, %v2495
      %v2549 = vmax.f32 %v2385, %v2496
      %v2550 = vmax.f32 %v2386, %v2497
      %v2551 = vmax.f32 %v2387, %v2498
      %v2552 = vmax.f32 %v2388, %v2458
      %v2553 = vmax.f32 %v2389, %v2499
      %v2554 = vmax.f32 %v2390, %v2500
      %v2555 = vmax.f32 %v2391, %v2501
      %v2556 = vmax.f32 %v2392, %v2502
      %v2557 = vmax.f32 %v2393, %v2503
      %v2558 = vmax.f32 %v2394, %v2504
      %v2559 = vmax.f32 %v2395, %v2472
      %v2560 = vmax.f32 %v2396, %v2505
      %v2561 = vmax.f32 %v2397, %v2506
      %v2562 = vmax.f32 %v2398, %v2507
      %v2563 = vmax.f32 %v2399, %v2508
      %v2564 = vmax.f32 %v2400, %v2509
      %v2565 = vmax.f32 %v2401, %v2510
      %v2566 = vmax.f32 %v2402, %v2486
      %v2567 = vld [vmem:[%s5] sm:$0xff]
      %v2568 = vld [vmem:[%s5 + $0x8] sm:$0xff]
      %v2569 = vld [vmem:[%s5 + $0x10] sm:$0xff]
      %v2570 = vld [vmem:[%s5 + $0x18] sm:$0xff]
      %v2571 = vld [vmem:[%s5 + $0x20] sm:$0xff]
      %v2572 = vld [vmem:[%s5 + $0x28] sm:$0xff]
      %v2573 = vld [vmem:[%s5 + $0x30] sm:$0xff]
      %v2574 = vld [vmem:[%s5 + $0x38] sm:$0xff]
      %v2575 = vld [vmem:[%s5 + $0x40] sm:$0xff]
      %v2576 = vld [vmem:[%s5 + $0x48] sm:$0xff]
      %v2577 = vld [vmem:[%s5 + $0x50] sm:$0xff]
      %v2578 = vld [vmem:[%s5 + $0x58] sm:$0xff]
      %v2579 = vld [vmem:[%s5 + $0x60] sm:$0xff]
      %v2580 = vld [vmem:[%s5 + $0x68] sm:$0xff]
      %v2581 = vld [vmem:[%s5 + $0x70] sm:$0xff]
      %v2582 = vld [vmem:[%s5 + $0x78] sm:$0xff]
      %v2583 = vld [vmem:[%s5 + $0x80] sm:$0xff]
      %v2584 = vld [vmem:[%s5 + $0x88] sm:$0xff]
      %v2585 = vld [vmem:[%s5 + $0x90] sm:$0xff]
      %v2586 = vld [vmem:[%s5 + $0x98] sm:$0xff]
      %v2587 = vld [vmem:[%s5 + $0xa0] sm:$0xff]
      %v2588 = vld [vmem:[%s5 + $0xa8] sm:$0xff]
      %v2589 = vld [vmem:[%s5 + $0xb0] sm:$0xff]
      %v2590 = vld [vmem:[%s5 + $0xb8] sm:$0xff]
      %v2591 = vld [vmem:[%s5 + $0xc0] sm:$0xff]
      %v2592 = vld [vmem:[%s5 + $0xc8] sm:$0xff]
      %v2593 = vld [vmem:[%s5 + $0xd0] sm:$0xff]
      %v2594 = vld [vmem:[%s5 + $0xd8] sm:$0xff]
      %v2595 = vld [vmem:[%s5 + $0xe0] sm:$0xff]
      %v2596 = vld [vmem:[%s5 + $0xe8] sm:$0xff]
      %v2597 = vld [vmem:[%s5 + $0xf0] sm:$0xff]
      %v2598 = vld [vmem:[%s5 + $0xf8] sm:$0xff]
      %v2599 = vld [vmem:[%s5 + $0x100] sm:$0xff]
      %v2600 = vld [vmem:[%s5 + $0x108] sm:$0xff]
      %v2601 = vld [vmem:[%s5 + $0x110] sm:$0xff]
      %v2602 = vld [vmem:[%s5 + $0x118] sm:$0xff]
      %v2603 = vld [vmem:[%s5 + $0x120] sm:$0xff]
      %v2604 = vld [vmem:[%s5 + $0x128] sm:$0xff]
      %v2605 = vld [vmem:[%s5 + $0x130] sm:$0xff]
      %v2606 = vld [vmem:[%s5 + $0x138] sm:$0xff]
      %v2607 = vld [vmem:[%s5 + $0x140] sm:$0xff]
      %v2608 = vld [vmem:[%s5 + $0x148] sm:$0xff]
      %v2609 = vld [vmem:[%s5 + $0x150] sm:$0xff]
      %v2610 = vld [vmem:[%s5 + $0x158] sm:$0xff]
      %v2611 = vld [vmem:[%s5 + $0x160] sm:$0xff]
      %v2612 = vld [vmem:[%s5 + $0x168] sm:$0xff]
      %v2613 = vld [vmem:[%s5 + $0x170] sm:$0xff]
      %v2614 = vld [vmem:[%s5 + $0x178] sm:$0xff]
      %v2615 = vld [vmem:[%s5 + $0x180] sm:$0xff]
      %v2616 = vld [vmem:[%s5 + $0x188] sm:$0xff]
      %v2617 = vld [vmem:[%s5 + $0x190] sm:$0xff]
      %v2618 = vld [vmem:[%s5 + $0x198] sm:$0xff]
      %v2619 = vld [vmem:[%s5 + $0x1a0] sm:$0xff]
      %v2620 = vld [vmem:[%s5 + $0x1a8] sm:$0xff]
      %v2621 = vld [vmem:[%s5 + $0x1b0] sm:$0xff]
      %v2622 = vld [vmem:[%s5 + $0x1b8] sm:$0xff]
      %v2623 = vld [vmem:[%s5 + $0x1c0] sm:$0xff]
      %v2624 = vld [vmem:[%s5 + $0x1c8] sm:$0xff]
      %v2625 = vld [vmem:[%s5 + $0x1d0] sm:$0xff]
      %v2626 = vld [vmem:[%s5 + $0x1d8] sm:$0xff]
      %v2627 = vld [vmem:[%s5 + $0x1e0] sm:$0xff]
      %v2628 = vld [vmem:[%s5 + $0x1e8] sm:$0xff]
      %v2629 = vld [vmem:[%s5 + $0x1f0] sm:$0xff]
      %v2630 = vld [vmem:[%s5 + $0x1f8] sm:$0xff]
      %v2631 = vld [vmem:[%s5 + $0x200] sm:$0xff]
      %v2632 = vld [vmem:[%s5 + $0x208] sm:$0xff]
      %v2633 = vld [vmem:[%s5 + $0x210] sm:$0xff]
      %v2634 = vld [vmem:[%s5 + $0x218] sm:$0xff]
      %v2635 = vld [vmem:[%s5 + $0x220] sm:$0xff]
      %v2636 = vld [vmem:[%s5 + $0x228] sm:$0xff]
      %v2637 = vld [vmem:[%s5 + $0x230] sm:$0xff]
      %v2638 = vld [vmem:[%s5 + $0x238] sm:$0xff]
      %v2639 = vld [vmem:[%s5 + $0x240] sm:$0xff]
      %v2640 = vld [vmem:[%s5 + $0x248] sm:$0xff]
      %v2641 = vld [vmem:[%s5 + $0x250] sm:$0xff]
      %v2642 = vld [vmem:[%s5 + $0x258] sm:$0xff]
      %v2643 = vld [vmem:[%s5 + $0x260] sm:$0xff]
      %v2644 = vld [vmem:[%s5 + $0x268] sm:$0xff]
      %v2645 = vld [vmem:[%s5 + $0x270] sm:$0xff]
      %v2646 = vld [vmem:[%s5 + $0x278] sm:$0xff]
      %v2647 = vld [vmem:[%s5 + $0x280] sm:$0xff]
      %v2648 = vld [vmem:[%s5 + $0x288] sm:$0xff]
      %v2649 = vld [vmem:[%s5 + $0x290] sm:$0xff]
      %v2650 = vld [vmem:[%s5 + $0x298] sm:$0xff]
      %v2651 = vld [vmem:[%s5 + $0x2a0] sm:$0xff]
      %v2652 = vld [vmem:[%s5 + $0x2a8] sm:$0xff]
      %v2653 = vld [vmem:[%s5 + $0x2b0] sm:$0xff]
      %v2654 = vld [vmem:[%s5 + $0x2b8] sm:$0xff]
      %v2655 = vld [vmem:[%s5 + $0x2c0] sm:$0xff]
      %v2656 = vld [vmem:[%s5 + $0x2c8] sm:$0xff]
      %v2657 = vld [vmem:[%s5 + $0x2d0] sm:$0xff]
      %v2658 = vld [vmem:[%s5 + $0x2d8] sm:$0xff]
      %v2659 = vld [vmem:[%s5 + $0x2e0] sm:$0xff]
      %v2660 = vld [vmem:[%s5 + $0x2e8] sm:$0xff]
      %v2661 = vld [vmem:[%s5 + $0x2f0] sm:$0xff]
      %v2662 = vld [vmem:[%s5 + $0x2f8] sm:$0xff]
      %v2663 = vld [vmem:[%s5 + $0x300] sm:$0xff]
      %v2664 = vld [vmem:[%s5 + $0x308] sm:$0xff]
      %v2665 = vld [vmem:[%s5 + $0x310] sm:$0xff]
      %v2666 = vld [vmem:[%s5 + $0x318] sm:$0xff]
      %v2667 = vld [vmem:[%s5 + $0x320] sm:$0xff]
      %v2668 = vld [vmem:[%s5 + $0x328] sm:$0xff]
      %v2669 = vld [vmem:[%s5 + $0x330] sm:$0xff]
      %v2670 = vld [vmem:[%s5 + $0x338] sm:$0xff]
      %v2671 = vld [vmem:[%s5 + $0x340] sm:$0xff]
      %v2672 = vld [vmem:[%s5 + $0x348] sm:$0xff]
      %v2673 = vld [vmem:[%s5 + $0x350] sm:$0xff]
      %v2674 = vld [vmem:[%s5 + $0x358] sm:$0xff]
      %v2675 = vld [vmem:[%s5 + $0x360] sm:$0xff]
      %v2676 = vld [vmem:[%s5 + $0x368] sm:$0xff]
      %v2677 = vld [vmem:[%s5 + $0x370] sm:$0xff]
      %v2678 = vld [vmem:[%s5 + $0x378] sm:$0xff]
      %v2679 = vld [vmem:[%s5 + $0x380] sm:$0xff]
      %v2680 = vld [vmem:[%s5 + $0x388] sm:$0xff]
      %v2681 = vld [vmem:[%s5 + $0x390] sm:$0xff]
      %v2682 = vld [vmem:[%s5 + $0x398] sm:$0xff]
      %v2683 = vld [vmem:[%s5 + $0x3a0] sm:$0xff]
      %v2684 = vld [vmem:[%s5 + $0x3a8] sm:$0xff]
      %v2685 = vld [vmem:[%s5 + $0x3b0] sm:$0xff]
      %v2686 = vld [vmem:[%s5 + $0x3b8] sm:$0xff]
      %v2687 = vld [vmem:[%s5 + $0x3c0] sm:$0xff]
      %v2688 = vld [vmem:[%s5 + $0x3c8] sm:$0xff]
      %v2689 = vld [vmem:[%s5 + $0x3d0] sm:$0xff]
      %v2690 = vld [vmem:[%s5 + $0x3d8] sm:$0xff]
      %v2691 = vld [vmem:[%s5 + $0x3e0] sm:$0xff]
      %v2692 = vld [vmem:[%s5 + $0x3e8] sm:$0xff]
      %v2693 = vld [vmem:[%s5 + $0x3f0] sm:$0xff]
      %v2694 = vld [vmem:[%s5 + $0x3f8] sm:$0xff]
      %v2695 = vld [vmem:[%s5 + $0x400] sm:$0xff]
      %v2696 = vld [vmem:[%s5 + $0x408] sm:$0xff]
      %v2697 = vld [vmem:[%s5 + $0x410] sm:$0xff]
      %v2698 = vld [vmem:[%s5 + $0x418] sm:$0xff]
      %v2699 = vld [vmem:[%s5 + $0x420] sm:$0xff]
      %v2700 = vld [vmem:[%s5 + $0x428] sm:$0xff]
      %v2701 = vld [vmem:[%s5 + $0x430] sm:$0xff]
      %v2702 = vld [vmem:[%s5 + $0x438] sm:$0xff]
      %v2703 = vld [vmem:[%s5 + $0x440] sm:$0xff]
      %v2704 = vld [vmem:[%s5 + $0x448] sm:$0xff]
      %v2705 = vld [vmem:[%s5 + $0x450] sm:$0xff]
      %v2706 = vld [vmem:[%s5 + $0x458] sm:$0xff]
      %v2707 = vld [vmem:[%s5 + $0x460] sm:$0xff]
      %v2708 = vld [vmem:[%s5 + $0x468] sm:$0xff]
      %v2709 = vld [vmem:[%s5 + $0x470] sm:$0xff]
      %v2710 = vld [vmem:[%s5 + $0x478] sm:$0xff]
      %v2711 = vld [vmem:[%s5 + $0x480] sm:$0xff]
      %v2712 = vld [vmem:[%s5 + $0x488] sm:$0xff]
      %v2713 = vld [vmem:[%s5 + $0x490] sm:$0xff]
      %v2714 = vld [vmem:[%s5 + $0x498] sm:$0xff]
      %v2715 = vld [vmem:[%s5 + $0x4a0] sm:$0xff]
      %v2716 = vld [vmem:[%s5 + $0x4a8] sm:$0xff]
      %v2717 = vld [vmem:[%s5 + $0x4b0] sm:$0xff]
      %v2718 = vld [vmem:[%s5 + $0x4b8] sm:$0xff]
      %v2719 = vld [vmem:[%s5 + $0x4c0] sm:$0xff]
      %v2720 = vld [vmem:[%s5 + $0x4c8] sm:$0xff]
      %v2721 = vld [vmem:[%s5 + $0x4d0] sm:$0xff]
      %v2722 = vld [vmem:[%s5 + $0x4d8] sm:$0xff]
      %v2723 = vld [vmem:[%s5 + $0x4e0] sm:$0xff]
      %v2724 = vld [vmem:[%s5 + $0x4e8] sm:$0xff]
      %v2725 = vld [vmem:[%s5 + $0x4f0] sm:$0xff]
      %v2726 = vld [vmem:[%s5 + $0x4f8] sm:$0xff]
      %v2727 = vld [vmem:[%s5 + $0x500] sm:$0xff]
      %v2728 = vld [vmem:[%s5 + $0x508] sm:$0xff]
      %v2729 = vld [vmem:[%s5 + $0x510] sm:$0xff]
      %v2730 = vld [vmem:[%s5 + $0x518] sm:$0xff]
      %v2731 = vld [vmem:[%s5 + $0x520] sm:$0xff]
      %v2732 = vld [vmem:[%s5 + $0x528] sm:$0xff]
      %v2733 = vld [vmem:[%s5 + $0x530] sm:$0xff]
      %v2734 = vld [vmem:[%s5 + $0x538] sm:$0xff]
      %v2735 = vld [vmem:[%s5 + $0x540] sm:$0xff]
      %v2736 = vld [vmem:[%s5 + $0x548] sm:$0xff]
      %v2737 = vld [vmem:[%s5 + $0x550] sm:$0xff]
      %v2738 = vld [vmem:[%s5 + $0x558] sm:$0xff]
      %v2739 = vld [vmem:[%s5 + $0x560] sm:$0xff]
      %v2740 = vld [vmem:[%s5 + $0x568] sm:$0xff]
      %v2741 = vld [vmem:[%s5 + $0x570] sm:$0xff]
      %v2742 = vld [vmem:[%s5 + $0x578] sm:$0xff]
      %v2743 = vld [vmem:[%s5 + $0x580] sm:$0xff]
      %v2744 = vld [vmem:[%s5 + $0x588] sm:$0xff]
      %v2745 = vld [vmem:[%s5 + $0x590] sm:$0xff]
      %v2746 = vld [vmem:[%s5 + $0x598] sm:$0xff]
      %v2747 = vld [vmem:[%s5 + $0x5a0] sm:$0xff]
      %v2748 = vld [vmem:[%s5 + $0x5a8] sm:$0xff]
      %v2749 = vld [vmem:[%s5 + $0x5b0] sm:$0xff]
      %v2750 = vld [vmem:[%s5 + $0x5b8] sm:$0xff]
      %v2751 = vld [vmem:[%s5 + $0x5c0] sm:$0xff]
      %v2752 = vld [vmem:[%s5 + $0x5c8] sm:$0xff]
      %v2753 = vld [vmem:[%s5 + $0x5d0] sm:$0xff]
      %v2754 = vld [vmem:[%s5 + $0x5d8] sm:$0xff]
      %v2755 = vld [vmem:[%s5 + $0x5e0] sm:$0xff]
      %v2756 = vld [vmem:[%s5 + $0x5e8] sm:$0xff]
      %v2757 = vld [vmem:[%s5 + $0x5f0] sm:$0xff]
      %v2758 = vld [vmem:[%s5 + $0x5f8] sm:$0xff]
      %v2759 = vld [vmem:[%s5 + $0x600] sm:$0xff]
      %v2760 = vld [vmem:[%s5 + $0x608] sm:$0xff]
      %v2761 = vld [vmem:[%s5 + $0x610] sm:$0xff]
      %v2762 = vld [vmem:[%s5 + $0x618] sm:$0xff]
      %v2763 = vld [vmem:[%s5 + $0x620] sm:$0xff]
      %v2764 = vld [vmem:[%s5 + $0x628] sm:$0xff]
      %v2765 = vld [vmem:[%s5 + $0x630] sm:$0xff]
      %v2766 = vld [vmem:[%s5 + $0x638] sm:$0xff]
      %v2767 = vld [vmem:[%s5 + $0x640] sm:$0x7f]
      %v2768 = vld [vmem:[%s5 + $0x648] sm:$0x7f]
      %vm2769 = vcmask 318464
      %v2771 = vsel %vm2769, %v2545, 0
      %v2774 = vsel %vm2769, %v2552, 0
      %v2777 = vsel %vm2769, %v2559, 0
      %v2780 = vsel %vm2769, %v2566, 0
      %vm2782 = vcmask 1046528
      %v2784 = vsel %vm2782, %v2767, 0
      %v2787 = vsel %vm2782, %v2768, 0
      %2789 = vmatprep.subr.mxu0 %v2568
      %2790 = vmatpush1.msra.mxu0 %v2567
      %2791 = vmatprep.subr.mxu0 %v2570
      %2792 = vmatpush1.msra.mxu0 %v2569
      %2793 = vmatprep.subr.mxu0 %v2572
      %2794 = vmatpush1.msra.mxu0 %v2571
      %2795 = vmatprep.subr.mxu0 %v2574
      %2796 = vmatpush1.msra.mxu0 %v2573
      %2797 = vmatprep.subr.mxu0 %v2576
      %2798 = vmatpush1.msra.mxu0 %v2575
      %2799 = vmatprep.subr.mxu0 %v2578
      %2800 = vmatpush1.msra.mxu0 %v2577
      %2801 = vmatprep.subr.mxu0 %v2580
      %2802 = vmatpush1.msra.mxu0 %v2579
      %2803 = vmatprep.subr.mxu0 %v2582
      %2804 = vmatpush1.msra.mxu0 %v2581
      %2805 = vmatprep.subr.mxu0 %v2584
      %2806 = vmatpush1.msra.mxu0 %v2583
      %2807 = vmatprep.subr.mxu0 %v2586
      %2808 = vmatpush1.msra.mxu0 %v2585
      %2809 = vmatprep.subr.mxu0 %v2588
      %2810 = vmatpush1.msra.mxu0 %v2587
      %2811 = vmatprep.subr.mxu0 %v2590
      %2812 = vmatpush1.msra.mxu0 %v2589
      %2813 = vmatprep.subr.mxu0 %v2592
      %2814 = vmatpush1.msra.mxu0 %v2591
      %2815 = vmatprep.subr.mxu0 %v2594
      %2816 = vmatpush1.msra.mxu0 %v2593
      %2817 = vmatprep.subr.mxu0 %v2596
      %2818 = vmatpush1.msra.mxu0 %v2595
      %2819 = vmatprep.subr.mxu0 %v2598
      %2820 = vmatpush1.msra.mxu0 %v2597
      %2821 = vmatprep.subr.mxu0 %v2600
      %2822 = vmatpush1.msra.mxu0 %v2599
      %2823 = vmatprep.subr.mxu0 %v2602
      %2824 = vmatpush1.msra.mxu0 %v2601
      %2825 = vmatprep.subr.mxu0 %v2604
      %2826 = vmatpush1.msra.mxu0 %v2603
      %2827 = vmatprep.subr.mxu0 %v2606
      %2828 = vmatpush1.msra.mxu0 %v2605
      %2829 = vmatprep.subr.mxu0 %v2608
      %2830 = vmatpush1.msra.mxu0 %v2607
      %2831 = vmatprep.subr.mxu0 %v2610
      %2832 = vmatpush1.msra.mxu0 %v2609
      %2833 = vmatprep.subr.mxu0 %v2612
      %2834 = vmatpush1.msra.mxu0 %v2611
      %2835 = vmatprep.subr.mxu0 %v2614
      %2836 = vmatpush1.msra.mxu0 %v2613
      %2837 = vmatprep.subr.mxu0 %v2616
      %2838 = vmatpush1.msra.mxu0 %v2615
      %2839 = vmatprep.subr.mxu0 %v2618
      %2840 = vmatpush1.msra.mxu0 %v2617
      %2841 = vmatprep.subr.mxu0 %v2620
      %2842 = vmatpush1.msra.mxu0 %v2619
      %2843 = vmatprep.subr.mxu0 %v2622
      %2844 = vmatpush1.msra.mxu0 %v2621
      %2845 = vmatprep.subr.mxu0 %v2624
      %2846 = vmatpush1.msra.mxu0 %v2623
      %2847 = vmatprep.subr.mxu0 %v2626
      %2848 = vmatpush1.msra.mxu0 %v2625
      %2849 = vmatprep.subr.mxu0 %v2628
      %2850 = vmatpush1.msra.mxu0 %v2627
      %2851 = vmatprep.subr.mxu0 %v2630
      %2852 = vmatpush1.msra.mxu0 %v2629
      %2853 = vmatprep.mubr.f32.mxu0 %v2540
      %2854 = vmatmul.mubr.f32.gmra.mrb[0].mxu0 %v2539
      %v2855 = vpop.f32.mrb[0].mxu0
      %v2856 = vadd.f32 0.0, %v2855
      %v2857 = vpop.f32.mrb[0].mxu0
      %v2858 = vadd.f32 0.0, %v2857
      %2859 = vmatprep.mubr.f32.mxu0 %v2547
      %2860 = vmatmul.mubr.f32.gmra.mrb[0].mxu0 %v2546
      %v2861 = vpop.f32.mrb[0].mxu0
      %v2862 = vadd.f32 0.0, %v2861
      %v2863 = vpop.f32.mrb[0].mxu0
      %v2864 = vadd.f32 0.0, %v2863
      %2865 = vmatprep.mubr.f32.mxu0 %v2554
      %2866 = vmatmul.mubr.f32.gmra.mrb[0].mxu0 %v2553
      %v2867 = vpop.f32.mrb[0].mxu0
      %v2868 = vadd.f32 0.0, %v2867
      %v2869 = vpop.f32.mrb[0].mxu0
      %v2870 = vadd.f32 0.0, %v2869
      %2871 = vmatprep.mubr.f32.mxu0 %v2561
      %2872 = vmatmul.mubr.f32.gmra.mrb[0].mxu0 %v2560
      %v2873 = vpop.f32.mrb[0].mxu0
      %v2874 = vadd.f32 0.0, %v2873
      %v2875 = vpop.f32.mrb[0].mxu0
      %v2876 = vadd.f32 0.0, %v2875
      %2877 = vdwg.mxu0
      %2878 = vmatprep.subr.mxu0 %v2632
      %2879 = vmatpush1.msra.mxu0 %v2631
      %2880 = vmatprep.subr.mxu0 %v2634
      %2881 = vmatpush1.msra.mxu0 %v2633
      %2882 = vmatprep.subr.mxu0 %v2636
      %2883 = vmatpush1.msra.mxu0 %v2635
      %2884 = vmatprep.subr.mxu0 %v2638
      %2885 = vmatpush1.msra.mxu0 %v2637
      %2886 = vmatprep.subr.mxu0 %v2640
      %2887 = vmatpush1.msra.mxu0 %v2639
      %2888 = vmatprep.subr.mxu0 %v2642
      %2889 = vmatpush1.msra.mxu0 %v2641
      %2890 = vmatprep.subr.mxu0 %v2644
      %2891 = vmatpush1.msra.mxu0 %v2643
      %2892 = vmatprep.subr.mxu0 %v2646
      %2893 = vmatpush1.msra.mxu0 %v2645
      %2894 = vmatprep.subr.mxu0 %v2648
      %2895 = vmatpush1.msra.mxu0 %v2647
      %2896 = vmatprep.subr.mxu0 %v2650
      %2897 = vmatpush1.msra.mxu0 %v2649
      %2898 = vmatprep.subr.mxu0 %v2652
      %2899 = vmatpush1.msra.mxu0 %v2651
      %2900 = vmatprep.subr.mxu0 %v2654
      %2901 = vmatpush1.msra.mxu0 %v2653
      %2902 = vmatprep.subr.mxu0 %v2656
      %2903 = vmatpush1.msra.mxu0 %v2655
      %2904 = vmatprep.subr.mxu0 %v2658
      %2905 = vmatpush1.msra.mxu0 %v2657
      %2906 = vmatprep.subr.mxu0 %v2660
      %2907 = vmatpush1.msra.mxu0 %v2659
      %2908 = vmatprep.subr.mxu0 %v2662
      %2909 = vmatpush1.msra.mxu0 %v2661
      %2910 = vmatprep.subr.mxu0 %v2664
      %2911 = vmatpush1.msra.mxu0 %v2663
      %2912 = vmatprep.subr.mxu0 %v2666
      %2913 = vmatpush1.msra.mxu0 %v2665
      %2914 = vmatprep.subr.mxu0 %v2668
      %2915 = vmatpush1.msra.mxu0 %v2667
      %2916 = vmatprep.subr.mxu0 %v2670
      %2917 = vmatpush1.msra.mxu0 %v2669
      %2918 = vmatprep.subr.mxu0 %v2672
      %2919 = vmatpush1.msra.mxu0 %v2671
      %2920 = vmatprep.subr.mxu0 %v2674
      %2921 = vmatpush1.msra.mxu0 %v2673
      %2922 = vmatprep.subr.mxu0 %v2676
      %2923 = vmatpush1.msra.mxu0 %v2675
      %2924 = vmatprep.subr.mxu0 %v2678
      %2925 = vmatpush1.msra.mxu0 %v2677
      %2926 = vmatprep.subr.mxu0 %v2680
      %2927 = vmatpush1.msra.mxu0 %v2679
      %2928 = vmatprep.subr.mxu0 %v2682
      %2929 = vmatpush1.msra.mxu0 %v2681
      %2930 = vmatprep.subr.mxu0 %v2684
      %2931 = vmatpush1.msra.mxu0 %v2683
      %2932 = vmatprep.subr.mxu0 %v2686
      %2933 = vmatpush1.msra.mxu0 %v2685
      %2934 = vmatprep.subr.mxu0 %v2688
      %2935 = vmatpush1.msra.mxu0 %v2687
      %2936 = vmatprep.subr.mxu0 %v2690
      %2937 = vmatpush1.msra.mxu0 %v2689
      %2938 = vmatprep.subr.mxu0 %v2692
      %2939 = vmatpush1.msra.mxu0 %v2691
      %2940 = vmatprep.subr.mxu0 %v2694
      %2941 = vmatpush1.msra.mxu0 %v2693
      %2942 = vmatprep.mubr.f32.mxu0 %v2542
      %2943 = vmatmul.mubr.f32.gmra.mrb[0].mxu0 %v2541
      %v2944 = vpop.f32.mrb[0].mxu0
      %v2945 = vadd.f32 %v2856, %v2944
      %v2946 = vpop.f32.mrb[0].mxu0
      %v2947 = vadd.f32 %v2858, %v2946
      %2948 = vmatprep.mubr.f32.mxu0 %v2549
      %2949 = vmatmul.mubr.f32.gmra.mrb[0].mxu0 %v2548
      %v2950 = vpop.f32.mrb[0].mxu0
      %v2951 = vadd.f32 %v2862, %v2950
      %v2952 = vpop.f32.mrb[0].mxu0
      %v2953 = vadd.f32 %v2864, %v2952
      %2954 = vmatprep.mubr.f32.mxu0 %v2556
      %2955 = vmatmul.mubr.f32.gmra.mrb[0].mxu0 %v2555
      %v2956 = vpop.f32.mrb[0].mxu0
      %v2957 = vadd.f32 %v2868, %v2956
      %v2958 = vpop.f32.mrb[0].mxu0
      %v2959 = vadd.f32 %v2870, %v2958
      %2960 = vmatprep.mubr.f32.mxu0 %v2563
      %2961 = vmatmul.mubr.f32.gmra.mrb[0].mxu0 %v2562
      %v2962 = vpop.f32.mrb[0].mxu0
      %v2963 = vadd.f32 %v2874, %v2962
      %v2964 = vpop.f32.mrb[0].mxu0
      %v2965 = vadd.f32 %v2876, %v2964
      %2966 = vdwg.mxu0
      %2967 = vmatprep.subr.mxu0 %v2696
      %2968 = vmatpush1.msra.mxu0 %v2695
      %2969 = vmatprep.subr.mxu0 %v2698
      %2970 = vmatpush1.msra.mxu0 %v2697
      %2971 = vmatprep.subr.mxu0 %v2700
      %2972 = vmatpush1.msra.mxu0 %v2699
      %2973 = vmatprep.subr.mxu0 %v2702
      %2974 = vmatpush1.msra.mxu0 %v2701
      %2975 = vmatprep.subr.mxu0 %v2704
      %2976 = vmatpush1.msra.mxu0 %v2703
      %2977 = vmatprep.subr.mxu0 %v2706
      %2978 = vmatpush1.msra.mxu0 %v2705
      %2979 = vmatprep.subr.mxu0 %v2708
      %2980 = vmatpush1.msra.mxu0 %v2707
      %2981 = vmatprep.subr.mxu0 %v2710
      %2982 = vmatpush1.msra.mxu0 %v2709
      %2983 = vmatprep.subr.mxu0 %v2712
      %2984 = vmatpush1.msra.mxu0 %v2711
      %2985 = vmatprep.subr.mxu0 %v2714
      %2986 = vmatpush1.msra.mxu0 %v2713
      %2987 = vmatprep.subr.mxu0 %v2716
      %2988 = vmatpush1.msra.mxu0 %v2715
      %2989 = vmatprep.subr.mxu0 %v2718
      %2990 = vmatpush1.msra.mxu0 %v2717
      %2991 = vmatprep.subr.mxu0 %v2720
      %2992 = vmatpush1.msra.mxu0 %v2719
      %2993 = vmatprep.subr.mxu0 %v2722
      %2994 = vmatpush1.msra.mxu0 %v2721
      %2995 = vmatprep.subr.mxu0 %v2724
      %2996 = vmatpush1.msra.mxu0 %v2723
      %2997 = vmatprep.subr.mxu0 %v2726
      %2998 = vmatpush1.msra.mxu0 %v2725
      %2999 = vmatprep.subr.mxu0 %v2728
      %3000 = vmatpush1.msra.mxu0 %v2727
      %3001 = vmatprep.subr.mxu0 %v2730
      %3002 = vmatpush1.msra.mxu0 %v2729
      %3003 = vmatprep.subr.mxu0 %v2732
      %3004 = vmatpush1.msra.mxu0 %v2731
      %3005 = vmatprep.subr.mxu0 %v2734
      %3006 = vmatpush1.msra.mxu0 %v2733
      %3007 = vmatprep.subr.mxu0 %v2736
      %3008 = vmatpush1.msra.mxu0 %v2735
      %3009 = vmatprep.subr.mxu0 %v2738
      %3010 = vmatpush1.msra.mxu0 %v2737
      %3011 = vmatprep.subr.mxu0 %v2740
      %3012 = vmatpush1.msra.mxu0 %v2739
      %3013 = vmatprep.subr.mxu0 %v2742
      %3014 = vmatpush1.msra.mxu0 %v2741
      %3015 = vmatprep.subr.mxu0 %v2744
      %3016 = vmatpush1.msra.mxu0 %v2743
      %3017 = vmatprep.subr.mxu0 %v2746
      %3018 = vmatpush1.msra.mxu0 %v2745
      %3019 = vmatprep.subr.mxu0 %v2748
      %3020 = vmatpush1.msra.mxu0 %v2747
      %3021 = vmatprep.subr.mxu0 %v2750
      %3022 = vmatpush1.msra.mxu0 %v2749
      %3023 = vmatprep.subr.mxu0 %v2752
      %3024 = vmatpush1.msra.mxu0 %v2751
      %3025 = vmatprep.subr.mxu0 %v2754
      %3026 = vmatpush1.msra.mxu0 %v2753
      %3027 = vmatprep.subr.mxu0 %v2756
      %3028 = vmatpush1.msra.mxu0 %v2755
      %3029 = vmatprep.subr.mxu0 %v2758
      %3030 = vmatpush1.msra.mxu0 %v2757
      %3031 = vmatprep.mubr.f32.mxu0 %v2544
      %3032 = vmatmul.mubr.f32.gmra.mrb[0].mxu0 %v2543
      %v3033 = vpop.f32.mrb[0].mxu0
      %v3034 = vadd.f32 %v2945, %v3033
      %v3035 = vpop.f32.mrb[0].mxu0
      %v3036 = vadd.f32 %v2947, %v3035
      %3037 = vmatprep.mubr.f32.mxu0 %v2551
      %3038 = vmatmul.mubr.f32.gmra.mrb[0].mxu0 %v2550
      %v3039 = vpop.f32.mrb[0].mxu0
      %v3040 = vadd.f32 %v2951, %v3039
      %v3041 = vpop.f32.mrb[0].mxu0
      %v3042 = vadd.f32 %v2953, %v3041
      %3043 = vmatprep.mubr.f32.mxu0 %v2558
      %3044 = vmatmul.mubr.f32.gmra.mrb[0].mxu0 %v2557
      %v3045 = vpop.f32.mrb[0].mxu0
      %v3046 = vadd.f32 %v2957, %v3045
      %v3047 = vpop.f32.mrb[0].mxu0
      %v3048 = vadd.f32 %v2959, %v3047
      %3049 = vmatprep.mubr.f32.mxu0 %v2565
      %3050 = vmatmul.mubr.f32.gmra.mrb[0].mxu0 %v2564
      %v3051 = vpop.f32.mrb[0].mxu0
      %v3052 = vadd.f32 %v2963, %v3051
      %v3053 = vpop.f32.mrb[0].mxu0
      %v3054 = vadd.f32 %v2965, %v3053
      %3055 = vdwg.mxu0
      %3056 = vmatprep.subr.mxu0 %v2760
      %3057 = vmatpush1.msra.mxu0 %v2759
      %3058 = vmatprep.subr.mxu0 %v2762
      %3059 = vmatpush1.msra.mxu0 %v2761
      %3060 = vmatprep.subr.mxu0 %v2764
      %3061 = vmatpush1.msra.mxu0 %v2763
      %3062 = vmatprep.subr.mxu0 %v2766
      %3063 = vmatpush1.msra.mxu0 %v2765
      %3064 = vmatprep.subr.mxu0 %v2787
      %3065 = vmatpush1.msra.mxu0 %v2784
      %3066 = vmatprep.subr.mxu0 0.0
      %3067 = vmatpush1.msra.mxu0 0.0
      %3068 = vmatprep.subr.mxu0 0.0
      %3069 = vmatpush1.msra.mxu0 0.0
      %3070 = vmatprep.subr.mxu0 0.0
      %3071 = vmatpush1.msra.mxu0 0.0
      %3072 = vmatprep.subr.mxu0 0.0
      %3073 = vmatpush1.msra.mxu0 0.0
      %3074 = vmatprep.subr.mxu0 0.0
      %3075 = vmatpush1.msra.mxu0 0.0
      %3076 = vmatprep.subr.mxu0 0.0
      %3077 = vmatpush1.msra.mxu0 0.0
      %3078 = vmatprep.subr.mxu0 0.0
      %3079 = vmatpush1.msra.mxu0 0.0
      %3080 = vmatprep.subr.mxu0 0.0
      %3081 = vmatpush1.msra.mxu0 0.0
      %3082 = vmatprep.subr.mxu0 0.0
      %3083 = vmatpush1.msra.mxu0 0.0
      %3084 = vmatprep.subr.mxu0 0.0
      %3085 = vmatpush1.msra.mxu0 0.0
      %3086 = vmatprep.subr.mxu0 0.0
      %3087 = vmatpush1.msra.mxu0 0.0
      %3088 = vmatprep.subr.mxu0 0.0
      %3089 = vmatpush1.msra.mxu0 0.0
      %3090 = vmatprep.subr.mxu0 0.0
      %3091 = vmatpush1.msra.mxu0 0.0
      %3092 = vmatprep.subr.mxu0 0.0
      %3093 = vmatpush1.msra.mxu0 0.0
      %3094 = vmatprep.subr.mxu0 0.0
      %3095 = vmatpush1.msra.mxu0 0.0
      %3096 = vmatprep.subr.mxu0 0.0
      %3097 = vmatpush1.msra.mxu0 0.0
      %3098 = vmatprep.subr.mxu0 0.0
      %3099 = vmatpush1.msra.mxu0 0.0
      %3100 = vmatprep.subr.mxu0 0.0
      %3101 = vmatpush1.msra.mxu0 0.0
      %3102 = vmatprep.subr.mxu0 0.0
      %3103 = vmatpush1.msra.mxu0 0.0
      %3104 = vmatprep.subr.mxu0 0.0
      %3105 = vmatpush1.msra.mxu0 0.0
      %3106 = vmatprep.subr.mxu0 0.0
      %3107 = vmatpush1.msra.mxu0 0.0
      %3108 = vmatprep.subr.mxu0 0.0
      %3109 = vmatpush1.msra.mxu0 0.0
      %3110 = vmatprep.subr.mxu0 0.0
      %3111 = vmatpush1.msra.mxu0 0.0
      %3112 = vmatprep.subr.mxu0 0.0
      %3113 = vmatpush1.msra.mxu0 0.0
      %3114 = vmatprep.subr.mxu0 0.0
      %3115 = vmatpush1.msra.mxu0 0.0
      %3116 = vmatprep.subr.mxu0 0.0
      %3117 = vmatpush1.msra.mxu0 0.0
      %3118 = vmatprep.subr.mxu0 0.0
      %3119 = vmatpush1.msra.mxu0 0.0
      %3120 = vmatprep.mubr.f32.mxu0 0.0
      %3121 = vmatmul.mubr.f32.gmra.mrb[0].mxu0 %v2771
      %v3122 = vpop.f32.mrb[0].mxu0
      %v3123 = vadd.f32 %v3034, %v3122
      %v3124 = vpop.f32.mrb[0].mxu0
      %v3125 = vadd.f32 %v3036, %v3124
      %3126 = vmatprep.mubr.f32.mxu0 0.0
      %3127 = vmatmul.mubr.f32.gmra.mrb[0].mxu0 %v2774
      %v3128 = vpop.f32.mrb[0].mxu0
      %v3129 = vadd.f32 %v3040, %v3128
      %v3130 = vpop.f32.mrb[0].mxu0
      %v3131 = vadd.f32 %v3042, %v3130
      %3132 = vmatprep.mubr.f32.mxu0 0.0
      %3133 = vmatmul.mubr.f32.gmra.mrb[0].mxu0 %v2777
      %v3134 = vpop.f32.mrb[0].mxu0
      %v3135 = vadd.f32 %v3046, %v3134
      %v3136 = vpop.f32.mrb[0].mxu0
      %v3137 = vadd.f32 %v3048, %v3136
      %3138 = vmatprep.mubr.f32.mxu0 0.0
      %3139 = vmatmul.mubr.f32.gmra.mrb[0].mxu0 %v2780
      %v3140 = vpop.f32.mrb[0].mxu0
      %v3141 = vadd.f32 %v3052, %v3140
      %v3142 = vpop.f32.mrb[0].mxu0
      %v3143 = vadd.f32 %v3054, %v3142
      %3144 = vdwg.mxu0
      %v3145 = vld [vmem:[%s3] sm:$0xff]
      %v3146 = vld [vmem:[%s3 + $0x8] sm:$0xff]
      %v3147 = vld [vmem:[%s3 + $0x10] sm:$0xff]
      %v3148 = vld [vmem:[%s3 + $0x18] sm:$0xff]
      %v3149 = vld [vmem:[%s3 + $0x20] sm:$0xff]
      %v3150 = vld [vmem:[%s3 + $0x28] sm:$0xff]
      %v3151 = vld [vmem:[%s3 + $0x30] sm:$0xff]
      %v3152 = vld [vmem:[%s3 + $0x38] sm:$0xff]
      %s3153 = scalar_lea.vmem %s3, 64
      %v3154 = vld [vmem:[%s3153] sm:$0xff]
      %v3155 = vld [vmem:[%s3153 + $0x8] sm:$0xff]
      %v3156 = vld [vmem:[%s3153 + $0x10] sm:$0xff]
      %v3157 = vld [vmem:[%s3153 + $0x18] sm:$0xff]
      %v3158 = vld [vmem:[%s3153 + $0x20] sm:$0xff]
      %v3159 = vld [vmem:[%s3153 + $0x28] sm:$0xff]
      %v3160 = vld [vmem:[%s3153 + $0x30] sm:$0xff]
      %v3161 = vld [vmem:[%s3153 + $0x38] sm:$0xff]
      %3170 = vrot.lane.b32.xlu0 %v3123, 127
      %v3171 = vpop.permute.xlu0 %3170
      %3172 = vrot.lane.b32.xlu0 %v3125, 127
      %v3173 = vpop.permute.xlu0 %3172
      %3174 = vrot.lane.b32.xlu0 %v3129, 127
      %v3175 = vpop.permute.xlu0 %3174
      %3176 = vrot.lane.b32.xlu0 %v3131, 127
      %v3177 = vpop.permute.xlu0 %3176
      %3178 = vrot.lane.b32.xlu0 %v3135, 127
      %v3179 = vpop.permute.xlu0 %3178
      %3180 = vrot.lane.b32.xlu0 %v3137, 127
      %v3181 = vpop.permute.xlu0 %3180
      %3182 = vrot.lane.b32.xlu0 %v3141, 127
      %v3183 = vpop.permute.xlu0 %3182
      %3184 = vrot.lane.b32.xlu0 %v3143, 127
      %v3185 = vpop.permute.xlu0 %3184
      %v3186 = vsel %vm493, %v3171, %v3173
      %v3187 = vsel %vm493, %v3175, %v3177
      %v3188 = vsel %vm493, %v3179, %v3181
      %v3189 = vsel %vm493, %v3183, %v3185
      %vm3198 = vcmask 261120
      %v3200 = vsel %vm3198, %v3154, 0
      %v3203 = vsel %vm3198, %v3155, 0
      %v3206 = vsel %vm3198, %v3156, 0
      %v3209 = vsel %vm3198, %v3157, 0
      %v3212 = vsel %vm3198, %v3158, 0
      %v3215 = vsel %vm3198, %v3159, 0
      %v3218 = vsel %vm3198, %v3160, 0
      %v3221 = vsel %vm3198, %v3161, 0
      %3223 = vmatprep.subr.mxu0 %v3173
      %3224 = vmatpush1.msra.mxu0 %v3186
      %3225 = vmatprep.subr.mxu0 %v3177
      %3226 = vmatpush1.msra.mxu0 %v3187
      %3227 = vmatprep.subr.mxu0 %v3181
      %3228 = vmatpush1.msra.mxu0 %v3188
      %3229 = vmatprep.subr.mxu0 %v3185
      %3230 = vmatpush1.msra.mxu0 %v3189
      %3231 = vmatprep.subr.mxu0 0.0
      %3232 = vmatpush1.msra.mxu0 0.0
      %3233 = vmatprep.subr.mxu0 0.0
      %3234 = vmatpush1.msra.mxu0 0.0
      %3235 = vmatprep.subr.mxu0 0.0
      %3236 = vmatpush1.msra.mxu0 0.0
      %3237 = vmatprep.subr.mxu0 0.0
      %3238 = vmatpush1.msra.mxu0 0.0
      %3239 = vmatprep.subr.mxu0 0.0
      %3240 = vmatpush1.msra.mxu0 0.0
      %3241 = vmatprep.subr.mxu0 0.0
      %3242 = vmatpush1.msra.mxu0 0.0
      %3243 = vmatprep.subr.mxu0 0.0
      %3244 = vmatpush1.msra.mxu0 0.0
      %3245 = vmatprep.subr.mxu0 0.0
      %3246 = vmatpush1.msra.mxu0 0.0
      %3247 = vmatprep.subr.mxu0 0.0
      %3248 = vmatpush1.msra.mxu0 0.0
      %3249 = vmatprep.subr.mxu0 0.0
      %3250 = vmatpush1.msra.mxu0 0.0
      %3251 = vmatprep.subr.mxu0 0.0
      %3252 = vmatpush1.msra.mxu0 0.0
      %3253 = vmatprep.subr.mxu0 0.0
      %3254 = vmatpush1.msra.mxu0 0.0
      %3255 = vmatprep.subr.mxu0 0.0
      %3256 = vmatpush1.msra.mxu0 0.0
      %3257 = vmatprep.subr.mxu0 0.0
      %3258 = vmatpush1.msra.mxu0 0.0
      %3259 = vmatprep.subr.mxu0 0.0
      %3260 = vmatpush1.msra.mxu0 0.0
      %3261 = vmatprep.subr.mxu0 0.0
      %3262 = vmatpush1.msra.mxu0 0.0
      %3263 = vmatprep.subr.mxu0 0.0
      %3264 = vmatpush1.msra.mxu0 0.0
      %3265 = vmatprep.subr.mxu0 0.0
      %3266 = vmatpush1.msra.mxu0 0.0
      %3267 = vmatprep.subr.mxu0 0.0
      %3268 = vmatpush1.msra.mxu0 0.0
      %3269 = vmatprep.subr.mxu0 0.0
      %3270 = vmatpush1.msra.mxu0 0.0
      %3271 = vmatprep.subr.mxu0 0.0
      %3272 = vmatpush1.msra.mxu0 0.0
      %3273 = vmatprep.subr.mxu0 0.0
      %3274 = vmatpush1.msra.mxu0 0.0
      %3275 = vmatprep.subr.mxu0 0.0
      %3276 = vmatpush1.msra.mxu0 0.0
      %3277 = vmatprep.subr.mxu0 0.0
      %3278 = vmatpush1.msra.mxu0 0.0
      %3279 = vmatprep.subr.mxu0 0.0
      %3280 = vmatpush1.msra.mxu0 0.0
      %3281 = vmatprep.subr.mxu0 0.0
      %3282 = vmatpush1.msra.mxu0 0.0
      %3283 = vmatprep.subr.mxu0 0.0
      %3284 = vmatpush1.msra.mxu0 0.0
      %3285 = vmatprep.subr.mxu0 0.0
      %3286 = vmatpush1.msra.mxu0 0.0
      %3287 = vmatprep.mubr.f32.mxu0 0.0
      %3288 = vmatmul.mubr.f32.gmra.mrb[0].mxu0 %v3200
      %v3289 = vpop.f32.mrb[0].mxu0
      %v3290 = vadd.f32 0.0, %v3289
      %v3291 = vpop.f32.mrb[0].mxu0
      %v3292 = vadd.f32 0.0, %v3291
      %3293 = vmatprep.mubr.f32.mxu0 0.0
      %3294 = vmatmul.mubr.f32.gmra.mrb[0].mxu0 %v3203
      %v3295 = vpop.f32.mrb[0].mxu0
      %v3296 = vadd.f32 0.0, %v3295
      %v3297 = vpop.f32.mrb[0].mxu0
      %v3298 = vadd.f32 0.0, %v3297
      %3299 = vmatprep.mubr.f32.mxu0 0.0
      %3300 = vmatmul.mubr.f32.gmra.mrb[0].mxu0 %v3206
      %v3301 = vpop.f32.mrb[0].mxu0
      %v3302 = vadd.f32 0.0, %v3301
      %v3303 = vpop.f32.mrb[0].mxu0
      %v3304 = vadd.f32 0.0, %v3303
      %3305 = vmatprep.mubr.f32.mxu0 0.0
      %3306 = vmatmul.mubr.f32.gmra.mrb[0].mxu0 %v3209
      %v3307 = vpop.f32.mrb[0].mxu0
      %v3308 = vadd.f32 0.0, %v3307
      %v3309 = vpop.f32.mrb[0].mxu0
      %v3310 = vadd.f32 0.0, %v3309
      %3311 = vmatprep.mubr.f32.mxu0 0.0
      %3312 = vmatmul.mubr.f32.gmra.mrb[0].mxu0 %v3212
      %v3313 = vpop.f32.mrb[0].mxu0
      %v3314 = vadd.f32 0.0, %v3313
      %v3315 = vpop.f32.mrb[0].mxu0
      %v3316 = vadd.f32 0.0, %v3315
      %3317 = vmatprep.mubr.f32.mxu0 0.0
      %3318 = vmatmul.mubr.f32.gmra.mrb[0].mxu0 %v3215
      %v3319 = vpop.f32.mrb[0].mxu0
      %v3320 = vadd.f32 0.0, %v3319
      %v3321 = vpop.f32.mrb[0].mxu0
      %v3322 = vadd.f32 0.0, %v3321
      %3323 = vmatprep.mubr.f32.mxu0 0.0
      %3324 = vmatmul.mubr.f32.gmra.mrb[0].mxu0 %v3218
      %v3325 = vpop.f32.mrb[0].mxu0
      %v3326 = vadd.f32 0.0, %v3325
      %v3327 = vpop.f32.mrb[0].mxu0
      %v3328 = vadd.f32 0.0, %v3327
      %3329 = vmatprep.mubr.f32.mxu0 0.0
      %3330 = vmatmul.mubr.f32.gmra.mrb[0].mxu0 %v3221
      %v3331 = vpop.f32.mrb[0].mxu0
      %v3332 = vadd.f32 0.0, %v3331
      %v3333 = vpop.f32.mrb[0].mxu0
      %v3334 = vadd.f32 0.0, %v3333
      %3335 = vdwg.mxu0
      %v3337 = vsel %vm3198, %v3145, 0
      %v3340 = vsel %vm3198, %v3146, 0
      %v3343 = vsel %vm3198, %v3147, 0
      %v3346 = vsel %vm3198, %v3148, 0
      %v3349 = vsel %vm3198, %v3149, 0
      %v3352 = vsel %vm3198, %v3150, 0
      %v3355 = vsel %vm3198, %v3151, 0
      %v3358 = vsel %vm3198, %v3152, 0
      %3360 = vmatprep.subr.mxu0 %v3125
      %3361 = vmatpush1.msra.mxu0 %v3123
      %3362 = vmatprep.subr.mxu0 %v3131
      %3363 = vmatpush1.msra.mxu0 %v3129
      %3364 = vmatprep.subr.mxu0 %v3137
      %3365 = vmatpush1.msra.mxu0 %v3135
      %3366 = vmatprep.subr.mxu0 %v3143
      %3367 = vmatpush1.msra.mxu0 %v3141
      %3368 = vmatprep.subr.mxu0 0.0
      %3369 = vmatpush1.msra.mxu0 0.0
      %3370 = vmatprep.subr.mxu0 0.0
      %3371 = vmatpush1.msra.mxu0 0.0
      %3372 = vmatprep.subr.mxu0 0.0
      %3373 = vmatpush1.msra.mxu0 0.0
      %3374 = vmatprep.subr.mxu0 0.0
      %3375 = vmatpush1.msra.mxu0 0.0
      %3376 = vmatprep.subr.mxu0 0.0
      %3377 = vmatpush1.msra.mxu0 0.0
      %3378 = vmatprep.subr.mxu0 0.0
      %3379 = vmatpush1.msra.mxu0 0.0
      %3380 = vmatprep.subr.mxu0 0.0
      %3381 = vmatpush1.msra.mxu0 0.0
      %3382 = vmatprep.subr.mxu0 0.0
      %3383 = vmatpush1.msra.mxu0 0.0
      %3384 = vmatprep.subr.mxu0 0.0
      %3385 = vmatpush1.msra.mxu0 0.0
      %3386 = vmatprep.subr.mxu0 0.0
      %3387 = vmatpush1.msra.mxu0 0.0
      %3388 = vmatprep.subr.mxu0 0.0
      %3389 = vmatpush1.msra.mxu0 0.0
      %3390 = vmatprep.subr.mxu0 0.0
      %3391 = vmatpush1.msra.mxu0 0.0
      %3392 = vmatprep.subr.mxu0 0.0
      %3393 = vmatpush1.msra.mxu0 0.0
      %3394 = vmatprep.subr.mxu0 0.0
      %3395 = vmatpush1.msra.mxu0 0.0
      %3396 = vmatprep.subr.mxu0 0.0
      %3397 = vmatpush1.msra.mxu0 0.0
      %3398 = vmatprep.subr.mxu0 0.0
      %3399 = vmatpush1.msra.mxu0 0.0
      %3400 = vmatprep.subr.mxu0 0.0
      %3401 = vmatpush1.msra.mxu0 0.0
      %3402 = vmatprep.subr.mxu0 0.0
      %3403 = vmatpush1.msra.mxu0 0.0
      %3404 = vmatprep.subr.mxu0 0.0
      %3405 = vmatpush1.msra.mxu0 0.0
      %3406 = vmatprep.subr.mxu0 0.0
      %3407 = vmatpush1.msra.mxu0 0.0
      %3408 = vmatprep.subr.mxu0 0.0
      %3409 = vmatpush1.msra.mxu0 0.0
      %3410 = vmatprep.subr.mxu0 0.0
      %3411 = vmatpush1.msra.mxu0 0.0
      %3412 = vmatprep.subr.mxu0 0.0
      %3413 = vmatpush1.msra.mxu0 0.0
      %3414 = vmatprep.subr.mxu0 0.0
      %3415 = vmatpush1.msra.mxu0 0.0
      %3416 = vmatprep.subr.mxu0 0.0
      %3417 = vmatpush1.msra.mxu0 0.0
      %3418 = vmatprep.subr.mxu0 0.0
      %3419 = vmatpush1.msra.mxu0 0.0
      %3420 = vmatprep.subr.mxu0 0.0
      %3421 = vmatpush1.msra.mxu0 0.0
      %3422 = vmatprep.subr.mxu0 0.0
      %3423 = vmatpush1.msra.mxu0 0.0
      %3424 = vmatprep.mubr.f32.mxu0 0.0
      %3425 = vmatmul.mubr.f32.gmra.mrb[0].mxu0 %v3337
      %v3426 = vpop.f32.mrb[0].mxu0
      %v3427 = vadd.f32 %v3290, %v3426
      %v3428 = vpop.f32.mrb[0].mxu0
      %v3429 = vadd.f32 %v3292, %v3428
      %3430 = vmatprep.mubr.f32.mxu0 0.0
      %3431 = vmatmul.mubr.f32.gmra.mrb[0].mxu0 %v3340
      %v3432 = vpop.f32.mrb[0].mxu0
      %v3433 = vadd.f32 %v3296, %v3432
      %v3434 = vpop.f32.mrb[0].mxu0
      %v3435 = vadd.f32 %v3298, %v3434
      %3436 = vmatprep.mubr.f32.mxu0 0.0
      %3437 = vmatmul.mubr.f32.gmra.mrb[0].mxu0 %v3343
      %v3438 = vpop.f32.mrb[0].mxu0
      %v3439 = vadd.f32 %v3302, %v3438
      %v3440 = vpop.f32.mrb[0].mxu0
      %v3441 = vadd.f32 %v3304, %v3440
      %3442 = vmatprep.mubr.f32.mxu0 0.0
      %3443 = vmatmul.mubr.f32.gmra.mrb[0].mxu0 %v3346
      %v3444 = vpop.f32.mrb[0].mxu0
      %v3445 = vadd.f32 %v3308, %v3444
      %v3446 = vpop.f32.mrb[0].mxu0
      %v3447 = vadd.f32 %v3310, %v3446
      %3448 = vmatprep.mubr.f32.mxu0 0.0
      %3449 = vmatmul.mubr.f32.gmra.mrb[0].mxu0 %v3349
      %v3450 = vpop.f32.mrb[0].mxu0
      %v3451 = vadd.f32 %v3314, %v3450
      %v3452 = vpop.f32.mrb[0].mxu0
      %v3453 = vadd.f32 %v3316, %v3452
      %3454 = vmatprep.mubr.f32.mxu0 0.0
      %3455 = vmatmul.mubr.f32.gmra.mrb[0].mxu0 %v3352
      %v3456 = vpop.f32.mrb[0].mxu0
      %v3457 = vadd.f32 %v3320, %v3456
      %v3458 = vpop.f32.mrb[0].mxu0
      %v3459 = vadd.f32 %v3322, %v3458
      %3460 = vmatprep.mubr.f32.mxu0 0.0
      %3461 = vmatmul.mubr.f32.gmra.mrb[0].mxu0 %v3355
      %v3462 = vpop.f32.mrb[0].mxu0
      %v3463 = vadd.f32 %v3326, %v3462
      %v3464 = vpop.f32.mrb[0].mxu0
      %v3465 = vadd.f32 %v3328, %v3464
      %3466 = vmatprep.mubr.f32.mxu0 0.0
      %3467 = vmatmul.mubr.f32.gmra.mrb[0].mxu0 %v3358
      %v3468 = vpop.f32.mrb[0].mxu0
      %v3469 = vadd.f32 %v3332, %v3468
      %v3470 = vpop.f32.mrb[0].mxu0
      %v3471 = vadd.f32 %v3334, %v3470
      %3472 = vdwg.mxu0
      %s3473 = scalar_lea.vmem %s3, 128
      %v3474 = vld [vmem:[%s3473] sm:$0xff]
      %v3475 = vld [vmem:[%s3473 + $0x8] sm:$0xff]
      %v3476 = vld [vmem:[%s3473 + $0x10] sm:$0xff]
      %v3477 = vld [vmem:[%s3473 + $0x18] sm:$0xff]
      %v3478 = vld [vmem:[%s3473 + $0x20] sm:$0xff]
      %v3479 = vld [vmem:[%s3473 + $0x28] sm:$0xff]
      %v3480 = vld [vmem:[%s3473 + $0x30] sm:$0xff]
      %v3481 = vld [vmem:[%s3473 + $0x38] sm:$0xff]
      %3482 = vrot.lane.b32.xlu0 %v3123, 126
      %v3483 = vpop.permute.xlu0 %3482
      %3484 = vrot.lane.b32.xlu0 %v3125, 126
      %v3485 = vpop.permute.xlu0 %3484
      %3486 = vrot.lane.b32.xlu0 %v3129, 126
      %v3487 = vpop.permute.xlu0 %3486
      %3488 = vrot.lane.b32.xlu0 %v3131, 126
      %v3489 = vpop.permute.xlu0 %3488
      %3490 = vrot.lane.b32.xlu0 %v3135, 126
      %v3491 = vpop.permute.xlu0 %3490
      %3492 = vrot.lane.b32.xlu0 %v3137, 126
      %v3493 = vpop.permute.xlu0 %3492
      %3494 = vrot.lane.b32.xlu0 %v3141, 126
      %v3495 = vpop.permute.xlu0 %3494
      %3496 = vrot.lane.b32.xlu0 %v3143, 126
      %v3497 = vpop.permute.xlu0 %3496
      %v3498 = vsel %vm702, %v3483, %v3485
      %v3499 = vsel %vm702, %v3487, %v3489
      %v3500 = vsel %vm702, %v3491, %v3493
      %v3501 = vsel %vm702, %v3495, %v3497
      %v3511 = vsel %vm3198, %v3474, 0
      %v3514 = vsel %vm3198, %v3475, 0
      %v3517 = vsel %vm3198, %v3476, 0
      %v3520 = vsel %vm3198, %v3477, 0
      %v3523 = vsel %vm3198, %v3478, 0
      %v3526 = vsel %vm3198, %v3479, 0
      %v3529 = vsel %vm3198, %v3480, 0
      %v3532 = vsel %vm3198, %v3481, 0
      %3534 = vmatprep.subr.mxu0 %v3485
      %3535 = vmatpush1.msra.mxu0 %v3498
      %3536 = vmatprep.subr.mxu0 %v3489
      %3537 = vmatpush1.msra.mxu0 %v3499
      %3538 = vmatprep.subr.mxu0 %v3493
      %3539 = vmatpush1.msra.mxu0 %v3500
      %3540 = vmatprep.subr.mxu0 %v3497
      %3541 = vmatpush1.msra.mxu0 %v3501
      %3542 = vmatprep.subr.mxu0 0.0
      %3543 = vmatpush1.msra.mxu0 0.0
      %3544 = vmatprep.subr.mxu0 0.0
      %3545 = vmatpush1.msra.mxu0 0.0
      %3546 = vmatprep.subr.mxu0 0.0
      %3547 = vmatpush1.msra.mxu0 0.0
      %3548 = vmatprep.subr.mxu0 0.0
      %3549 = vmatpush1.msra.mxu0 0.0
      %3550 = vmatprep.subr.mxu0 0.0
      %3551 = vmatpush1.msra.mxu0 0.0
      %3552 = vmatprep.subr.mxu0 0.0
      %3553 = vmatpush1.msra.mxu0 0.0
      %3554 = vmatprep.subr.mxu0 0.0
      %3555 = vmatpush1.msra.mxu0 0.0
      %3556 = vmatprep.subr.mxu0 0.0
      %3557 = vmatpush1.msra.mxu0 0.0
      %3558 = vmatprep.subr.mxu0 0.0
      %3559 = vmatpush1.msra.mxu0 0.0
      %3560 = vmatprep.subr.mxu0 0.0
      %3561 = vmatpush1.msra.mxu0 0.0
      %3562 = vmatprep.subr.mxu0 0.0
      %3563 = vmatpush1.msra.mxu0 0.0
      %3564 = vmatprep.subr.mxu0 0.0
      %3565 = vmatpush1.msra.mxu0 0.0
      %3566 = vmatprep.subr.mxu0 0.0
      %3567 = vmatpush1.msra.mxu0 0.0
      %3568 = vmatprep.subr.mxu0 0.0
      %3569 = vmatpush1.msra.mxu0 0.0
      %3570 = vmatprep.subr.mxu0 0.0
      %3571 = vmatpush1.msra.mxu0 0.0
      %3572 = vmatprep.subr.mxu0 0.0
      %3573 = vmatpush1.msra.mxu0 0.0
      %3574 = vmatprep.subr.mxu0 0.0
      %3575 = vmatpush1.msra.mxu0 0.0
      %3576 = vmatprep.subr.mxu0 0.0
      %3577 = vmatpush1.msra.mxu0 0.0
      %3578 = vmatprep.subr.mxu0 0.0
      %3579 = vmatpush1.msra.mxu0 0.0
      %3580 = vmatprep.subr.mxu0 0.0
      %3581 = vmatpush1.msra.mxu0 0.0
      %3582 = vmatprep.subr.mxu0 0.0
      %3583 = vmatpush1.msra.mxu0 0.0
      %3584 = vmatprep.subr.mxu0 0.0
      %3585 = vmatpush1.msra.mxu0 0.0
      %3586 = vmatprep.subr.mxu0 0.0
      %3587 = vmatpush1.msra.mxu0 0.0
      %3588 = vmatprep.subr.mxu0 0.0
      %3589 = vmatpush1.msra.mxu0 0.0
      %3590 = vmatprep.subr.mxu0 0.0
      %3591 = vmatpush1.msra.mxu0 0.0
      %3592 = vmatprep.subr.mxu0 0.0
      %3593 = vmatpush1.msra.mxu0 0.0
      %3594 = vmatprep.subr.mxu0 0.0
      %3595 = vmatpush1.msra.mxu0 0.0
      %3596 = vmatprep.subr.mxu0 0.0
      %3597 = vmatpush1.msra.mxu0 0.0
      %3598 = vmatprep.mubr.f32.mxu0 0.0
      %3599 = vmatmul.mubr.f32.gmra.mrb[0].mxu0 %v3511
      %v3600 = vpop.f32.mrb[0].mxu0
      %v3601 = vadd.f32 0.0, %v3600
      %v3602 = vpop.f32.mrb[0].mxu0
      %v3603 = vadd.f32 0.0, %v3602
      %3604 = vmatprep.mubr.f32.mxu0 0.0
      %3605 = vmatmul.mubr.f32.gmra.mrb[0].mxu0 %v3514
      %v3606 = vpop.f32.mrb[0].mxu0
      %v3607 = vadd.f32 0.0, %v3606
      %v3608 = vpop.f32.mrb[0].mxu0
      %v3609 = vadd.f32 0.0, %v3608
      %3610 = vmatprep.mubr.f32.mxu0 0.0
      %3611 = vmatmul.mubr.f32.gmra.mrb[0].mxu0 %v3517
      %v3612 = vpop.f32.mrb[0].mxu0
      %v3613 = vadd.f32 0.0, %v3612
      %v3614 = vpop.f32.mrb[0].mxu0
      %v3615 = vadd.f32 0.0, %v3614
      %3616 = vmatprep.mubr.f32.mxu0 0.0
      %3617 = vmatmul.mubr.f32.gmra.mrb[0].mxu0 %v3520
      %v3618 = vpop.f32.mrb[0].mxu0
      %v3619 = vadd.f32 0.0, %v3618
      %v3620 = vpop.f32.mrb[0].mxu0
      %v3621 = vadd.f32 0.0, %v3620
      %3622 = vmatprep.mubr.f32.mxu0 0.0
      %3623 = vmatmul.mubr.f32.gmra.mrb[0].mxu0 %v3523
      %v3624 = vpop.f32.mrb[0].mxu0
      %v3625 = vadd.f32 0.0, %v3624
      %v3626 = vpop.f32.mrb[0].mxu0
      %v3627 = vadd.f32 0.0, %v3626
      %3628 = vmatprep.mubr.f32.mxu0 0.0
      %3629 = vmatmul.mubr.f32.gmra.mrb[0].mxu0 %v3526
      %v3630 = vpop.f32.mrb[0].mxu0
      %v3631 = vadd.f32 0.0, %v3630
      %v3632 = vpop.f32.mrb[0].mxu0
      %v3633 = vadd.f32 0.0, %v3632
      %3634 = vmatprep.mubr.f32.mxu0 0.0
      %3635 = vmatmul.mubr.f32.gmra.mrb[0].mxu0 %v3529
      %v3636 = vpop.f32.mrb[0].mxu0
      %v3637 = vadd.f32 0.0, %v3636
      %v3638 = vpop.f32.mrb[0].mxu0
      %v3639 = vadd.f32 0.0, %v3638
      %3640 = vmatprep.mubr.f32.mxu0 0.0
      %3641 = vmatmul.mubr.f32.gmra.mrb[0].mxu0 %v3532
      %v3642 = vpop.f32.mrb[0].mxu0
      %v3643 = vadd.f32 0.0, %v3642
      %v3644 = vpop.f32.mrb[0].mxu0
      %v3645 = vadd.f32 0.0, %v3644
      %3646 = vdwg.mxu0
      %v3647 = vadd.f32 %v3427, %v3601
      %v3648 = vadd.f32 %v3429, %v3603
      %v3649 = vadd.f32 %v3433, %v3607
      %v3650 = vadd.f32 %v3435, %v3609
      %v3651 = vadd.f32 %v3439, %v3613
      %v3652 = vadd.f32 %v3441, %v3615
      %v3653 = vadd.f32 %v3445, %v3619
      %v3654 = vadd.f32 %v3447, %v3621
      %v3655 = vadd.f32 %v3451, %v3625
      %v3656 = vadd.f32 %v3453, %v3627
      %v3657 = vadd.f32 %v3457, %v3631
      %v3658 = vadd.f32 %v3459, %v3633
      %v3659 = vadd.f32 %v3463, %v3637
      %v3660 = vadd.f32 %v3465, %v3639
      %v3661 = vadd.f32 %v3469, %v3643
      %v3662 = vadd.f32 %v3471, %v3645
      %s3663 = scalar_lea.vmem %s3, 192
      %v3664 = vld [vmem:[%s3663] sm:$0xff]
      %v3665 = vld [vmem:[%s3663 + $0x8] sm:$0xff]
      %v3666 = vld [vmem:[%s3663 + $0x10] sm:$0xff]
      %v3667 = vld [vmem:[%s3663 + $0x18] sm:$0xff]
      %v3668 = vld [vmem:[%s3663 + $0x20] sm:$0xff]
      %v3669 = vld [vmem:[%s3663 + $0x28] sm:$0xff]
      %v3670 = vld [vmem:[%s3663 + $0x30] sm:$0xff]
      %v3671 = vld [vmem:[%s3663 + $0x38] sm:$0xff]
      %3672 = vrot.lane.b32.xlu0 %v3123, 112
      %v3673 = vpop.permute.xlu0 %3672
      %3674 = vrot.lane.b32.xlu0 %v3125, 112
      %v3675 = vpop.permute.xlu0 %3674
      %3676 = vrot.lane.b32.xlu0 %v3129, 112
      %v3677 = vpop.permute.xlu0 %3676
      %3678 = vrot.lane.b32.xlu0 %v3131, 112
      %v3679 = vpop.permute.xlu0 %3678
      %3680 = vrot.lane.b32.xlu0 %v3135, 112
      %v3681 = vpop.permute.xlu0 %3680
      %3682 = vrot.lane.b32.xlu0 %v3137, 112
      %v3683 = vpop.permute.xlu0 %3682
      %3684 = vrot.lane.b32.xlu0 %v3141, 112
      %v3685 = vpop.permute.xlu0 %3684
      %3686 = vrot.lane.b32.xlu0 %v3143, 112
      %v3687 = vpop.permute.xlu0 %3686
      %vm3688 = vcmask 916480
      %v3689 = vsel %vm3688, %v3673, %v3675
      %v3690 = vsel %vm3688, %v3677, %v3679
      %v3691 = vsel %vm3688, %v3681, %v3683
      %v3692 = vsel %vm3688, %v3685, %v3687
      %v3702 = vsel %vm3198, %v3664, 0
      %v3705 = vsel %vm3198, %v3665, 0
      %v3708 = vsel %vm3198, %v3666, 0
      %v3711 = vsel %vm3198, %v3667, 0
      %v3714 = vsel %vm3198, %v3668, 0
      %v3717 = vsel %vm3198, %v3669, 0
      %v3720 = vsel %vm3198, %v3670, 0
      %v3723 = vsel %vm3198, %v3671, 0
      %3725 = vmatprep.subr.mxu0 %v3675
      %3726 = vmatpush1.msra.mxu0 %v3689
      %3727 = vmatprep.subr.mxu0 %v3679
      %3728 = vmatpush1.msra.mxu0 %v3690
      %3729 = vmatprep.subr.mxu0 %v3683
      %3730 = vmatpush1.msra.mxu0 %v3691
      %3731 = vmatprep.subr.mxu0 %v3687
      %3732 = vmatpush1.msra.mxu0 %v3692
      %3733 = vmatprep.subr.mxu0 0.0
      %3734 = vmatpush1.msra.mxu0 0.0
      %3735 = vmatprep.subr.mxu0 0.0
      %3736 = vmatpush1.msra.mxu0 0.0
      %3737 = vmatprep.subr.mxu0 0.0
      %3738 = vmatpush1.msra.mxu0 0.0
      %3739 = vmatprep.subr.mxu0 0.0
      %3740 = vmatpush1.msra.mxu0 0.0
      %3741 = vmatprep.subr.mxu0 0.0
      %3742 = vmatpush1.msra.mxu0 0.0
      %3743 = vmatprep.subr.mxu0 0.0
      %3744 = vmatpush1.msra.mxu0 0.0
      %3745 = vmatprep.subr.mxu0 0.0
      %3746 = vmatpush1.msra.mxu0 0.0
      %3747 = vmatprep.subr.mxu0 0.0
      %3748 = vmatpush1.msra.mxu0 0.0
      %3749 = vmatprep.subr.mxu0 0.0
      %3750 = vmatpush1.msra.mxu0 0.0
      %3751 = vmatprep.subr.mxu0 0.0
      %3752 = vmatpush1.msra.mxu0 0.0
      %3753 = vmatprep.subr.mxu0 0.0
      %3754 = vmatpush1.msra.mxu0 0.0
      %3755 = vmatprep.subr.mxu0 0.0
      %3756 = vmatpush1.msra.mxu0 0.0
      %3757 = vmatprep.subr.mxu0 0.0
      %3758 = vmatpush1.msra.mxu0 0.0
      %3759 = vmatprep.subr.mxu0 0.0
      %3760 = vmatpush1.msra.mxu0 0.0
      %3761 = vmatprep.subr.mxu0 0.0
      %3762 = vmatpush1.msra.mxu0 0.0
      %3763 = vmatprep.subr.mxu0 0.0
      %3764 = vmatpush1.msra.mxu0 0.0
      %3765 = vmatprep.subr.mxu0 0.0
      %3766 = vmatpush1.msra.mxu0 0.0
      %3767 = vmatprep.subr.mxu0 0.0
      %3768 = vmatpush1.msra.mxu0 0.0
      %3769 = vmatprep.subr.mxu0 0.0
      %3770 = vmatpush1.msra.mxu0 0.0
      %3771 = vmatprep.subr.mxu0 0.0
      %3772 = vmatpush1.msra.mxu0 0.0
      %3773 = vmatprep.subr.mxu0 0.0
      %3774 = vmatpush1.msra.mxu0 0.0
      %3775 = vmatprep.subr.mxu0 0.0
      %3776 = vmatpush1.msra.mxu0 0.0
      %3777 = vmatprep.subr.mxu0 0.0
      %3778 = vmatpush1.msra.mxu0 0.0
      %3779 = vmatprep.subr.mxu0 0.0
      %3780 = vmatpush1.msra.mxu0 0.0
      %3781 = vmatprep.subr.mxu0 0.0
      %3782 = vmatpush1.msra.mxu0 0.0
      %3783 = vmatprep.subr.mxu0 0.0
      %3784 = vmatpush1.msra.mxu0 0.0
      %3785 = vmatprep.subr.mxu0 0.0
      %3786 = vmatpush1.msra.mxu0 0.0
      %3787 = vmatprep.subr.mxu0 0.0
      %3788 = vmatpush1.msra.mxu0 0.0
      %3789 = vmatprep.mubr.f32.mxu0 0.0
      %3790 = vmatmul.mubr.f32.gmra.mrb[0].mxu0 %v3702
      %v3791 = vpop.f32.mrb[0].mxu0
      %v3792 = vadd.f32 0.0, %v3791
      %v3793 = vpop.f32.mrb[0].mxu0
      %v3794 = vadd.f32 0.0, %v3793
      %3795 = vmatprep.mubr.f32.mxu0 0.0
      %3796 = vmatmul.mubr.f32.gmra.mrb[0].mxu0 %v3705
      %v3797 = vpop.f32.mrb[0].mxu0
      %v3798 = vadd.f32 0.0, %v3797
      %v3799 = vpop.f32.mrb[0].mxu0
      %v3800 = vadd.f32 0.0, %v3799
      %3801 = vmatprep.mubr.f32.mxu0 0.0
      %3802 = vmatmul.mubr.f32.gmra.mrb[0].mxu0 %v3708
      %v3803 = vpop.f32.mrb[0].mxu0
      %v3804 = vadd.f32 0.0, %v3803
      %v3805 = vpop.f32.mrb[0].mxu0
      %v3806 = vadd.f32 0.0, %v3805
      %3807 = vmatprep.mubr.f32.mxu0 0.0
      %3808 = vmatmul.mubr.f32.gmra.mrb[0].mxu0 %v3711
      %v3809 = vpop.f32.mrb[0].mxu0
      %v3810 = vadd.f32 0.0, %v3809
      %v3811 = vpop.f32.mrb[0].mxu0
      %v3812 = vadd.f32 0.0, %v3811
      %3813 = vmatprep.mubr.f32.mxu0 0.0
      %3814 = vmatmul.mubr.f32.gmra.mrb[0].mxu0 %v3714
      %v3815 = vpop.f32.mrb[0].mxu0
      %v3816 = vadd.f32 0.0, %v3815
      %v3817 = vpop.f32.mrb[0].mxu0
      %v3818 = vadd.f32 0.0, %v3817
      %3819 = vmatprep.mubr.f32.mxu0 0.0
      %3820 = vmatmul.mubr.f32.gmra.mrb[0].mxu0 %v3717
      %v3821 = vpop.f32.mrb[0].mxu0
      %v3822 = vadd.f32 0.0, %v3821
      %v3823 = vpop.f32.mrb[0].mxu0
      %v3824 = vadd.f32 0.0, %v3823
      %3825 = vmatprep.mubr.f32.mxu0 0.0
      %3826 = vmatmul.mubr.f32.gmra.mrb[0].mxu0 %v3720
      %v3827 = vpop.f32.mrb[0].mxu0
      %v3828 = vadd.f32 0.0, %v3827
      %v3829 = vpop.f32.mrb[0].mxu0
      %v3830 = vadd.f32 0.0, %v3829
      %3831 = vmatprep.mubr.f32.mxu0 0.0
      %3832 = vmatmul.mubr.f32.gmra.mrb[0].mxu0 %v3723
      %v3833 = vpop.f32.mrb[0].mxu0
      %v3834 = vadd.f32 0.0, %v3833
      %v3835 = vpop.f32.mrb[0].mxu0
      %v3836 = vadd.f32 0.0, %v3835
      %3837 = vdwg.mxu0
      %v3838 = vadd.f32 %v3647, %v3792
      %v3839 = vadd.f32 %v3648, %v3794
      %v3840 = vadd.f32 %v3649, %v3798
      %v3841 = vadd.f32 %v3650, %v3800
      %v3842 = vadd.f32 %v3651, %v3804
      %v3843 = vadd.f32 %v3652, %v3806
      %v3844 = vadd.f32 %v3653, %v3810
      %v3845 = vadd.f32 %v3654, %v3812
      %v3846 = vadd.f32 %v3655, %v3816
      %v3847 = vadd.f32 %v3656, %v3818
      %v3848 = vadd.f32 %v3657, %v3822
      %v3849 = vadd.f32 %v3658, %v3824
      %v3850 = vadd.f32 %v3659, %v3828
      %v3851 = vadd.f32 %v3660, %v3830
      %v3852 = vadd.f32 %v3661, %v3834
      %v3853 = vadd.f32 %v3662, %v3836
      %s3854 = scalar_lea.vmem %s3, 256
      %v3855 = vld [vmem:[%s3854] sm:$0xff]
      %v3856 = vld [vmem:[%s3854 + $0x8] sm:$0xff]
      %v3857 = vld [vmem:[%s3854 + $0x10] sm:$0xff]
      %v3858 = vld [vmem:[%s3854 + $0x18] sm:$0xff]
      %v3859 = vld [vmem:[%s3854 + $0x20] sm:$0xff]
      %v3860 = vld [vmem:[%s3854 + $0x28] sm:$0xff]
      %v3861 = vld [vmem:[%s3854 + $0x30] sm:$0xff]
      %v3862 = vld [vmem:[%s3854 + $0x38] sm:$0xff]
      %3863 = vrot.lane.b32.xlu0 %v3123, 111
      %v3864 = vpop.permute.xlu0 %3863
      %3865 = vrot.lane.b32.xlu0 %v3125, 111
      %v3866 = vpop.permute.xlu0 %3865
      %3867 = vrot.lane.b32.xlu0 %v3129, 111
      %v3868 = vpop.permute.xlu0 %3867
      %3869 = vrot.lane.b32.xlu0 %v3131, 111
      %v3870 = vpop.permute.xlu0 %3869
      %3871 = vrot.lane.b32.xlu0 %v3135, 111
      %v3872 = vpop.permute.xlu0 %3871
      %3873 = vrot.lane.b32.xlu0 %v3137, 111
      %v3874 = vpop.permute.xlu0 %3873
      %3875 = vrot.lane.b32.xlu0 %v3141, 111
      %v3876 = vpop.permute.xlu0 %3875
      %3877 = vrot.lane.b32.xlu0 %v3143, 111
      %v3878 = vpop.permute.xlu0 %3877
      %vm3879 = vcmask 908288
      %v3880 = vsel %vm3879, %v3864, %v3866
      %v3881 = vsel %vm3879, %v3868, %v3870
      %v3882 = vsel %vm3879, %v3872, %v3874
      %v3883 = vsel %vm3879, %v3876, %v3878
      %v3893 = vsel %vm3198, %v3855, 0
      %v3896 = vsel %vm3198, %v3856, 0
      %v3899 = vsel %vm3198, %v3857, 0
      %v3902 = vsel %vm3198, %v3858, 0
      %v3905 = vsel %vm3198, %v3859, 0
      %v3908 = vsel %vm3198, %v3860, 0
      %v3911 = vsel %vm3198, %v3861, 0
      %v3914 = vsel %vm3198, %v3862, 0
      %3916 = vmatprep.subr.mxu0 %v3866
      %3917 = vmatpush1.msra.mxu0 %v3880
      %3918 = vmatprep.subr.mxu0 %v3870
      %3919 = vmatpush1.msra.mxu0 %v3881
      %3920 = vmatprep.subr.mxu0 %v3874
      %3921 = vmatpush1.msra.mxu0 %v3882
      %3922 = vmatprep.subr.mxu0 %v3878
      %3923 = vmatpush1.msra.mxu0 %v3883
      %3924 = vmatprep.subr.mxu0 0.0
      %3925 = vmatpush1.msra.mxu0 0.0
      %3926 = vmatprep.subr.mxu0 0.0
      %3927 = vmatpush1.msra.mxu0 0.0
      %3928 = vmatprep.subr.mxu0 0.0
      %3929 = vmatpush1.msra.mxu0 0.0
      %3930 = vmatprep.subr.mxu0 0.0
      %3931 = vmatpush1.msra.mxu0 0.0
      %3932 = vmatprep.subr.mxu0 0.0
      %3933 = vmatpush1.msra.mxu0 0.0
      %3934 = vmatprep.subr.mxu0 0.0
      %3935 = vmatpush1.msra.mxu0 0.0
      %3936 = vmatprep.subr.mxu0 0.0
      %3937 = vmatpush1.msra.mxu0 0.0
      %3938 = vmatprep.subr.mxu0 0.0
      %3939 = vmatpush1.msra.mxu0 0.0
      %3940 = vmatprep.subr.mxu0 0.0
      %3941 = vmatpush1.msra.mxu0 0.0
      %3942 = vmatprep.subr.mxu0 0.0
      %3943 = vmatpush1.msra.mxu0 0.0
      %3944 = vmatprep.subr.mxu0 0.0
      %3945 = vmatpush1.msra.mxu0 0.0
      %3946 = vmatprep.subr.mxu0 0.0
      %3947 = vmatpush1.msra.mxu0 0.0
      %3948 = vmatprep.subr.mxu0 0.0
      %3949 = vmatpush1.msra.mxu0 0.0
      %3950 = vmatprep.subr.mxu0 0.0
      %3951 = vmatpush1.msra.mxu0 0.0
      %3952 = vmatprep.subr.mxu0 0.0
      %3953 = vmatpush1.msra.mxu0 0.0
      %3954 = vmatprep.subr.mxu0 0.0
      %3955 = vmatpush1.msra.mxu0 0.0
      %3956 = vmatprep.subr.mxu0 0.0
      %3957 = vmatpush1.msra.mxu0 0.0
      %3958 = vmatprep.subr.mxu0 0.0
      %3959 = vmatpush1.msra.mxu0 0.0
      %3960 = vmatprep.subr.mxu0 0.0
      %3961 = vmatpush1.msra.mxu0 0.0
      %3962 = vmatprep.subr.mxu0 0.0
      %3963 = vmatpush1.msra.mxu0 0.0
      %3964 = vmatprep.subr.mxu0 0.0
      %3965 = vmatpush1.msra.mxu0 0.0
      %3966 = vmatprep.subr.mxu0 0.0
      %3967 = vmatpush1.msra.mxu0 0.0
      %3968 = vmatprep.subr.mxu0 0.0
      %3969 = vmatpush1.msra.mxu0 0.0
      %3970 = vmatprep.subr.mxu0 0.0
      %3971 = vmatpush1.msra.mxu0 0.0
      %3972 = vmatprep.subr.mxu0 0.0
      %3973 = vmatpush1.msra.mxu0 0.0
      %3974 = vmatprep.subr.mxu0 0.0
      %3975 = vmatpush1.msra.mxu0 0.0
      %3976 = vmatprep.subr.mxu0 0.0
      %3977 = vmatpush1.msra.mxu0 0.0
      %3978 = vmatprep.subr.mxu0 0.0
      %3979 = vmatpush1.msra.mxu0 0.0
      %3980 = vmatprep.mubr.f32.mxu0 0.0
      %3981 = vmatmul.mubr.f32.gmra.mrb[0].mxu0 %v3893
      %v3982 = vpop.f32.mrb[0].mxu0
      %v3983 = vadd.f32 0.0, %v3982
      %v3984 = vpop.f32.mrb[0].mxu0
      %v3985 = vadd.f32 0.0, %v3984
      %3986 = vmatprep.mubr.f32.mxu0 0.0
      %3987 = vmatmul.mubr.f32.gmra.mrb[0].mxu0 %v3896
      %v3988 = vpop.f32.mrb[0].mxu0
      %v3989 = vadd.f32 0.0, %v3988
      %v3990 = vpop.f32.mrb[0].mxu0
      %v3991 = vadd.f32 0.0, %v3990
      %3992 = vmatprep.mubr.f32.mxu0 0.0
      %3993 = vmatmul.mubr.f32.gmra.mrb[0].mxu0 %v3899
      %v3994 = vpop.f32.mrb[0].mxu0
      %v3995 = vadd.f32 0.0, %v3994
      %v3996 = vpop.f32.mrb[0].mxu0
      %v3997 = vadd.f32 0.0, %v3996
      %3998 = vmatprep.mubr.f32.mxu0 0.0
      %3999 = vmatmul.mubr.f32.gmra.mrb[0].mxu0 %v3902
      %v4000 = vpop.f32.mrb[0].mxu0
      %v4001 = vadd.f32 0.0, %v4000
      %v4002 = vpop.f32.mrb[0].mxu0
      %v4003 = vadd.f32 0.0, %v4002
      %4004 = vmatprep.mubr.f32.mxu0 0.0
      %4005 = vmatmul.mubr.f32.gmra.mrb[0].mxu0 %v3905
      %v4006 = vpop.f32.mrb[0].mxu0
      %v4007 = vadd.f32 0.0, %v4006
      %v4008 = vpop.f32.mrb[0].mxu0
      %v4009 = vadd.f32 0.0, %v4008
      %4010 = vmatprep.mubr.f32.mxu0 0.0
      %4011 = vmatmul.mubr.f32.gmra.mrb[0].mxu0 %v3908
      %v4012 = vpop.f32.mrb[0].mxu0
      %v4013 = vadd.f32 0.0, %v4012
      %v4014 = vpop.f32.mrb[0].mxu0
      %v4015 = vadd.f32 0.0, %v4014
      %4016 = vmatprep.mubr.f32.mxu0 0.0
      %4017 = vmatmul.mubr.f32.gmra.mrb[0].mxu0 %v3911
      %v4018 = vpop.f32.mrb[0].mxu0
      %v4019 = vadd.f32 0.0, %v4018
      %v4020 = vpop.f32.mrb[0].mxu0
      %v4021 = vadd.f32 0.0, %v4020
      %4022 = vmatprep.mubr.f32.mxu0 0.0
      %4023 = vmatmul.mubr.f32.gmra.mrb[0].mxu0 %v3914
      %v4024 = vpop.f32.mrb[0].mxu0
      %v4025 = vadd.f32 0.0, %v4024
      %v4026 = vpop.f32.mrb[0].mxu0
      %v4027 = vadd.f32 0.0, %v4026
      %4028 = vdwg.mxu0
      %v4029 = vadd.f32 %v3838, %v3983
      %v4030 = vadd.f32 %v3839, %v3985
      %v4031 = vadd.f32 %v3840, %v3989
      %v4032 = vadd.f32 %v3841, %v3991
      %v4033 = vadd.f32 %v3842, %v3995
      %v4034 = vadd.f32 %v3843, %v3997
      %v4035 = vadd.f32 %v3844, %v4001
      %v4036 = vadd.f32 %v3845, %v4003
      %v4037 = vadd.f32 %v3846, %v4007
      %v4038 = vadd.f32 %v3847, %v4009
      %v4039 = vadd.f32 %v3848, %v4013
      %v4040 = vadd.f32 %v3849, %v4015
      %v4041 = vadd.f32 %v3850, %v4019
      %v4042 = vadd.f32 %v3851, %v4021
      %v4043 = vadd.f32 %v3852, %v4025
      %v4044 = vadd.f32 %v3853, %v4027
      %s4045 = scalar_lea.vmem %s3, 320
      %v4046 = vld [vmem:[%s4045] sm:$0xff]
      %v4047 = vld [vmem:[%s4045 + $0x8] sm:$0xff]
      %v4048 = vld [vmem:[%s4045 + $0x10] sm:$0xff]
      %v4049 = vld [vmem:[%s4045 + $0x18] sm:$0xff]
      %v4050 = vld [vmem:[%s4045 + $0x20] sm:$0xff]
      %v4051 = vld [vmem:[%s4045 + $0x28] sm:$0xff]
      %v4052 = vld [vmem:[%s4045 + $0x30] sm:$0xff]
      %v4053 = vld [vmem:[%s4045 + $0x38] sm:$0xff]
      %4054 = vrot.lane.b32.xlu0 %v3123, 110
      %v4055 = vpop.permute.xlu0 %4054
      %4056 = vrot.lane.b32.xlu0 %v3125, 110
      %v4057 = vpop.permute.xlu0 %4056
      %4058 = vrot.lane.b32.xlu0 %v3129, 110
      %v4059 = vpop.permute.xlu0 %4058
      %4060 = vrot.lane.b32.xlu0 %v3131, 110
      %v4061 = vpop.permute.xlu0 %4060
      %4062 = vrot.lane.b32.xlu0 %v3135, 110
      %v4063 = vpop.permute.xlu0 %4062
      %4064 = vrot.lane.b32.xlu0 %v3137, 110
      %v4065 = vpop.permute.xlu0 %4064
      %4066 = vrot.lane.b32.xlu0 %v3141, 110
      %v4067 = vpop.permute.xlu0 %4066
      %4068 = vrot.lane.b32.xlu0 %v3143, 110
      %v4069 = vpop.permute.xlu0 %4068
      %vm4070 = vcmask 900096
      %v4071 = vsel %vm4070, %v4055, %v4057
      %v4072 = vsel %vm4070, %v4059, %v4061
      %v4073 = vsel %vm4070, %v4063, %v4065
      %v4074 = vsel %vm4070, %v4067, %v4069
      %v4084 = vsel %vm3198, %v4046, 0
      %v4087 = vsel %vm3198, %v4047, 0
      %v4090 = vsel %vm3198, %v4048, 0
      %v4093 = vsel %vm3198, %v4049, 0
      %v4096 = vsel %vm3198, %v4050, 0
      %v4099 = vsel %vm3198, %v4051, 0
      %v4102 = vsel %vm3198, %v4052, 0
      %v4105 = vsel %vm3198, %v4053, 0
      %4107 = vmatprep.subr.mxu0 %v4057
      %4108 = vmatpush1.msra.mxu0 %v4071
      %4109 = vmatprep.subr.mxu0 %v4061
      %4110 = vmatpush1.msra.mxu0 %v4072
      %4111 = vmatprep.subr.mxu0 %v4065
      %4112 = vmatpush1.msra.mxu0 %v4073
      %4113 = vmatprep.subr.mxu0 %v4069
      %4114 = vmatpush1.msra.mxu0 %v4074
      %4115 = vmatprep.subr.mxu0 0.0
      %4116 = vmatpush1.msra.mxu0 0.0
      %4117 = vmatprep.subr.mxu0 0.0
      %4118 = vmatpush1.msra.mxu0 0.0
      %4119 = vmatprep.subr.mxu0 0.0
      %4120 = vmatpush1.msra.mxu0 0.0
      %4121 = vmatprep.subr.mxu0 0.0
      %4122 = vmatpush1.msra.mxu0 0.0
      %4123 = vmatprep.subr.mxu0 0.0
      %4124 = vmatpush1.msra.mxu0 0.0
      %4125 = vmatprep.subr.mxu0 0.0
      %4126 = vmatpush1.msra.mxu0 0.0
      %4127 = vmatprep.subr.mxu0 0.0
      %4128 = vmatpush1.msra.mxu0 0.0
      %4129 = vmatprep.subr.mxu0 0.0
      %4130 = vmatpush1.msra.mxu0 0.0
      %4131 = vmatprep.subr.mxu0 0.0
      %4132 = vmatpush1.msra.mxu0 0.0
      %4133 = vmatprep.subr.mxu0 0.0
      %4134 = vmatpush1.msra.mxu0 0.0
      %4135 = vmatprep.subr.mxu0 0.0
      %4136 = vmatpush1.msra.mxu0 0.0
      %4137 = vmatprep.subr.mxu0 0.0
      %4138 = vmatpush1.msra.mxu0 0.0
      %4139 = vmatprep.subr.mxu0 0.0
      %4140 = vmatpush1.msra.mxu0 0.0
      %4141 = vmatprep.subr.mxu0 0.0
      %4142 = vmatpush1.msra.mxu0 0.0
      %4143 = vmatprep.subr.mxu0 0.0
      %4144 = vmatpush1.msra.mxu0 0.0
      %4145 = vmatprep.subr.mxu0 0.0
      %4146 = vmatpush1.msra.mxu0 0.0
      %4147 = vmatprep.subr.mxu0 0.0
      %4148 = vmatpush1.msra.mxu0 0.0
      %4149 = vmatprep.subr.mxu0 0.0
      %4150 = vmatpush1.msra.mxu0 0.0
      %4151 = vmatprep.subr.mxu0 0.0
      %4152 = vmatpush1.msra.mxu0 0.0
      %4153 = vmatprep.subr.mxu0 0.0
      %4154 = vmatpush1.msra.mxu0 0.0
      %4155 = vmatprep.subr.mxu0 0.0
      %4156 = vmatpush1.msra.mxu0 0.0
      %4157 = vmatprep.subr.mxu0 0.0
      %4158 = vmatpush1.msra.mxu0 0.0
      %4159 = vmatprep.subr.mxu0 0.0
      %4160 = vmatpush1.msra.mxu0 0.0
      %4161 = vmatprep.subr.mxu0 0.0
      %4162 = vmatpush1.msra.mxu0 0.0
      %4163 = vmatprep.subr.mxu0 0.0
      %4164 = vmatpush1.msra.mxu0 0.0
      %4165 = vmatprep.subr.mxu0 0.0
      %4166 = vmatpush1.msra.mxu0 0.0
      %4167 = vmatprep.subr.mxu0 0.0
      %4168 = vmatpush1.msra.mxu0 0.0
      %4169 = vmatprep.subr.mxu0 0.0
      %4170 = vmatpush1.msra.mxu0 0.0
      %4171 = vmatprep.mubr.f32.mxu0 0.0
      %4172 = vmatmul.mubr.f32.gmra.mrb[0].mxu0 %v4084
      %v4173 = vpop.f32.mrb[0].mxu0
      %v4174 = vadd.f32 0.0, %v4173
      %v4175 = vpop.f32.mrb[0].mxu0
      %v4176 = vadd.f32 0.0, %v4175
      %4177 = vmatprep.mubr.f32.mxu0 0.0
      %4178 = vmatmul.mubr.f32.gmra.mrb[0].mxu0 %v4087
      %v4179 = vpop.f32.mrb[0].mxu0
      %v4180 = vadd.f32 0.0, %v4179
      %v4181 = vpop.f32.mrb[0].mxu0
      %v4182 = vadd.f32 0.0, %v4181
      %4183 = vmatprep.mubr.f32.mxu0 0.0
      %4184 = vmatmul.mubr.f32.gmra.mrb[0].mxu0 %v4090
      %v4185 = vpop.f32.mrb[0].mxu0
      %v4186 = vadd.f32 0.0, %v4185
      %v4187 = vpop.f32.mrb[0].mxu0
      %v4188 = vadd.f32 0.0, %v4187
      %4189 = vmatprep.mubr.f32.mxu0 0.0
      %4190 = vmatmul.mubr.f32.gmra.mrb[0].mxu0 %v4093
      %v4191 = vpop.f32.mrb[0].mxu0
      %v4192 = vadd.f32 0.0, %v4191
      %v4193 = vpop.f32.mrb[0].mxu0
      %v4194 = vadd.f32 0.0, %v4193
      %4195 = vmatprep.mubr.f32.mxu0 0.0
      %4196 = vmatmul.mubr.f32.gmra.mrb[0].mxu0 %v4096
      %v4197 = vpop.f32.mrb[0].mxu0
      %v4198 = vadd.f32 0.0, %v4197
      %v4199 = vpop.f32.mrb[0].mxu0
      %v4200 = vadd.f32 0.0, %v4199
      %4201 = vmatprep.mubr.f32.mxu0 0.0
      %4202 = vmatmul.mubr.f32.gmra.mrb[0].mxu0 %v4099
      %v4203 = vpop.f32.mrb[0].mxu0
      %v4204 = vadd.f32 0.0, %v4203
      %v4205 = vpop.f32.mrb[0].mxu0
      %v4206 = vadd.f32 0.0, %v4205
      %4207 = vmatprep.mubr.f32.mxu0 0.0
      %4208 = vmatmul.mubr.f32.gmra.mrb[0].mxu0 %v4102
      %v4209 = vpop.f32.mrb[0].mxu0
      %v4210 = vadd.f32 0.0, %v4209
      %v4211 = vpop.f32.mrb[0].mxu0
      %v4212 = vadd.f32 0.0, %v4211
      %4213 = vmatprep.mubr.f32.mxu0 0.0
      %4214 = vmatmul.mubr.f32.gmra.mrb[0].mxu0 %v4105
      %v4215 = vpop.f32.mrb[0].mxu0
      %v4216 = vadd.f32 0.0, %v4215
      %v4217 = vpop.f32.mrb[0].mxu0
      %v4218 = vadd.f32 0.0, %v4217
      %4219 = vdwg.mxu0
      %v4220 = vadd.f32 %v4029, %v4174
      %v4221 = vadd.f32 %v4030, %v4176
      %v4222 = vadd.f32 %v4031, %v4180
      %v4223 = vadd.f32 %v4032, %v4182
      %v4224 = vadd.f32 %v4033, %v4186
      %v4225 = vadd.f32 %v4034, %v4188
      %v4226 = vadd.f32 %v4035, %v4192
      %v4227 = vadd.f32 %v4036, %v4194
      %v4228 = vadd.f32 %v4037, %v4198
      %v4229 = vadd.f32 %v4038, %v4200
      %v4230 = vadd.f32 %v4039, %v4204
      %v4231 = vadd.f32 %v4040, %v4206
      %v4232 = vadd.f32 %v4041, %v4210
      %v4233 = vadd.f32 %v4042, %v4212
      %v4234 = vadd.f32 %v4043, %v4216
      %v4235 = vadd.f32 %v4044, %v4218
      %s4236 = scalar_lea.vmem %s3, 384
      %v4237 = vld [vmem:[%s4236] sm:$0xff]
      %v4238 = vld [vmem:[%s4236 + $0x8] sm:$0xff]
      %v4239 = vld [vmem:[%s4236 + $0x10] sm:$0xff]
      %v4240 = vld [vmem:[%s4236 + $0x18] sm:$0xff]
      %v4241 = vld [vmem:[%s4236 + $0x20] sm:$0xff]
      %v4242 = vld [vmem:[%s4236 + $0x28] sm:$0xff]
      %v4243 = vld [vmem:[%s4236 + $0x30] sm:$0xff]
      %v4244 = vld [vmem:[%s4236 + $0x38] sm:$0xff]
      %4245 = vrot.lane.b32.xlu0 %v3123, 96
      %v4246 = vpop.permute.xlu0 %4245
      %4247 = vrot.lane.b32.xlu0 %v3125, 96
      %v4248 = vpop.permute.xlu0 %4247
      %4249 = vrot.lane.b32.xlu0 %v3129, 96
      %v4250 = vpop.permute.xlu0 %4249
      %4251 = vrot.lane.b32.xlu0 %v3131, 96
      %v4252 = vpop.permute.xlu0 %4251
      %4253 = vrot.lane.b32.xlu0 %v3135, 96
      %v4254 = vpop.permute.xlu0 %4253
      %4255 = vrot.lane.b32.xlu0 %v3137, 96
      %v4256 = vpop.permute.xlu0 %4255
      %4257 = vrot.lane.b32.xlu0 %v3141, 96
      %v4258 = vpop.permute.xlu0 %4257
      %4259 = vrot.lane.b32.xlu0 %v3143, 96
      %v4260 = vpop.permute.xlu0 %4259
      %v4261 = vsel %vm1329, %v4246, %v4248
      %v4262 = vsel %vm1329, %v4250, %v4252
      %v4263 = vsel %vm1329, %v4254, %v4256
      %v4264 = vsel %vm1329, %v4258, %v4260
      %v4274 = vsel %vm3198, %v4237, 0
      %v4277 = vsel %vm3198, %v4238, 0
      %v4280 = vsel %vm3198, %v4239, 0
      %v4283 = vsel %vm3198, %v4240, 0
      %v4286 = vsel %vm3198, %v4241, 0
      %v4289 = vsel %vm3198, %v4242, 0
      %v4292 = vsel %vm3198, %v4243, 0
      %v4295 = vsel %vm3198, %v4244, 0
      %4297 = vmatprep.subr.mxu0 %v4248
      %4298 = vmatpush1.msra.mxu0 %v4261
      %4299 = vmatprep.subr.mxu0 %v4252
      %4300 = vmatpush1.msra.mxu0 %v4262
      %4301 = vmatprep.subr.mxu0 %v4256
      %4302 = vmatpush1.msra.mxu0 %v4263
      %4303 = vmatprep.subr.mxu0 %v4260
      %4304 = vmatpush1.msra.mxu0 %v4264
      %4305 = vmatprep.subr.mxu0 0.0
      %4306 = vmatpush1.msra.mxu0 0.0
      %4307 = vmatprep.subr.mxu0 0.0
      %4308 = vmatpush1.msra.mxu0 0.0
      %4309 = vmatprep.subr.mxu0 0.0
      %4310 = vmatpush1.msra.mxu0 0.0
      %4311 = vmatprep.subr.mxu0 0.0
      %4312 = vmatpush1.msra.mxu0 0.0
      %4313 = vmatprep.subr.mxu0 0.0
      %4314 = vmatpush1.msra.mxu0 0.0
      %4315 = vmatprep.subr.mxu0 0.0
      %4316 = vmatpush1.msra.mxu0 0.0
      %4317 = vmatprep.subr.mxu0 0.0
      %4318 = vmatpush1.msra.mxu0 0.0
      %4319 = vmatprep.subr.mxu0 0.0
      %4320 = vmatpush1.msra.mxu0 0.0
      %4321 = vmatprep.subr.mxu0 0.0
      %4322 = vmatpush1.msra.mxu0 0.0
      %4323 = vmatprep.subr.mxu0 0.0
      %4324 = vmatpush1.msra.mxu0 0.0
      %4325 = vmatprep.subr.mxu0 0.0
      %4326 = vmatpush1.msra.mxu0 0.0
      %4327 = vmatprep.subr.mxu0 0.0
      %4328 = vmatpush1.msra.mxu0 0.0
      %4329 = vmatprep.subr.mxu0 0.0
      %4330 = vmatpush1.msra.mxu0 0.0
      %4331 = vmatprep.subr.mxu0 0.0
      %4332 = vmatpush1.msra.mxu0 0.0
      %4333 = vmatprep.subr.mxu0 0.0
      %4334 = vmatpush1.msra.mxu0 0.0
      %4335 = vmatprep.subr.mxu0 0.0
      %4336 = vmatpush1.msra.mxu0 0.0
      %4337 = vmatprep.subr.mxu0 0.0
      %4338 = vmatpush1.msra.mxu0 0.0
      %4339 = vmatprep.subr.mxu0 0.0
      %4340 = vmatpush1.msra.mxu0 0.0
      %4341 = vmatprep.subr.mxu0 0.0
      %4342 = vmatpush1.msra.mxu0 0.0
      %4343 = vmatprep.subr.mxu0 0.0
      %4344 = vmatpush1.msra.mxu0 0.0
      %4345 = vmatprep.subr.mxu0 0.0
      %4346 = vmatpush1.msra.mxu0 0.0
      %4347 = vmatprep.subr.mxu0 0.0
      %4348 = vmatpush1.msra.mxu0 0.0
      %4349 = vmatprep.subr.mxu0 0.0
      %4350 = vmatpush1.msra.mxu0 0.0
      %4351 = vmatprep.subr.mxu0 0.0
      %4352 = vmatpush1.msra.mxu0 0.0
      %4353 = vmatprep.subr.mxu0 0.0
      %4354 = vmatpush1.msra.mxu0 0.0
      %4355 = vmatprep.subr.mxu0 0.0
      %4356 = vmatpush1.msra.mxu0 0.0
      %4357 = vmatprep.subr.mxu0 0.0
      %4358 = vmatpush1.msra.mxu0 0.0
      %4359 = vmatprep.subr.mxu0 0.0
      %4360 = vmatpush1.msra.mxu0 0.0
      %4361 = vmatprep.mubr.f32.mxu0 0.0
      %4362 = vmatmul.mubr.f32.gmra.mrb[0].mxu0 %v4274
      %v4363 = vpop.f32.mrb[0].mxu0
      %v4364 = vadd.f32 0.0, %v4363
      %v4365 = vpop.f32.mrb[0].mxu0
      %v4366 = vadd.f32 0.0, %v4365
      %4367 = vmatprep.mubr.f32.mxu0 0.0
      %4368 = vmatmul.mubr.f32.gmra.mrb[0].mxu0 %v4277
      %v4369 = vpop.f32.mrb[0].mxu0
      %v4370 = vadd.f32 0.0, %v4369
      %v4371 = vpop.f32.mrb[0].mxu0
      %v4372 = vadd.f32 0.0, %v4371
      %4373 = vmatprep.mubr.f32.mxu0 0.0
      %4374 = vmatmul.mubr.f32.gmra.mrb[0].mxu0 %v4280
      %v4375 = vpop.f32.mrb[0].mxu0
      %v4376 = vadd.f32 0.0, %v4375
      %v4377 = vpop.f32.mrb[0].mxu0
      %v4378 = vadd.f32 0.0, %v4377
      %4379 = vmatprep.mubr.f32.mxu0 0.0
      %4380 = vmatmul.mubr.f32.gmra.mrb[0].mxu0 %v4283
      %v4381 = vpop.f32.mrb[0].mxu0
      %v4382 = vadd.f32 0.0, %v4381
      %v4383 = vpop.f32.mrb[0].mxu0
      %v4384 = vadd.f32 0.0, %v4383
      %4385 = vmatprep.mubr.f32.mxu0 0.0
      %4386 = vmatmul.mubr.f32.gmra.mrb[0].mxu0 %v4286
      %v4387 = vpop.f32.mrb[0].mxu0
      %v4388 = vadd.f32 0.0, %v4387
      %v4389 = vpop.f32.mrb[0].mxu0
      %v4390 = vadd.f32 0.0, %v4389
      %4391 = vmatprep.mubr.f32.mxu0 0.0
      %4392 = vmatmul.mubr.f32.gmra.mrb[0].mxu0 %v4289
      %v4393 = vpop.f32.mrb[0].mxu0
      %v4394 = vadd.f32 0.0, %v4393
      %v4395 = vpop.f32.mrb[0].mxu0
      %v4396 = vadd.f32 0.0, %v4395
      %4397 = vmatprep.mubr.f32.mxu0 0.0
      %4398 = vmatmul.mubr.f32.gmra.mrb[0].mxu0 %v4292
      %v4399 = vpop.f32.mrb[0].mxu0
      %v4400 = vadd.f32 0.0, %v4399
      %v4401 = vpop.f32.mrb[0].mxu0
      %v4402 = vadd.f32 0.0, %v4401
      %4403 = vmatprep.mubr.f32.mxu0 0.0
      %4404 = vmatmul.mubr.f32.gmra.mrb[0].mxu0 %v4295
      %v4405 = vpop.f32.mrb[0].mxu0
      %v4406 = vadd.f32 0.0, %v4405
      %v4407 = vpop.f32.mrb[0].mxu0
      %v4408 = vadd.f32 0.0, %v4407
      %4409 = vdwg.mxu0
      %v4410 = vadd.f32 %v4220, %v4364
      %v4411 = vadd.f32 %v4221, %v4366
      %v4412 = vadd.f32 %v4222, %v4370
      %v4413 = vadd.f32 %v4223, %v4372
      %v4414 = vadd.f32 %v4224, %v4376
      %v4415 = vadd.f32 %v4225, %v4378
      %v4416 = vadd.f32 %v4226, %v4382
      %v4417 = vadd.f32 %v4227, %v4384
      %v4418 = vadd.f32 %v4228, %v4388
      %v4419 = vadd.f32 %v4229, %v4390
      %v4420 = vadd.f32 %v4230, %v4394
      %v4421 = vadd.f32 %v4231, %v4396
      %v4422 = vadd.f32 %v4232, %v4400
      %v4423 = vadd.f32 %v4233, %v4402
      %v4424 = vadd.f32 %v4234, %v4406
      %v4425 = vadd.f32 %v4235, %v4408
      %s4426 = scalar_lea.vmem %s3, 448
      %v4427 = vld [vmem:[%s4426] sm:$0xff]
      %v4428 = vld [vmem:[%s4426 + $0x8] sm:$0xff]
      %v4429 = vld [vmem:[%s4426 + $0x10] sm:$0xff]
      %v4430 = vld [vmem:[%s4426 + $0x18] sm:$0xff]
      %v4431 = vld [vmem:[%s4426 + $0x20] sm:$0xff]
      %v4432 = vld [vmem:[%s4426 + $0x28] sm:$0xff]
      %v4433 = vld [vmem:[%s4426 + $0x30] sm:$0xff]
      %v4434 = vld [vmem:[%s4426 + $0x38] sm:$0xff]
      %4435 = vrot.lane.b32.xlu0 %v3123, 95
      %v4436 = vpop.permute.xlu0 %4435
      %4437 = vrot.lane.b32.xlu0 %v3125, 95
      %v4438 = vpop.permute.xlu0 %4437
      %4439 = vrot.lane.b32.xlu0 %v3129, 95
      %v4440 = vpop.permute.xlu0 %4439
      %4441 = vrot.lane.b32.xlu0 %v3131, 95
      %v4442 = vpop.permute.xlu0 %4441
      %4443 = vrot.lane.b32.xlu0 %v3135, 95
      %v4444 = vpop.permute.xlu0 %4443
      %4445 = vrot.lane.b32.xlu0 %v3137, 95
      %v4446 = vpop.permute.xlu0 %4445
      %4447 = vrot.lane.b32.xlu0 %v3141, 95
      %v4448 = vpop.permute.xlu0 %4447
      %4449 = vrot.lane.b32.xlu0 %v3143, 95
      %v4450 = vpop.permute.xlu0 %4449
      %vm4451 = vcmask 777216
      %v4452 = vsel %vm4451, %v4436, %v4438
      %v4453 = vsel %vm4451, %v4440, %v4442
      %v4454 = vsel %vm4451, %v4444, %v4446
      %v4455 = vsel %vm4451, %v4448, %v4450
      %v4465 = vsel %vm3198, %v4427, 0
      %v4468 = vsel %vm3198, %v4428, 0
      %v4471 = vsel %vm3198, %v4429, 0
      %v4474 = vsel %vm3198, %v4430, 0
      %v4477 = vsel %vm3198, %v4431, 0
      %v4480 = vsel %vm3198, %v4432, 0
      %v4483 = vsel %vm3198, %v4433, 0
      %v4486 = vsel %vm3198, %v4434, 0
      %4488 = vmatprep.subr.mxu0 %v4438
      %4489 = vmatpush1.msra.mxu0 %v4452
      %4490 = vmatprep.subr.mxu0 %v4442
      %4491 = vmatpush1.msra.mxu0 %v4453
      %4492 = vmatprep.subr.mxu0 %v4446
      %4493 = vmatpush1.msra.mxu0 %v4454
      %4494 = vmatprep.subr.mxu0 %v4450
      %4495 = vmatpush1.msra.mxu0 %v4455
      %4496 = vmatprep.subr.mxu0 0.0
      %4497 = vmatpush1.msra.mxu0 0.0
      %4498 = vmatprep.subr.mxu0 0.0
      %4499 = vmatpush1.msra.mxu0 0.0
      %4500 = vmatprep.subr.mxu0 0.0
      %4501 = vmatpush1.msra.mxu0 0.0
      %4502 = vmatprep.subr.mxu0 0.0
      %4503 = vmatpush1.msra.mxu0 0.0
      %4504 = vmatprep.subr.mxu0 0.0
      %4505 = vmatpush1.msra.mxu0 0.0
      %4506 = vmatprep.subr.mxu0 0.0
      %4507 = vmatpush1.msra.mxu0 0.0
      %4508 = vmatprep.subr.mxu0 0.0
      %4509 = vmatpush1.msra.mxu0 0.0
      %4510 = vmatprep.subr.mxu0 0.0
      %4511 = vmatpush1.msra.mxu0 0.0
      %4512 = vmatprep.subr.mxu0 0.0
      %4513 = vmatpush1.msra.mxu0 0.0
      %4514 = vmatprep.subr.mxu0 0.0
      %4515 = vmatpush1.msra.mxu0 0.0
      %4516 = vmatprep.subr.mxu0 0.0
      %4517 = vmatpush1.msra.mxu0 0.0
      %4518 = vmatprep.subr.mxu0 0.0
      %4519 = vmatpush1.msra.mxu0 0.0
      %4520 = vmatprep.subr.mxu0 0.0
      %4521 = vmatpush1.msra.mxu0 0.0
      %4522 = vmatprep.subr.mxu0 0.0
      %4523 = vmatpush1.msra.mxu0 0.0
      %4524 = vmatprep.subr.mxu0 0.0
      %4525 = vmatpush1.msra.mxu0 0.0
      %4526 = vmatprep.subr.mxu0 0.0
      %4527 = vmatpush1.msra.mxu0 0.0
      %4528 = vmatprep.subr.mxu0 0.0
      %4529 = vmatpush1.msra.mxu0 0.0
      %4530 = vmatprep.subr.mxu0 0.0
      %4531 = vmatpush1.msra.mxu0 0.0
      %4532 = vmatprep.subr.mxu0 0.0
      %4533 = vmatpush1.msra.mxu0 0.0
      %4534 = vmatprep.subr.mxu0 0.0
      %4535 = vmatpush1.msra.mxu0 0.0
      %4536 = vmatprep.subr.mxu0 0.0
      %4537 = vmatpush1.msra.mxu0 0.0
      %4538 = vmatprep.subr.mxu0 0.0
      %4539 = vmatpush1.msra.mxu0 0.0
      %4540 = vmatprep.subr.mxu0 0.0
      %4541 = vmatpush1.msra.mxu0 0.0
      %4542 = vmatprep.subr.mxu0 0.0
      %4543 = vmatpush1.msra.mxu0 0.0
      %4544 = vmatprep.subr.mxu0 0.0
      %4545 = vmatpush1.msra.mxu0 0.0
      %4546 = vmatprep.subr.mxu0 0.0
      %4547 = vmatpush1.msra.mxu0 0.0
      %4548 = vmatprep.subr.mxu0 0.0
      %4549 = vmatpush1.msra.mxu0 0.0
      %4550 = vmatprep.subr.mxu0 0.0
      %4551 = vmatpush1.msra.mxu0 0.0
      %4552 = vmatprep.mubr.f32.mxu0 0.0
      %4553 = vmatmul.mubr.f32.gmra.mrb[0].mxu0 %v4465
      %v4554 = vpop.f32.mrb[0].mxu0
      %v4555 = vadd.f32 0.0, %v4554
      %v4556 = vpop.f32.mrb[0].mxu0
      %v4557 = vadd.f32 0.0, %v4556
      %4558 = vmatprep.mubr.f32.mxu0 0.0
      %4559 = vmatmul.mubr.f32.gmra.mrb[0].mxu0 %v4468
      %v4560 = vpop.f32.mrb[0].mxu0
      %v4561 = vadd.f32 0.0, %v4560
      %v4562 = vpop.f32.mrb[0].mxu0
      %v4563 = vadd.f32 0.0, %v4562
      %4564 = vmatprep.mubr.f32.mxu0 0.0
      %4565 = vmatmul.mubr.f32.gmra.mrb[0].mxu0 %v4471
      %v4566 = vpop.f32.mrb[0].mxu0
      %v4567 = vadd.f32 0.0, %v4566
      %v4568 = vpop.f32.mrb[0].mxu0
      %v4569 = vadd.f32 0.0, %v4568
      %4570 = vmatprep.mubr.f32.mxu0 0.0
      %4571 = vmatmul.mubr.f32.gmra.mrb[0].mxu0 %v4474
      %v4572 = vpop.f32.mrb[0].mxu0
      %v4573 = vadd.f32 0.0, %v4572
      %v4574 = vpop.f32.mrb[0].mxu0
      %v4575 = vadd.f32 0.0, %v4574
      %4576 = vmatprep.mubr.f32.mxu0 0.0
      %4577 = vmatmul.mubr.f32.gmra.mrb[0].mxu0 %v4477
      %v4578 = vpop.f32.mrb[0].mxu0
      %v4579 = vadd.f32 0.0, %v4578
      %v4580 = vpop.f32.mrb[0].mxu0
      %v4581 = vadd.f32 0.0, %v4580
      %4582 = vmatprep.mubr.f32.mxu0 0.0
      %4583 = vmatmul.mubr.f32.gmra.mrb[0].mxu0 %v4480
      %v4584 = vpop.f32.mrb[0].mxu0
      %v4585 = vadd.f32 0.0, %v4584
      %v4586 = vpop.f32.mrb[0].mxu0
      %v4587 = vadd.f32 0.0, %v4586
      %4588 = vmatprep.mubr.f32.mxu0 0.0
      %4589 = vmatmul.mubr.f32.gmra.mrb[0].mxu0 %v4483
      %v4590 = vpop.f32.mrb[0].mxu0
      %v4591 = vadd.f32 0.0, %v4590
      %v4592 = vpop.f32.mrb[0].mxu0
      %v4593 = vadd.f32 0.0, %v4592
      %4594 = vmatprep.mubr.f32.mxu0 0.0
      %4595 = vmatmul.mubr.f32.gmra.mrb[0].mxu0 %v4486
      %v4596 = vpop.f32.mrb[0].mxu0
      %v4597 = vadd.f32 0.0, %v4596
      %v4598 = vpop.f32.mrb[0].mxu0
      %v4599 = vadd.f32 0.0, %v4598
      %4600 = vdwg.mxu0
      %v4601 = vadd.f32 %v4410, %v4555
      %v4602 = vadd.f32 %v4411, %v4557
      %v4603 = vadd.f32 %v4412, %v4561
      %v4604 = vadd.f32 %v4413, %v4563
      %v4605 = vadd.f32 %v4414, %v4567
      %v4606 = vadd.f32 %v4415, %v4569
      %v4607 = vadd.f32 %v4416, %v4573
      %v4608 = vadd.f32 %v4417, %v4575
      %v4609 = vadd.f32 %v4418, %v4579
      %v4610 = vadd.f32 %v4419, %v4581
      %v4611 = vadd.f32 %v4420, %v4585
      %v4612 = vadd.f32 %v4421, %v4587
      %v4613 = vadd.f32 %v4422, %v4591
      %v4614 = vadd.f32 %v4423, %v4593
      %v4615 = vadd.f32 %v4424, %v4597
      %v4616 = vadd.f32 %v4425, %v4599
      %s4617 = scalar_lea.vmem %s3, 512
      %v4618 = vld [vmem:[%s4617] sm:$0xff]
      %v4619 = vld [vmem:[%s4617 + $0x8] sm:$0xff]
      %v4620 = vld [vmem:[%s4617 + $0x10] sm:$0xff]
      %v4621 = vld [vmem:[%s4617 + $0x18] sm:$0xff]
      %v4622 = vld [vmem:[%s4617 + $0x20] sm:$0xff]
      %v4623 = vld [vmem:[%s4617 + $0x28] sm:$0xff]
      %v4624 = vld [vmem:[%s4617 + $0x30] sm:$0xff]
      %v4625 = vld [vmem:[%s4617 + $0x38] sm:$0xff]
      %4626 = vrot.lane.b32.xlu0 %v3123, 94
      %v4627 = vpop.permute.xlu0 %4626
      %4628 = vrot.lane.b32.xlu0 %v3125, 94
      %v4629 = vpop.permute.xlu0 %4628
      %4630 = vrot.lane.b32.xlu0 %v3129, 94
      %v4631 = vpop.permute.xlu0 %4630
      %4632 = vrot.lane.b32.xlu0 %v3131, 94
      %v4633 = vpop.permute.xlu0 %4632
      %4634 = vrot.lane.b32.xlu0 %v3135, 94
      %v4635 = vpop.permute.xlu0 %4634
      %4636 = vrot.lane.b32.xlu0 %v3137, 94
      %v4637 = vpop.permute.xlu0 %4636
      %4638 = vrot.lane.b32.xlu0 %v3141, 94
      %v4639 = vpop.permute.xlu0 %4638
      %4640 = vrot.lane.b32.xlu0 %v3143, 94
      %v4641 = vpop.permute.xlu0 %4640
      %vm4642 = vcmask 769024
      %v4643 = vsel %vm4642, %v4627, %v4629
      %v4644 = vsel %vm4642, %v4631, %v4633
      %v4645 = vsel %vm4642, %v4635, %v4637
      %v4646 = vsel %vm4642, %v4639, %v4641
      %v4656 = vsel %vm3198, %v4618, 0
      %v4659 = vsel %vm3198, %v4619, 0
      %v4662 = vsel %vm3198, %v4620, 0
      %v4665 = vsel %vm3198, %v4621, 0
      %v4668 = vsel %vm3198, %v4622, 0
      %v4671 = vsel %vm3198, %v4623, 0
      %v4674 = vsel %vm3198, %v4624, 0
      %v4677 = vsel %vm3198, %v4625, 0
      %4679 = vmatprep.subr.mxu0 %v4629
      %4680 = vmatpush1.msra.mxu0 %v4643
      %4681 = vmatprep.subr.mxu0 %v4633
      %4682 = vmatpush1.msra.mxu0 %v4644
      %4683 = vmatprep.subr.mxu0 %v4637
      %4684 = vmatpush1.msra.mxu0 %v4645
      %4685 = vmatprep.subr.mxu0 %v4641
      %4686 = vmatpush1.msra.mxu0 %v4646
      %4687 = vmatprep.subr.mxu0 0.0
      %4688 = vmatpush1.msra.mxu0 0.0
      %4689 = vmatprep.subr.mxu0 0.0
      %4690 = vmatpush1.msra.mxu0 0.0
      %4691 = vmatprep.subr.mxu0 0.0
      %4692 = vmatpush1.msra.mxu0 0.0
      %4693 = vmatprep.subr.mxu0 0.0
      %4694 = vmatpush1.msra.mxu0 0.0
      %4695 = vmatprep.subr.mxu0 0.0
      %4696 = vmatpush1.msra.mxu0 0.0
      %4697 = vmatprep.subr.mxu0 0.0
      %4698 = vmatpush1.msra.mxu0 0.0
      %4699 = vmatprep.subr.mxu0 0.0
      %4700 = vmatpush1.msra.mxu0 0.0
      %4701 = vmatprep.subr.mxu0 0.0
      %4702 = vmatpush1.msra.mxu0 0.0
      %4703 = vmatprep.subr.mxu0 0.0
      %4704 = vmatpush1.msra.mxu0 0.0
      %4705 = vmatprep.subr.mxu0 0.0
      %4706 = vmatpush1.msra.mxu0 0.0
      %4707 = vmatprep.subr.mxu0 0.0
      %4708 = vmatpush1.msra.mxu0 0.0
      %4709 = vmatprep.subr.mxu0 0.0
      %4710 = vmatpush1.msra.mxu0 0.0
      %4711 = vmatprep.subr.mxu0 0.0
      %4712 = vmatpush1.msra.mxu0 0.0
      %4713 = vmatprep.subr.mxu0 0.0
      %4714 = vmatpush1.msra.mxu0 0.0
      %4715 = vmatprep.subr.mxu0 0.0
      %4716 = vmatpush1.msra.mxu0 0.0
      %4717 = vmatprep.subr.mxu0 0.0
      %4718 = vmatpush1.msra.mxu0 0.0
      %4719 = vmatprep.subr.mxu0 0.0
      %4720 = vmatpush1.msra.mxu0 0.0
      %4721 = vmatprep.subr.mxu0 0.0
      %4722 = vmatpush1.msra.mxu0 0.0
      %4723 = vmatprep.subr.mxu0 0.0
      %4724 = vmatpush1.msra.mxu0 0.0
      %4725 = vmatprep.subr.mxu0 0.0
      %4726 = vmatpush1.msra.mxu0 0.0
      %4727 = vmatprep.subr.mxu0 0.0
      %4728 = vmatpush1.msra.mxu0 0.0
      %4729 = vmatprep.subr.mxu0 0.0
      %4730 = vmatpush1.msra.mxu0 0.0
      %4731 = vmatprep.subr.mxu0 0.0
      %4732 = vmatpush1.msra.mxu0 0.0
      %4733 = vmatprep.subr.mxu0 0.0
      %4734 = vmatpush1.msra.mxu0 0.0
      %4735 = vmatprep.subr.mxu0 0.0
      %4736 = vmatpush1.msra.mxu0 0.0
      %4737 = vmatprep.subr.mxu0 0.0
      %4738 = vmatpush1.msra.mxu0 0.0
      %4739 = vmatprep.subr.mxu0 0.0
      %4740 = vmatpush1.msra.mxu0 0.0
      %4741 = vmatprep.subr.mxu0 0.0
      %4742 = vmatpush1.msra.mxu0 0.0
      %4743 = vmatprep.mubr.f32.mxu0 0.0
      %4744 = vmatmul.mubr.f32.gmra.mrb[0].mxu0 %v4656
      %v4745 = vpop.f32.mrb[0].mxu0
      %v4746 = vadd.f32 0.0, %v4745
      %v4747 = vpop.f32.mrb[0].mxu0
      %v4748 = vadd.f32 0.0, %v4747
      %4749 = vmatprep.mubr.f32.mxu0 0.0
      %4750 = vmatmul.mubr.f32.gmra.mrb[0].mxu0 %v4659
      %v4751 = vpop.f32.mrb[0].mxu0
      %v4752 = vadd.f32 0.0, %v4751
      %v4753 = vpop.f32.mrb[0].mxu0
      %v4754 = vadd.f32 0.0, %v4753
      %4755 = vmatprep.mubr.f32.mxu0 0.0
      %4756 = vmatmul.mubr.f32.gmra.mrb[0].mxu0 %v4662
      %v4757 = vpop.f32.mrb[0].mxu0
      %v4758 = vadd.f32 0.0, %v4757
      %v4759 = vpop.f32.mrb[0].mxu0
      %v4760 = vadd.f32 0.0, %v4759
      %4761 = vmatprep.mubr.f32.mxu0 0.0
      %4762 = vmatmul.mubr.f32.gmra.mrb[0].mxu0 %v4665
      %v4763 = vpop.f32.mrb[0].mxu0
      %v4764 = vadd.f32 0.0, %v4763
      %v4765 = vpop.f32.mrb[0].mxu0
      %v4766 = vadd.f32 0.0, %v4765
      %4767 = vmatprep.mubr.f32.mxu0 0.0
      %4768 = vmatmul.mubr.f32.gmra.mrb[0].mxu0 %v4668
      %v4769 = vpop.f32.mrb[0].mxu0
      %v4770 = vadd.f32 0.0, %v4769
      %v4771 = vpop.f32.mrb[0].mxu0
      %v4772 = vadd.f32 0.0, %v4771
      %4773 = vmatprep.mubr.f32.mxu0 0.0
      %4774 = vmatmul.mubr.f32.gmra.mrb[0].mxu0 %v4671
      %v4775 = vpop.f32.mrb[0].mxu0
      %v4776 = vadd.f32 0.0, %v4775
      %v4777 = vpop.f32.mrb[0].mxu0
      %v4778 = vadd.f32 0.0, %v4777
      %4779 = vmatprep.mubr.f32.mxu0 0.0
      %4780 = vmatmul.mubr.f32.gmra.mrb[0].mxu0 %v4674
      %v4781 = vpop.f32.mrb[0].mxu0
      %v4782 = vadd.f32 0.0, %v4781
      %v4783 = vpop.f32.mrb[0].mxu0
      %v4784 = vadd.f32 0.0, %v4783
      %4785 = vmatprep.mubr.f32.mxu0 0.0
      %4786 = vmatmul.mubr.f32.gmra.mrb[0].mxu0 %v4677
      %v4787 = vpop.f32.mrb[0].mxu0
      %v4788 = vadd.f32 0.0, %v4787
      %v4789 = vpop.f32.mrb[0].mxu0
      %v4790 = vadd.f32 0.0, %v4789
      %4791 = vdwg.mxu0
      %v4792 = vadd.f32 %v4601, %v4746
      %v4793 = vadd.f32 %v4602, %v4748
      %v4794 = vadd.f32 %v4603, %v4752
      %v4795 = vadd.f32 %v4604, %v4754
      %v4796 = vadd.f32 %v4605, %v4758
      %v4797 = vadd.f32 %v4606, %v4760
      %v4798 = vadd.f32 %v4607, %v4764
      %v4799 = vadd.f32 %v4608, %v4766
      %v4800 = vadd.f32 %v4609, %v4770
      %v4801 = vadd.f32 %v4610, %v4772
      %v4802 = vadd.f32 %v4611, %v4776
      %v4803 = vadd.f32 %v4612, %v4778
      %v4804 = vadd.f32 %v4613, %v4782
      %v4805 = vadd.f32 %v4614, %v4784
      %v4806 = vadd.f32 %v4615, %v4788
      %v4807 = vadd.f32 %v4616, %v4790
      %v4808 = vld [vmem:[%s4] sm:$0xff]
      %v4809 = vld [vmem:[%s4 + $0x8] sm:$0xff]
      %v4810 = vld [vmem:[%s4 + $0x10] sm:$0xff]
      %v4811 = vld [vmem:[%s4 + $0x18] sm:$0xff]
      %v4812 = vld [vmem:[%s4 + $0x20] sm:$0xff]
      %v4813 = vld [vmem:[%s4 + $0x28] sm:$0xff]
      %v4814 = vld [vmem:[%s4 + $0x30] sm:$0xff]
      %v4815 = vld [vmem:[%s4 + $0x38] sm:$0xff]
      %4817 = vset.pattern.permute.xlu0 0
      %4818 = vperm.xlu0 %4817, %v4808
      %v4819 = vpop.permute.xlu0 %4818
      %4822 = vset.pattern.permute.xlu0 0
      %4823 = vperm.xlu0 %4822, %v4809
      %v4824 = vpop.permute.xlu0 %4823
      %4827 = vset.pattern.permute.xlu0 0
      %4828 = vperm.xlu0 %4827, %v4810
      %v4829 = vpop.permute.xlu0 %4828
      %4832 = vset.pattern.permute.xlu0 0
      %4833 = vperm.xlu0 %4832, %v4811
      %v4834 = vpop.permute.xlu0 %4833
      %4837 = vset.pattern.permute.xlu0 0
      %4838 = vperm.xlu0 %4837, %v4812
      %v4839 = vpop.permute.xlu0 %4838
      %4842 = vset.pattern.permute.xlu0 0
      %4843 = vperm.xlu0 %4842, %v4813
      %v4844 = vpop.permute.xlu0 %4843
      %4847 = vset.pattern.permute.xlu0 0
      %4848 = vperm.xlu0 %4847, %v4814
      %v4849 = vpop.permute.xlu0 %4848
      %4852 = vset.pattern.permute.xlu0 0
      %4853 = vperm.xlu0 %4852, %v4815
      %v4854 = vpop.permute.xlu0 %4853
      %v4856 = vadd.f32 %v4792, %v4819
      %v4857 = vadd.f32 %v4793, %v4819
      %v4858 = vadd.f32 %v4794, %v4824
      %v4859 = vadd.f32 %v4795, %v4824
      %v4860 = vadd.f32 %v4796, %v4829
      %v4861 = vadd.f32 %v4797, %v4829
      %v4862 = vadd.f32 %v4798, %v4834
      %v4863 = vadd.f32 %v4799, %v4834
      %v4864 = vadd.f32 %v4800, %v4839
      %v4865 = vadd.f32 %v4801, %v4839
      %v4866 = vadd.f32 %v4802, %v4844
      %v4867 = vadd.f32 %v4803, %v4844
      %v4868 = vadd.f32 %v4804, %v4849
      %v4869 = vadd.f32 %v4805, %v4849
      %v4870 = vadd.f32 %v4806, %v4854
      %v4871 = vadd.f32 %v4807, %v4854
      %v4872 = vmax.f32 %v4856, 0.0
      %v4873 = vmax.f32 %v4857, 0.0
      %v4874 = vmax.f32 %v4858, 0.0
      %v4875 = vmax.f32 %v4859, 0.0
      %v4876 = vmax.f32 %v4860, 0.0
      %v4877 = vmax.f32 %v4861, 0.0
      %v4878 = vmax.f32 %v4862, 0.0
      %v4879 = vmax.f32 %v4863, 0.0
      %v4880 = vmax.f32 %v4864, 0.0
      %v4881 = vmax.f32 %v4865, 0.0
      %v4882 = vmax.f32 %v4866, 0.0
      %v4883 = vmax.f32 %v4867, 0.0
      %v4884 = vmax.f32 %v4868, 0.0
      %v4885 = vmax.f32 %v4869, 0.0
      %v4886 = vmax.f32 %v4870, 0.0
      %v4887 = vmax.f32 %v4871, 0.0
      %4888 = vst [vmem:[#allocation3] sm:$0xff] %v4872
      %4889 = vst.msk [vmem:[#allocation3 + $0x8] sm:$0xff] %vm4642, %v4873
      %4890 = vst [vmem:[#allocation3 + $0x10] sm:$0xff] %v4874
      %4891 = vst.msk [vmem:[#allocation3 + $0x18] sm:$0xff] %vm4642, %v4875
      %4892 = vst [vmem:[#allocation3 + $0x20] sm:$0xff] %v4876
      %4893 = vst.msk [vmem:[#allocation3 + $0x28] sm:$0xff] %vm4642, %v4877
      %4894 = vst [vmem:[#allocation3 + $0x30] sm:$0xff] %v4878
      %4895 = vst.msk [vmem:[#allocation3 + $0x38] sm:$0xff] %vm4642, %v4879
      %4896 = vst [vmem:[#allocation3 + $0x40] sm:$0xff] %v4880
      %4897 = vst.msk [vmem:[#allocation3 + $0x48] sm:$0xff] %vm4642, %v4881
      %4898 = vst [vmem:[#allocation3 + $0x50] sm:$0xff] %v4882
      %4899 = vst.msk [vmem:[#allocation3 + $0x58] sm:$0xff] %vm4642, %v4883
      %4900 = vst [vmem:[#allocation3 + $0x60] sm:$0xff] %v4884
      %4901 = vst.msk [vmem:[#allocation3 + $0x68] sm:$0xff] %vm4642, %v4885
      %4902 = vst [vmem:[#allocation3 + $0x70] sm:$0xff] %v4886
      %4903 = vst.msk [vmem:[#allocation3 + $0x78] sm:$0xff] %vm4642, %v4887
      %v4904 = vld [vmem:[#allocation3] sm:$0xff]
      %v4905 = vld [vmem:[#allocation3 + $0x8] sm:$0xff]
      %v4906 = vld [vmem:[#allocation3 + $0x10] sm:$0xff]
      %v4907 = vld [vmem:[#allocation3 + $0x18] sm:$0xff]
      %v4908 = vld [vmem:[#allocation3 + $0x20] sm:$0xff]
      %v4909 = vld [vmem:[#allocation3 + $0x28] sm:$0xff]
      %v4910 = vld [vmem:[#allocation3 + $0x30] sm:$0xff]
      %v4911 = vld [vmem:[#allocation3 + $0x38] sm:$0xff]
      %v4912 = vld [vmem:[#allocation3 + $0x40] sm:$0xff]
      %v4913 = vld [vmem:[#allocation3 + $0x48] sm:$0xff]
      %v4914 = vld [vmem:[#allocation3 + $0x50] sm:$0xff]
      %v4915 = vld [vmem:[#allocation3 + $0x58] sm:$0xff]
      %v4916 = vld [vmem:[#allocation3 + $0x60] sm:$0xff]
      %v4917 = vld [vmem:[#allocation3 + $0x68] sm:$0xff]
      %v4918 = vld [vmem:[#allocation3 + $0x70] sm:$0xff]
      %v4919 = vld [vmem:[#allocation3 + $0x78] sm:$0xff]
      %4936 = vrot.lane.b32.xlu0 %v4904, 127
      %v4937 = vpop.permute.xlu0 %4936
      %4938 = vrot.lane.b32.xlu0 %v4905, 127
      %v4939 = vpop.permute.xlu0 %4938
      %4940 = vrot.lane.b32.xlu0 %v4906, 127
      %v4941 = vpop.permute.xlu0 %4940
      %4942 = vrot.lane.b32.xlu0 %v4907, 127
      %v4943 = vpop.permute.xlu0 %4942
      %4944 = vrot.lane.b32.xlu0 %v4908, 127
      %v4945 = vpop.permute.xlu0 %4944
      %4946 = vrot.lane.b32.xlu0 %v4909, 127
      %v4947 = vpop.permute.xlu0 %4946
      %4948 = vrot.lane.b32.xlu0 %v4910, 127
      %v4949 = vpop.permute.xlu0 %4948
      %4950 = vrot.lane.b32.xlu0 %v4911, 127
      %v4951 = vpop.permute.xlu0 %4950
      %4952 = vrot.lane.b32.xlu0 %v4912, 127
      %v4953 = vpop.permute.xlu0 %4952
      %4954 = vrot.lane.b32.xlu0 %v4913, 127
      %v4955 = vpop.permute.xlu0 %4954
      %4956 = vrot.lane.b32.xlu0 %v4914, 127
      %v4957 = vpop.permute.xlu0 %4956
      %4958 = vrot.lane.b32.xlu0 %v4915, 127
      %v4959 = vpop.permute.xlu0 %4958
      %4960 = vrot.lane.b32.xlu0 %v4916, 127
      %v4961 = vpop.permute.xlu0 %4960
      %4962 = vrot.lane.b32.xlu0 %v4917, 127
      %v4963 = vpop.permute.xlu0 %4962
      %4964 = vrot.lane.b32.xlu0 %v4918, 127
      %v4965 = vpop.permute.xlu0 %4964
      %4966 = vrot.lane.b32.xlu0 %v4919, 127
      %v4967 = vpop.permute.xlu0 %4966
      %v4968 = vsel %vm493, %v4937, %v4939
      %v4969 = vsel %vm493, %v4941, %v4943
      %v4970 = vsel %vm493, %v4945, %v4947
      %v4971 = vsel %vm493, %v4949, %v4951
      %v4972 = vsel %vm493, %v4953, %v4955
      %v4973 = vsel %vm493, %v4957, %v4959
      %v4974 = vsel %vm493, %v4961, %v4963
      %v4975 = vsel %vm493, %v4965, %v4967
      %v4992 = vmax.f32 %v4904, %v4968
      %v4993 = vmax.f32 %v4905, %v4939
      %v4994 = vmax.f32 %v4906, %v4969
      %v4995 = vmax.f32 %v4907, %v4943
      %v4996 = vmax.f32 %v4908, %v4970
      %v4997 = vmax.f32 %v4909, %v4947
      %v4998 = vmax.f32 %v4910, %v4971
      %v4999 = vmax.f32 %v4911, %v4951
      %v5000 = vmax.f32 %v4912, %v4972
      %v5001 = vmax.f32 %v4913, %v4955
      %v5002 = vmax.f32 %v4914, %v4973
      %v5003 = vmax.f32 %v4915, %v4959
      %v5004 = vmax.f32 %v4916, %v4974
      %v5005 = vmax.f32 %v4917, %v4963
      %v5006 = vmax.f32 %v4918, %v4975
      %v5007 = vmax.f32 %v4919, %v4967
      %5024 = vrot.lane.b32.xlu0 %v4992, 112
      %v5025 = vpop.permute.xlu0 %5024
      %5026 = vrot.lane.b32.xlu0 %v4993, 112
      %v5027 = vpop.permute.xlu0 %5026
      %5028 = vrot.lane.b32.xlu0 %v4994, 112
      %v5029 = vpop.permute.xlu0 %5028
      %5030 = vrot.lane.b32.xlu0 %v4995, 112
      %v5031 = vpop.permute.xlu0 %5030
      %5032 = vrot.lane.b32.xlu0 %v4996, 112
      %v5033 = vpop.permute.xlu0 %5032
      %5034 = vrot.lane.b32.xlu0 %v4997, 112
      %v5035 = vpop.permute.xlu0 %5034
      %5036 = vrot.lane.b32.xlu0 %v4998, 112
      %v5037 = vpop.permute.xlu0 %5036
      %5038 = vrot.lane.b32.xlu0 %v4999, 112
      %v5039 = vpop.permute.xlu0 %5038
      %5040 = vrot.lane.b32.xlu0 %v5000, 112
      %v5041 = vpop.permute.xlu0 %5040
      %5042 = vrot.lane.b32.xlu0 %v5001, 112
      %v5043 = vpop.permute.xlu0 %5042
      %5044 = vrot.lane.b32.xlu0 %v5002, 112
      %v5045 = vpop.permute.xlu0 %5044
      %5046 = vrot.lane.b32.xlu0 %v5003, 112
      %v5047 = vpop.permute.xlu0 %5046
      %5048 = vrot.lane.b32.xlu0 %v5004, 112
      %v5049 = vpop.permute.xlu0 %5048
      %5050 = vrot.lane.b32.xlu0 %v5005, 112
      %v5051 = vpop.permute.xlu0 %5050
      %5052 = vrot.lane.b32.xlu0 %v5006, 112
      %v5053 = vpop.permute.xlu0 %5052
      %5054 = vrot.lane.b32.xlu0 %v5007, 112
      %v5055 = vpop.permute.xlu0 %5054
      %v5056 = vsel %vm3688, %v5025, %v5027
      %v5057 = vsel %vm3688, %v5029, %v5031
      %v5058 = vsel %vm3688, %v5033, %v5035
      %v5059 = vsel %vm3688, %v5037, %v5039
      %v5060 = vsel %vm3688, %v5041, %v5043
      %v5061 = vsel %vm3688, %v5045, %v5047
      %v5062 = vsel %vm3688, %v5049, %v5051
      %v5063 = vsel %vm3688, %v5053, %v5055
      %v5080 = vmax.f32 %v4992, %v5056
      %v5081 = vmax.f32 %v4993, %v5027
      %v5082 = vmax.f32 %v4994, %v5057
      %v5083 = vmax.f32 %v4995, %v5031
      %v5084 = vmax.f32 %v4996, %v5058
      %v5085 = vmax.f32 %v4997, %v5035
      %v5086 = vmax.f32 %v4998, %v5059
      %v5087 = vmax.f32 %v4999, %v5039
      %v5088 = vmax.f32 %v5000, %v5060
      %v5089 = vmax.f32 %v5001, %v5043
      %v5090 = vmax.f32 %v5002, %v5061
      %v5091 = vmax.f32 %v5003, %v5047
      %v5092 = vmax.f32 %v5004, %v5062
      %v5093 = vmax.f32 %v5005, %v5051
      %v5094 = vmax.f32 %v5006, %v5063
      %v5095 = vmax.f32 %v5007, %v5055
      %v5096 = vld [vmem:[%s6] sm:$0xff]
      %v5097 = vld [vmem:[%s6 + $0x8] sm:$0xff]
      %v5098 = vld [vmem:[%s6 + $0x10] sm:$0xff]
      %v5099 = vld [vmem:[%s6 + $0x18] sm:$0xff]
      %v5100 = vld [vmem:[%s6 + $0x20] sm:$0xff]
      %v5101 = vld [vmem:[%s6 + $0x28] sm:$0xff]
      %v5102 = vld [vmem:[%s6 + $0x30] sm:$0xff]
      %v5103 = vld [vmem:[%s6 + $0x38] sm:$0xff]
      %v5104 = vld [vmem:[%s6 + $0x40] sm:$0xff]
      %v5105 = vld [vmem:[%s6 + $0x48] sm:$0xff]
      %v5106 = vld [vmem:[%s6 + $0x50] sm:$0xff]
      %v5107 = vld [vmem:[%s6 + $0x58] sm:$0xff]
      %v5108 = vld [vmem:[%s6 + $0x60] sm:$0xff]
      %v5109 = vld [vmem:[%s6 + $0x68] sm:$0xff]
      %v5110 = vld [vmem:[%s6 + $0x70] sm:$0xff]
      %v5111 = vld [vmem:[%s6 + $0x78] sm:$0xff]
      %v5112 = vld [vmem:[%s6 + $0x80] sm:$0xff]
      %v5113 = vld [vmem:[%s6 + $0x88] sm:$0xff]
      %v5114 = vld [vmem:[%s6 + $0x90] sm:$0xff]
      %v5115 = vld [vmem:[%s6 + $0x98] sm:$0xff]
      %v5116 = vld [vmem:[%s6 + $0xa0] sm:$0xff]
      %v5117 = vld [vmem:[%s6 + $0xa8] sm:$0xff]
      %v5118 = vld [vmem:[%s6 + $0xb0] sm:$0xff]
      %v5119 = vld [vmem:[%s6 + $0xb8] sm:$0xff]
      %v5120 = vld [vmem:[%s6 + $0xc0] sm:$0xff]
      %v5121 = vld [vmem:[%s6 + $0xc8] sm:$0x1f]
      %vm5122 = vcmask 629760
      %v5124 = vsel %vm5122, %v5081, 0
      %v5127 = vsel %vm5122, %v5083, 0
      %v5130 = vsel %vm5122, %v5085, 0
      %v5133 = vsel %vm5122, %v5087, 0
      %v5136 = vsel %vm5122, %v5089, 0
      %v5139 = vsel %vm5122, %v5091, 0
      %v5142 = vsel %vm5122, %v5093, 0
      %v5145 = vsel %vm5122, %v5095, 0
      %vm5147 = vcmask 1044480
      %v5149 = vsel %vm5147, %v5121, 0
      %5151 = vmatprep.subr.mxu0 0.0
      %5152 = vmatpush1.msra.mxu0 %v5096
      %5153 = vmatprep.subr.mxu0 0.0
      %5154 = vmatpush1.msra.mxu0 %v5097
      %5155 = vmatprep.subr.mxu0 0.0
      %5156 = vmatpush1.msra.mxu0 %v5098
      %5157 = vmatprep.subr.mxu0 0.0
      %5158 = vmatpush1.msra.mxu0 %v5099
      %5159 = vmatprep.subr.mxu0 0.0
      %5160 = vmatpush1.msra.mxu0 %v5100
      %5161 = vmatprep.subr.mxu0 0.0
      %5162 = vmatpush1.msra.mxu0 %v5101
      %5163 = vmatprep.subr.mxu0 0.0
      %5164 = vmatpush1.msra.mxu0 %v5102
      %5165 = vmatprep.subr.mxu0 0.0
      %5166 = vmatpush1.msra.mxu0 %v5103
      %5167 = vmatprep.subr.mxu0 0.0
      %5168 = vmatpush1.msra.mxu0 %v5104
      %5169 = vmatprep.subr.mxu0 0.0
      %5170 = vmatpush1.msra.mxu0 %v5105
      %5171 = vmatprep.subr.mxu0 0.0
      %5172 = vmatpush1.msra.mxu0 %v5106
      %5173 = vmatprep.subr.mxu0 0.0
      %5174 = vmatpush1.msra.mxu0 %v5107
      %5175 = vmatprep.subr.mxu0 0.0
      %5176 = vmatpush1.msra.mxu0 %v5108
      %5177 = vmatprep.subr.mxu0 0.0
      %5178 = vmatpush1.msra.mxu0 %v5109
      %5179 = vmatprep.subr.mxu0 0.0
      %5180 = vmatpush1.msra.mxu0 %v5110
      %5181 = vmatprep.subr.mxu0 0.0
      %5182 = vmatpush1.msra.mxu0 %v5111
      %5183 = vmatprep.subr.mxu0 0.0
      %5184 = vmatpush1.msra.mxu0 %v5112
      %5185 = vmatprep.subr.mxu0 0.0
      %5186 = vmatpush1.msra.mxu0 %v5113
      %5187 = vmatprep.subr.mxu0 0.0
      %5188 = vmatpush1.msra.mxu0 %v5114
      %5189 = vmatprep.subr.mxu0 0.0
      %5190 = vmatpush1.msra.mxu0 %v5115
      %5191 = vmatprep.subr.mxu0 0.0
      %5192 = vmatpush1.msra.mxu0 %v5116
      %5193 = vmatprep.subr.mxu0 0.0
      %5194 = vmatpush1.msra.mxu0 %v5117
      %5195 = vmatprep.subr.mxu0 0.0
      %5196 = vmatpush1.msra.mxu0 %v5118
      %5197 = vmatprep.subr.mxu0 0.0
      %5198 = vmatpush1.msra.mxu0 %v5119
      %5199 = vmatprep.subr.mxu0 0.0
      %5200 = vmatpush1.msra.mxu0 %v5120
      %5201 = vmatprep.subr.mxu0 0.0
      %5202 = vmatpush1.msra.mxu0 %v5149
      %5203 = vmatprep.subr.mxu0 0.0
      %5204 = vmatpush1.msra.mxu0 0.0
      %5205 = vmatprep.subr.mxu0 0.0
      %5206 = vmatpush1.msra.mxu0 0.0
      %5207 = vmatprep.subr.mxu0 0.0
      %5208 = vmatpush1.msra.mxu0 0.0
      %5209 = vmatprep.subr.mxu0 0.0
      %5210 = vmatpush1.msra.mxu0 0.0
      %5211 = vmatprep.subr.mxu0 0.0
      %5212 = vmatpush1.msra.mxu0 0.0
      %5213 = vmatprep.subr.mxu0 0.0
      %5214 = vmatpush1.msra.mxu0 0.0
      %5215 = vmatprep.mubr.f32.mxu0 %v5124
      %5216 = vmatmul.mubr.f32.gmra.mrb[0].mxu0 %v5080
      %v5217 = vpop.f32.mrb[0].mxu0
      %v5218 = vadd.f32 0.0, %v5217
      %v5219 = vpop.f32.mrb[0].mxu0
      %5220 = vmatprep.mubr.f32.mxu0 %v5127
      %5221 = vmatmul.mubr.f32.gmra.mrb[0].mxu0 %v5082
      %v5222 = vpop.f32.mrb[0].mxu0
      %v5223 = vadd.f32 0.0, %v5222
      %v5224 = vpop.f32.mrb[0].mxu0
      %5225 = vmatprep.mubr.f32.mxu0 %v5130
      %5226 = vmatmul.mubr.f32.gmra.mrb[0].mxu0 %v5084
      %v5227 = vpop.f32.mrb[0].mxu0
      %v5228 = vadd.f32 0.0, %v5227
      %v5229 = vpop.f32.mrb[0].mxu0
      %5230 = vmatprep.mubr.f32.mxu0 %v5133
      %5231 = vmatmul.mubr.f32.gmra.mrb[0].mxu0 %v5086
      %v5232 = vpop.f32.mrb[0].mxu0
      %v5233 = vadd.f32 0.0, %v5232
      %v5234 = vpop.f32.mrb[0].mxu0
      %5235 = vmatprep.mubr.f32.mxu0 %v5136
      %5236 = vmatmul.mubr.f32.gmra.mrb[0].mxu0 %v5088
      %v5237 = vpop.f32.mrb[0].mxu0
      %v5238 = vadd.f32 0.0, %v5237
      %v5239 = vpop.f32.mrb[0].mxu0
      %5240 = vmatprep.mubr.f32.mxu0 %v5139
      %5241 = vmatmul.mubr.f32.gmra.mrb[0].mxu0 %v5090
      %v5242 = vpop.f32.mrb[0].mxu0
      %v5243 = vadd.f32 0.0, %v5242
      %v5244 = vpop.f32.mrb[0].mxu0
      %5245 = vmatprep.mubr.f32.mxu0 %v5142
      %5246 = vmatmul.mubr.f32.gmra.mrb[0].mxu0 %v5092
      %v5247 = vpop.f32.mrb[0].mxu0
      %v5248 = vadd.f32 0.0, %v5247
      %v5249 = vpop.f32.mrb[0].mxu0
      %5250 = vmatprep.mubr.f32.mxu0 %v5145
      %5251 = vmatmul.mubr.f32.gmra.mrb[0].mxu0 %v5094
      %v5252 = vpop.f32.mrb[0].mxu0
      %v5253 = vadd.f32 0.0, %v5252
      %v5254 = vpop.f32.mrb[0].mxu0
      %5255 = vdwg.mxu0
      %vm5256 = vcmask 400384
      %5257 = vst.msk [vmem:[%s275] sm:$0xff] %vm5256, %v5218
      %5258 = vst.msk [vmem:[%s275 + $0x8] sm:$0xff] %vm5256, %v5223
      %5259 = vst.msk [vmem:[%s275 + $0x10] sm:$0xff] %vm5256, %v5228
      %5260 = vst.msk [vmem:[%s275 + $0x18] sm:$0xff] %vm5256, %v5233
      %5261 = vst.msk [vmem:[%s275 + $0x20] sm:$0xff] %vm5256, %v5238
      %5262 = vst.msk [vmem:[%s275 + $0x28] sm:$0xff] %vm5256, %v5243
      %5263 = vst.msk [vmem:[%s275 + $0x30] sm:$0xff] %vm5256, %v5248
      %5264 = vst.msk [vmem:[%s275 + $0x38] sm:$0xff] %vm5256, %v5253
      %p5265 = scmp.lt.s32.totalorder %s18, 7
      %s5266 = scalar_select %p5265, %s18, 7
      %s5267 = smul.addr %s5266, 8
      %s5268 = smul.addr %s5267, 8
      %s5269 = scalar_lea.vmem %s7, %s5268
      // Predicated region
      $region49: #{cnn_forward.2} parent=47 // pred_check
        %p5270 = pneg %p188
      $region50: #{cnn_forward.2} parent=47 // pred_check_branch
        %5272 = sbr.rel (%p5270) target = $region52
      $region51: #{cnn_forward.2} parent=47 // pred_region
        _
      $region52: #{cnn_forward.2} parent=47 // pred_fallthru
        _
    $region48: #{cnn_forward.2} parent=5 // pred_fallthru
      _
    %p5273 = scmp.le.s32.totalorder 2, %s13
    // Predicated region
    $region53: #{cnn_forward.2} parent=5 // pred_check
      %p5274 = pneg %p5273
    $region54: #{cnn_forward.2} parent=5 // pred_check_branch
      %5276 = sbr.rel (%p5274) target = $region56
    $region55: #{cnn_forward.2} parent=5 // pred_region
      %s5277 = ssub.s32 %s13, 2
      // Predicated region
      $region57: #{cnn_forward.2} parent=55 // pred_check
        %p5278 = pneg %p194
      $region58: #{cnn_forward.2} parent=55 // pred_check_branch
        %5280 = sbr.rel (%p5278) target = $region60
      $region59: #{cnn_forward.2} parent=55 // pred_region
        %p5281 = scmp.lt.s32.totalorder %s19, 7
        %s5282 = scalar_select %p5281, %s19, 7
        %s5283 = smul.addr %s5282, 8
        %s5284 = smul.addr %s5283, 8
        %s5285 = scalar_lea.vmem %s7, %s5284
      $region60: #{cnn_forward.2} parent=55 // pred_fallthru
        _
    $region56: #{cnn_forward.2} parent=5 // pred_fallthru
      _
  $region6: #{cnn_forward.2} parent=0 // loop_footer
    %s17 = sadd.s32 1, %s13
  $region7: #{cnn_forward.2} parent=0 // loop_footer_branch
    %12 = sbr.rel target = $region3
  $region8: #{cnn_forward.2} parent=0 // loop_exit
    _

</llo_original>
